<compile_context>
chip_gen: v7x
topology: tpu7x:2x2x1
jax: 0.10.0
libtpu: 0.0.40
codegen_flags: <defaults>
</compile_context>

<pallas_src>
import math
import functools

import jax
import jax.numpy as jnp
from jax import lax
from jax.experimental import pallas as pl
from jax.experimental.pallas import tpu as pltpu

HEAD_DIM = 64      # attention_head_size in the PyTorch module
LN_EPS = 1e-5      # nn.LayerNorm default eps


# ----------------------------- math helpers (shared kernel / reference) -------
def _layernorm(v, gamma, beta, eps=LN_EPS):
    mu = jnp.mean(v, axis=-1, keepdims=True)
    var = jnp.mean(jnp.square(v - mu), axis=-1, keepdims=True)
    return (v - mu) * lax.rsqrt(var + eps) * gamma + beta


def _silu(v):
    return v * jax.nn.sigmoid(v)


def _mha(h2, wqkv, bqkv, wo, bo, Nb, T, H, d, *, approx_recip):
    """Multi-head self-attention + output projection on a (Nb*T, Cin) tile.

    wqkv: (Cin, 3*O) bf16 fused [Wq | Wk | Wv]; bqkv: (1, 3*O) f32;
    wo: (O, O) bf16; bo: (1, O) f32.
    Heads are combined by accumulating per-head slices of the output projection
    (no concat / lane reshuffle across heads).
    """
    # TODO(synk): `trans_nd(config, ...)` source was not provided; modeled as standard
    # multi-head scaled-dot-product self-attention with output projection.
    O = H * d
    qkv = jnp.dot(h2.astype(jnp.bfloat16), wqkv,
                  preferred_element_type=jnp.float32) + bqkv            # (Nb*T, 3O)
    qkv = qkv.reshape(Nb, T, 3 * O)
    scale = 1.0 / math.sqrt(d)
    attn = None
    for hd in range(H):                                                 # static, small H
        q = (qkv[:, :, hd * d:(hd + 1) * d] * scale).astype(jnp.bfloat16)
        k = qkv[:, :, O + hd * d:O + (hd + 1) * d].astype(jnp.bfloat16)
        v = qkv[:, :, 2 * O + hd * d:2 * O + (hd + 1) * d].astype(jnp.bfloat16)
        s = jnp.einsum('bqd,bkd->bqk', q, k,
                       preferred_element_type=jnp.float32)              # (Nb, T, T)
        s = s - jnp.max(s, axis=-1, keepdims=True)
        p = jnp.exp(s)
        denom = jnp.sum(p, axis=-1, keepdims=True)
        inv = pl.reciprocal(denom, approx=True) if approx_recip else 1.0 / denom
        p = p * inv
        o_h = jnp.einsum('bqk,bkd->bqd', p.astype(jnp.bfloat16), v,
                         preferred_element_type=jnp.float32)            # (Nb, T, d)
        contrib = jnp.dot(o_h.reshape(Nb * T, d).astype(jnp.bfloat16),
                          wo[hd * d:(hd + 1) * d, :],
                          preferred_element_type=jnp.float32)           # (Nb*T, O)
        attn = contrib if attn is None else attn + contrib
    return attn + bo


def _block_math(x2, e, w, Nb, T, H, d, *, approx_recip):
    """x2: (Nb*T, C) f32; e: (Nb, E) f32; returns (Nb*T, O) f32."""
    # in_layers: LayerNorm(C) -> SiLU -> trans_nd
    h = _silu(_layernorm(x2, w["ln1"][0:1], w["ln1"][1:2]))
    h = _mha(h, w["wqkv1"], w["bqkv1"], w["wo1"], w["bo1"], Nb, T, H, d,
             approx_recip=approx_recip)
    # emb_layers: SiLU -> Linear, broadcast over T (unsqueeze(1))
    emb_out = jnp.dot(_silu(e).astype(jnp.bfloat16), w["wemb"],
                      preferred_element_type=jnp.float32) + w["bemb"]   # (Nb, O)
    h = (h.reshape(Nb, T, -1) + emb_out[:, None, :]).reshape(Nb * T, -1)
    # out_layers: LayerNorm(O) -> SiLU -> Dropout -> zero_module(trans_nd)
    # TODO(synk): Dropout is eval-mode identity; zero_module init replaced by a
    # deterministic non-zero init so this path is actually exercised.
    h = _silu(_layernorm(h, w["ln2"][0:1], w["ln2"][1:2]))
    h = _mha(h, w["wqkv2"], w["bqkv2"], w["wo2"], w["bo2"], Nb, T, H, d,
             approx_recip=approx_recip)
    # skip_connection = Identity (out_channels == channels) + residual
    return x2 + h


# ----------------------------------- Pallas kernel ----------------------------
_WEIGHT_KEYS = ("ln1", "wqkv1", "bqkv1", "wo1", "bo1", "wemb", "bemb",
                "ln2", "wqkv2", "bqkv2", "wo2", "bo2")


def _trans_simple_block_kernel(Nb, T, H, d, x_ref, emb_ref, *rest):
    *w_refs, out_ref = rest
    C = x_ref.shape[-1]
    w = {k: r[...] for k, r in zip(_WEIGHT_KEYS, w_refs)}
    y = _block_math(x_ref[...].reshape(Nb * T, C), emb_ref[...], w, Nb, T, H, d,
                    approx_recip=True)
    out_ref[...] = y.reshape(Nb, T, y.shape[-1]).astype(out_ref.dtype)


# ----------------------------------- wrapper ----------------------------------
def _prep_weights(params):
    w = dict(params)
    for k in ("wqkv1", "wo1", "wemb", "wqkv2", "wo2"):   # MXU operands -> bf16 once
        w[k] = params[k].astype(jnp.bfloat16)
    return w


def trans_simple_block(x, emb, params, *, num_heads, block_batch=None):
    N, T, C = x.shape
    E = emb.shape[-1]
    O = params["wo1"].shape[0]
    assert O == num_heads * HEAD_DIM
    assert O == C, "skip_connection = Identity requires out_channels == channels"
    # TODO(synk): out_channels != channels skip paths and use_scale_shift_norm=True
    # are not implemented (not instantiated by this config).

    # Batch tile: enough rows so every matmul LHS is (Nb*T, C) >= 128 sublanes,
    # amortizing the ~0.35us per-grid-step pipeline overhead.
    if block_batch is None:
        block_batch = max(1, min(N, pl.cdiv(128, T)))
        while N % block_batch:
            block_batch -= 1
    Nb = block_batch
    assert N % Nb == 0

    w = _prep_weights(params)
    kernel = functools.partial(_trans_simple_block_kernel, Nb, T, num_heads, HEAD_DIM)
    # Whole-array VMEM residents: constant across the grid, copied in once,
    # not double-buffered by the pipeline.
    resident = pl.BlockSpec(memory_space=pltpu.MemorySpace.VMEM)

    return pl.pallas_call(
        kernel,
        out_shape=jax.ShapeDtypeStruct((N, T, O), x.dtype),
        grid=(N // Nb,),
        in_specs=[
            pl.BlockSpec((Nb, T, C), lambda b: (b, 0, 0)),   # x tile
            pl.BlockSpec((Nb, E), lambda b: (b, 0)),         # emb tile
        ] + [resident] * len(_WEIGHT_KEYS),
        out_specs=pl.BlockSpec((Nb, T, O), lambda b: (b, 0, 0)),
        compiler_params=pltpu.CompilerParams(
            dimension_semantics=("parallel",)),              # >=2 steps keeps both v7x TCs busy
    )(x, emb, *[w[k] for k in _WEIGHT_KEYS])


# ---------------------------- pure-JAX reference ------------------------------
def ref_forward(x, emb, params, *, num_heads):
    N, T, C = x.shape
    w = _prep_weights(params)
    y = _block_math(x.reshape(N * T, C), emb, w, N, T, num_heads, HEAD_DIM,
                    approx_recip=False)
    return y.reshape(N, T, -1)


# ------------------------------------- main ------------------------------------
if __name__ == "__main__":
    N, T, C, E = 16, 16, 128, 64         # batch, seq, channels, emb_channels
    O = C                                # out_channels == channels -> Identity skip
    num_heads = O // HEAD_DIM            # = 2 -> multi-head path exercised

    key = jax.random.PRNGKey(0)
    ks = jax.random.split(key, 12)
    s = 0.02
    f32 = jnp.float32
    params = {
        "ln1":   jnp.concatenate([jnp.ones((1, C), f32), jnp.zeros((1, C), f32)], 0),
        "wqkv1": s * jax.random.normal(ks[0], (C, 3 * O), f32),   # fused [Wq|Wk|Wv]
        "bqkv1": s * jax.random.normal(ks[1], (1, 3 * O), f32),
        "wo1":   s * jax.random.normal(ks[2], (O, O), f32),
        "bo1":   s * jax.random.normal(ks[3], (1, O), f32),
        "wemb":  s * jax.random.normal(ks[4], (E, O), f32),
        "bemb":  s * jax.random.normal(ks[5], (1, O), f32),
        "ln2":   jnp.concatenate([jnp.ones((1, O), f32), jnp.zeros((1, O), f32)], 0),
        "wqkv2": s * jax.random.normal(ks[6], (O, 3 * O), f32),
        "bqkv2": s * jax.random.normal(ks[7], (1, 3 * O), f32),
        "wo2":   s * jax.random.normal(ks[8], (O, O), f32),
        "bo2":   s * jax.random.normal(ks[9], (1, O), f32),
    }
    x = jax.random.normal(ks[10], (N, T, C), f32)
    emb = jax.random.normal(ks[11], (N, E), f32)

    out = trans_simple_block(x, emb, params, num_heads=num_heads)
    out = jax.block_until_ready(out)

    ref = ref_forward(x, emb, params, num_heads=num_heads)
    assert out.shape == (N, T, O), out.shape
    assert bool(jnp.all(jnp.isfinite(out)))
    max_err = jnp.max(jnp.abs(out - ref))
    assert bool(jnp.allclose(out, ref, atol=2e-3, rtol=2e-3)), \
        f"kernel != reference (max |err| = {max_err})"

    print("KERNEL_OK")
</pallas_src>

<mosaic_0001>
module attributes {stable_mosaic.version = 11 : i64} {
  func.func @_trans_simple_block_kernel(%arg0: i32, %arg1: memref<8x16x128xf32, #tpu.memory_space<vmem>>, %arg2: memref<8x64xf32, #tpu.memory_space<vmem>>, %arg3: memref<2x128xf32, #tpu.memory_space<vmem>>, %arg4: memref<128x384xbf16, #tpu.memory_space<vmem>>, %arg5: memref<1x384xf32, #tpu.memory_space<vmem>>, %arg6: memref<128x128xbf16, #tpu.memory_space<vmem>>, %arg7: memref<1x128xf32, #tpu.memory_space<vmem>>, %arg8: memref<64x128xbf16, #tpu.memory_space<vmem>>, %arg9: memref<1x128xf32, #tpu.memory_space<vmem>>, %arg10: memref<2x128xf32, #tpu.memory_space<vmem>>, %arg11: memref<128x384xbf16, #tpu.memory_space<vmem>>, %arg12: memref<1x384xf32, #tpu.memory_space<vmem>>, %arg13: memref<128x128xbf16, #tpu.memory_space<vmem>>, %arg14: memref<1x128xf32, #tpu.memory_space<vmem>>, %arg15: memref<8x16x128xf32, #tpu.memory_space<vmem>>) attributes {dimension_semantics = [#tpu.dimension_semantics<parallel>], iteration_bounds = array<i64: 2>, scalar_prefetch = 0 : i64, scratch_operands = 0 : i64, tpu.core_type = #tpu.core_type<tc>, window_params = [{transform_indices = @transform_0, window_bounds = array<i64: 8, 16, 128>}, {transform_indices = @transform_1, window_bounds = array<i64: 8, 64>}, {pipeline_mode = #tpu.pipeline_mode<synchronous>, transform_indices = @transform_2, window_bounds = array<i64: 2, 128>}, {pipeline_mode = #tpu.pipeline_mode<synchronous>, transform_indices = @transform_3, window_bounds = array<i64: 128, 384>}, {pipeline_mode = #tpu.pipeline_mode<synchronous>, transform_indices = @transform_4, window_bounds = array<i64: 1, 384>}, {pipeline_mode = #tpu.pipeline_mode<synchronous>, transform_indices = @transform_5, window_bounds = array<i64: 128, 128>}, {pipeline_mode = #tpu.pipeline_mode<synchronous>, transform_indices = @transform_6, window_bounds = array<i64: 1, 128>}, {pipeline_mode = #tpu.pipeline_mode<synchronous>, transform_indices = @transform_7, window_bounds = array<i64: 64, 128>}, {pipeline_mode = #tpu.pipeline_mode<synchronous>, transform_indices = @transform_8, window_bounds = array<i64: 1, 128>}, {pipeline_mode = #tpu.pipeline_mode<synchronous>, transform_indices = @transform_9, window_bounds = array<i64: 2, 128>}, {pipeline_mode = #tpu.pipeline_mode<synchronous>, transform_indices = @transform_10, window_bounds = array<i64: 128, 384>}, {pipeline_mode = #tpu.pipeline_mode<synchronous>, transform_indices = @transform_11, window_bounds = array<i64: 1, 384>}, {pipeline_mode = #tpu.pipeline_mode<synchronous>, transform_indices = @transform_12, window_bounds = array<i64: 128, 128>}, {pipeline_mode = #tpu.pipeline_mode<synchronous>, transform_indices = @transform_13, window_bounds = array<i64: 1, 128>}, {transform_indices = @transform_14, window_bounds = array<i64: 8, 16, 128>}]} {
    %c0 = arith.constant 0 : index
    %c0_0 = arith.constant 0 : index
    %0 = vector.load %arg3[%c0, %c0_0] : memref<2x128xf32, #tpu.memory_space<vmem>>, vector<2x128xf32>
    %c0_1 = arith.constant 0 : index
    %c0_2 = arith.constant 0 : index
    %1 = vector.load %arg4[%c0_1, %c0_2] : memref<128x384xbf16, #tpu.memory_space<vmem>>, vector<128x384xbf16>
    %c0_3 = arith.constant 0 : index
    %c0_4 = arith.constant 0 : index
    %2 = vector.load %arg5[%c0_3, %c0_4] : memref<1x384xf32, #tpu.memory_space<vmem>>, vector<1x384xf32>
    %c0_5 = arith.constant 0 : index
    %c0_6 = arith.constant 0 : index
    %3 = vector.load %arg6[%c0_5, %c0_6] : memref<128x128xbf16, #tpu.memory_space<vmem>>, vector<128x128xbf16>
    %c0_7 = arith.constant 0 : index
    %c0_8 = arith.constant 0 : index
    %4 = vector.load %arg7[%c0_7, %c0_8] : memref<1x128xf32, #tpu.memory_space<vmem>>, vector<1x128xf32>
    %c0_9 = arith.constant 0 : index
    %c0_10 = arith.constant 0 : index
    %5 = vector.load %arg8[%c0_9, %c0_10] : memref<64x128xbf16, #tpu.memory_space<vmem>>, vector<64x128xbf16>
    %c0_11 = arith.constant 0 : index
    %c0_12 = arith.constant 0 : index
    %6 = vector.load %arg9[%c0_11, %c0_12] : memref<1x128xf32, #tpu.memory_space<vmem>>, vector<1x128xf32>
    %c0_13 = arith.constant 0 : index
    %c0_14 = arith.constant 0 : index
    %7 = vector.load %arg10[%c0_13, %c0_14] : memref<2x128xf32, #tpu.memory_space<vmem>>, vector<2x128xf32>
    %c0_15 = arith.constant 0 : index
    %c0_16 = arith.constant 0 : index
    %8 = vector.load %arg11[%c0_15, %c0_16] : memref<128x384xbf16, #tpu.memory_space<vmem>>, vector<128x384xbf16>
    %c0_17 = arith.constant 0 : index
    %c0_18 = arith.constant 0 : index
    %9 = vector.load %arg12[%c0_17, %c0_18] : memref<1x384xf32, #tpu.memory_space<vmem>>, vector<1x384xf32>
    %c0_19 = arith.constant 0 : index
    %c0_20 = arith.constant 0 : index
    %10 = vector.load %arg13[%c0_19, %c0_20] : memref<128x128xbf16, #tpu.memory_space<vmem>>, vector<128x128xbf16>
    %c0_21 = arith.constant 0 : index
    %c0_22 = arith.constant 0 : index
    %11 = vector.load %arg14[%c0_21, %c0_22] : memref<1x128xf32, #tpu.memory_space<vmem>>, vector<1x128xf32>
    %c0_23 = arith.constant 0 : index
    %c0_24 = arith.constant 0 : index
    %c0_25 = arith.constant 0 : index
    %12 = vector.load %arg1[%c0_23, %c0_24, %c0_25] : memref<8x16x128xf32, #tpu.memory_space<vmem>>, vector<8x16x128xf32>
    %13 = vector.shape_cast %12 : vector<8x16x128xf32> to vector<128x128xf32>
    %c0_26 = arith.constant 0 : index
    %c0_27 = arith.constant 0 : index
    %14 = vector.load %arg2[%c0_26, %c0_27] : memref<8x64xf32, #tpu.memory_space<vmem>>, vector<8x64xf32>
    %15 = vector.extract_strided_slice %0 {offsets = [0, 0], sizes = [1, 128], strides = [1, 1]} : vector<2x128xf32> to vector<1x128xf32>
    %16 = vector.extract_strided_slice %0 {offsets = [1, 0], sizes = [1, 128], strides = [1, 1]} : vector<2x128xf32> to vector<1x128xf32>
    %cst = arith.constant dense<0.000000e+00> : vector<128xf32>
    %17 = vector.multi_reduction <add>, %13, %cst [1] : vector<128x128xf32> to vector<128xf32>
    %18 = vector.shape_cast %17 : vector<128xf32> to vector<128x1xf32>
    %cst_28 = arith.constant 1.280000e+02 : f32
    %19 = vector.broadcast %cst_28 : f32 to vector<128x1xf32>
    %20 = arith.divf %18, %19 : vector<128x1xf32>
    %21 = vector.broadcast %20 : vector<128x1xf32> to vector<128x128xf32>
    %22 = arith.subf %13, %21 : vector<128x128xf32>
    %23 = arith.mulf %22, %22 : vector<128x128xf32>
    %cst_29 = arith.constant dense<0.000000e+00> : vector<128xf32>
    %24 = vector.multi_reduction <add>, %23, %cst_29 [1] : vector<128x128xf32> to vector<128xf32>
    %25 = vector.shape_cast %24 : vector<128xf32> to vector<128x1xf32>
    %cst_30 = arith.constant 1.280000e+02 : f32
    %26 = vector.broadcast %cst_30 : f32 to vector<128x1xf32>
    %27 = arith.divf %25, %26 : vector<128x1xf32>
    %28 = vector.broadcast %20 : vector<128x1xf32> to vector<128x128xf32>
    %29 = arith.subf %13, %28 : vector<128x128xf32>
    %cst_31 = arith.constant 9.99999974E-6 : f32
    %30 = vector.broadcast %cst_31 : f32 to vector<128x1xf32>
    %31 = arith.addf %27, %30 : vector<128x1xf32>
    %32 = math.rsqrt %31 : vector<128x1xf32>
    %33 = vector.broadcast %32 : vector<128x1xf32> to vector<128x128xf32>
    %34 = arith.mulf %29, %33 : vector<128x128xf32>
    %35 = vector.broadcast %15 : vector<1x128xf32> to vector<128x128xf32>
    %36 = arith.mulf %34, %35 : vector<128x128xf32>
    %37 = vector.broadcast %16 : vector<1x128xf32> to vector<128x128xf32>
    %38 = arith.addf %36, %37 : vector<128x128xf32>
    %39 = arith.negf %38 : vector<128x128xf32>
    %40 = math.exp %39 : vector<128x128xf32>
    %cst_32 = arith.constant 1.000000e+00 : f32
    %41 = vector.broadcast %cst_32 : f32 to vector<128x128xf32>
    %42 = arith.addf %41, %40 : vector<128x128xf32>
    %43 = arith.divf %41, %42 : vector<128x128xf32>
    %44 = arith.mulf %38, %43 : vector<128x128xf32>
    %45 = arith.truncf %44 : vector<128x128xf32> to vector<128x128xbf16>
    %cst_33 = arith.constant dense<0.000000e+00> : vector<128x384xf32>
    %46 = tpu.matmul %45, %1, %cst_33 {dimension_numbers = #tpu.dot_dimension_numbers<[1], [0], [0], [1], [0, 0, 1, 1], [], []>} : vector<128x128xbf16>, vector<128x384xbf16>, vector<128x384xf32> -> vector<128x384xf32>
    %47 = vector.broadcast %2 : vector<1x384xf32> to vector<128x384xf32>
    %48 = arith.addf %46, %47 : vector<128x384xf32>
    %49 = vector.shape_cast %48 : vector<128x384xf32> to vector<8x16x384xf32>
    %50 = vector.extract_strided_slice %49 {offsets = [0, 0, 0], sizes = [8, 16, 64], strides = [1, 1, 1]} : vector<8x16x384xf32> to vector<8x16x64xf32>
    %cst_34 = arith.constant 1.250000e-01 : f32
    %51 = vector.broadcast %cst_34 : f32 to vector<8x16x64xf32>
    %52 = arith.mulf %50, %51 : vector<8x16x64xf32>
    %53 = arith.truncf %52 : vector<8x16x64xf32> to vector<8x16x64xbf16>
    %54 = vector.extract_strided_slice %49 {offsets = [0, 0, 128], sizes = [8, 16, 64], strides = [1, 1, 1]} : vector<8x16x384xf32> to vector<8x16x64xf32>
    %55 = arith.truncf %54 : vector<8x16x64xf32> to vector<8x16x64xbf16>
    %56 = vector.extract_strided_slice %49 {offsets = [0, 0, 256], sizes = [8, 16, 64], strides = [1, 1, 1]} : vector<8x16x384xf32> to vector<8x16x64xf32>
    %57 = arith.truncf %56 : vector<8x16x64xf32> to vector<8x16x64xbf16>
    "tpu.trace_start"() <{level = 10 : i32, message = "bqd,bkd->bqk"}> : () -> ()
    %cst_35 = arith.constant dense<0.000000e+00> : vector<8x16x16xf32>
    %58 = tpu.matmul %53, %55, %cst_35 {dimension_numbers = #tpu.dot_dimension_numbers<[2], [2], [1], [1], [0, 0, 0, 1, 1, 1], [0], [0]>} : vector<8x16x64xbf16>, vector<8x16x64xbf16>, vector<8x16x16xf32> -> vector<8x16x16xf32>
    "tpu.trace_stop"() : () -> ()
    %cst_36 = arith.constant dense<0xFF800000> : vector<8x16xf32>
    %59 = vector.multi_reduction <maximumf>, %58, %cst_36 [2] : vector<8x16x16xf32> to vector<8x16xf32>
    %60 = vector.shape_cast %59 : vector<8x16xf32> to vector<8x16x1xf32>
    %61 = vector.broadcast %60 : vector<8x16x1xf32> to vector<8x16x16xf32>
    %62 = arith.subf %58, %61 : vector<8x16x16xf32>
    %63 = math.exp %62 : vector<8x16x16xf32>
    %cst_37 = arith.constant dense<0.000000e+00> : vector<8x16xf32>
    %64 = vector.multi_reduction <add>, %63, %cst_37 [2] : vector<8x16x16xf32> to vector<8x16xf32>
    %65 = vector.shape_cast %64 : vector<8x16xf32> to vector<8x16x1xf32>
    %66 = tpu.reciprocal %65 {approx = true} : vector<8x16x1xf32> -> vector<8x16x1xf32>
    %67 = vector.broadcast %66 : vector<8x16x1xf32> to vector<8x16x16xf32>
    %68 = arith.mulf %63, %67 : vector<8x16x16xf32>
    %69 = arith.truncf %68 : vector<8x16x16xf32> to vector<8x16x16xbf16>
    "tpu.trace_start"() <{level = 10 : i32, message = "bqk,bkd->bqd"}> : () -> ()
    %cst_38 = arith.constant dense<0.000000e+00> : vector<8x16x64xf32>
    %70 = tpu.matmul %69, %57, %cst_38 {dimension_numbers = #tpu.dot_dimension_numbers<[2], [1], [1], [2], [0, 0, 0, 1, 1, 2], [0], [0]>} : vector<8x16x16xbf16>, vector<8x16x64xbf16>, vector<8x16x64xf32> -> vector<8x16x64xf32>
    "tpu.trace_stop"() : () -> ()
    %71 = vector.shape_cast %70 : vector<8x16x64xf32> to vector<128x64xf32>
    %72 = arith.truncf %71 : vector<128x64xf32> to vector<128x64xbf16>
    %73 = vector.extract_strided_slice %3 {offsets = [0, 0], sizes = [64, 128], strides = [1, 1]} : vector<128x128xbf16> to vector<64x128xbf16>
    %cst_39 = arith.constant dense<0.000000e+00> : vector<128x128xf32>
    %74 = tpu.matmul %72, %73, %cst_39 {dimension_numbers = #tpu.dot_dimension_numbers<[1], [0], [0], [1], [0, 0, 1, 1], [], []>} : vector<128x64xbf16>, vector<64x128xbf16>, vector<128x128xf32> -> vector<128x128xf32>
    %75 = vector.extract_strided_slice %49 {offsets = [0, 0, 64], sizes = [8, 16, 64], strides = [1, 1, 1]} : vector<8x16x384xf32> to vector<8x16x64xf32>
    %cst_40 = arith.constant 1.250000e-01 : f32
    %76 = vector.broadcast %cst_40 : f32 to vector<8x16x64xf32>
    %77 = arith.mulf %75, %76 : vector<8x16x64xf32>
    %78 = arith.truncf %77 : vector<8x16x64xf32> to vector<8x16x64xbf16>
    %79 = vector.extract_strided_slice %49 {offsets = [0, 0, 192], sizes = [8, 16, 64], strides = [1, 1, 1]} : vector<8x16x384xf32> to vector<8x16x64xf32>
    %80 = arith.truncf %79 : vector<8x16x64xf32> to vector<8x16x64xbf16>
    %81 = vector.extract_strided_slice %49 {offsets = [0, 0, 320], sizes = [8, 16, 64], strides = [1, 1, 1]} : vector<8x16x384xf32> to vector<8x16x64xf32>
    %82 = arith.truncf %81 : vector<8x16x64xf32> to vector<8x16x64xbf16>
    "tpu.trace_start"() <{level = 10 : i32, message = "bqd,bkd->bqk"}> : () -> ()
    %cst_41 = arith.constant dense<0.000000e+00> : vector<8x16x16xf32>
    %83 = tpu.matmul %78, %80, %cst_41 {dimension_numbers = #tpu.dot_dimension_numbers<[2], [2], [1], [1], [0, 0, 0, 1, 1, 1], [0], [0]>} : vector<8x16x64xbf16>, vector<8x16x64xbf16>, vector<8x16x16xf32> -> vector<8x16x16xf32>
    "tpu.trace_stop"() : () -> ()
    %cst_42 = arith.constant dense<0xFF800000> : vector<8x16xf32>
    %84 = vector.multi_reduction <maximumf>, %83, %cst_42 [2] : vector<8x16x16xf32> to vector<8x16xf32>
    %85 = vector.shape_cast %84 : vector<8x16xf32> to vector<8x16x1xf32>
    %86 = vector.broadcast %85 : vector<8x16x1xf32> to vector<8x16x16xf32>
    %87 = arith.subf %83, %86 : vector<8x16x16xf32>
    %88 = math.exp %87 : vector<8x16x16xf32>
    %cst_43 = arith.constant dense<0.000000e+00> : vector<8x16xf32>
    %89 = vector.multi_reduction <add>, %88, %cst_43 [2] : vector<8x16x16xf32> to vector<8x16xf32>
    %90 = vector.shape_cast %89 : vector<8x16xf32> to vector<8x16x1xf32>
    %91 = tpu.reciprocal %90 {approx = true} : vector<8x16x1xf32> -> vector<8x16x1xf32>
    %92 = vector.broadcast %91 : vector<8x16x1xf32> to vector<8x16x16xf32>
    %93 = arith.mulf %88, %92 : vector<8x16x16xf32>
    %94 = arith.truncf %93 : vector<8x16x16xf32> to vector<8x16x16xbf16>
    "tpu.trace_start"() <{level = 10 : i32, message = "bqk,bkd->bqd"}> : () -> ()
    %cst_44 = arith.constant dense<0.000000e+00> : vector<8x16x64xf32>
    %95 = tpu.matmul %94, %82, %cst_44 {dimension_numbers = #tpu.dot_dimension_numbers<[2], [1], [1], [2], [0, 0, 0, 1, 1, 2], [0], [0]>} : vector<8x16x16xbf16>, vector<8x16x64xbf16>, vector<8x16x64xf32> -> vector<8x16x64xf32>
    "tpu.trace_stop"() : () -> ()
    %96 = vector.shape_cast %95 : vector<8x16x64xf32> to vector<128x64xf32>
    %97 = arith.truncf %96 : vector<128x64xf32> to vector<128x64xbf16>
    %98 = vector.extract_strided_slice %3 {offsets = [64, 0], sizes = [64, 128], strides = [1, 1]} : vector<128x128xbf16> to vector<64x128xbf16>
    %cst_45 = arith.constant dense<0.000000e+00> : vector<128x128xf32>
    %99 = tpu.matmul %97, %98, %cst_45 {dimension_numbers = #tpu.dot_dimension_numbers<[1], [0], [0], [1], [0, 0, 1, 1], [], []>} : vector<128x64xbf16>, vector<64x128xbf16>, vector<128x128xf32> -> vector<128x128xf32>
    %100 = arith.addf %74, %99 : vector<128x128xf32>
    %101 = vector.broadcast %4 : vector<1x128xf32> to vector<128x128xf32>
    %102 = arith.addf %100, %101 : vector<128x128xf32>
    %103 = arith.negf %14 : vector<8x64xf32>
    %104 = math.exp %103 : vector<8x64xf32>
    %cst_46 = arith.constant 1.000000e+00 : f32
    %105 = vector.broadcast %cst_46 : f32 to vector<8x64xf32>
    %106 = arith.addf %105, %104 : vector<8x64xf32>
    %107 = arith.divf %105, %106 : vector<8x64xf32>
    %108 = arith.mulf %14, %107 : vector<8x64xf32>
    %109 = arith.truncf %108 : vector<8x64xf32> to vector<8x64xbf16>
    %cst_47 = arith.constant dense<0.000000e+00> : vector<8x128xf32>
    %110 = tpu.matmul %109, %5, %cst_47 {dimension_numbers = #tpu.dot_dimension_numbers<[1], [0], [0], [1], [0, 0, 1, 1], [], []>} : vector<8x64xbf16>, vector<64x128xbf16>, vector<8x128xf32> -> vector<8x128xf32>
    %111 = vector.broadcast %6 : vector<1x128xf32> to vector<8x128xf32>
    %112 = arith.addf %110, %111 : vector<8x128xf32>
    %113 = vector.shape_cast %102 : vector<128x128xf32> to vector<8x16x128xf32>
    %114 = vector.shape_cast %112 : vector<8x128xf32> to vector<8x1x128xf32>
    %115 = vector.broadcast %114 : vector<8x1x128xf32> to vector<8x16x128xf32>
    %116 = arith.addf %113, %115 : vector<8x16x128xf32>
    %117 = vector.shape_cast %116 : vector<8x16x128xf32> to vector<128x128xf32>
    %118 = vector.extract_strided_slice %7 {offsets = [0, 0], sizes = [1, 128], strides = [1, 1]} : vector<2x128xf32> to vector<1x128xf32>
    %119 = vector.extract_strided_slice %7 {offsets = [1, 0], sizes = [1, 128], strides = [1, 1]} : vector<2x128xf32> to vector<1x128xf32>
    %cst_48 = arith.constant dense<0.000000e+00> : vector<128xf32>
    %120 = vector.multi_reduction <add>, %117, %cst_48 [1] : vector<128x128xf32> to vector<128xf32>
    %121 = vector.shape_cast %120 : vector<128xf32> to vector<128x1xf32>
    %cst_49 = arith.constant 1.280000e+02 : f32
    %122 = vector.broadcast %cst_49 : f32 to vector<128x1xf32>
    %123 = arith.divf %121, %122 : vector<128x1xf32>
    %124 = vector.broadcast %123 : vector<128x1xf32> to vector<128x128xf32>
    %125 = arith.subf %117, %124 : vector<128x128xf32>
    %126 = arith.mulf %125, %125 : vector<128x128xf32>
    %cst_50 = arith.constant dense<0.000000e+00> : vector<128xf32>
    %127 = vector.multi_reduction <add>, %126, %cst_50 [1] : vector<128x128xf32> to vector<128xf32>
    %128 = vector.shape_cast %127 : vector<128xf32> to vector<128x1xf32>
    %cst_51 = arith.constant 1.280000e+02 : f32
    %129 = vector.broadcast %cst_51 : f32 to vector<128x1xf32>
    %130 = arith.divf %128, %129 : vector<128x1xf32>
    %131 = vector.broadcast %123 : vector<128x1xf32> to vector<128x128xf32>
    %132 = arith.subf %117, %131 : vector<128x128xf32>
    %cst_52 = arith.constant 9.99999974E-6 : f32
    %133 = vector.broadcast %cst_52 : f32 to vector<128x1xf32>
    %134 = arith.addf %130, %133 : vector<128x1xf32>
    %135 = math.rsqrt %134 : vector<128x1xf32>
    %136 = vector.broadcast %135 : vector<128x1xf32> to vector<128x128xf32>
    %137 = arith.mulf %132, %136 : vector<128x128xf32>
    %138 = vector.broadcast %118 : vector<1x128xf32> to vector<128x128xf32>
    %139 = arith.mulf %137, %138 : vector<128x128xf32>
    %140 = vector.broadcast %119 : vector<1x128xf32> to vector<128x128xf32>
    %141 = arith.addf %139, %140 : vector<128x128xf32>
    %142 = arith.negf %141 : vector<128x128xf32>
    %143 = math.exp %142 : vector<128x128xf32>
    %cst_53 = arith.constant 1.000000e+00 : f32
    %144 = vector.broadcast %cst_53 : f32 to vector<128x128xf32>
    %145 = arith.addf %144, %143 : vector<128x128xf32>
    %146 = arith.divf %144, %145 : vector<128x128xf32>
    %147 = arith.mulf %141, %146 : vector<128x128xf32>
    %148 = arith.truncf %147 : vector<128x128xf32> to vector<128x128xbf16>
    %cst_54 = arith.constant dense<0.000000e+00> : vector<128x384xf32>
    %149 = tpu.matmul %148, %8, %cst_54 {dimension_numbers = #tpu.dot_dimension_numbers<[1], [0], [0], [1], [0, 0, 1, 1], [], []>} : vector<128x128xbf16>, vector<128x384xbf16>, vector<128x384xf32> -> vector<128x384xf32>
    %150 = vector.broadcast %9 : vector<1x384xf32> to vector<128x384xf32>
    %151 = arith.addf %149, %150 : vector<128x384xf32>
    %152 = vector.shape_cast %151 : vector<128x384xf32> to vector<8x16x384xf32>
    %153 = vector.extract_strided_slice %152 {offsets = [0, 0, 0], sizes = [8, 16, 64], strides = [1, 1, 1]} : vector<8x16x384xf32> to vector<8x16x64xf32>
    %cst_55 = arith.constant 1.250000e-01 : f32
    %154 = vector.broadcast %cst_55 : f32 to vector<8x16x64xf32>
    %155 = arith.mulf %153, %154 : vector<8x16x64xf32>
    %156 = arith.truncf %155 : vector<8x16x64xf32> to vector<8x16x64xbf16>
    %157 = vector.extract_strided_slice %152 {offsets = [0, 0, 128], sizes = [8, 16, 64], strides = [1, 1, 1]} : vector<8x16x384xf32> to vector<8x16x64xf32>
    %158 = arith.truncf %157 : vector<8x16x64xf32> to vector<8x16x64xbf16>
    %159 = vector.extract_strided_slice %152 {offsets = [0, 0, 256], sizes = [8, 16, 64], strides = [1, 1, 1]} : vector<8x16x384xf32> to vector<8x16x64xf32>
    %160 = arith.truncf %159 : vector<8x16x64xf32> to vector<8x16x64xbf16>
    "tpu.trace_start"() <{level = 10 : i32, message = "bqd,bkd->bqk"}> : () -> ()
    %cst_56 = arith.constant dense<0.000000e+00> : vector<8x16x16xf32>
    %161 = tpu.matmul %156, %158, %cst_56 {dimension_numbers = #tpu.dot_dimension_numbers<[2], [2], [1], [1], [0, 0, 0, 1, 1, 1], [0], [0]>} : vector<8x16x64xbf16>, vector<8x16x64xbf16>, vector<8x16x16xf32> -> vector<8x16x16xf32>
    "tpu.trace_stop"() : () -> ()
    %cst_57 = arith.constant dense<0xFF800000> : vector<8x16xf32>
    %162 = vector.multi_reduction <maximumf>, %161, %cst_57 [2] : vector<8x16x16xf32> to vector<8x16xf32>
    %163 = vector.shape_cast %162 : vector<8x16xf32> to vector<8x16x1xf32>
    %164 = vector.broadcast %163 : vector<8x16x1xf32> to vector<8x16x16xf32>
    %165 = arith.subf %161, %164 : vector<8x16x16xf32>
    %166 = math.exp %165 : vector<8x16x16xf32>
    %cst_58 = arith.constant dense<0.000000e+00> : vector<8x16xf32>
    %167 = vector.multi_reduction <add>, %166, %cst_58 [2] : vector<8x16x16xf32> to vector<8x16xf32>
    %168 = vector.shape_cast %167 : vector<8x16xf32> to vector<8x16x1xf32>
    %169 = tpu.reciprocal %168 {approx = true} : vector<8x16x1xf32> -> vector<8x16x1xf32>
    %170 = vector.broadcast %169 : vector<8x16x1xf32> to vector<8x16x16xf32>
    %171 = arith.mulf %166, %170 : vector<8x16x16xf32>
    %172 = arith.truncf %171 : vector<8x16x16xf32> to vector<8x16x16xbf16>
    "tpu.trace_start"() <{level = 10 : i32, message = "bqk,bkd->bqd"}> : () -> ()
    %cst_59 = arith.constant dense<0.000000e+00> : vector<8x16x64xf32>
    %173 = tpu.matmul %172, %160, %cst_59 {dimension_numbers = #tpu.dot_dimension_numbers<[2], [1], [1], [2], [0, 0, 0, 1, 1, 2], [0], [0]>} : vector<8x16x16xbf16>, vector<8x16x64xbf16>, vector<8x16x64xf32> -> vector<8x16x64xf32>
    "tpu.trace_stop"() : () -> ()
    %174 = vector.shape_cast %173 : vector<8x16x64xf32> to vector<128x64xf32>
    %175 = arith.truncf %174 : vector<128x64xf32> to vector<128x64xbf16>
    %176 = vector.extract_strided_slice %10 {offsets = [0, 0], sizes = [64, 128], strides = [1, 1]} : vector<128x128xbf16> to vector<64x128xbf16>
    %cst_60 = arith.constant dense<0.000000e+00> : vector<128x128xf32>
    %177 = tpu.matmul %175, %176, %cst_60 {dimension_numbers = #tpu.dot_dimension_numbers<[1], [0], [0], [1], [0, 0, 1, 1], [], []>} : vector<128x64xbf16>, vector<64x128xbf16>, vector<128x128xf32> -> vector<128x128xf32>
    %178 = vector.extract_strided_slice %152 {offsets = [0, 0, 64], sizes = [8, 16, 64], strides = [1, 1, 1]} : vector<8x16x384xf32> to vector<8x16x64xf32>
    %cst_61 = arith.constant 1.250000e-01 : f32
    %179 = vector.broadcast %cst_61 : f32 to vector<8x16x64xf32>
    %180 = arith.mulf %178, %179 : vector<8x16x64xf32>
    %181 = arith.truncf %180 : vector<8x16x64xf32> to vector<8x16x64xbf16>
    %182 = vector.extract_strided_slice %152 {offsets = [0, 0, 192], sizes = [8, 16, 64], strides = [1, 1, 1]} : vector<8x16x384xf32> to vector<8x16x64xf32>
    %183 = arith.truncf %182 : vector<8x16x64xf32> to vector<8x16x64xbf16>
    %184 = vector.extract_strided_slice %152 {offsets = [0, 0, 320], sizes = [8, 16, 64], strides = [1, 1, 1]} : vector<8x16x384xf32> to vector<8x16x64xf32>
    %185 = arith.truncf %184 : vector<8x16x64xf32> to vector<8x16x64xbf16>
    "tpu.trace_start"() <{level = 10 : i32, message = "bqd,bkd->bqk"}> : () -> ()
    %cst_62 = arith.constant dense<0.000000e+00> : vector<8x16x16xf32>
    %186 = tpu.matmul %181, %183, %cst_62 {dimension_numbers = #tpu.dot_dimension_numbers<[2], [2], [1], [1], [0, 0, 0, 1, 1, 1], [0], [0]>} : vector<8x16x64xbf16>, vector<8x16x64xbf16>, vector<8x16x16xf32> -> vector<8x16x16xf32>
    "tpu.trace_stop"() : () -> ()
    %cst_63 = arith.constant dense<0xFF800000> : vector<8x16xf32>
    %187 = vector.multi_reduction <maximumf>, %186, %cst_63 [2] : vector<8x16x16xf32> to vector<8x16xf32>
    %188 = vector.shape_cast %187 : vector<8x16xf32> to vector<8x16x1xf32>
    %189 = vector.broadcast %188 : vector<8x16x1xf32> to vector<8x16x16xf32>
    %190 = arith.subf %186, %189 : vector<8x16x16xf32>
    %191 = math.exp %190 : vector<8x16x16xf32>
    %cst_64 = arith.constant dense<0.000000e+00> : vector<8x16xf32>
    %192 = vector.multi_reduction <add>, %191, %cst_64 [2] : vector<8x16x16xf32> to vector<8x16xf32>
    %193 = vector.shape_cast %192 : vector<8x16xf32> to vector<8x16x1xf32>
    %194 = tpu.reciprocal %193 {approx = true} : vector<8x16x1xf32> -> vector<8x16x1xf32>
    %195 = vector.broadcast %194 : vector<8x16x1xf32> to vector<8x16x16xf32>
    %196 = arith.mulf %191, %195 : vector<8x16x16xf32>
    %197 = arith.truncf %196 : vector<8x16x16xf32> to vector<8x16x16xbf16>
    "tpu.trace_start"() <{level = 10 : i32, message = "bqk,bkd->bqd"}> : () -> ()
    %cst_65 = arith.constant dense<0.000000e+00> : vector<8x16x64xf32>
    %198 = tpu.matmul %197, %185, %cst_65 {dimension_numbers = #tpu.dot_dimension_numbers<[2], [1], [1], [2], [0, 0, 0, 1, 1, 2], [0], [0]>} : vector<8x16x16xbf16>, vector<8x16x64xbf16>, vector<8x16x64xf32> -> vector<8x16x64xf32>
    "tpu.trace_stop"() : () -> ()
    %199 = vector.shape_cast %198 : vector<8x16x64xf32> to vector<128x64xf32>
    %200 = arith.truncf %199 : vector<128x64xf32> to vector<128x64xbf16>
    %201 = vector.extract_strided_slice %10 {offsets = [64, 0], sizes = [64, 128], strides = [1, 1]} : vector<128x128xbf16> to vector<64x128xbf16>
    %cst_66 = arith.constant dense<0.000000e+00> : vector<128x128xf32>
    %202 = tpu.matmul %200, %201, %cst_66 {dimension_numbers = #tpu.dot_dimension_numbers<[1], [0], [0], [1], [0, 0, 1, 1], [], []>} : vector<128x64xbf16>, vector<64x128xbf16>, vector<128x128xf32> -> vector<128x128xf32>
    %203 = arith.addf %177, %202 : vector<128x128xf32>
    %204 = vector.broadcast %11 : vector<1x128xf32> to vector<128x128xf32>
    %205 = arith.addf %203, %204 : vector<128x128xf32>
    %206 = arith.addf %13, %205 : vector<128x128xf32>
    %207 = vector.shape_cast %206 : vector<128x128xf32> to vector<8x16x128xf32>
    %c0_67 = arith.constant 0 : index
    %c0_68 = arith.constant 0 : index
    %c0_69 = arith.constant 0 : index
    %208 = vector.load %arg15[%c0_67, %c0_68, %c0_69] : memref<8x16x128xf32, #tpu.memory_space<vmem>>, vector<8x16x128xf32>
    tpu.vector_store %arg15[%c0_67, %c0_68, %c0_69], %207 {strides = array<i32>} : memref<8x16x128xf32, #tpu.memory_space<vmem>>, vector<8x16x128xf32>,
    return
  }
  func.func @transform_0(%arg0: i32) -> (i32, i32, i32) {
    %c0_i32 = arith.constant 0 : i32
    %c0_i32_0 = arith.constant 0 : i32
    %c0_i32_1 = arith.constant 0 : i32
    return %arg0, %c0_i32, %c0_i32_0 : i32, i32, i32
  }
  func.func @transform_1(%arg0: i32) -> (i32, i32) {
    %c0_i32 = arith.constant 0 : i32
    %c0_i32_0 = arith.constant 0 : i32
    return %arg0, %c0_i32 : i32, i32
  }
  func.func @transform_2(%arg0: i32) -> (i32, i32) {
    %c0_i32 = arith.constant 0 : i32
    %c0_i32_0 = arith.constant 0 : i32
    %c0_i32_1 = arith.constant 0 : i32
    return %c0_i32, %c0_i32_0 : i32, i32
  }
  func.func @transform_3(%arg0: i32) -> (i32, i32) {
    %c0_i32 = arith.constant 0 : i32
    %c0_i32_0 = arith.constant 0 : i32
    %c0_i32_1 = arith.constant 0 : i32
    return %c0_i32, %c0_i32_0 : i32, i32
  }
  func.func @transform_4(%arg0: i32) -> (i32, i32) {
    %c0_i32 = arith.constant 0 : i32
    %c0_i32_0 = arith.constant 0 : i32
    %c0_i32_1 = arith.constant 0 : i32
    return %c0_i32, %c0_i32_0 : i32, i32
  }
  func.func @transform_5(%arg0: i32) -> (i32, i32) {
    %c0_i32 = arith.constant 0 : i32
    %c0_i32_0 = arith.constant 0 : i32
    %c0_i32_1 = arith.constant 0 : i32
    return %c0_i32, %c0_i32_0 : i32, i32
  }
  func.func @transform_6(%arg0: i32) -> (i32, i32) {
    %c0_i32 = arith.constant 0 : i32
    %c0_i32_0 = arith.constant 0 : i32
    %c0_i32_1 = arith.constant 0 : i32
    return %c0_i32, %c0_i32_0 : i32, i32
  }
  func.func @transform_7(%arg0: i32) -> (i32, i32) {
    %c0_i32 = arith.constant 0 : i32
    %c0_i32_0 = arith.constant 0 : i32
    %c0_i32_1 = arith.constant 0 : i32
    return %c0_i32, %c0_i32_0 : i32, i32
  }
  func.func @transform_8(%arg0: i32) -> (i32, i32) {
    %c0_i32 = arith.constant 0 : i32
    %c0_i32_0 = arith.constant 0 : i32
    %c0_i32_1 = arith.constant 0 : i32
    return %c0_i32, %c0_i32_0 : i32, i32
  }
  func.func @transform_9(%arg0: i32) -> (i32, i32) {
    %c0_i32 = arith.constant 0 : i32
    %c0_i32_0 = arith.constant 0 : i32
    %c0_i32_1 = arith.constant 0 : i32
    return %c0_i32, %c0_i32_0 : i32, i32
  }
  func.func @transform_10(%arg0: i32) -> (i32, i32) {
    %c0_i32 = arith.constant 0 : i32
    %c0_i32_0 = arith.constant 0 : i32
    %c0_i32_1 = arith.constant 0 : i32
    return %c0_i32, %c0_i32_0 : i32, i32
  }
  func.func @transform_11(%arg0: i32) -> (i32, i32) {
    %c0_i32 = arith.constant 0 : i32
    %c0_i32_0 = arith.constant 0 : i32
    %c0_i32_1 = arith.constant 0 : i32
    return %c0_i32, %c0_i32_0 : i32, i32
  }
  func.func @transform_12(%arg0: i32) -> (i32, i32) {
    %c0_i32 = arith.constant 0 : i32
    %c0_i32_0 = arith.constant 0 : i32
    %c0_i32_1 = arith.constant 0 : i32
    return %c0_i32, %c0_i32_0 : i32, i32
  }
  func.func @transform_13(%arg0: i32) -> (i32, i32) {
    %c0_i32 = arith.constant 0 : i32
    %c0_i32_0 = arith.constant 0 : i32
    %c0_i32_1 = arith.constant 0 : i32
    return %c0_i32, %c0_i32_0 : i32, i32
  }
  func.func @transform_14(%arg0: i32) -> (i32, i32, i32) {
    %c0_i32 = arith.constant 0 : i32
    %c0_i32_0 = arith.constant 0 : i32
    %c0_i32_1 = arith.constant 0 : i32
    return %arg0, %c0_i32, %c0_i32_0 : i32, i32, i32
  }
}

</mosaic_0001>

<llo_original>
// kernel: tpu_custom_call.1
$region0: #{tpu_custom_call.1}
  #allocation0 [shape = 'u32[]', space=smem, size = 0x4, offset = 0x4, fixed_abs, tag = 'smem constant byte address 0x4 - core index']
  #allocation1 [shape = 'u32[144,128]{1,0:T(1,128)}', space=vmem, size = 0x12000, scoped, tag = 'internal scratch']
  %s0 = inlined_call_operand.hbm [shape: f32[16,16,128], index: 0, kind: input, shape index: {}]
  %s1 = inlined_call_operand.hbm [shape: f32[16,64], index: 1, kind: input, shape index: {}]
  %s2 = inlined_call_operand.hbm [shape: f32[2,128], index: 2, kind: input, shape index: {}]
  %s3 = inlined_call_operand.hbm [shape: bf16[128,384], index: 3, kind: input, shape index: {}]
  %s4 = inlined_call_operand.vmem [shape: f32[1,384], index: 4, kind: input, shape index: {}]
  %s5 = inlined_call_operand.hbm [shape: bf16[128,128], index: 5, kind: input, shape index: {}]
  %s6 = inlined_call_operand.vmem [shape: f32[1,128], index: 6, kind: input, shape index: {}]
  %s7 = inlined_call_operand.hbm [shape: bf16[64,128], index: 7, kind: input, shape index: {}]
  %s8 = inlined_call_operand.vmem [shape: f32[1,128], index: 8, kind: input, shape index: {}]
  %s9 = inlined_call_operand.vmem [shape: f32[2,128], index: 9, kind: input, shape index: {}]
  %s10 = inlined_call_operand.hbm [shape: bf16[128,384], index: 10, kind: input, shape index: {}]
  %s11 = inlined_call_operand.vmem [shape: f32[1,384], index: 11, kind: input, shape index: {}]
  %s12 = inlined_call_operand.hbm [shape: bf16[128,128], index: 12, kind: input, shape index: {}]
  %s13 = inlined_call_operand.vmem [shape: f32[1,128], index: 13, kind: input, shape index: {}]
  %s14 = inlined_call_operand.hbm [shape: f32[16,16,128], index: 14, kind: output, shape index: {}]
  %s15 = sld [smem:[#allocation0]]
  $region121: #{tpu_custom_call.1} parent=0
    _
  %s17 = ssub.s32 1, %s15
  %s18 = scalar_select 0, %s17, %s15
  $region1: #{tpu_custom_call.1} parent=0
    #allocation2 [shape = 'u8[131072]{0}', space=vmem, size = 0x20000, scoped, tag = 'input window, operand 0']
    #allocation3 [shape = 's32[2]{0}', space=sflag, size = 0x8, scoped, tag = 'scoped memory for tpu_custom_call.1']
    #allocation4 [shape = 's32[2]{0}', space=sflag, size = 0x8, scoped, tag = 'scoped memory for tpu_custom_call.1']
    #allocation5 [shape = 'u8[8192]{0}', space=vmem, size = 0x2000, scoped, tag = 'input window, operand 1']
    #allocation6 [shape = 's32[2]{0}', space=sflag, size = 0x8, scoped, tag = 'scoped memory for tpu_custom_call.1']
    #allocation7 [shape = 'u8[1024]{0}', space=vmem, size = 0x400, scoped, tag = 'input window, operand 2, single buffered']
    #allocation8 [shape = 'u8[98304]{0}', space=vmem, size = 0x18000, scoped, tag = 'input window, operand 3, single buffered']
    #allocation9 [shape = 's32[1]{0}', space=sflag, size = 0x4, scoped, tag = 'scoped memory for tpu_custom_call.1']
    #allocation10 [shape = 'u8[32768]{0}', space=vmem, size = 0x8000, scoped, tag = 'input window, operand 5, single buffered']
    #allocation11 [shape = 'u8[16384]{0}', space=vmem, size = 0x4000, scoped, tag = 'input window, operand 7, single buffered']
    #allocation12 [shape = 's32[1]{0}', space=sflag, size = 0x4, scoped, tag = 'scoped memory for tpu_custom_call.1']
    #allocation13 [shape = 'u8[98304]{0}', space=vmem, size = 0x18000, scoped, tag = 'input window, operand 10, single buffered']
    #allocation14 [shape = 'u8[32768]{0}', space=vmem, size = 0x8000, scoped, tag = 'input window, operand 12, single buffered']
    #allocation15 [shape = 's32[1]{0}', space=sflag, size = 0x4, scoped, tag = 'scoped memory for tpu_custom_call.1']
    #allocation16 [shape = 'u8[131072]{0}', space=vmem, size = 0x20000, scoped, tag = 'output window, operand 0']
    %19 = vsyncpa [#allocation3], 0
    %s20 = scalar_lea.sflag [#allocation3], 1
    %21 = vsyncpa %s20, 0
    %22 = vsyncpa [#allocation6], 0
    %s23 = scalar_lea.sflag [#allocation6], 1
    %24 = vsyncpa %s23, 0
    %25 = vsyncpa [#allocation9], 0
    %26 = vsyncpa [#allocation12], 0
    %27 = vsyncpa [#allocation15], 0
    %28 = vsyncpa [#allocation4], 0
    %s29 = scalar_lea.sflag [#allocation4], 1
    %30 = vsyncpa %s29, 0
    loop: start=0, step=1, limit=4
    $region2: #{tpu_custom_call.1} parent=1 // loop_pre_header
      _
    $region3: #{tpu_custom_call.1} parent=1 // loop_header
      %s32 = sphi 0, %s36
      %p33 = scmp.ge.s32.totalorder %s32, 4
      %s42 = sphi 0, %s44
      %s45 = sphi 0, %s42
      %s46 = sphi 0, %s45
      %s62 = sphi 0, %s46
      %s68 = sphi 0, %s70
      %s71 = sphi 0, %s68
      %s72 = sphi 0, %s71
      %s88 = sphi 0, %s72
      %s92 = sphi 0, %s92
      %s94 = sphi 0, %s92
      %s95 = sphi 0, %s94
      %s109 = sphi 0, %s95
      %s113 = sphi 0, %s113
      %s115 = sphi 0, %s113
      %s116 = sphi 0, %s115
      %s130 = sphi 0, %s116
      %s134 = sphi 0, %s134
      %s136 = sphi 0, %s134
      %s137 = sphi 0, %s136
      %s151 = sphi 0, %s137
      %s155 = sphi 0, %s155
      %s157 = sphi 0, %s155
      %s158 = sphi 0, %s157
      %s172 = sphi 0, %s158
      %s176 = sphi 0, %s176
      %s178 = sphi 0, %s176
      %s179 = sphi 0, %s178
      %s193 = sphi 0, %s179
      %s197 = sphi 0, %s197
      %s199 = sphi 0, %s197
      %s200 = sphi 0, %s199
      %s214 = sphi 0, %s200
      %s218 = sphi 0, %s218
      %s220 = sphi 0, %s218
      %s221 = sphi 0, %s220
      %s235 = sphi 0, %s221
      %s239 = sphi 0, %s239
      %s241 = sphi 0, %s239
      %s242 = sphi 0, %s241
      %s256 = sphi 0, %s242
      %s260 = sphi 0, %s260
      %s262 = sphi 0, %s260
      %s263 = sphi 0, %s262
      %s277 = sphi 0, %s263
      %s281 = sphi 0, %s281
      %s283 = sphi 0, %s281
      %s284 = sphi 0, %s283
      %s298 = sphi 0, %s284
      %s302 = sphi 0, %s302
      %s304 = sphi 0, %s302
      %s305 = sphi 0, %s304
      %s319 = sphi 0, %s305
      %s323 = sphi 0, %s323
      %s325 = sphi 0, %s323
      %s326 = sphi 0, %s325
      %s340 = sphi 0, %s326
      %s346 = sphi 0, %s348
      %s349 = sphi 0, %s346
      %s350 = sphi 0, %s349
      %s366 = sphi 0, %s350
    $region4: #{tpu_custom_call.1} parent=1 // loop_header_branch
      %35 = sbr.rel (%p33) target = $region8
    $region5: #{tpu_custom_call.1} parent=1 // loop_body
      %s37 = ssub.s32 %s32, 1
      %s38 = ssub.s32 %s32, 2
      %s39 = sadd.s32 %s32, 1
      %s40 = ssub.s32 %s32, %s39
      %p41 = scmp.eq.s32.totalorder %s40, 0
      %s43 = sadd.s32 %s42, 1
      %s44 = scalar_select %p41, %s42, %s43
      %p47 = pneg %p41
      %p48 = scmp.eq.s32.totalorder %s32, 1
      %p49 = por %p47, %p48
      %p50 = scmp.ne.s32.totalorder %s42, %s45
      %p51 = scmp.eq.s32.totalorder %s32, 0
      %p52 = por %p50, %p51
      %p53 = scmp.ne.s32.totalorder %s42, %s45
      %p54 = scmp.eq.s32.totalorder %s37, 1
      %p55 = por %p53, %p54
      %p56 = scmp.ne.s32.totalorder %s45, %s46
      %p57 = scmp.eq.s32.totalorder %s37, 0
      %p58 = por %p56, %p57
      %p59 = scmp.ne.s32.totalorder %s45, %s46
      %p60 = scmp.eq.s32.totalorder %s38, 1
      %p61 = por %p59, %p60
      %p63 = scmp.ne.s32.totalorder %s46, %s62
      %p64 = scmp.eq.s32.totalorder %s38, 0
      %p65 = por %p63, %p64
      %s66 = ssub.s32 %s32, %s39
      %p67 = scmp.eq.s32.totalorder %s66, 0
      %s69 = sadd.s32 %s68, 1
      %s70 = scalar_select %p67, %s68, %s69
      %p73 = pneg %p67
      %p74 = scmp.eq.s32.totalorder %s32, 1
      %p75 = por %p73, %p74
      %p76 = scmp.ne.s32.totalorder %s68, %s71
      %p77 = scmp.eq.s32.totalorder %s32, 0
      %p78 = por %p76, %p77
      %p79 = scmp.ne.s32.totalorder %s68, %s71
      %p80 = scmp.eq.s32.totalorder %s37, 1
      %p81 = por %p79, %p80
      %p82 = scmp.ne.s32.totalorder %s71, %s72
      %p83 = scmp.eq.s32.totalorder %s37, 0
      %p84 = por %p82, %p83
      %p85 = scmp.ne.s32.totalorder %s71, %s72
      %p86 = scmp.eq.s32.totalorder %s38, 1
      %p87 = por %p85, %p86
      %p89 = scmp.ne.s32.totalorder %s72, %s88
      %p90 = scmp.eq.s32.totalorder %s38, 0
      %p91 = por %p89, %p90
      %s93 = sadd.s32 %s92, 1
      %p96 = scmp.eq.s32.totalorder %s32, 1
      %p97 = scmp.ne.s32.totalorder %s92, %s94
      %p98 = scmp.eq.s32.totalorder %s32, 0
      %p99 = por %p97, %p98
      %p100 = scmp.ne.s32.totalorder %s92, %s94
      %p101 = scmp.eq.s32.totalorder %s37, 1
      %p102 = por %p100, %p101
      %p103 = scmp.ne.s32.totalorder %s94, %s95
      %p104 = scmp.eq.s32.totalorder %s37, 0
      %p105 = por %p103, %p104
      %p106 = scmp.ne.s32.totalorder %s94, %s95
      %p107 = scmp.eq.s32.totalorder %s38, 1
      %p108 = por %p106, %p107
      %p110 = scmp.ne.s32.totalorder %s95, %s109
      %p111 = scmp.eq.s32.totalorder %s38, 0
      %p112 = por %p110, %p111
      %s114 = sadd.s32 %s113, 1
      %p117 = scmp.eq.s32.totalorder %s32, 1
      %p118 = scmp.ne.s32.totalorder %s113, %s115
      %p119 = scmp.eq.s32.totalorder %s32, 0
      %p120 = por %p118, %p119
      %p121 = scmp.ne.s32.totalorder %s113, %s115
      %p122 = scmp.eq.s32.totalorder %s37, 1
      %p123 = por %p121, %p122
      %p124 = scmp.ne.s32.totalorder %s115, %s116
      %p125 = scmp.eq.s32.totalorder %s37, 0
      %p126 = por %p124, %p125
      %p127 = scmp.ne.s32.totalorder %s115, %s116
      %p128 = scmp.eq.s32.totalorder %s38, 1
      %p129 = por %p127, %p128
      %p131 = scmp.ne.s32.totalorder %s116, %s130
      %p132 = scmp.eq.s32.totalorder %s38, 0
      %p133 = por %p131, %p132
      %s135 = sadd.s32 %s134, 1
      %p138 = scmp.eq.s32.totalorder %s32, 1
      %p139 = scmp.ne.s32.totalorder %s134, %s136
      %p140 = scmp.eq.s32.totalorder %s32, 0
      %p141 = por %p139, %p140
      %p142 = scmp.ne.s32.totalorder %s134, %s136
      %p143 = scmp.eq.s32.totalorder %s37, 1
      %p144 = por %p142, %p143
      %p145 = scmp.ne.s32.totalorder %s136, %s137
      %p146 = scmp.eq.s32.totalorder %s37, 0
      %p147 = por %p145, %p146
      %p148 = scmp.ne.s32.totalorder %s136, %s137
      %p149 = scmp.eq.s32.totalorder %s38, 1
      %p150 = por %p148, %p149
      %p152 = scmp.ne.s32.totalorder %s137, %s151
      %p153 = scmp.eq.s32.totalorder %s38, 0
      %p154 = por %p152, %p153
      %s156 = sadd.s32 %s155, 1
      %p159 = scmp.eq.s32.totalorder %s32, 1
      %p160 = scmp.ne.s32.totalorder %s155, %s157
      %p161 = scmp.eq.s32.totalorder %s32, 0
      %p162 = por %p160, %p161
      %p163 = scmp.ne.s32.totalorder %s155, %s157
      %p164 = scmp.eq.s32.totalorder %s37, 1
      %p165 = por %p163, %p164
      %p166 = scmp.ne.s32.totalorder %s157, %s158
      %p167 = scmp.eq.s32.totalorder %s37, 0
      %p168 = por %p166, %p167
      %p169 = scmp.ne.s32.totalorder %s157, %s158
      %p170 = scmp.eq.s32.totalorder %s38, 1
      %p171 = por %p169, %p170
      %p173 = scmp.ne.s32.totalorder %s158, %s172
      %p174 = scmp.eq.s32.totalorder %s38, 0
      %p175 = por %p173, %p174
      %s177 = sadd.s32 %s176, 1
      %p180 = scmp.eq.s32.totalorder %s32, 1
      %p181 = scmp.ne.s32.totalorder %s176, %s178
      %p182 = scmp.eq.s32.totalorder %s32, 0
      %p183 = por %p181, %p182
      %p184 = scmp.ne.s32.totalorder %s176, %s178
      %p185 = scmp.eq.s32.totalorder %s37, 1
      %p186 = por %p184, %p185
      %p187 = scmp.ne.s32.totalorder %s178, %s179
      %p188 = scmp.eq.s32.totalorder %s37, 0
      %p189 = por %p187, %p188
      %p190 = scmp.ne.s32.totalorder %s178, %s179
      %p191 = scmp.eq.s32.totalorder %s38, 1
      %p192 = por %p190, %p191
      %p194 = scmp.ne.s32.totalorder %s179, %s193
      %p195 = scmp.eq.s32.totalorder %s38, 0
      %p196 = por %p194, %p195
      %s198 = sadd.s32 %s197, 1
      %p201 = scmp.eq.s32.totalorder %s32, 1
      %p202 = scmp.ne.s32.totalorder %s197, %s199
      %p203 = scmp.eq.s32.totalorder %s32, 0
      %p204 = por %p202, %p203
      %p205 = scmp.ne.s32.totalorder %s197, %s199
      %p206 = scmp.eq.s32.totalorder %s37, 1
      %p207 = por %p205, %p206
      %p208 = scmp.ne.s32.totalorder %s199, %s200
      %p209 = scmp.eq.s32.totalorder %s37, 0
      %p210 = por %p208, %p209
      %p211 = scmp.ne.s32.totalorder %s199, %s200
      %p212 = scmp.eq.s32.totalorder %s38, 1
      %p213 = por %p211, %p212
      %p215 = scmp.ne.s32.totalorder %s200, %s214
      %p216 = scmp.eq.s32.totalorder %s38, 0
      %p217 = por %p215, %p216
      %s219 = sadd.s32 %s218, 1
      %p222 = scmp.eq.s32.totalorder %s32, 1
      %p223 = scmp.ne.s32.totalorder %s218, %s220
      %p224 = scmp.eq.s32.totalorder %s32, 0
      %p225 = por %p223, %p224
      %p226 = scmp.ne.s32.totalorder %s218, %s220
      %p227 = scmp.eq.s32.totalorder %s37, 1
      %p228 = por %p226, %p227
      %p229 = scmp.ne.s32.totalorder %s220, %s221
      %p230 = scmp.eq.s32.totalorder %s37, 0
      %p231 = por %p229, %p230
      %p232 = scmp.ne.s32.totalorder %s220, %s221
      %p233 = scmp.eq.s32.totalorder %s38, 1
      %p234 = por %p232, %p233
      %p236 = scmp.ne.s32.totalorder %s221, %s235
      %p237 = scmp.eq.s32.totalorder %s38, 0
      %p238 = por %p236, %p237
      %s240 = sadd.s32 %s239, 1
      %p243 = scmp.eq.s32.totalorder %s32, 1
      %p244 = scmp.ne.s32.totalorder %s239, %s241
      %p245 = scmp.eq.s32.totalorder %s32, 0
      %p246 = por %p244, %p245
      %p247 = scmp.ne.s32.totalorder %s239, %s241
      %p248 = scmp.eq.s32.totalorder %s37, 1
      %p249 = por %p247, %p248
      %p250 = scmp.ne.s32.totalorder %s241, %s242
      %p251 = scmp.eq.s32.totalorder %s37, 0
      %p252 = por %p250, %p251
      %p253 = scmp.ne.s32.totalorder %s241, %s242
      %p254 = scmp.eq.s32.totalorder %s38, 1
      %p255 = por %p253, %p254
      %p257 = scmp.ne.s32.totalorder %s242, %s256
      %p258 = scmp.eq.s32.totalorder %s38, 0
      %p259 = por %p257, %p258
      %s261 = sadd.s32 %s260, 1
      %p264 = scmp.eq.s32.totalorder %s32, 1
      %p265 = scmp.ne.s32.totalorder %s260, %s262
      %p266 = scmp.eq.s32.totalorder %s32, 0
      %p267 = por %p265, %p266
      %p268 = scmp.ne.s32.totalorder %s260, %s262
      %p269 = scmp.eq.s32.totalorder %s37, 1
      %p270 = por %p268, %p269
      %p271 = scmp.ne.s32.totalorder %s262, %s263
      %p272 = scmp.eq.s32.totalorder %s37, 0
      %p273 = por %p271, %p272
      %p274 = scmp.ne.s32.totalorder %s262, %s263
      %p275 = scmp.eq.s32.totalorder %s38, 1
      %p276 = por %p274, %p275
      %p278 = scmp.ne.s32.totalorder %s263, %s277
      %p279 = scmp.eq.s32.totalorder %s38, 0
      %p280 = por %p278, %p279
      %s282 = sadd.s32 %s281, 1
      %p285 = scmp.eq.s32.totalorder %s32, 1
      %p286 = scmp.ne.s32.totalorder %s281, %s283
      %p287 = scmp.eq.s32.totalorder %s32, 0
      %p288 = por %p286, %p287
      %p289 = scmp.ne.s32.totalorder %s281, %s283
      %p290 = scmp.eq.s32.totalorder %s37, 1
      %p291 = por %p289, %p290
      %p292 = scmp.ne.s32.totalorder %s283, %s284
      %p293 = scmp.eq.s32.totalorder %s37, 0
      %p294 = por %p292, %p293
      %p295 = scmp.ne.s32.totalorder %s283, %s284
      %p296 = scmp.eq.s32.totalorder %s38, 1
      %p297 = por %p295, %p296
      %p299 = scmp.ne.s32.totalorder %s284, %s298
      %p300 = scmp.eq.s32.totalorder %s38, 0
      %p301 = por %p299, %p300
      %s303 = sadd.s32 %s302, 1
      %p306 = scmp.eq.s32.totalorder %s32, 1
      %p307 = scmp.ne.s32.totalorder %s302, %s304
      %p308 = scmp.eq.s32.totalorder %s32, 0
      %p309 = por %p307, %p308
      %p310 = scmp.ne.s32.totalorder %s302, %s304
      %p311 = scmp.eq.s32.totalorder %s37, 1
      %p312 = por %p310, %p311
      %p313 = scmp.ne.s32.totalorder %s304, %s305
      %p314 = scmp.eq.s32.totalorder %s37, 0
      %p315 = por %p313, %p314
      %p316 = scmp.ne.s32.totalorder %s304, %s305
      %p317 = scmp.eq.s32.totalorder %s38, 1
      %p318 = por %p316, %p317
      %p320 = scmp.ne.s32.totalorder %s305, %s319
      %p321 = scmp.eq.s32.totalorder %s38, 0
      %p322 = por %p320, %p321
      %s324 = sadd.s32 %s323, 1
      %p327 = scmp.eq.s32.totalorder %s32, 1
      %p328 = scmp.ne.s32.totalorder %s323, %s325
      %p329 = scmp.eq.s32.totalorder %s32, 0
      %p330 = por %p328, %p329
      %p331 = scmp.ne.s32.totalorder %s323, %s325
      %p332 = scmp.eq.s32.totalorder %s37, 1
      %p333 = por %p331, %p332
      %p334 = scmp.ne.s32.totalorder %s325, %s326
      %p335 = scmp.eq.s32.totalorder %s37, 0
      %p336 = por %p334, %p335
      %p337 = scmp.ne.s32.totalorder %s325, %s326
      %p338 = scmp.eq.s32.totalorder %s38, 1
      %p339 = por %p337, %p338
      %p341 = scmp.ne.s32.totalorder %s326, %s340
      %p342 = scmp.eq.s32.totalorder %s38, 0
      %p343 = por %p341, %p342
      %s344 = ssub.s32 %s32, %s39
      %p345 = scmp.eq.s32.totalorder %s344, 0
      %s347 = sadd.s32 %s346, 1
      %s348 = scalar_select %p345, %s346, %s347
      %p351 = pneg %p345
      %p352 = scmp.eq.s32.totalorder %s32, 1
      %p353 = por %p351, %p352
      %p354 = scmp.ne.s32.totalorder %s346, %s349
      %p355 = scmp.eq.s32.totalorder %s32, 0
      %p356 = por %p354, %p355
      %p357 = scmp.ne.s32.totalorder %s346, %s349
      %p358 = scmp.eq.s32.totalorder %s37, 1
      %p359 = por %p357, %p358
      %p360 = scmp.ne.s32.totalorder %s349, %s350
      %p361 = scmp.eq.s32.totalorder %s37, 0
      %p362 = por %p360, %p361
      %p363 = scmp.ne.s32.totalorder %s349, %s350
      %p364 = scmp.eq.s32.totalorder %s38, 1
      %p365 = por %p363, %p364
      %p367 = scmp.ne.s32.totalorder %s350, %s366
      %p368 = scmp.eq.s32.totalorder %s38, 0
      %p369 = por %p367, %p368
      %p370 = scmp.le.s32.totalorder 1, %s32
      %p371 = scmp.lt.s32.totalorder %s32, 3
      %p372 = pnand %p370, %p371
      %p373 = pneg %p372
      // Predicated region
      $region9: #{tpu_custom_call.1} parent=5 // pred_check
        _
      $region10: #{tpu_custom_call.1} parent=5 // pred_check_branch
        %375 = sbr.rel (%p372) target = $region12
      $region11: #{tpu_custom_call.1} parent=5 // pred_region
        %s376 = ssub.s32 %s32, 1
        // Predicated region
        $region13: #{tpu_custom_call.1} parent=11 // pred_check
          %p377 = pneg %p105
        $region14: #{tpu_custom_call.1} parent=11 // pred_check_branch
          %379 = sbr.rel (%p377) target = $region16
        $region15: #{tpu_custom_call.1} parent=11 // pred_region
          %s381 = ssub.s32 32, 32
          %382 = vsyncadd [#allocation6], %s381
          %s384 = sshll.u32 [#allocation7], 4
          %s385 = int_to_ptr.vmem [resolvable:$true] %s384
          %387 = dma.hbm_to_vmem [thread:$0]  %s2, 32, %s385, [#allocation6]
        $region16: #{tpu_custom_call.1} parent=11 // pred_fallthru
          _
        // Predicated region
        $region17: #{tpu_custom_call.1} parent=11 // pred_check
          %p388 = pneg %p126
        $region18: #{tpu_custom_call.1} parent=11 // pred_check_branch
          %390 = sbr.rel (%p388) target = $region20
        $region19: #{tpu_custom_call.1} parent=11 // pred_region
          %s392 = ssub.s32 3072, 3072
          %393 = vsyncadd [#allocation9], %s392
          %s394 = sshll.u32 [#allocation8], 4
          %s395 = int_to_ptr.vmem [resolvable:$true] %s394
          %400 = dma.hbm_to_vmem [thread:$0]  %s3, 3072, %s395, [#allocation9], 192, 192, 12
        $region20: #{tpu_custom_call.1} parent=11 // pred_fallthru
          _
        // Predicated region
        $region21: #{tpu_custom_call.1} parent=11 // pred_check
          %p401 = pneg %p147
        $region22: #{tpu_custom_call.1} parent=11 // pred_check_branch
          %403 = sbr.rel (%p401) target = $region24
        $region23: #{tpu_custom_call.1} parent=11 // pred_region
          _
        $region24: #{tpu_custom_call.1} parent=11 // pred_fallthru
          _
        // Predicated region
        $region25: #{tpu_custom_call.1} parent=11 // pred_check
          %p404 = pneg %p168
        $region26: #{tpu_custom_call.1} parent=11 // pred_check_branch
          %406 = sbr.rel (%p404) target = $region28
        $region27: #{tpu_custom_call.1} parent=11 // pred_region
          %s408 = ssub.s32 1024, 1024
          %409 = vsyncadd [#allocation9], %s408
          %s410 = sshll.u32 [#allocation10], 4
          %s411 = int_to_ptr.vmem [resolvable:$true] %s410
          %416 = dma.hbm_to_vmem [thread:$0]  %s5, 1024, %s411, [#allocation9], 64, 64, 4
        $region28: #{tpu_custom_call.1} parent=11 // pred_fallthru
          _
        // Predicated region
        $region29: #{tpu_custom_call.1} parent=11 // pred_check
          %p417 = pneg %p189
        $region30: #{tpu_custom_call.1} parent=11 // pred_check_branch
          %419 = sbr.rel (%p417) target = $region32
        $region31: #{tpu_custom_call.1} parent=11 // pred_region
          _
        $region32: #{tpu_custom_call.1} parent=11 // pred_fallthru
          _
        // Predicated region
        $region33: #{tpu_custom_call.1} parent=11 // pred_check
          %p420 = pneg %p210
        $region34: #{tpu_custom_call.1} parent=11 // pred_check_branch
          %422 = sbr.rel (%p420) target = $region36
        $region35: #{tpu_custom_call.1} parent=11 // pred_region
          %s424 = ssub.s32 512, 512
          %425 = vsyncadd [#allocation12], %s424
          %s426 = sshll.u32 [#allocation11], 4
          %s427 = int_to_ptr.vmem [resolvable:$true] %s426
          %432 = dma.hbm_to_vmem [thread:$0]  %s7, 512, %s427, [#allocation12], 64, 64, 4
        $region36: #{tpu_custom_call.1} parent=11 // pred_fallthru
          _
        // Predicated region
        $region37: #{tpu_custom_call.1} parent=11 // pred_check
          %p433 = pneg %p231
        $region38: #{tpu_custom_call.1} parent=11 // pred_check_branch
          %435 = sbr.rel (%p433) target = $region40
        $region39: #{tpu_custom_call.1} parent=11 // pred_region
          _
        $region40: #{tpu_custom_call.1} parent=11 // pred_fallthru
          _
        // Predicated region
        $region41: #{tpu_custom_call.1} parent=11 // pred_check
          %p436 = pneg %p252
        $region42: #{tpu_custom_call.1} parent=11 // pred_check_branch
          %438 = sbr.rel (%p436) target = $region44
        $region43: #{tpu_custom_call.1} parent=11 // pred_region
          _
        $region44: #{tpu_custom_call.1} parent=11 // pred_fallthru
          _
        // Predicated region
        $region45: #{tpu_custom_call.1} parent=11 // pred_check
          %p439 = pneg %p273
        $region46: #{tpu_custom_call.1} parent=11 // pred_check_branch
          %441 = sbr.rel (%p439) target = $region48
        $region47: #{tpu_custom_call.1} parent=11 // pred_region
          %s443 = ssub.s32 3072, 3072
          %444 = vsyncadd [#allocation12], %s443
          %s445 = sshll.u32 [#allocation13], 4
          %s446 = int_to_ptr.vmem [resolvable:$true] %s445
          %451 = dma.hbm_to_vmem [thread:$0]  %s10, 3072, %s446, [#allocation12], 192, 192, 12
        $region48: #{tpu_custom_call.1} parent=11 // pred_fallthru
          _
        // Predicated region
        $region49: #{tpu_custom_call.1} parent=11 // pred_check
          %p452 = pneg %p294
        $region50: #{tpu_custom_call.1} parent=11 // pred_check_branch
          %454 = sbr.rel (%p452) target = $region52
        $region51: #{tpu_custom_call.1} parent=11 // pred_region
          _
        $region52: #{tpu_custom_call.1} parent=11 // pred_fallthru
          _
        // Predicated region
        $region53: #{tpu_custom_call.1} parent=11 // pred_check
          %p455 = pneg %p315
        $region54: #{tpu_custom_call.1} parent=11 // pred_check_branch
          %457 = sbr.rel (%p455) target = $region56
        $region55: #{tpu_custom_call.1} parent=11 // pred_region
          %s459 = ssub.s32 1024, 1024
          %460 = vsyncadd [#allocation15], %s459
          %s461 = sshll.u32 [#allocation14], 4
          %s462 = int_to_ptr.vmem [resolvable:$true] %s461
          %467 = dma.hbm_to_vmem [thread:$0]  %s12, 1024, %s462, [#allocation15], 64, 64, 4
        $region56: #{tpu_custom_call.1} parent=11 // pred_fallthru
          _
        // Predicated region
        $region57: #{tpu_custom_call.1} parent=11 // pred_check
          %p468 = pneg %p336
        $region58: #{tpu_custom_call.1} parent=11 // pred_check_branch
          %470 = sbr.rel (%p468) target = $region60
        $region59: #{tpu_custom_call.1} parent=11 // pred_region
          _
        $region60: #{tpu_custom_call.1} parent=11 // pred_fallthru
          _
      $region12: #{tpu_custom_call.1} parent=5 // pred_fallthru
        _
      %p471 = scmp.lt.s32.totalorder %s32, 2
      // Predicated region
      $region61: #{tpu_custom_call.1} parent=5 // pred_check
        %p472 = pneg %p471
      $region62: #{tpu_custom_call.1} parent=5 // pred_check_branch
        %474 = sbr.rel (%p472) target = $region64
      $region63: #{tpu_custom_call.1} parent=5 // pred_region
        // Predicated region
        $region65: #{tpu_custom_call.1} parent=63 // pred_check
          %p475 = pneg %p52
        $region66: #{tpu_custom_call.1} parent=63 // pred_check_branch
          %477 = sbr.rel (%p475) target = $region68
        $region67: #{tpu_custom_call.1} parent=63 // pred_region
          %s478 = sand.u32 %s42, 1
          %s479 = scalar_lea.sflag [#allocation3], %s478
          %s480 = sand.u32 %s42, 1
          %s481 = smul.addr %s480, 128
          %s482 = scalar_lea.vmem [#allocation2], %s481
          %s483 = smul.u32 8, %s32
          %s485 = ssub.s32 2048, 2048
          %486 = vsyncadd %s479, %s485
          %s487 = smul.addr %s483, 2
          %s488 = smul.addr %s487, 128
          %s489 = scalar_lea.hbm %s0, %s488
          %s490 = sshll.u32 %s482, 4
          %s491 = int_to_ptr.vmem [resolvable:$true] %s490
          %496 = dma.hbm_to_vmem [thread:$0]  %s489, 2048, %s491, %s479, 128, 128, 8
        $region68: #{tpu_custom_call.1} parent=63 // pred_fallthru
          _
        // Predicated region
        $region69: #{tpu_custom_call.1} parent=63 // pred_check
          %p497 = pneg %p78
        $region70: #{tpu_custom_call.1} parent=63 // pred_check_branch
          %499 = sbr.rel (%p497) target = $region72
        $region71: #{tpu_custom_call.1} parent=63 // pred_region
          %s500 = sand.u32 %s32, 1
          %s501 = scalar_lea.sflag [#allocation6], %s500
          %s502 = sand.u32 %s68, 1
          %s503 = smul.addr %s502, 8
          %s504 = scalar_lea.vmem [#allocation5], %s503
          %s506 = ssub.s32 128, 128
          %507 = vsyncadd %s501, %s506
          %s508 = smul.addr %s32, 128
          %s509 = scalar_lea.hbm %s1, %s508
          %s511 = sshll.u32 %s504, 4
          %s512 = int_to_ptr.vmem [resolvable:$true] %s511
          %514 = dma.hbm_to_vmem [thread:$0]  %s509, 128, %s512, %s501
        $region72: #{tpu_custom_call.1} parent=63 // pred_fallthru
          _
      $region64: #{tpu_custom_call.1} parent=5 // pred_fallthru
        _
      %p515 = scmp.le.s32.totalorder 1, %s32
      %p516 = scmp.lt.s32.totalorder %s32, 3
      %p517 = pnand %p515, %p516
      %p518 = pneg %p517
      // Predicated region
      $region73: #{tpu_custom_call.1} parent=5 // pred_check
        _
      $region74: #{tpu_custom_call.1} parent=5 // pred_check_branch
        %520 = sbr.rel (%p517) target = $region76
      $region75: #{tpu_custom_call.1} parent=5 // pred_region
        %s521 = ssub.s32 %s32, 1
        %s522 = sand.u32 %s45, 1
        %s523 = scalar_lea.sflag [#allocation3], %s522
        %s524 = sand.u32 %s45, 1
        %s525 = smul.addr %s524, 128
        %s526 = scalar_lea.vmem [#allocation2], %s525
        // Predicated region
        $region77: #{tpu_custom_call.1} parent=75 // pred_check
          %p527 = pneg %p58
        $region78: #{tpu_custom_call.1} parent=75 // pred_check_branch
          %529 = sbr.rel (%p527) target = $region80
        $region79: #{tpu_custom_call.1} parent=75 // pred_region
          %530 = dma.done %s523, 2048
        $region80: #{tpu_custom_call.1} parent=75 // pred_fallthru
          _
        %s531 = sand.u32 %s37, 1
        %s532 = scalar_lea.sflag [#allocation6], %s531
        %s533 = sand.u32 %s71, 1
        %s534 = smul.addr %s533, 8
        %s535 = scalar_lea.vmem [#allocation5], %s534
        // Predicated region
        $region81: #{tpu_custom_call.1} parent=75 // pred_check
          %p536 = pneg %p84
        $region82: #{tpu_custom_call.1} parent=75 // pred_check_branch
          %538 = sbr.rel (%p536) target = $region84
        $region83: #{tpu_custom_call.1} parent=75 // pred_region
          %539 = dma.done %s532, 128
        $region84: #{tpu_custom_call.1} parent=75 // pred_fallthru
          _
        // Predicated region
        $region85: #{tpu_custom_call.1} parent=75 // pred_check
          %p540 = pneg %p105
        $region86: #{tpu_custom_call.1} parent=75 // pred_check_branch
          %542 = sbr.rel (%p540) target = $region88
        $region87: #{tpu_custom_call.1} parent=75 // pred_region
          %543 = dma.done [#allocation6], 32
        $region88: #{tpu_custom_call.1} parent=75 // pred_fallthru
          _
        // Predicated region
        $region89: #{tpu_custom_call.1} parent=75 // pred_check
          %p544 = pneg %p126
        $region90: #{tpu_custom_call.1} parent=75 // pred_check_branch
          %546 = sbr.rel (%p544) target = $region92
        $region91: #{tpu_custom_call.1} parent=75 // pred_region
          %547 = dma.done [#allocation9], 3072
        $region92: #{tpu_custom_call.1} parent=75 // pred_fallthru
          _
        // Predicated region
        $region93: #{tpu_custom_call.1} parent=75 // pred_check
          %p548 = pneg %p168
        $region94: #{tpu_custom_call.1} parent=75 // pred_check_branch
          %550 = sbr.rel (%p548) target = $region96
        $region95: #{tpu_custom_call.1} parent=75 // pred_region
          %551 = dma.done [#allocation9], 1024
        $region96: #{tpu_custom_call.1} parent=75 // pred_fallthru
          _
        // Predicated region
        $region97: #{tpu_custom_call.1} parent=75 // pred_check
          %p552 = pneg %p210
        $region98: #{tpu_custom_call.1} parent=75 // pred_check_branch
          %554 = sbr.rel (%p552) target = $region100
        $region99: #{tpu_custom_call.1} parent=75 // pred_region
          %555 = dma.done [#allocation12], 512
        $region100: #{tpu_custom_call.1} parent=75 // pred_fallthru
          _
        // Predicated region
        $region101: #{tpu_custom_call.1} parent=75 // pred_check
          %p556 = pneg %p273
        $region102: #{tpu_custom_call.1} parent=75 // pred_check_branch
          %558 = sbr.rel (%p556) target = $region104
        $region103: #{tpu_custom_call.1} parent=75 // pred_region
          %559 = dma.done [#allocation12], 3072
        $region104: #{tpu_custom_call.1} parent=75 // pred_fallthru
          _
        // Predicated region
        $region105: #{tpu_custom_call.1} parent=75 // pred_check
          %p560 = pneg %p315
        $region106: #{tpu_custom_call.1} parent=75 // pred_check_branch
          %562 = sbr.rel (%p560) target = $region108
        $region107: #{tpu_custom_call.1} parent=75 // pred_region
          %563 = dma.done [#allocation15], 1024
        $region108: #{tpu_custom_call.1} parent=75 // pred_fallthru
          _
        %s564 = sand.u32 %s45, 1
        %s565 = scalar_lea.sflag [#allocation3], %s564
        %s566 = sand.u32 %s45, 1
        %s567 = smul.addr %s566, 128
        %s568 = scalar_lea.vmem [#allocation2], %s567
        %p569 = pneg %p58
        %p570 = pneg %p55
        %s571 = sand.u32 %s37, 1
        %s572 = scalar_lea.sflag [#allocation6], %s571
        %s573 = sand.u32 %s71, 1
        %s574 = smul.addr %s573, 8
        %s575 = scalar_lea.vmem [#allocation5], %s574
        %p576 = pneg %p84
        %p577 = pneg %p81
        %p578 = pneg %p105
        %p579 = pneg %p102
        %p580 = pneg %p126
        %p581 = pneg %p123
        %p582 = pneg %p147
        %p583 = pneg %p144
        %p584 = pneg %p168
        %p585 = pneg %p165
        %p586 = pneg %p189
        %p587 = pneg %p186
        %p588 = pneg %p210
        %p589 = pneg %p207
        %p590 = pneg %p231
        %p591 = pneg %p228
        %p592 = pneg %p252
        %p593 = pneg %p249
        %p594 = pneg %p273
        %p595 = pneg %p270
        %p596 = pneg %p294
        %p597 = pneg %p291
        %p598 = pneg %p315
        %p599 = pneg %p312
        %p600 = pneg %p336
        %p601 = pneg %p333
        %p602 = pneg %p362
        %p603 = pneg %p359
        %s604 = sand.u32 %s349, 1
        %s605 = scalar_lea.sflag [#allocation4], %s604
        %s606 = sand.u32 %s349, 1
        %s607 = smul.addr %s606, 128
        %s608 = scalar_lea.vmem [#allocation16], %s607
        %s609 = smul.u32 8, %s37
        %s610 = smul.u32 8, %s37
        %v612 = vld [vmem:[#allocation7] sm:$0x3]
        %v613 = vld [vmem:[#allocation8] sm:$0xff]
        %v614 = vld [vmem:[#allocation8 + $0x8] sm:$0xf]
        %v615 = vld [vmem:[#allocation8 + $0xc] sm:$0xff]
        %v616 = vld [vmem:[#allocation8 + $0x14] sm:$0xf]
        %v617 = vld [vmem:[#allocation8 + $0x18] sm:$0xff]
        %v618 = vld [vmem:[#allocation8 + $0x20] sm:$0xf]
        %v619 = vld [vmem:[#allocation8 + $0x24] sm:$0xff]
        %v620 = vld [vmem:[#allocation8 + $0x2c] sm:$0xf]
        %v621 = vld [vmem:[#allocation8 + $0x30] sm:$0xff]
        %v622 = vld [vmem:[#allocation8 + $0x38] sm:$0xf]
        %v623 = vld [vmem:[#allocation8 + $0x3c] sm:$0xff]
        %v624 = vld [vmem:[#allocation8 + $0x44] sm:$0xf]
        %v625 = vld [vmem:[#allocation8 + $0x48] sm:$0xff]
        %v626 = vld [vmem:[#allocation8 + $0x50] sm:$0xf]
        %v627 = vld [vmem:[#allocation8 + $0x54] sm:$0xff]
        %v628 = vld [vmem:[#allocation8 + $0x5c] sm:$0xf]
        %v629 = vld [vmem:[#allocation8 + $0x60] sm:$0xff]
        %v630 = vld [vmem:[#allocation8 + $0x68] sm:$0xf]
        %v631 = vld [vmem:[#allocation8 + $0x6c] sm:$0xff]
        %v632 = vld [vmem:[#allocation8 + $0x74] sm:$0xf]
        %v633 = vld [vmem:[#allocation8 + $0x78] sm:$0xff]
        %v634 = vld [vmem:[#allocation8 + $0x80] sm:$0xf]
        %v635 = vld [vmem:[#allocation8 + $0x84] sm:$0xff]
        %v636 = vld [vmem:[#allocation8 + $0x8c] sm:$0xf]
        %v637 = vld [vmem:[#allocation8 + $0x90] sm:$0xff]
        %v638 = vld [vmem:[#allocation8 + $0x98] sm:$0xf]
        %v639 = vld [vmem:[#allocation8 + $0x9c] sm:$0xff]
        %v640 = vld [vmem:[#allocation8 + $0xa4] sm:$0xf]
        %v641 = vld [vmem:[#allocation8 + $0xa8] sm:$0xff]
        %v642 = vld [vmem:[#allocation8 + $0xb0] sm:$0xf]
        %v643 = vld [vmem:[#allocation8 + $0xb4] sm:$0xff]
        %v644 = vld [vmem:[#allocation8 + $0xbc] sm:$0xf]
        %v645 = vld [vmem:[%s4] sm:$0x7]
        %v646 = vld [vmem:[#allocation10] sm:$0xf]
        %v647 = vld [vmem:[#allocation10 + $0x4] sm:$0xf]
        %v648 = vld [vmem:[#allocation10 + $0x8] sm:$0xf]
        %v649 = vld [vmem:[#allocation10 + $0xc] sm:$0xf]
        %v650 = vld [vmem:[#allocation10 + $0x10] sm:$0xf]
        %v651 = vld [vmem:[#allocation10 + $0x14] sm:$0xf]
        %v652 = vld [vmem:[#allocation10 + $0x18] sm:$0xf]
        %v653 = vld [vmem:[#allocation10 + $0x1c] sm:$0xf]
        %v654 = vld [vmem:[#allocation10 + $0x20] sm:$0xf]
        %v655 = vld [vmem:[#allocation10 + $0x24] sm:$0xf]
        %v656 = vld [vmem:[#allocation10 + $0x28] sm:$0xf]
        %v657 = vld [vmem:[#allocation10 + $0x2c] sm:$0xf]
        %v658 = vld [vmem:[#allocation10 + $0x30] sm:$0xf]
        %v659 = vld [vmem:[#allocation10 + $0x34] sm:$0xf]
        %v660 = vld [vmem:[#allocation10 + $0x38] sm:$0xf]
        %v661 = vld [vmem:[#allocation10 + $0x3c] sm:$0xf]
        %v662 = vld [vmem:[%s6] sm:$0x1]
        %v663 = vld [vmem:[#allocation11] sm:$0xf]
        %v664 = vld [vmem:[#allocation11 + $0x4] sm:$0xf]
        %v665 = vld [vmem:[#allocation11 + $0x8] sm:$0xf]
        %v666 = vld [vmem:[#allocation11 + $0xc] sm:$0xf]
        %v667 = vld [vmem:[#allocation11 + $0x10] sm:$0xf]
        %v668 = vld [vmem:[#allocation11 + $0x14] sm:$0xf]
        %v669 = vld [vmem:[#allocation11 + $0x18] sm:$0xf]
        %v670 = vld [vmem:[#allocation11 + $0x1c] sm:$0xf]
        %v671 = vld [vmem:[%s8] sm:$0x1]
        %v672 = vld [vmem:[%s9] sm:$0x3]
        %v673 = vld [vmem:[#allocation13] sm:$0xff]
        %v674 = vld [vmem:[#allocation13 + $0x8] sm:$0xf]
        %v675 = vld [vmem:[#allocation13 + $0xc] sm:$0xff]
        %v676 = vld [vmem:[#allocation13 + $0x14] sm:$0xf]
        %v677 = vld [vmem:[#allocation13 + $0x18] sm:$0xff]
        %v678 = vld [vmem:[#allocation13 + $0x20] sm:$0xf]
        %v679 = vld [vmem:[#allocation13 + $0x24] sm:$0xff]
        %v680 = vld [vmem:[#allocation13 + $0x2c] sm:$0xf]
        %v681 = vld [vmem:[#allocation13 + $0x30] sm:$0xff]
        %v682 = vld [vmem:[#allocation13 + $0x38] sm:$0xf]
        %v683 = vld [vmem:[#allocation13 + $0x3c] sm:$0xff]
        %v684 = vld [vmem:[#allocation13 + $0x44] sm:$0xf]
        %v685 = vld [vmem:[#allocation13 + $0x48] sm:$0xff]
        %v686 = vld [vmem:[#allocation13 + $0x50] sm:$0xf]
        %v687 = vld [vmem:[#allocation13 + $0x54] sm:$0xff]
        %v688 = vld [vmem:[#allocation13 + $0x5c] sm:$0xf]
        %v689 = vld [vmem:[#allocation13 + $0x60] sm:$0xff]
        %v690 = vld [vmem:[#allocation13 + $0x68] sm:$0xf]
        %v691 = vld [vmem:[#allocation13 + $0x6c] sm:$0xff]
        %v692 = vld [vmem:[#allocation13 + $0x74] sm:$0xf]
        %v693 = vld [vmem:[#allocation13 + $0x78] sm:$0xff]
        %v694 = vld [vmem:[#allocation13 + $0x80] sm:$0xf]
        %v695 = vld [vmem:[#allocation13 + $0x84] sm:$0xff]
        %v696 = vld [vmem:[#allocation13 + $0x8c] sm:$0xf]
        %v697 = vld [vmem:[#allocation13 + $0x90] sm:$0xff]
        %v698 = vld [vmem:[#allocation13 + $0x98] sm:$0xf]
        %v699 = vld [vmem:[#allocation13 + $0x9c] sm:$0xff]
        %v700 = vld [vmem:[#allocation13 + $0xa4] sm:$0xf]
        %v701 = vld [vmem:[#allocation13 + $0xa8] sm:$0xff]
        %v702 = vld [vmem:[#allocation13 + $0xb0] sm:$0xf]
        %v703 = vld [vmem:[#allocation13 + $0xb4] sm:$0xff]
        %v704 = vld [vmem:[#allocation13 + $0xbc] sm:$0xf]
        %v705 = vld [vmem:[%s11] sm:$0x7]
        %v706 = vld [vmem:[#allocation14] sm:$0xf]
        %v707 = vld [vmem:[#allocation14 + $0x4] sm:$0xf]
        %v708 = vld [vmem:[#allocation14 + $0x8] sm:$0xf]
        %v709 = vld [vmem:[#allocation14 + $0xc] sm:$0xf]
        %v710 = vld [vmem:[#allocation14 + $0x10] sm:$0xf]
        %v711 = vld [vmem:[#allocation14 + $0x14] sm:$0xf]
        %v712 = vld [vmem:[#allocation14 + $0x18] sm:$0xf]
        %v713 = vld [vmem:[#allocation14 + $0x1c] sm:$0xf]
        %v714 = vld [vmem:[#allocation14 + $0x20] sm:$0xf]
        %v715 = vld [vmem:[#allocation14 + $0x24] sm:$0xf]
        %v716 = vld [vmem:[#allocation14 + $0x28] sm:$0xf]
        %v717 = vld [vmem:[#allocation14 + $0x2c] sm:$0xf]
        %v718 = vld [vmem:[#allocation14 + $0x30] sm:$0xf]
        %v719 = vld [vmem:[#allocation14 + $0x34] sm:$0xf]
        %v720 = vld [vmem:[#allocation14 + $0x38] sm:$0xf]
        %v721 = vld [vmem:[#allocation14 + $0x3c] sm:$0xf]
        %v722 = vld [vmem:[%s13] sm:$0x1]
        %v723 = vld [vmem:[%s526] sm:$0xff]
        %v724 = vld [vmem:[%s526 + $0x8] sm:$0xff]
        %v725 = vld [vmem:[%s526 + $0x10] sm:$0xff]
        %v726 = vld [vmem:[%s526 + $0x18] sm:$0xff]
        %v727 = vld [vmem:[%s526 + $0x20] sm:$0xff]
        %v728 = vld [vmem:[%s526 + $0x28] sm:$0xff]
        %v729 = vld [vmem:[%s526 + $0x30] sm:$0xff]
        %v730 = vld [vmem:[%s526 + $0x38] sm:$0xff]
        %v731 = vld [vmem:[%s526 + $0x40] sm:$0xff]
        %v732 = vld [vmem:[%s526 + $0x48] sm:$0xff]
        %v733 = vld [vmem:[%s526 + $0x50] sm:$0xff]
        %v734 = vld [vmem:[%s526 + $0x58] sm:$0xff]
        %v735 = vld [vmem:[%s526 + $0x60] sm:$0xff]
        %v736 = vld [vmem:[%s526 + $0x68] sm:$0xff]
        %v737 = vld [vmem:[%s526 + $0x70] sm:$0xff]
        %v738 = vld [vmem:[%s526 + $0x78] sm:$0xff]
        %v739 = vld [vmem:[%s535] sm:$0xff]
        %740 = vadd.xlane.f32.xlu0 %v723
        %v741 = vpop.xlane.xlu0 %740
        %742 = vadd.xlane.f32.xlu0 %v724
        %v743 = vpop.xlane.xlu0 %742
        %744 = vadd.xlane.f32.xlu0 %v725
        %v745 = vpop.xlane.xlu0 %744
        %746 = vadd.xlane.f32.xlu0 %v726
        %v747 = vpop.xlane.xlu0 %746
        %748 = vadd.xlane.f32.xlu0 %v727
        %v749 = vpop.xlane.xlu0 %748
        %750 = vadd.xlane.f32.xlu0 %v728
        %v751 = vpop.xlane.xlu0 %750
        %752 = vadd.xlane.f32.xlu0 %v729
        %v753 = vpop.xlane.xlu0 %752
        %754 = vadd.xlane.f32.xlu0 %v730
        %v755 = vpop.xlane.xlu0 %754
        %756 = vadd.xlane.f32.xlu0 %v731
        %v757 = vpop.xlane.xlu0 %756
        %758 = vadd.xlane.f32.xlu0 %v732
        %v759 = vpop.xlane.xlu0 %758
        %760 = vadd.xlane.f32.xlu0 %v733
        %v761 = vpop.xlane.xlu0 %760
        %762 = vadd.xlane.f32.xlu0 %v734
        %v763 = vpop.xlane.xlu0 %762
        %764 = vadd.xlane.f32.xlu0 %v735
        %v765 = vpop.xlane.xlu0 %764
        %766 = vadd.xlane.f32.xlu0 %v736
        %v767 = vpop.xlane.xlu0 %766
        %768 = vadd.xlane.f32.xlu0 %v737
        %v769 = vpop.xlane.xlu0 %768
        %770 = vadd.xlane.f32.xlu0 %v738
        %v771 = vpop.xlane.xlu0 %770
        %v772 = vrcp.pop 128.0
        %v773 = vmul.f32 %v741, %v772
        %v774 = vmul.f32 %v743, %v772
        %v775 = vmul.f32 %v745, %v772
        %v776 = vmul.f32 %v747, %v772
        %v777 = vmul.f32 %v749, %v772
        %v778 = vmul.f32 %v751, %v772
        %v779 = vmul.f32 %v753, %v772
        %v780 = vmul.f32 %v755, %v772
        %v781 = vmul.f32 %v757, %v772
        %v782 = vmul.f32 %v759, %v772
        %v783 = vmul.f32 %v761, %v772
        %v784 = vmul.f32 %v763, %v772
        %v785 = vmul.f32 %v765, %v772
        %v786 = vmul.f32 %v767, %v772
        %v787 = vmul.f32 %v769, %v772
        %v788 = vmul.f32 %v771, %v772
        %v789 = vsub.f32 %v723, %v773
        %v790 = vsub.f32 %v724, %v774
        %v791 = vsub.f32 %v725, %v775
        %v792 = vsub.f32 %v726, %v776
        %v793 = vsub.f32 %v727, %v777
        %v794 = vsub.f32 %v728, %v778
        %v795 = vsub.f32 %v729, %v779
        %v796 = vsub.f32 %v730, %v780
        %v797 = vsub.f32 %v731, %v781
        %v798 = vsub.f32 %v732, %v782
        %v799 = vsub.f32 %v733, %v783
        %v800 = vsub.f32 %v734, %v784
        %v801 = vsub.f32 %v735, %v785
        %v802 = vsub.f32 %v736, %v786
        %v803 = vsub.f32 %v737, %v787
        %v804 = vsub.f32 %v738, %v788
        %v805 = vmul.f32 %v789, %v789
        %v806 = vmul.f32 %v790, %v790
        %v807 = vmul.f32 %v791, %v791
        %v808 = vmul.f32 %v792, %v792
        %v809 = vmul.f32 %v793, %v793
        %v810 = vmul.f32 %v794, %v794
        %v811 = vmul.f32 %v795, %v795
        %v812 = vmul.f32 %v796, %v796
        %v813 = vmul.f32 %v797, %v797
        %v814 = vmul.f32 %v798, %v798
        %v815 = vmul.f32 %v799, %v799
        %v816 = vmul.f32 %v800, %v800
        %v817 = vmul.f32 %v801, %v801
        %v818 = vmul.f32 %v802, %v802
        %v819 = vmul.f32 %v803, %v803
        %v820 = vmul.f32 %v804, %v804
        %821 = vadd.xlane.f32.xlu0 %v805
        %v822 = vpop.xlane.xlu0 %821
        %823 = vadd.xlane.f32.xlu0 %v806
        %v824 = vpop.xlane.xlu0 %823
        %825 = vadd.xlane.f32.xlu0 %v807
        %v826 = vpop.xlane.xlu0 %825
        %827 = vadd.xlane.f32.xlu0 %v808
        %v828 = vpop.xlane.xlu0 %827
        %829 = vadd.xlane.f32.xlu0 %v809
        %v830 = vpop.xlane.xlu0 %829
        %831 = vadd.xlane.f32.xlu0 %v810
        %v832 = vpop.xlane.xlu0 %831
        %833 = vadd.xlane.f32.xlu0 %v811
        %v834 = vpop.xlane.xlu0 %833
        %835 = vadd.xlane.f32.xlu0 %v812
        %v836 = vpop.xlane.xlu0 %835
        %837 = vadd.xlane.f32.xlu0 %v813
        %v838 = vpop.xlane.xlu0 %837
        %839 = vadd.xlane.f32.xlu0 %v814
        %v840 = vpop.xlane.xlu0 %839
        %841 = vadd.xlane.f32.xlu0 %v815
        %v842 = vpop.xlane.xlu0 %841
        %843 = vadd.xlane.f32.xlu0 %v816
        %v844 = vpop.xlane.xlu0 %843
        %845 = vadd.xlane.f32.xlu0 %v817
        %v846 = vpop.xlane.xlu0 %845
        %847 = vadd.xlane.f32.xlu0 %v818
        %v848 = vpop.xlane.xlu0 %847
        %849 = vadd.xlane.f32.xlu0 %v819
        %v850 = vpop.xlane.xlu0 %849
        %851 = vadd.xlane.f32.xlu0 %v820
        %v852 = vpop.xlane.xlu0 %851
        %v853 = vmul.f32 %v822, %v772
        %v854 = vmul.f32 %v824, %v772
        %v855 = vmul.f32 %v826, %v772
        %v856 = vmul.f32 %v828, %v772
        %v857 = vmul.f32 %v830, %v772
        %v858 = vmul.f32 %v832, %v772
        %v859 = vmul.f32 %v834, %v772
        %v860 = vmul.f32 %v836, %v772
        %v861 = vmul.f32 %v838, %v772
        %v862 = vmul.f32 %v840, %v772
        %v863 = vmul.f32 %v842, %v772
        %v864 = vmul.f32 %v844, %v772
        %v865 = vmul.f32 %v846, %v772
        %v866 = vmul.f32 %v848, %v772
        %v867 = vmul.f32 %v850, %v772
        %v868 = vmul.f32 %v852, %v772
        %v869 = vadd.f32 %v853, 1e-05
        %v870 = vadd.f32 %v854, 1e-05
        %v871 = vadd.f32 %v855, 1e-05
        %v872 = vadd.f32 %v856, 1e-05
        %v873 = vadd.f32 %v857, 1e-05
        %v874 = vadd.f32 %v858, 1e-05
        %v875 = vadd.f32 %v859, 1e-05
        %v876 = vadd.f32 %v860, 1e-05
        %v877 = vadd.f32 %v861, 1e-05
        %v878 = vadd.f32 %v862, 1e-05
        %v879 = vadd.f32 %v863, 1e-05
        %v880 = vadd.f32 %v864, 1e-05
        %v881 = vadd.f32 %v865, 1e-05
        %v882 = vadd.f32 %v866, 1e-05
        %v883 = vadd.f32 %v867, 1e-05
        %v884 = vadd.f32 %v868, 1e-05
        %v885 = vrsqrt.pop %v869
        %v886 = vrsqrt.pop %v870
        %v887 = vrsqrt.pop %v871
        %v888 = vrsqrt.pop %v872
        %v889 = vrsqrt.pop %v873
        %v890 = vrsqrt.pop %v874
        %v891 = vrsqrt.pop %v875
        %v892 = vrsqrt.pop %v876
        %v893 = vrsqrt.pop %v877
        %v894 = vrsqrt.pop %v878
        %v895 = vrsqrt.pop %v879
        %v896 = vrsqrt.pop %v880
        %v897 = vrsqrt.pop %v881
        %v898 = vrsqrt.pop %v882
        %v899 = vrsqrt.pop %v883
        %v900 = vrsqrt.pop %v884
        %v901 = vmul.f32 %v789, %v885
        %v902 = vmul.f32 %v790, %v886
        %v903 = vmul.f32 %v791, %v887
        %v904 = vmul.f32 %v792, %v888
        %v905 = vmul.f32 %v793, %v889
        %v906 = vmul.f32 %v794, %v890
        %v907 = vmul.f32 %v795, %v891
        %v908 = vmul.f32 %v796, %v892
        %v909 = vmul.f32 %v797, %v893
        %v910 = vmul.f32 %v798, %v894
        %v911 = vmul.f32 %v799, %v895
        %v912 = vmul.f32 %v800, %v896
        %v913 = vmul.f32 %v801, %v897
        %v914 = vmul.f32 %v802, %v898
        %v915 = vmul.f32 %v803, %v899
        %v916 = vmul.f32 %v804, %v900
        %v917 = vlaneseq
        %v918 = vshrl.u32 %v917, 7
        %v919 = vsub.s32 0, %v918
        %v920 = vrot.slane %v612, %v919
        %v921 = vmul.f32 %v901, %v920
        %v922 = vmul.f32 %v902, %v920
        %v923 = vmul.f32 %v903, %v920
        %v924 = vmul.f32 %v904, %v920
        %v925 = vmul.f32 %v905, %v920
        %v926 = vmul.f32 %v906, %v920
        %v927 = vmul.f32 %v907, %v920
        %v928 = vmul.f32 %v908, %v920
        %v929 = vmul.f32 %v909, %v920
        %v930 = vmul.f32 %v910, %v920
        %v931 = vmul.f32 %v911, %v920
        %v932 = vmul.f32 %v912, %v920
        %v933 = vmul.f32 %v913, %v920
        %v934 = vmul.f32 %v914, %v920
        %v935 = vmul.f32 %v915, %v920
        %v936 = vmul.f32 %v916, %v920
        %v937 = vlaneseq
        %v938 = vshrl.u32 %v937, 7
        %v939 = vsub.s32 1, %v938
        %v940 = vrot.slane %v612, %v939
        %v941 = vadd.f32 %v921, %v940
        %v942 = vadd.f32 %v922, %v940
        %v943 = vadd.f32 %v923, %v940
        %v944 = vadd.f32 %v924, %v940
        %v945 = vadd.f32 %v925, %v940
        %v946 = vadd.f32 %v926, %v940
        %v947 = vadd.f32 %v927, %v940
        %v948 = vadd.f32 %v928, %v940
        %v949 = vadd.f32 %v929, %v940
        %v950 = vadd.f32 %v930, %v940
        %v951 = vadd.f32 %v931, %v940
        %v952 = vadd.f32 %v932, %v940
        %v953 = vadd.f32 %v933, %v940
        %v954 = vadd.f32 %v934, %v940
        %v955 = vadd.f32 %v935, %v940
        %v956 = vadd.f32 %v936, %v940
        %v957 = vxor.u32 %v941, 2147483648
        %v958 = vxor.u32 %v942, 2147483648
        %v959 = vxor.u32 %v943, 2147483648
        %v960 = vxor.u32 %v944, 2147483648
        %v961 = vxor.u32 %v945, 2147483648
        %v962 = vxor.u32 %v946, 2147483648
        %v963 = vxor.u32 %v947, 2147483648
        %v964 = vxor.u32 %v948, 2147483648
        %v965 = vxor.u32 %v949, 2147483648
        %v966 = vxor.u32 %v950, 2147483648
        %v967 = vxor.u32 %v951, 2147483648
        %v968 = vxor.u32 %v952, 2147483648
        %v969 = vxor.u32 %v953, 2147483648
        %v970 = vxor.u32 %v954, 2147483648
        %v971 = vxor.u32 %v955, 2147483648
        %v972 = vxor.u32 %v956, 2147483648
        %v973 = vmul.f32 %v957, 1.442695
        %v974 = vpow.pop %v973
        %v975 = vmul.f32 %v958, 1.442695
        %v976 = vpow.pop %v975
        %v977 = vmul.f32 %v959, 1.442695
        %v978 = vpow.pop %v977
        %v979 = vmul.f32 %v960, 1.442695
        %v980 = vpow.pop %v979
        %v981 = vmul.f32 %v961, 1.442695
        %v982 = vpow.pop %v981
        %v983 = vmul.f32 %v962, 1.442695
        %v984 = vpow.pop %v983
        %v985 = vmul.f32 %v963, 1.442695
        %v986 = vpow.pop %v985
        %v987 = vmul.f32 %v964, 1.442695
        %v988 = vpow.pop %v987
        %v989 = vmul.f32 %v965, 1.442695
        %v990 = vpow.pop %v989
        %v991 = vmul.f32 %v966, 1.442695
        %v992 = vpow.pop %v991
        %v993 = vmul.f32 %v967, 1.442695
        %v994 = vpow.pop %v993
        %v995 = vmul.f32 %v968, 1.442695
        %v996 = vpow.pop %v995
        %v997 = vmul.f32 %v969, 1.442695
        %v998 = vpow.pop %v997
        %v999 = vmul.f32 %v970, 1.442695
        %v1000 = vpow.pop %v999
        %v1001 = vmul.f32 %v971, 1.442695
        %v1002 = vpow.pop %v1001
        %v1003 = vmul.f32 %v972, 1.442695
        %v1004 = vpow.pop %v1003
        %v1005 = vadd.f32 %v974, 1.0
        %v1006 = vadd.f32 %v976, 1.0
        %v1007 = vadd.f32 %v978, 1.0
        %v1008 = vadd.f32 %v980, 1.0
        %v1009 = vadd.f32 %v982, 1.0
        %v1010 = vadd.f32 %v984, 1.0
        %v1011 = vadd.f32 %v986, 1.0
        %v1012 = vadd.f32 %v988, 1.0
        %v1013 = vadd.f32 %v990, 1.0
        %v1014 = vadd.f32 %v992, 1.0
        %v1015 = vadd.f32 %v994, 1.0
        %v1016 = vadd.f32 %v996, 1.0
        %v1017 = vadd.f32 %v998, 1.0
        %v1018 = vadd.f32 %v1000, 1.0
        %v1019 = vadd.f32 %v1002, 1.0
        %v1020 = vadd.f32 %v1004, 1.0
        %v1021 = vrcp.pop %v1005
        %v1022 = vmul.f32 1.0, %v1021
        %v1023 = vrcp.pop %v1006
        %v1024 = vmul.f32 1.0, %v1023
        %v1025 = vrcp.pop %v1007
        %v1026 = vmul.f32 1.0, %v1025
        %v1027 = vrcp.pop %v1008
        %v1028 = vmul.f32 1.0, %v1027
        %v1029 = vrcp.pop %v1009
        %v1030 = vmul.f32 1.0, %v1029
        %v1031 = vrcp.pop %v1010
        %v1032 = vmul.f32 1.0, %v1031
        %v1033 = vrcp.pop %v1011
        %v1034 = vmul.f32 1.0, %v1033
        %v1035 = vrcp.pop %v1012
        %v1036 = vmul.f32 1.0, %v1035
        %v1037 = vrcp.pop %v1013
        %v1038 = vmul.f32 1.0, %v1037
        %v1039 = vrcp.pop %v1014
        %v1040 = vmul.f32 1.0, %v1039
        %v1041 = vrcp.pop %v1015
        %v1042 = vmul.f32 1.0, %v1041
        %v1043 = vrcp.pop %v1016
        %v1044 = vmul.f32 1.0, %v1043
        %v1045 = vrcp.pop %v1017
        %v1046 = vmul.f32 1.0, %v1045
        %v1047 = vrcp.pop %v1018
        %v1048 = vmul.f32 1.0, %v1047
        %v1049 = vrcp.pop %v1019
        %v1050 = vmul.f32 1.0, %v1049
        %v1051 = vrcp.pop %v1020
        %v1052 = vmul.f32 1.0, %v1051
        %v1053 = vmul.f32 %v941, %v1022
        %v1054 = vmul.f32 %v942, %v1024
        %v1055 = vmul.f32 %v943, %v1026
        %v1056 = vmul.f32 %v944, %v1028
        %v1057 = vmul.f32 %v945, %v1030
        %v1058 = vmul.f32 %v946, %v1032
        %v1059 = vmul.f32 %v947, %v1034
        %v1060 = vmul.f32 %v948, %v1036
        %v1061 = vmul.f32 %v949, %v1038
        %v1062 = vmul.f32 %v950, %v1040
        %v1063 = vmul.f32 %v951, %v1042
        %v1064 = vmul.f32 %v952, %v1044
        %v1065 = vmul.f32 %v953, %v1046
        %v1066 = vmul.f32 %v954, %v1048
        %v1067 = vmul.f32 %v955, %v1050
        %v1068 = vmul.f32 %v956, %v1052
        %v1069 = vpack.c.bf16 %v1054, %v1053
        %v1070 = vpack.c.bf16 %v1056, %v1055
        %v1071 = vpack.c.bf16 %v1058, %v1057
        %v1072 = vpack.c.bf16 %v1060, %v1059
        %v1073 = vpack.c.bf16 %v1062, %v1061
        %v1074 = vpack.c.bf16 %v1064, %v1063
        %v1075 = vpack.c.bf16 %v1066, %v1065
        %v1076 = vpack.c.bf16 %v1068, %v1067
        %v1078 = vlaneseq
        %v1079 = vshrl.u32 %v1078, 7
        %v1080 = vsub.s32 0, %v1079
        %v1081 = vrot.slane %v645, %v1080
        %v1082 = vlaneseq
        %v1083 = vshrl.u32 %v1082, 7
        %v1084 = vsub.s32 1, %v1083
        %v1085 = vrot.slane %v645, %v1084
        %v1086 = vlaneseq
        %v1087 = vshrl.u32 %v1086, 7
        %v1088 = vsub.s32 2, %v1087
        %v1089 = vrot.slane %v645, %v1088
        %v1125 = vunpack.c.l.b16 %v613
        %v1126 = vunpack.c.h.b16 %v613
        %v1127 = vunpack.c.l.b16 %v614
        %v1128 = vunpack.c.l.b16 %v615
        %v1129 = vunpack.c.h.b16 %v615
        %v1130 = vunpack.c.l.b16 %v616
        %v1131 = vunpack.c.l.b16 %v617
        %v1132 = vunpack.c.h.b16 %v617
        %v1133 = vunpack.c.l.b16 %v618
        %v1134 = vunpack.c.l.b16 %v619
        %v1135 = vunpack.c.h.b16 %v619
        %v1136 = vunpack.c.l.b16 %v620
        %v1137 = vunpack.c.l.b16 %v621
        %v1138 = vunpack.c.h.b16 %v621
        %v1139 = vunpack.c.l.b16 %v622
        %v1140 = vunpack.c.l.b16 %v623
        %v1141 = vunpack.c.h.b16 %v623
        %v1142 = vunpack.c.l.b16 %v624
        %v1143 = vunpack.c.l.b16 %v625
        %v1144 = vunpack.c.h.b16 %v625
        %v1145 = vunpack.c.l.b16 %v626
        %v1146 = vunpack.c.l.b16 %v627
        %v1147 = vunpack.c.h.b16 %v627
        %v1148 = vunpack.c.l.b16 %v628
        %v1149 = vunpack.c.l.b16 %v629
        %v1150 = vunpack.c.h.b16 %v629
        %v1151 = vunpack.c.l.b16 %v630
        %v1152 = vunpack.c.l.b16 %v631
        %v1153 = vunpack.c.h.b16 %v631
        %v1154 = vunpack.c.l.b16 %v632
        %v1155 = vunpack.c.l.b16 %v633
        %v1156 = vunpack.c.h.b16 %v633
        %v1157 = vunpack.c.l.b16 %v634
        %v1158 = vunpack.c.l.b16 %v635
        %v1159 = vunpack.c.h.b16 %v635
        %v1160 = vunpack.c.l.b16 %v636
        %v1161 = vunpack.c.l.b16 %v637
        %v1162 = vunpack.c.h.b16 %v637
        %v1163 = vunpack.c.l.b16 %v638
        %v1164 = vunpack.c.l.b16 %v639
        %v1165 = vunpack.c.h.b16 %v639
        %v1166 = vunpack.c.l.b16 %v640
        %v1167 = vunpack.c.l.b16 %v641
        %v1168 = vunpack.c.h.b16 %v641
        %v1169 = vunpack.c.l.b16 %v642
        %v1170 = vunpack.c.l.b16 %v643
        %v1171 = vunpack.c.h.b16 %v643
        %v1172 = vunpack.c.l.b16 %v644
        %v1173 = vpack.c.b16 %v1128, %v1125
        %v1174 = vpack.c.b16 %v1129, %v1126
        %v1175 = vpack.c.b16 %v1130, %v1127
        %v1176 = vpack.c.b16 %v1134, %v1131
        %v1177 = vpack.c.b16 %v1135, %v1132
        %v1178 = vpack.c.b16 %v1136, %v1133
        %v1179 = vpack.c.b16 %v1140, %v1137
        %v1180 = vpack.c.b16 %v1141, %v1138
        %v1181 = vpack.c.b16 %v1142, %v1139
        %v1182 = vpack.c.b16 %v1146, %v1143
        %v1183 = vpack.c.b16 %v1147, %v1144
        %v1184 = vpack.c.b16 %v1148, %v1145
        %v1185 = vpack.c.b16 %v1152, %v1149
        %v1186 = vpack.c.b16 %v1153, %v1150
        %v1187 = vpack.c.b16 %v1154, %v1151
        %v1188 = vpack.c.b16 %v1158, %v1155
        %v1189 = vpack.c.b16 %v1159, %v1156
        %v1190 = vpack.c.b16 %v1160, %v1157
        %v1191 = vpack.c.b16 %v1164, %v1161
        %v1192 = vpack.c.b16 %v1165, %v1162
        %v1193 = vpack.c.b16 %v1166, %v1163
        %v1194 = vpack.c.b16 %v1170, %v1167
        %v1195 = vpack.c.b16 %v1171, %v1168
        %v1196 = vpack.c.b16 %v1172, %v1169
        %1221 = vmatprep.subr.bf16.mxu0 %v1174
        %1222 = vmatpush1.bf16.msra.mxu0 %v1173
        %1223 = vmatprep.subr.bf16.mxu0 %v1177
        %1224 = vmatpush1.bf16.msra.mxu0 %v1176
        %1225 = vmatprep.subr.bf16.mxu0 %v1180
        %1226 = vmatpush1.bf16.msra.mxu0 %v1179
        %1227 = vmatprep.subr.bf16.mxu0 %v1183
        %1228 = vmatpush1.bf16.msra.mxu0 %v1182
        %1229 = vmatprep.subr.bf16.mxu0 %v1186
        %1230 = vmatpush1.bf16.msra.mxu0 %v1185
        %1231 = vmatprep.subr.bf16.mxu0 %v1189
        %1232 = vmatpush1.bf16.msra.mxu0 %v1188
        %1233 = vmatprep.subr.bf16.mxu0 %v1192
        %1234 = vmatpush1.bf16.msra.mxu0 %v1191
        %1235 = vmatprep.subr.bf16.mxu0 %v1195
        %1236 = vmatpush1.bf16.msra.mxu0 %v1194
        %1237 = vmatprep.subr.bf16.mxu0 0
        %1238 = vmatpush1.bf16.msra.mxu0 0
        %1239 = vmatprep.subr.bf16.mxu0 0
        %1240 = vmatpush1.bf16.msra.mxu0 0
        %1241 = vmatprep.subr.bf16.mxu0 0
        %1242 = vmatpush1.bf16.msra.mxu0 0
        %1243 = vmatprep.subr.bf16.mxu0 0
        %1244 = vmatpush1.bf16.msra.mxu0 0
        %1245 = vmatprep.subr.bf16.mxu0 0
        %1246 = vmatpush1.bf16.msra.mxu0 0
        %1247 = vmatprep.subr.bf16.mxu0 0
        %1248 = vmatpush1.bf16.msra.mxu0 0
        %1249 = vmatprep.subr.bf16.mxu0 0
        %1250 = vmatpush1.bf16.msra.mxu0 0
        %1251 = vmatprep.subr.bf16.mxu0 0
        %1252 = vmatpush1.bf16.msra.mxu0 0
        %1253 = vmatprep.mubr.bf16.mxu0 0
        %1254 = vmatmul.mubr.bf16.gmra.mrb[0].mxu0 %v1069
        %v1255 = vpop.f32.mrb[0].mxu0
        %v1256 = vadd.f32 %v1081, %v1255
        %v1257 = vpop.f32.mrb[0].mxu0
        %v1258 = vadd.f32 %v1085, %v1257
        %v1259 = vpop.f32.mrb[0].mxu0
        %v1260 = vadd.f32 %v1081, %v1259
        %v1261 = vpop.f32.mrb[0].mxu0
        %v1262 = vadd.f32 %v1085, %v1261
        %1263 = vmatprep.mubr.bf16.mxu0 0
        %1264 = vmatmul.mubr.bf16.gmra.mrb[0].mxu0 %v1070
        %v1265 = vpop.f32.mrb[0].mxu0
        %v1266 = vadd.f32 %v1081, %v1265
        %v1267 = vpop.f32.mrb[0].mxu0
        %v1268 = vadd.f32 %v1085, %v1267
        %v1269 = vpop.f32.mrb[0].mxu0
        %v1270 = vadd.f32 %v1081, %v1269
        %v1271 = vpop.f32.mrb[0].mxu0
        %v1272 = vadd.f32 %v1085, %v1271
        %1273 = vmatprep.mubr.bf16.mxu0 0
        %1274 = vmatmul.mubr.bf16.gmra.mrb[0].mxu0 %v1071
        %v1275 = vpop.f32.mrb[0].mxu0
        %v1276 = vadd.f32 %v1081, %v1275
        %v1277 = vpop.f32.mrb[0].mxu0
        %v1278 = vadd.f32 %v1085, %v1277
        %v1279 = vpop.f32.mrb[0].mxu0
        %v1280 = vadd.f32 %v1081, %v1279
        %v1281 = vpop.f32.mrb[0].mxu0
        %v1282 = vadd.f32 %v1085, %v1281
        %1283 = vmatprep.mubr.bf16.mxu0 0
        %1284 = vmatmul.mubr.bf16.gmra.mrb[0].mxu0 %v1072
        %v1285 = vpop.f32.mrb[0].mxu0
        %v1286 = vadd.f32 %v1081, %v1285
        %v1287 = vpop.f32.mrb[0].mxu0
        %v1288 = vadd.f32 %v1085, %v1287
        %v1289 = vpop.f32.mrb[0].mxu0
        %v1290 = vadd.f32 %v1081, %v1289
        %v1291 = vpop.f32.mrb[0].mxu0
        %v1292 = vadd.f32 %v1085, %v1291
        %1293 = vmatprep.mubr.bf16.mxu0 0
        %1294 = vmatmul.mubr.bf16.gmra.mrb[0].mxu0 %v1073
        %v1295 = vpop.f32.mrb[0].mxu0
        %v1296 = vadd.f32 %v1081, %v1295
        %v1297 = vpop.f32.mrb[0].mxu0
        %v1298 = vadd.f32 %v1085, %v1297
        %v1299 = vpop.f32.mrb[0].mxu0
        %v1300 = vadd.f32 %v1081, %v1299
        %v1301 = vpop.f32.mrb[0].mxu0
        %v1302 = vadd.f32 %v1085, %v1301
        %1303 = vmatprep.mubr.bf16.mxu0 0
        %1304 = vmatmul.mubr.bf16.gmra.mrb[0].mxu0 %v1074
        %v1305 = vpop.f32.mrb[0].mxu0
        %v1306 = vadd.f32 %v1081, %v1305
        %v1307 = vpop.f32.mrb[0].mxu0
        %v1308 = vadd.f32 %v1085, %v1307
        %v1309 = vpop.f32.mrb[0].mxu0
        %v1310 = vadd.f32 %v1081, %v1309
        %v1311 = vpop.f32.mrb[0].mxu0
        %v1312 = vadd.f32 %v1085, %v1311
        %1313 = vmatprep.mubr.bf16.mxu0 0
        %1314 = vmatmul.mubr.bf16.gmra.mrb[0].mxu0 %v1075
        %v1315 = vpop.f32.mrb[0].mxu0
        %v1316 = vadd.f32 %v1081, %v1315
        %v1317 = vpop.f32.mrb[0].mxu0
        %v1318 = vadd.f32 %v1085, %v1317
        %v1319 = vpop.f32.mrb[0].mxu0
        %v1320 = vadd.f32 %v1081, %v1319
        %v1321 = vpop.f32.mrb[0].mxu0
        %v1322 = vadd.f32 %v1085, %v1321
        %1323 = vmatprep.mubr.bf16.mxu0 0
        %1324 = vmatmul.mubr.bf16.gmra.mrb[0].mxu0 %v1076
        %v1325 = vpop.f32.mrb[0].mxu0
        %v1326 = vadd.f32 %v1081, %v1325
        %v1327 = vpop.f32.mrb[0].mxu0
        %v1328 = vadd.f32 %v1085, %v1327
        %v1329 = vpop.f32.mrb[0].mxu0
        %v1330 = vadd.f32 %v1081, %v1329
        %v1331 = vpop.f32.mrb[0].mxu0
        %v1332 = vadd.f32 %v1085, %v1331
        %1333 = vdwg.mxu0
        %1334 = vmatprep.subr.bf16.mxu0 0
        %1335 = vmatpush1.bf16.msra.mxu0 %v1175
        %1336 = vmatprep.subr.bf16.mxu0 0
        %1337 = vmatpush1.bf16.msra.mxu0 %v1178
        %1338 = vmatprep.subr.bf16.mxu0 0
        %1339 = vmatpush1.bf16.msra.mxu0 %v1181
        %1340 = vmatprep.subr.bf16.mxu0 0
        %1341 = vmatpush1.bf16.msra.mxu0 %v1184
        %1342 = vmatprep.subr.bf16.mxu0 0
        %1343 = vmatpush1.bf16.msra.mxu0 %v1187
        %1344 = vmatprep.subr.bf16.mxu0 0
        %1345 = vmatpush1.bf16.msra.mxu0 %v1190
        %1346 = vmatprep.subr.bf16.mxu0 0
        %1347 = vmatpush1.bf16.msra.mxu0 %v1193
        %1348 = vmatprep.subr.bf16.mxu0 0
        %1349 = vmatpush1.bf16.msra.mxu0 %v1196
        %1350 = vmatprep.subr.bf16.mxu0 0
        %1351 = vmatpush1.bf16.msra.mxu0 0
        %1352 = vmatprep.subr.bf16.mxu0 0
        %1353 = vmatpush1.bf16.msra.mxu0 0
        %1354 = vmatprep.subr.bf16.mxu0 0
        %1355 = vmatpush1.bf16.msra.mxu0 0
        %1356 = vmatprep.subr.bf16.mxu0 0
        %1357 = vmatpush1.bf16.msra.mxu0 0
        %1358 = vmatprep.subr.bf16.mxu0 0
        %1359 = vmatpush1.bf16.msra.mxu0 0
        %1360 = vmatprep.subr.bf16.mxu0 0
        %1361 = vmatpush1.bf16.msra.mxu0 0
        %1362 = vmatprep.subr.bf16.mxu0 0
        %1363 = vmatpush1.bf16.msra.mxu0 0
        %1364 = vmatprep.subr.bf16.mxu0 0
        %1365 = vmatpush1.bf16.msra.mxu0 0
        %1366 = vmatprep.mubr.bf16.mxu0 0
        %1367 = vmatmul.mubr.bf16.gmra.mrb[0].mxu0 %v1069
        %v1368 = vpop.f32.mrb[0].mxu0
        %v1369 = vadd.f32 %v1089, %v1368
        %v1370 = vpop.f32.mrb[0].mxu0
        %v1371 = vpop.f32.mrb[0].mxu0
        %v1372 = vadd.f32 %v1089, %v1371
        %v1373 = vpop.f32.mrb[0].mxu0
        %1374 = vmatprep.mubr.bf16.mxu0 0
        %1375 = vmatmul.mubr.bf16.gmra.mrb[0].mxu0 %v1070
        %v1376 = vpop.f32.mrb[0].mxu0
        %v1377 = vadd.f32 %v1089, %v1376
        %v1378 = vpop.f32.mrb[0].mxu0
        %v1379 = vpop.f32.mrb[0].mxu0
        %v1380 = vadd.f32 %v1089, %v1379
        %v1381 = vpop.f32.mrb[0].mxu0
        %1382 = vmatprep.mubr.bf16.mxu0 0
        %1383 = vmatmul.mubr.bf16.gmra.mrb[0].mxu0 %v1071
        %v1384 = vpop.f32.mrb[0].mxu0
        %v1385 = vadd.f32 %v1089, %v1384
        %v1386 = vpop.f32.mrb[0].mxu0
        %v1387 = vpop.f32.mrb[0].mxu0
        %v1388 = vadd.f32 %v1089, %v1387
        %v1389 = vpop.f32.mrb[0].mxu0
        %1390 = vmatprep.mubr.bf16.mxu0 0
        %1391 = vmatmul.mubr.bf16.gmra.mrb[0].mxu0 %v1072
        %v1392 = vpop.f32.mrb[0].mxu0
        %v1393 = vadd.f32 %v1089, %v1392
        %v1394 = vpop.f32.mrb[0].mxu0
        %v1395 = vpop.f32.mrb[0].mxu0
        %v1396 = vadd.f32 %v1089, %v1395
        %v1397 = vpop.f32.mrb[0].mxu0
        %1398 = vmatprep.mubr.bf16.mxu0 0
        %1399 = vmatmul.mubr.bf16.gmra.mrb[0].mxu0 %v1073
        %v1400 = vpop.f32.mrb[0].mxu0
        %v1401 = vadd.f32 %v1089, %v1400
        %v1402 = vpop.f32.mrb[0].mxu0
        %v1403 = vpop.f32.mrb[0].mxu0
        %v1404 = vadd.f32 %v1089, %v1403
        %v1405 = vpop.f32.mrb[0].mxu0
        %1406 = vmatprep.mubr.bf16.mxu0 0
        %1407 = vmatmul.mubr.bf16.gmra.mrb[0].mxu0 %v1074
        %v1408 = vpop.f32.mrb[0].mxu0
        %v1409 = vadd.f32 %v1089, %v1408
        %v1410 = vpop.f32.mrb[0].mxu0
        %v1411 = vpop.f32.mrb[0].mxu0
        %v1412 = vadd.f32 %v1089, %v1411
        %v1413 = vpop.f32.mrb[0].mxu0
        %1414 = vmatprep.mubr.bf16.mxu0 0
        %1415 = vmatmul.mubr.bf16.gmra.mrb[0].mxu0 %v1075
        %v1416 = vpop.f32.mrb[0].mxu0
        %v1417 = vadd.f32 %v1089, %v1416
        %v1418 = vpop.f32.mrb[0].mxu0
        %v1419 = vpop.f32.mrb[0].mxu0
        %v1420 = vadd.f32 %v1089, %v1419
        %v1421 = vpop.f32.mrb[0].mxu0
        %1422 = vmatprep.mubr.bf16.mxu0 0
        %1423 = vmatmul.mubr.bf16.gmra.mrb[0].mxu0 %v1076
        %v1424 = vpop.f32.mrb[0].mxu0
        %v1425 = vadd.f32 %v1089, %v1424
        %v1426 = vpop.f32.mrb[0].mxu0
        %v1427 = vpop.f32.mrb[0].mxu0
        %v1428 = vadd.f32 %v1089, %v1427
        %v1429 = vpop.f32.mrb[0].mxu0
        %1430 = vdwg.mxu0
        %v1431 = vmul.f32 %v1256, 0.125
        %v1432 = vmul.f32 %v1260, 0.125
        %v1433 = vmul.f32 %v1266, 0.125
        %v1434 = vmul.f32 %v1270, 0.125
        %v1435 = vmul.f32 %v1276, 0.125
        %v1436 = vmul.f32 %v1280, 0.125
        %v1437 = vmul.f32 %v1286, 0.125
        %v1438 = vmul.f32 %v1290, 0.125
        %v1439 = vmul.f32 %v1296, 0.125
        %v1440 = vmul.f32 %v1300, 0.125
        %v1441 = vmul.f32 %v1306, 0.125
        %v1442 = vmul.f32 %v1310, 0.125
        %v1443 = vmul.f32 %v1316, 0.125
        %v1444 = vmul.f32 %v1320, 0.125
        %v1445 = vmul.f32 %v1326, 0.125
        %v1446 = vmul.f32 %v1330, 0.125
        %v1447 = vpack.c.bf16 %v1432, %v1431
        %v1448 = vpack.c.bf16 %v1434, %v1433
        %v1449 = vpack.c.bf16 %v1436, %v1435
        %v1450 = vpack.c.bf16 %v1438, %v1437
        %v1451 = vpack.c.bf16 %v1440, %v1439
        %v1452 = vpack.c.bf16 %v1442, %v1441
        %v1453 = vpack.c.bf16 %v1444, %v1443
        %v1454 = vpack.c.bf16 %v1446, %v1445
        %v1455 = vpack.c.bf16 %v1262, %v1258
        %v1456 = vpack.c.bf16 %v1272, %v1268
        %v1457 = vpack.c.bf16 %v1282, %v1278
        %v1458 = vpack.c.bf16 %v1292, %v1288
        %v1459 = vpack.c.bf16 %v1302, %v1298
        %v1460 = vpack.c.bf16 %v1312, %v1308
        %v1461 = vpack.c.bf16 %v1322, %v1318
        %v1462 = vpack.c.bf16 %v1332, %v1328
        %v1463 = vpack.c.bf16 %v1372, %v1369
        %v1464 = vpack.c.bf16 %v1380, %v1377
        %v1465 = vpack.c.bf16 %v1388, %v1385
        %v1466 = vpack.c.bf16 %v1396, %v1393
        %v1467 = vpack.c.bf16 %v1404, %v1401
        %v1468 = vpack.c.bf16 %v1412, %v1409
        %v1469 = vpack.c.bf16 %v1420, %v1417
        %v1470 = vpack.c.bf16 %v1428, %v1425
        %vm1471 = vcmask 523264
        %v1473 = vsel %vm1471, %v1447, 0
        %v1476 = vsel %vm1471, %v1455, 0
        %1478 = vmatprep.subr.bf16.mxu0 0
        %1479 = vmatpush1.bf16.xpose.msra.mxu0 %v1476
        %1480 = vmatprep.subr.bf16.mxu0 0
        %1481 = vmatpush1.bf16.xpose.msra.mxu0 0
        %1482 = vmatprep.subr.bf16.mxu0 0
        %1483 = vmatpush1.bf16.xpose.msra.mxu0 0
        %1484 = vmatprep.subr.bf16.mxu0 0
        %1485 = vmatpush1.bf16.xpose.msra.mxu0 0
        %1486 = vmatprep.subr.bf16.mxu0 0
        %1487 = vmatpush1.bf16.xpose.msra.mxu0 0
        %1488 = vmatprep.subr.bf16.mxu0 0
        %1489 = vmatpush1.bf16.xpose.msra.mxu0 0
        %1490 = vmatprep.subr.bf16.mxu0 0
        %1491 = vmatpush1.bf16.xpose.msra.mxu0 0
        %1492 = vmatprep.subr.bf16.mxu0 0
        %1493 = vmatpush1.bf16.xpose.msra.mxu0 0
        %1494 = vmatprep.subr.bf16.mxu0 0
        %1495 = vmatpush1.bf16.xpose.msra.mxu0 0
        %1496 = vmatprep.subr.bf16.mxu0 0
        %1497 = vmatpush1.bf16.xpose.msra.mxu0 0
        %1498 = vmatprep.subr.bf16.mxu0 0
        %1499 = vmatpush1.bf16.xpose.msra.mxu0 0
        %1500 = vmatprep.subr.bf16.mxu0 0
        %1501 = vmatpush1.bf16.xpose.msra.mxu0 0
        %1502 = vmatprep.subr.bf16.mxu0 0
        %1503 = vmatpush1.bf16.xpose.msra.mxu0 0
        %1504 = vmatprep.subr.bf16.mxu0 0
        %1505 = vmatpush1.bf16.xpose.msra.mxu0 0
        %1506 = vmatprep.subr.bf16.mxu0 0
        %1507 = vmatpush1.bf16.xpose.msra.mxu0 0
        %1508 = vmatprep.subr.bf16.mxu0 0
        %1509 = vmatpush1.bf16.xpose.msra.mxu0 0
        %1510 = vmatprep.mubr.bf16.mxu0 0
        %1511 = vmatmul.mubr.bf16.gmra.mrb[0].mxu0 %v1473
        %v1512 = vpop.f32.mrb[0].mxu0
        %v1513 = vadd.f32 0.0, %v1512
        %v1514 = vpop.f32.mrb[0].mxu0
        %v1515 = vpop.f32.mrb[0].mxu0
        %v1516 = vadd.f32 0.0, %v1515
        %v1517 = vpop.f32.mrb[0].mxu0
        %1518 = vdwg.mxu0
        %v1520 = vsel %vm1471, %v1448, 0
        %v1523 = vsel %vm1471, %v1456, 0
        %1525 = vmatprep.subr.bf16.mxu0 0
        %1526 = vmatpush1.bf16.xpose.msra.mxu0 %v1523
        %1527 = vmatprep.subr.bf16.mxu0 0
        %1528 = vmatpush1.bf16.xpose.msra.mxu0 0
        %1529 = vmatprep.subr.bf16.mxu0 0
        %1530 = vmatpush1.bf16.xpose.msra.mxu0 0
        %1531 = vmatprep.subr.bf16.mxu0 0
        %1532 = vmatpush1.bf16.xpose.msra.mxu0 0
        %1533 = vmatprep.subr.bf16.mxu0 0
        %1534 = vmatpush1.bf16.xpose.msra.mxu0 0
        %1535 = vmatprep.subr.bf16.mxu0 0
        %1536 = vmatpush1.bf16.xpose.msra.mxu0 0
        %1537 = vmatprep.subr.bf16.mxu0 0
        %1538 = vmatpush1.bf16.xpose.msra.mxu0 0
        %1539 = vmatprep.subr.bf16.mxu0 0
        %1540 = vmatpush1.bf16.xpose.msra.mxu0 0
        %1541 = vmatprep.subr.bf16.mxu0 0
        %1542 = vmatpush1.bf16.xpose.msra.mxu0 0
        %1543 = vmatprep.subr.bf16.mxu0 0
        %1544 = vmatpush1.bf16.xpose.msra.mxu0 0
        %1545 = vmatprep.subr.bf16.mxu0 0
        %1546 = vmatpush1.bf16.xpose.msra.mxu0 0
        %1547 = vmatprep.subr.bf16.mxu0 0
        %1548 = vmatpush1.bf16.xpose.msra.mxu0 0
        %1549 = vmatprep.subr.bf16.mxu0 0
        %1550 = vmatpush1.bf16.xpose.msra.mxu0 0
        %1551 = vmatprep.subr.bf16.mxu0 0
        %1552 = vmatpush1.bf16.xpose.msra.mxu0 0
        %1553 = vmatprep.subr.bf16.mxu0 0
        %1554 = vmatpush1.bf16.xpose.msra.mxu0 0
        %1555 = vmatprep.subr.bf16.mxu0 0
        %1556 = vmatpush1.bf16.xpose.msra.mxu0 0
        %1557 = vmatprep.mubr.bf16.mxu0 0
        %1558 = vmatmul.mubr.bf16.gmra.mrb[0].mxu0 %v1520
        %v1559 = vpop.f32.mrb[0].mxu0
        %v1560 = vadd.f32 0.0, %v1559
        %v1561 = vpop.f32.mrb[0].mxu0
        %v1562 = vpop.f32.mrb[0].mxu0
        %v1563 = vadd.f32 0.0, %v1562
        %v1564 = vpop.f32.mrb[0].mxu0
        %1565 = vdwg.mxu0
        %v1567 = vsel %vm1471, %v1449, 0
        %v1570 = vsel %vm1471, %v1457, 0
        %1572 = vmatprep.subr.bf16.mxu0 0
        %1573 = vmatpush1.bf16.xpose.msra.mxu0 %v1570
        %1574 = vmatprep.subr.bf16.mxu0 0
        %1575 = vmatpush1.bf16.xpose.msra.mxu0 0
        %1576 = vmatprep.subr.bf16.mxu0 0
        %1577 = vmatpush1.bf16.xpose.msra.mxu0 0
        %1578 = vmatprep.subr.bf16.mxu0 0
        %1579 = vmatpush1.bf16.xpose.msra.mxu0 0
        %1580 = vmatprep.subr.bf16.mxu0 0
        %1581 = vmatpush1.bf16.xpose.msra.mxu0 0
        %1582 = vmatprep.subr.bf16.mxu0 0
        %1583 = vmatpush1.bf16.xpose.msra.mxu0 0
        %1584 = vmatprep.subr.bf16.mxu0 0
        %1585 = vmatpush1.bf16.xpose.msra.mxu0 0
        %1586 = vmatprep.subr.bf16.mxu0 0
        %1587 = vmatpush1.bf16.xpose.msra.mxu0 0
        %1588 = vmatprep.subr.bf16.mxu0 0
        %1589 = vmatpush1.bf16.xpose.msra.mxu0 0
        %1590 = vmatprep.subr.bf16.mxu0 0
        %1591 = vmatpush1.bf16.xpose.msra.mxu0 0
        %1592 = vmatprep.subr.bf16.mxu0 0
        %1593 = vmatpush1.bf16.xpose.msra.mxu0 0
        %1594 = vmatprep.subr.bf16.mxu0 0
        %1595 = vmatpush1.bf16.xpose.msra.mxu0 0
        %1596 = vmatprep.subr.bf16.mxu0 0
        %1597 = vmatpush1.bf16.xpose.msra.mxu0 0
        %1598 = vmatprep.subr.bf16.mxu0 0
        %1599 = vmatpush1.bf16.xpose.msra.mxu0 0
        %1600 = vmatprep.subr.bf16.mxu0 0
        %1601 = vmatpush1.bf16.xpose.msra.mxu0 0
        %1602 = vmatprep.subr.bf16.mxu0 0
        %1603 = vmatpush1.bf16.xpose.msra.mxu0 0
        %1604 = vmatprep.mubr.bf16.mxu0 0
        %1605 = vmatmul.mubr.bf16.gmra.mrb[0].mxu0 %v1567
        %v1606 = vpop.f32.mrb[0].mxu0
        %v1607 = vadd.f32 0.0, %v1606
        %v1608 = vpop.f32.mrb[0].mxu0
        %v1609 = vpop.f32.mrb[0].mxu0
        %v1610 = vadd.f32 0.0, %v1609
        %v1611 = vpop.f32.mrb[0].mxu0
        %1612 = vdwg.mxu0
        %v1614 = vsel %vm1471, %v1450, 0
        %v1617 = vsel %vm1471, %v1458, 0
        %1619 = vmatprep.subr.bf16.mxu0 0
        %1620 = vmatpush1.bf16.xpose.msra.mxu0 %v1617
        %1621 = vmatprep.subr.bf16.mxu0 0
        %1622 = vmatpush1.bf16.xpose.msra.mxu0 0
        %1623 = vmatprep.subr.bf16.mxu0 0
        %1624 = vmatpush1.bf16.xpose.msra.mxu0 0
        %1625 = vmatprep.subr.bf16.mxu0 0
        %1626 = vmatpush1.bf16.xpose.msra.mxu0 0
        %1627 = vmatprep.subr.bf16.mxu0 0
        %1628 = vmatpush1.bf16.xpose.msra.mxu0 0
        %1629 = vmatprep.subr.bf16.mxu0 0
        %1630 = vmatpush1.bf16.xpose.msra.mxu0 0
        %1631 = vmatprep.subr.bf16.mxu0 0
        %1632 = vmatpush1.bf16.xpose.msra.mxu0 0
        %1633 = vmatprep.subr.bf16.mxu0 0
        %1634 = vmatpush1.bf16.xpose.msra.mxu0 0
        %1635 = vmatprep.subr.bf16.mxu0 0
        %1636 = vmatpush1.bf16.xpose.msra.mxu0 0
        %1637 = vmatprep.subr.bf16.mxu0 0
        %1638 = vmatpush1.bf16.xpose.msra.mxu0 0
        %1639 = vmatprep.subr.bf16.mxu0 0
        %1640 = vmatpush1.bf16.xpose.msra.mxu0 0
        %1641 = vmatprep.subr.bf16.mxu0 0
        %1642 = vmatpush1.bf16.xpose.msra.mxu0 0
        %1643 = vmatprep.subr.bf16.mxu0 0
        %1644 = vmatpush1.bf16.xpose.msra.mxu0 0
        %1645 = vmatprep.subr.bf16.mxu0 0
        %1646 = vmatpush1.bf16.xpose.msra.mxu0 0
        %1647 = vmatprep.subr.bf16.mxu0 0
        %1648 = vmatpush1.bf16.xpose.msra.mxu0 0
        %1649 = vmatprep.subr.bf16.mxu0 0
        %1650 = vmatpush1.bf16.xpose.msra.mxu0 0
        %1651 = vmatprep.mubr.bf16.mxu0 0
        %1652 = vmatmul.mubr.bf16.gmra.mrb[0].mxu0 %v1614
        %v1653 = vpop.f32.mrb[0].mxu0
        %v1654 = vadd.f32 0.0, %v1653
        %v1655 = vpop.f32.mrb[0].mxu0
        %v1656 = vpop.f32.mrb[0].mxu0
        %v1657 = vadd.f32 0.0, %v1656
        %v1658 = vpop.f32.mrb[0].mxu0
        %1659 = vdwg.mxu0
        %v1661 = vsel %vm1471, %v1451, 0
        %v1664 = vsel %vm1471, %v1459, 0
        %1666 = vmatprep.subr.bf16.mxu0 0
        %1667 = vmatpush1.bf16.xpose.msra.mxu0 %v1664
        %1668 = vmatprep.subr.bf16.mxu0 0
        %1669 = vmatpush1.bf16.xpose.msra.mxu0 0
        %1670 = vmatprep.subr.bf16.mxu0 0
        %1671 = vmatpush1.bf16.xpose.msra.mxu0 0
        %1672 = vmatprep.subr.bf16.mxu0 0
        %1673 = vmatpush1.bf16.xpose.msra.mxu0 0
        %1674 = vmatprep.subr.bf16.mxu0 0
        %1675 = vmatpush1.bf16.xpose.msra.mxu0 0
        %1676 = vmatprep.subr.bf16.mxu0 0
        %1677 = vmatpush1.bf16.xpose.msra.mxu0 0
        %1678 = vmatprep.subr.bf16.mxu0 0
        %1679 = vmatpush1.bf16.xpose.msra.mxu0 0
        %1680 = vmatprep.subr.bf16.mxu0 0
        %1681 = vmatpush1.bf16.xpose.msra.mxu0 0
        %1682 = vmatprep.subr.bf16.mxu0 0
        %1683 = vmatpush1.bf16.xpose.msra.mxu0 0
        %1684 = vmatprep.subr.bf16.mxu0 0
        %1685 = vmatpush1.bf16.xpose.msra.mxu0 0
        %1686 = vmatprep.subr.bf16.mxu0 0
        %1687 = vmatpush1.bf16.xpose.msra.mxu0 0
        %1688 = vmatprep.subr.bf16.mxu0 0
        %1689 = vmatpush1.bf16.xpose.msra.mxu0 0
        %1690 = vmatprep.subr.bf16.mxu0 0
        %1691 = vmatpush1.bf16.xpose.msra.mxu0 0
        %1692 = vmatprep.subr.bf16.mxu0 0
        %1693 = vmatpush1.bf16.xpose.msra.mxu0 0
        %1694 = vmatprep.subr.bf16.mxu0 0
        %1695 = vmatpush1.bf16.xpose.msra.mxu0 0
        %1696 = vmatprep.subr.bf16.mxu0 0
        %1697 = vmatpush1.bf16.xpose.msra.mxu0 0
        %1698 = vmatprep.mubr.bf16.mxu0 0
        %1699 = vmatmul.mubr.bf16.gmra.mrb[0].mxu0 %v1661
        %v1700 = vpop.f32.mrb[0].mxu0
        %v1701 = vadd.f32 0.0, %v1700
        %v1702 = vpop.f32.mrb[0].mxu0
        %v1703 = vpop.f32.mrb[0].mxu0
        %v1704 = vadd.f32 0.0, %v1703
        %v1705 = vpop.f32.mrb[0].mxu0
        %1706 = vdwg.mxu0
        %v1708 = vsel %vm1471, %v1452, 0
        %v1711 = vsel %vm1471, %v1460, 0
        %1713 = vmatprep.subr.bf16.mxu0 0
        %1714 = vmatpush1.bf16.xpose.msra.mxu0 %v1711
        %1715 = vmatprep.subr.bf16.mxu0 0
        %1716 = vmatpush1.bf16.xpose.msra.mxu0 0
        %1717 = vmatprep.subr.bf16.mxu0 0
        %1718 = vmatpush1.bf16.xpose.msra.mxu0 0
        %1719 = vmatprep.subr.bf16.mxu0 0
        %1720 = vmatpush1.bf16.xpose.msra.mxu0 0
        %1721 = vmatprep.subr.bf16.mxu0 0
        %1722 = vmatpush1.bf16.xpose.msra.mxu0 0
        %1723 = vmatprep.subr.bf16.mxu0 0
        %1724 = vmatpush1.bf16.xpose.msra.mxu0 0
        %1725 = vmatprep.subr.bf16.mxu0 0
        %1726 = vmatpush1.bf16.xpose.msra.mxu0 0
        %1727 = vmatprep.subr.bf16.mxu0 0
        %1728 = vmatpush1.bf16.xpose.msra.mxu0 0
        %1729 = vmatprep.subr.bf16.mxu0 0
        %1730 = vmatpush1.bf16.xpose.msra.mxu0 0
        %1731 = vmatprep.subr.bf16.mxu0 0
        %1732 = vmatpush1.bf16.xpose.msra.mxu0 0
        %1733 = vmatprep.subr.bf16.mxu0 0
        %1734 = vmatpush1.bf16.xpose.msra.mxu0 0
        %1735 = vmatprep.subr.bf16.mxu0 0
        %1736 = vmatpush1.bf16.xpose.msra.mxu0 0
        %1737 = vmatprep.subr.bf16.mxu0 0
        %1738 = vmatpush1.bf16.xpose.msra.mxu0 0
        %1739 = vmatprep.subr.bf16.mxu0 0
        %1740 = vmatpush1.bf16.xpose.msra.mxu0 0
        %1741 = vmatprep.subr.bf16.mxu0 0
        %1742 = vmatpush1.bf16.xpose.msra.mxu0 0
        %1743 = vmatprep.subr.bf16.mxu0 0
        %1744 = vmatpush1.bf16.xpose.msra.mxu0 0
        %1745 = vmatprep.mubr.bf16.mxu0 0
        %1746 = vmatmul.mubr.bf16.gmra.mrb[0].mxu0 %v1708
        %v1747 = vpop.f32.mrb[0].mxu0
        %v1748 = vadd.f32 0.0, %v1747
        %v1749 = vpop.f32.mrb[0].mxu0
        %v1750 = vpop.f32.mrb[0].mxu0
        %v1751 = vadd.f32 0.0, %v1750
        %v1752 = vpop.f32.mrb[0].mxu0
        %1753 = vdwg.mxu0
        %v1755 = vsel %vm1471, %v1453, 0
        %v1758 = vsel %vm1471, %v1461, 0
        %1760 = vmatprep.subr.bf16.mxu0 0
        %1761 = vmatpush1.bf16.xpose.msra.mxu0 %v1758
        %1762 = vmatprep.subr.bf16.mxu0 0
        %1763 = vmatpush1.bf16.xpose.msra.mxu0 0
        %1764 = vmatprep.subr.bf16.mxu0 0
        %1765 = vmatpush1.bf16.xpose.msra.mxu0 0
        %1766 = vmatprep.subr.bf16.mxu0 0
        %1767 = vmatpush1.bf16.xpose.msra.mxu0 0
        %1768 = vmatprep.subr.bf16.mxu0 0
        %1769 = vmatpush1.bf16.xpose.msra.mxu0 0
        %1770 = vmatprep.subr.bf16.mxu0 0
        %1771 = vmatpush1.bf16.xpose.msra.mxu0 0
        %1772 = vmatprep.subr.bf16.mxu0 0
        %1773 = vmatpush1.bf16.xpose.msra.mxu0 0
        %1774 = vmatprep.subr.bf16.mxu0 0
        %1775 = vmatpush1.bf16.xpose.msra.mxu0 0
        %1776 = vmatprep.subr.bf16.mxu0 0
        %1777 = vmatpush1.bf16.xpose.msra.mxu0 0
        %1778 = vmatprep.subr.bf16.mxu0 0
        %1779 = vmatpush1.bf16.xpose.msra.mxu0 0
        %1780 = vmatprep.subr.bf16.mxu0 0
        %1781 = vmatpush1.bf16.xpose.msra.mxu0 0
        %1782 = vmatprep.subr.bf16.mxu0 0
        %1783 = vmatpush1.bf16.xpose.msra.mxu0 0
        %1784 = vmatprep.subr.bf16.mxu0 0
        %1785 = vmatpush1.bf16.xpose.msra.mxu0 0
        %1786 = vmatprep.subr.bf16.mxu0 0
        %1787 = vmatpush1.bf16.xpose.msra.mxu0 0
        %1788 = vmatprep.subr.bf16.mxu0 0
        %1789 = vmatpush1.bf16.xpose.msra.mxu0 0
        %1790 = vmatprep.subr.bf16.mxu0 0
        %1791 = vmatpush1.bf16.xpose.msra.mxu0 0
        %1792 = vmatprep.mubr.bf16.mxu0 0
        %1793 = vmatmul.mubr.bf16.gmra.mrb[0].mxu0 %v1755
        %v1794 = vpop.f32.mrb[0].mxu0
        %v1795 = vadd.f32 0.0, %v1794
        %v1796 = vpop.f32.mrb[0].mxu0
        %v1797 = vpop.f32.mrb[0].mxu0
        %v1798 = vadd.f32 0.0, %v1797
        %v1799 = vpop.f32.mrb[0].mxu0
        %1800 = vdwg.mxu0
        %v1802 = vsel %vm1471, %v1454, 0
        %v1805 = vsel %vm1471, %v1462, 0
        %1807 = vmatprep.subr.bf16.mxu0 0
        %1808 = vmatpush1.bf16.xpose.msra.mxu0 %v1805
        %1809 = vmatprep.subr.bf16.mxu0 0
        %1810 = vmatpush1.bf16.xpose.msra.mxu0 0
        %1811 = vmatprep.subr.bf16.mxu0 0
        %1812 = vmatpush1.bf16.xpose.msra.mxu0 0
        %1813 = vmatprep.subr.bf16.mxu0 0
        %1814 = vmatpush1.bf16.xpose.msra.mxu0 0
        %1815 = vmatprep.subr.bf16.mxu0 0
        %1816 = vmatpush1.bf16.xpose.msra.mxu0 0
        %1817 = vmatprep.subr.bf16.mxu0 0
        %1818 = vmatpush1.bf16.xpose.msra.mxu0 0
        %1819 = vmatprep.subr.bf16.mxu0 0
        %1820 = vmatpush1.bf16.xpose.msra.mxu0 0
        %1821 = vmatprep.subr.bf16.mxu0 0
        %1822 = vmatpush1.bf16.xpose.msra.mxu0 0
        %1823 = vmatprep.subr.bf16.mxu0 0
        %1824 = vmatpush1.bf16.xpose.msra.mxu0 0
        %1825 = vmatprep.subr.bf16.mxu0 0
        %1826 = vmatpush1.bf16.xpose.msra.mxu0 0
        %1827 = vmatprep.subr.bf16.mxu0 0
        %1828 = vmatpush1.bf16.xpose.msra.mxu0 0
        %1829 = vmatprep.subr.bf16.mxu0 0
        %1830 = vmatpush1.bf16.xpose.msra.mxu0 0
        %1831 = vmatprep.subr.bf16.mxu0 0
        %1832 = vmatpush1.bf16.xpose.msra.mxu0 0
        %1833 = vmatprep.subr.bf16.mxu0 0
        %1834 = vmatpush1.bf16.xpose.msra.mxu0 0
        %1835 = vmatprep.subr.bf16.mxu0 0
        %1836 = vmatpush1.bf16.xpose.msra.mxu0 0
        %1837 = vmatprep.subr.bf16.mxu0 0
        %1838 = vmatpush1.bf16.xpose.msra.mxu0 0
        %1839 = vmatprep.mubr.bf16.mxu0 0
        %1840 = vmatmul.mubr.bf16.gmra.mrb[0].mxu0 %v1802
        %v1841 = vpop.f32.mrb[0].mxu0
        %v1842 = vadd.f32 0.0, %v1841
        %v1843 = vpop.f32.mrb[0].mxu0
        %v1844 = vpop.f32.mrb[0].mxu0
        %v1845 = vadd.f32 0.0, %v1844
        %v1846 = vpop.f32.mrb[0].mxu0
        %1847 = vdwg.mxu0
        %vm1848 = vcmask 130048
        %v1849 = vsel %vm1848, %v1513, -inf
        %1850 = vmax.xlane.f32.xlu0 %v1849
        %v1851 = vpop.xlane.xlu0 %1850
        %v1852 = vsel %vm1848, %v1516, -inf
        %1853 = vmax.xlane.f32.xlu0 %v1852
        %v1854 = vpop.xlane.xlu0 %1853
        %v1855 = vsel %vm1848, %v1560, -inf
        %1856 = vmax.xlane.f32.xlu0 %v1855
        %v1857 = vpop.xlane.xlu0 %1856
        %v1858 = vsel %vm1848, %v1563, -inf
        %1859 = vmax.xlane.f32.xlu0 %v1858
        %v1860 = vpop.xlane.xlu0 %1859
        %v1861 = vsel %vm1848, %v1607, -inf
        %1862 = vmax.xlane.f32.xlu0 %v1861
        %v1863 = vpop.xlane.xlu0 %1862
        %v1864 = vsel %vm1848, %v1610, -inf
        %1865 = vmax.xlane.f32.xlu0 %v1864
        %v1866 = vpop.xlane.xlu0 %1865
        %v1867 = vsel %vm1848, %v1654, -inf
        %1868 = vmax.xlane.f32.xlu0 %v1867
        %v1869 = vpop.xlane.xlu0 %1868
        %v1870 = vsel %vm1848, %v1657, -inf
        %1871 = vmax.xlane.f32.xlu0 %v1870
        %v1872 = vpop.xlane.xlu0 %1871
        %v1873 = vsel %vm1848, %v1701, -inf
        %1874 = vmax.xlane.f32.xlu0 %v1873
        %v1875 = vpop.xlane.xlu0 %1874
        %v1876 = vsel %vm1848, %v1704, -inf
        %1877 = vmax.xlane.f32.xlu0 %v1876
        %v1878 = vpop.xlane.xlu0 %1877
        %v1879 = vsel %vm1848, %v1748, -inf
        %1880 = vmax.xlane.f32.xlu0 %v1879
        %v1881 = vpop.xlane.xlu0 %1880
        %v1882 = vsel %vm1848, %v1751, -inf
        %1883 = vmax.xlane.f32.xlu0 %v1882
        %v1884 = vpop.xlane.xlu0 %1883
        %v1885 = vsel %vm1848, %v1795, -inf
        %1886 = vmax.xlane.f32.xlu0 %v1885
        %v1887 = vpop.xlane.xlu0 %1886
        %v1888 = vsel %vm1848, %v1798, -inf
        %1889 = vmax.xlane.f32.xlu0 %v1888
        %v1890 = vpop.xlane.xlu0 %1889
        %v1891 = vsel %vm1848, %v1842, -inf
        %1892 = vmax.xlane.f32.xlu0 %v1891
        %v1893 = vpop.xlane.xlu0 %1892
        %v1894 = vsel %vm1848, %v1845, -inf
        %1895 = vmax.xlane.f32.xlu0 %v1894
        %v1896 = vpop.xlane.xlu0 %1895
        %v1897 = vsub.f32 %v1513, %v1851
        %v1898 = vsub.f32 %v1516, %v1854
        %v1899 = vsub.f32 %v1560, %v1857
        %v1900 = vsub.f32 %v1563, %v1860
        %v1901 = vsub.f32 %v1607, %v1863
        %v1902 = vsub.f32 %v1610, %v1866
        %v1903 = vsub.f32 %v1654, %v1869
        %v1904 = vsub.f32 %v1657, %v1872
        %v1905 = vsub.f32 %v1701, %v1875
        %v1906 = vsub.f32 %v1704, %v1878
        %v1907 = vsub.f32 %v1748, %v1881
        %v1908 = vsub.f32 %v1751, %v1884
        %v1909 = vsub.f32 %v1795, %v1887
        %v1910 = vsub.f32 %v1798, %v1890
        %v1911 = vsub.f32 %v1842, %v1893
        %v1912 = vsub.f32 %v1845, %v1896
        %v1913 = vmul.f32 %v1897, 1.442695
        %v1914 = vpow.pop %v1913
        %v1915 = vmul.f32 %v1898, 1.442695
        %v1916 = vpow.pop %v1915
        %v1917 = vmul.f32 %v1899, 1.442695
        %v1918 = vpow.pop %v1917
        %v1919 = vmul.f32 %v1900, 1.442695
        %v1920 = vpow.pop %v1919
        %v1921 = vmul.f32 %v1901, 1.442695
        %v1922 = vpow.pop %v1921
        %v1923 = vmul.f32 %v1902, 1.442695
        %v1924 = vpow.pop %v1923
        %v1925 = vmul.f32 %v1903, 1.442695
        %v1926 = vpow.pop %v1925
        %v1927 = vmul.f32 %v1904, 1.442695
        %v1928 = vpow.pop %v1927
        %v1929 = vmul.f32 %v1905, 1.442695
        %v1930 = vpow.pop %v1929
        %v1931 = vmul.f32 %v1906, 1.442695
        %v1932 = vpow.pop %v1931
        %v1933 = vmul.f32 %v1907, 1.442695
        %v1934 = vpow.pop %v1933
        %v1935 = vmul.f32 %v1908, 1.442695
        %v1936 = vpow.pop %v1935
        %v1937 = vmul.f32 %v1909, 1.442695
        %v1938 = vpow.pop %v1937
        %v1939 = vmul.f32 %v1910, 1.442695
        %v1940 = vpow.pop %v1939
        %v1941 = vmul.f32 %v1911, 1.442695
        %v1942 = vpow.pop %v1941
        %v1943 = vmul.f32 %v1912, 1.442695
        %v1944 = vpow.pop %v1943
        %v1945 = vsel %vm1848, %v1914, 0.0
        %1946 = vadd.xlane.f32.xlu0 %v1945
        %v1947 = vpop.xlane.xlu0 %1946
        %v1948 = vsel %vm1848, %v1916, 0.0
        %1949 = vadd.xlane.f32.xlu0 %v1948
        %v1950 = vpop.xlane.xlu0 %1949
        %v1951 = vsel %vm1848, %v1918, 0.0
        %1952 = vadd.xlane.f32.xlu0 %v1951
        %v1953 = vpop.xlane.xlu0 %1952
        %v1954 = vsel %vm1848, %v1920, 0.0
        %1955 = vadd.xlane.f32.xlu0 %v1954
        %v1956 = vpop.xlane.xlu0 %1955
        %v1957 = vsel %vm1848, %v1922, 0.0
        %1958 = vadd.xlane.f32.xlu0 %v1957
        %v1959 = vpop.xlane.xlu0 %1958
        %v1960 = vsel %vm1848, %v1924, 0.0
        %1961 = vadd.xlane.f32.xlu0 %v1960
        %v1962 = vpop.xlane.xlu0 %1961
        %v1963 = vsel %vm1848, %v1926, 0.0
        %1964 = vadd.xlane.f32.xlu0 %v1963
        %v1965 = vpop.xlane.xlu0 %1964
        %v1966 = vsel %vm1848, %v1928, 0.0
        %1967 = vadd.xlane.f32.xlu0 %v1966
        %v1968 = vpop.xlane.xlu0 %1967
        %v1969 = vsel %vm1848, %v1930, 0.0
        %1970 = vadd.xlane.f32.xlu0 %v1969
        %v1971 = vpop.xlane.xlu0 %1970
        %v1972 = vsel %vm1848, %v1932, 0.0
        %1973 = vadd.xlane.f32.xlu0 %v1972
        %v1974 = vpop.xlane.xlu0 %1973
        %v1975 = vsel %vm1848, %v1934, 0.0
        %1976 = vadd.xlane.f32.xlu0 %v1975
        %v1977 = vpop.xlane.xlu0 %1976
        %v1978 = vsel %vm1848, %v1936, 0.0
        %1979 = vadd.xlane.f32.xlu0 %v1978
        %v1980 = vpop.xlane.xlu0 %1979
        %v1981 = vsel %vm1848, %v1938, 0.0
        %1982 = vadd.xlane.f32.xlu0 %v1981
        %v1983 = vpop.xlane.xlu0 %1982
        %v1984 = vsel %vm1848, %v1940, 0.0
        %1985 = vadd.xlane.f32.xlu0 %v1984
        %v1986 = vpop.xlane.xlu0 %1985
        %v1987 = vsel %vm1848, %v1942, 0.0
        %1988 = vadd.xlane.f32.xlu0 %v1987
        %v1989 = vpop.xlane.xlu0 %1988
        %v1990 = vsel %vm1848, %v1944, 0.0
        %1991 = vadd.xlane.f32.xlu0 %v1990
        %v1992 = vpop.xlane.xlu0 %1991
        %v1993 = vrcp.pop %v1947
        %v1994 = vrcp.pop %v1950
        %v1995 = vrcp.pop %v1953
        %v1996 = vrcp.pop %v1956
        %v1997 = vrcp.pop %v1959
        %v1998 = vrcp.pop %v1962
        %v1999 = vrcp.pop %v1965
        %v2000 = vrcp.pop %v1968
        %v2001 = vrcp.pop %v1971
        %v2002 = vrcp.pop %v1974
        %v2003 = vrcp.pop %v1977
        %v2004 = vrcp.pop %v1980
        %v2005 = vrcp.pop %v1983
        %v2006 = vrcp.pop %v1986
        %v2007 = vrcp.pop %v1989
        %v2008 = vrcp.pop %v1992
        %v2009 = vmul.f32 %v1914, %v1993
        %v2010 = vmul.f32 %v1916, %v1994
        %v2011 = vmul.f32 %v1918, %v1995
        %v2012 = vmul.f32 %v1920, %v1996
        %v2013 = vmul.f32 %v1922, %v1997
        %v2014 = vmul.f32 %v1924, %v1998
        %v2015 = vmul.f32 %v1926, %v1999
        %v2016 = vmul.f32 %v1928, %v2000
        %v2017 = vmul.f32 %v1930, %v2001
        %v2018 = vmul.f32 %v1932, %v2002
        %v2019 = vmul.f32 %v1934, %v2003
        %v2020 = vmul.f32 %v1936, %v2004
        %v2021 = vmul.f32 %v1938, %v2005
        %v2022 = vmul.f32 %v1940, %v2006
        %v2023 = vmul.f32 %v1942, %v2007
        %v2024 = vmul.f32 %v1944, %v2008
        %v2025 = vpack.c.bf16 %v2010, %v2009
        %v2026 = vpack.c.bf16 %v2012, %v2011
        %v2027 = vpack.c.bf16 %v2014, %v2013
        %v2028 = vpack.c.bf16 %v2016, %v2015
        %v2029 = vpack.c.bf16 %v2018, %v2017
        %v2030 = vpack.c.bf16 %v2020, %v2019
        %v2031 = vpack.c.bf16 %v2022, %v2021
        %v2032 = vpack.c.bf16 %v2024, %v2023
        %v2034 = vsel %vm1848, %v2025, 0
        %2036 = vmatprep.subr.bf16.mxu0 0
        %2037 = vmatpush1.bf16.msra.mxu0 %v1463
        %2038 = vmatprep.subr.bf16.mxu0 0
        %2039 = vmatpush1.bf16.msra.mxu0 0
        %2040 = vmatprep.subr.bf16.mxu0 0
        %2041 = vmatpush1.bf16.msra.mxu0 0
        %2042 = vmatprep.subr.bf16.mxu0 0
        %2043 = vmatpush1.bf16.msra.mxu0 0
        %2044 = vmatprep.subr.bf16.mxu0 0
        %2045 = vmatpush1.bf16.msra.mxu0 0
        %2046 = vmatprep.subr.bf16.mxu0 0
        %2047 = vmatpush1.bf16.msra.mxu0 0
        %2048 = vmatprep.subr.bf16.mxu0 0
        %2049 = vmatpush1.bf16.msra.mxu0 0
        %2050 = vmatprep.subr.bf16.mxu0 0
        %2051 = vmatpush1.bf16.msra.mxu0 0
        %2052 = vmatprep.subr.bf16.mxu0 0
        %2053 = vmatpush1.bf16.msra.mxu0 0
        %2054 = vmatprep.subr.bf16.mxu0 0
        %2055 = vmatpush1.bf16.msra.mxu0 0
        %2056 = vmatprep.subr.bf16.mxu0 0
        %2057 = vmatpush1.bf16.msra.mxu0 0
        %2058 = vmatprep.subr.bf16.mxu0 0
        %2059 = vmatpush1.bf16.msra.mxu0 0
        %2060 = vmatprep.subr.bf16.mxu0 0
        %2061 = vmatpush1.bf16.msra.mxu0 0
        %2062 = vmatprep.subr.bf16.mxu0 0
        %2063 = vmatpush1.bf16.msra.mxu0 0
        %2064 = vmatprep.subr.bf16.mxu0 0
        %2065 = vmatpush1.bf16.msra.mxu0 0
        %2066 = vmatprep.subr.bf16.mxu0 0
        %2067 = vmatpush1.bf16.msra.mxu0 0
        %2068 = vmatprep.mubr.bf16.mxu0 0
        %2069 = vmatmul.mubr.bf16.gmra.mrb[0].mxu0 %v2034
        %v2070 = vpop.f32.mrb[0].mxu0
        %v2071 = vadd.f32 0.0, %v2070
        %v2072 = vpop.f32.mrb[0].mxu0
        %v2073 = vpop.f32.mrb[0].mxu0
        %v2074 = vadd.f32 0.0, %v2073
        %v2075 = vpop.f32.mrb[0].mxu0
        %2076 = vdwg.mxu0
        %v2078 = vsel %vm1848, %v2026, 0
        %2080 = vmatprep.subr.bf16.mxu0 0
        %2081 = vmatpush1.bf16.msra.mxu0 %v1464
        %2082 = vmatprep.subr.bf16.mxu0 0
        %2083 = vmatpush1.bf16.msra.mxu0 0
        %2084 = vmatprep.subr.bf16.mxu0 0
        %2085 = vmatpush1.bf16.msra.mxu0 0
        %2086 = vmatprep.subr.bf16.mxu0 0
        %2087 = vmatpush1.bf16.msra.mxu0 0
        %2088 = vmatprep.subr.bf16.mxu0 0
        %2089 = vmatpush1.bf16.msra.mxu0 0
        %2090 = vmatprep.subr.bf16.mxu0 0
        %2091 = vmatpush1.bf16.msra.mxu0 0
        %2092 = vmatprep.subr.bf16.mxu0 0
        %2093 = vmatpush1.bf16.msra.mxu0 0
        %2094 = vmatprep.subr.bf16.mxu0 0
        %2095 = vmatpush1.bf16.msra.mxu0 0
        %2096 = vmatprep.subr.bf16.mxu0 0
        %2097 = vmatpush1.bf16.msra.mxu0 0
        %2098 = vmatprep.subr.bf16.mxu0 0
        %2099 = vmatpush1.bf16.msra.mxu0 0
        %2100 = vmatprep.subr.bf16.mxu0 0
        %2101 = vmatpush1.bf16.msra.mxu0 0
        %2102 = vmatprep.subr.bf16.mxu0 0
        %2103 = vmatpush1.bf16.msra.mxu0 0
        %2104 = vmatprep.subr.bf16.mxu0 0
        %2105 = vmatpush1.bf16.msra.mxu0 0
        %2106 = vmatprep.subr.bf16.mxu0 0
        %2107 = vmatpush1.bf16.msra.mxu0 0
        %2108 = vmatprep.subr.bf16.mxu0 0
        %2109 = vmatpush1.bf16.msra.mxu0 0
        %2110 = vmatprep.subr.bf16.mxu0 0
        %2111 = vmatpush1.bf16.msra.mxu0 0
        %2112 = vmatprep.mubr.bf16.mxu0 0
        %2113 = vmatmul.mubr.bf16.gmra.mrb[0].mxu0 %v2078
        %v2114 = vpop.f32.mrb[0].mxu0
        %v2115 = vadd.f32 0.0, %v2114
        %v2116 = vpop.f32.mrb[0].mxu0
        %v2117 = vpop.f32.mrb[0].mxu0
        %v2118 = vadd.f32 0.0, %v2117
        %v2119 = vpop.f32.mrb[0].mxu0
        %2120 = vdwg.mxu0
        %v2122 = vsel %vm1848, %v2027, 0
        %2124 = vmatprep.subr.bf16.mxu0 0
        %2125 = vmatpush1.bf16.msra.mxu0 %v1465
        %2126 = vmatprep.subr.bf16.mxu0 0
        %2127 = vmatpush1.bf16.msra.mxu0 0
        %2128 = vmatprep.subr.bf16.mxu0 0
        %2129 = vmatpush1.bf16.msra.mxu0 0
        %2130 = vmatprep.subr.bf16.mxu0 0
        %2131 = vmatpush1.bf16.msra.mxu0 0
        %2132 = vmatprep.subr.bf16.mxu0 0
        %2133 = vmatpush1.bf16.msra.mxu0 0
        %2134 = vmatprep.subr.bf16.mxu0 0
        %2135 = vmatpush1.bf16.msra.mxu0 0
        %2136 = vmatprep.subr.bf16.mxu0 0
        %2137 = vmatpush1.bf16.msra.mxu0 0
        %2138 = vmatprep.subr.bf16.mxu0 0
        %2139 = vmatpush1.bf16.msra.mxu0 0
        %2140 = vmatprep.subr.bf16.mxu0 0
        %2141 = vmatpush1.bf16.msra.mxu0 0
        %2142 = vmatprep.subr.bf16.mxu0 0
        %2143 = vmatpush1.bf16.msra.mxu0 0
        %2144 = vmatprep.subr.bf16.mxu0 0
        %2145 = vmatpush1.bf16.msra.mxu0 0
        %2146 = vmatprep.subr.bf16.mxu0 0
        %2147 = vmatpush1.bf16.msra.mxu0 0
        %2148 = vmatprep.subr.bf16.mxu0 0
        %2149 = vmatpush1.bf16.msra.mxu0 0
        %2150 = vmatprep.subr.bf16.mxu0 0
        %2151 = vmatpush1.bf16.msra.mxu0 0
        %2152 = vmatprep.subr.bf16.mxu0 0
        %2153 = vmatpush1.bf16.msra.mxu0 0
        %2154 = vmatprep.subr.bf16.mxu0 0
        %2155 = vmatpush1.bf16.msra.mxu0 0
        %2156 = vmatprep.mubr.bf16.mxu0 0
        %2157 = vmatmul.mubr.bf16.gmra.mrb[0].mxu0 %v2122
        %v2158 = vpop.f32.mrb[0].mxu0
        %v2159 = vadd.f32 0.0, %v2158
        %v2160 = vpop.f32.mrb[0].mxu0
        %v2161 = vpop.f32.mrb[0].mxu0
        %v2162 = vadd.f32 0.0, %v2161
        %v2163 = vpop.f32.mrb[0].mxu0
        %2164 = vdwg.mxu0
        %v2166 = vsel %vm1848, %v2028, 0
        %2168 = vmatprep.subr.bf16.mxu0 0
        %2169 = vmatpush1.bf16.msra.mxu0 %v1466
        %2170 = vmatprep.subr.bf16.mxu0 0
        %2171 = vmatpush1.bf16.msra.mxu0 0
        %2172 = vmatprep.subr.bf16.mxu0 0
        %2173 = vmatpush1.bf16.msra.mxu0 0
        %2174 = vmatprep.subr.bf16.mxu0 0
        %2175 = vmatpush1.bf16.msra.mxu0 0
        %2176 = vmatprep.subr.bf16.mxu0 0
        %2177 = vmatpush1.bf16.msra.mxu0 0
        %2178 = vmatprep.subr.bf16.mxu0 0
        %2179 = vmatpush1.bf16.msra.mxu0 0
        %2180 = vmatprep.subr.bf16.mxu0 0
        %2181 = vmatpush1.bf16.msra.mxu0 0
        %2182 = vmatprep.subr.bf16.mxu0 0
        %2183 = vmatpush1.bf16.msra.mxu0 0
        %2184 = vmatprep.subr.bf16.mxu0 0
        %2185 = vmatpush1.bf16.msra.mxu0 0
        %2186 = vmatprep.subr.bf16.mxu0 0
        %2187 = vmatpush1.bf16.msra.mxu0 0
        %2188 = vmatprep.subr.bf16.mxu0 0
        %2189 = vmatpush1.bf16.msra.mxu0 0
        %2190 = vmatprep.subr.bf16.mxu0 0
        %2191 = vmatpush1.bf16.msra.mxu0 0
        %2192 = vmatprep.subr.bf16.mxu0 0
        %2193 = vmatpush1.bf16.msra.mxu0 0
        %2194 = vmatprep.subr.bf16.mxu0 0
        %2195 = vmatpush1.bf16.msra.mxu0 0
        %2196 = vmatprep.subr.bf16.mxu0 0
        %2197 = vmatpush1.bf16.msra.mxu0 0
        %2198 = vmatprep.subr.bf16.mxu0 0
        %2199 = vmatpush1.bf16.msra.mxu0 0
        %2200 = vmatprep.mubr.bf16.mxu0 0
        %2201 = vmatmul.mubr.bf16.gmra.mrb[0].mxu0 %v2166
        %v2202 = vpop.f32.mrb[0].mxu0
        %v2203 = vadd.f32 0.0, %v2202
        %v2204 = vpop.f32.mrb[0].mxu0
        %v2205 = vpop.f32.mrb[0].mxu0
        %v2206 = vadd.f32 0.0, %v2205
        %v2207 = vpop.f32.mrb[0].mxu0
        %2208 = vdwg.mxu0
        %v2210 = vsel %vm1848, %v2029, 0
        %2212 = vmatprep.subr.bf16.mxu0 0
        %2213 = vmatpush1.bf16.msra.mxu0 %v1467
        %2214 = vmatprep.subr.bf16.mxu0 0
        %2215 = vmatpush1.bf16.msra.mxu0 0
        %2216 = vmatprep.subr.bf16.mxu0 0
        %2217 = vmatpush1.bf16.msra.mxu0 0
        %2218 = vmatprep.subr.bf16.mxu0 0
        %2219 = vmatpush1.bf16.msra.mxu0 0
        %2220 = vmatprep.subr.bf16.mxu0 0
        %2221 = vmatpush1.bf16.msra.mxu0 0
        %2222 = vmatprep.subr.bf16.mxu0 0
        %2223 = vmatpush1.bf16.msra.mxu0 0
        %2224 = vmatprep.subr.bf16.mxu0 0
        %2225 = vmatpush1.bf16.msra.mxu0 0
        %2226 = vmatprep.subr.bf16.mxu0 0
        %2227 = vmatpush1.bf16.msra.mxu0 0
        %2228 = vmatprep.subr.bf16.mxu0 0
        %2229 = vmatpush1.bf16.msra.mxu0 0
        %2230 = vmatprep.subr.bf16.mxu0 0
        %2231 = vmatpush1.bf16.msra.mxu0 0
        %2232 = vmatprep.subr.bf16.mxu0 0
        %2233 = vmatpush1.bf16.msra.mxu0 0
        %2234 = vmatprep.subr.bf16.mxu0 0
        %2235 = vmatpush1.bf16.msra.mxu0 0
        %2236 = vmatprep.subr.bf16.mxu0 0
        %2237 = vmatpush1.bf16.msra.mxu0 0
        %2238 = vmatprep.subr.bf16.mxu0 0
        %2239 = vmatpush1.bf16.msra.mxu0 0
        %2240 = vmatprep.subr.bf16.mxu0 0
        %2241 = vmatpush1.bf16.msra.mxu0 0
        %2242 = vmatprep.subr.bf16.mxu0 0
        %2243 = vmatpush1.bf16.msra.mxu0 0
        %2244 = vmatprep.mubr.bf16.mxu0 0
        %2245 = vmatmul.mubr.bf16.gmra.mrb[0].mxu0 %v2210
        %v2246 = vpop.f32.mrb[0].mxu0
        %v2247 = vadd.f32 0.0, %v2246
        %v2248 = vpop.f32.mrb[0].mxu0
        %v2249 = vpop.f32.mrb[0].mxu0
        %v2250 = vadd.f32 0.0, %v2249
        %v2251 = vpop.f32.mrb[0].mxu0
        %2252 = vdwg.mxu0
        %v2254 = vsel %vm1848, %v2030, 0
        %2256 = vmatprep.subr.bf16.mxu0 0
        %2257 = vmatpush1.bf16.msra.mxu0 %v1468
        %2258 = vmatprep.subr.bf16.mxu0 0
        %2259 = vmatpush1.bf16.msra.mxu0 0
        %2260 = vmatprep.subr.bf16.mxu0 0
        %2261 = vmatpush1.bf16.msra.mxu0 0
        %2262 = vmatprep.subr.bf16.mxu0 0
        %2263 = vmatpush1.bf16.msra.mxu0 0
        %2264 = vmatprep.subr.bf16.mxu0 0
        %2265 = vmatpush1.bf16.msra.mxu0 0
        %2266 = vmatprep.subr.bf16.mxu0 0
        %2267 = vmatpush1.bf16.msra.mxu0 0
        %2268 = vmatprep.subr.bf16.mxu0 0
        %2269 = vmatpush1.bf16.msra.mxu0 0
        %2270 = vmatprep.subr.bf16.mxu0 0
        %2271 = vmatpush1.bf16.msra.mxu0 0
        %2272 = vmatprep.subr.bf16.mxu0 0
        %2273 = vmatpush1.bf16.msra.mxu0 0
        %2274 = vmatprep.subr.bf16.mxu0 0
        %2275 = vmatpush1.bf16.msra.mxu0 0
        %2276 = vmatprep.subr.bf16.mxu0 0
        %2277 = vmatpush1.bf16.msra.mxu0 0
        %2278 = vmatprep.subr.bf16.mxu0 0
        %2279 = vmatpush1.bf16.msra.mxu0 0
        %2280 = vmatprep.subr.bf16.mxu0 0
        %2281 = vmatpush1.bf16.msra.mxu0 0
        %2282 = vmatprep.subr.bf16.mxu0 0
        %2283 = vmatpush1.bf16.msra.mxu0 0
        %2284 = vmatprep.subr.bf16.mxu0 0
        %2285 = vmatpush1.bf16.msra.mxu0 0
        %2286 = vmatprep.subr.bf16.mxu0 0
        %2287 = vmatpush1.bf16.msra.mxu0 0
        %2288 = vmatprep.mubr.bf16.mxu0 0
        %2289 = vmatmul.mubr.bf16.gmra.mrb[0].mxu0 %v2254
        %v2290 = vpop.f32.mrb[0].mxu0
        %v2291 = vadd.f32 0.0, %v2290
        %v2292 = vpop.f32.mrb[0].mxu0
        %v2293 = vpop.f32.mrb[0].mxu0
        %v2294 = vadd.f32 0.0, %v2293
        %v2295 = vpop.f32.mrb[0].mxu0
        %2296 = vdwg.mxu0
        %v2298 = vsel %vm1848, %v2031, 0
        %2300 = vmatprep.subr.bf16.mxu0 0
        %2301 = vmatpush1.bf16.msra.mxu0 %v1469
        %2302 = vmatprep.subr.bf16.mxu0 0
        %2303 = vmatpush1.bf16.msra.mxu0 0
        %2304 = vmatprep.subr.bf16.mxu0 0
        %2305 = vmatpush1.bf16.msra.mxu0 0
        %2306 = vmatprep.subr.bf16.mxu0 0
        %2307 = vmatpush1.bf16.msra.mxu0 0
        %2308 = vmatprep.subr.bf16.mxu0 0
        %2309 = vmatpush1.bf16.msra.mxu0 0
        %2310 = vmatprep.subr.bf16.mxu0 0
        %2311 = vmatpush1.bf16.msra.mxu0 0
        %2312 = vmatprep.subr.bf16.mxu0 0
        %2313 = vmatpush1.bf16.msra.mxu0 0
        %2314 = vmatprep.subr.bf16.mxu0 0
        %2315 = vmatpush1.bf16.msra.mxu0 0
        %2316 = vmatprep.subr.bf16.mxu0 0
        %2317 = vmatpush1.bf16.msra.mxu0 0
        %2318 = vmatprep.subr.bf16.mxu0 0
        %2319 = vmatpush1.bf16.msra.mxu0 0
        %2320 = vmatprep.subr.bf16.mxu0 0
        %2321 = vmatpush1.bf16.msra.mxu0 0
        %2322 = vmatprep.subr.bf16.mxu0 0
        %2323 = vmatpush1.bf16.msra.mxu0 0
        %2324 = vmatprep.subr.bf16.mxu0 0
        %2325 = vmatpush1.bf16.msra.mxu0 0
        %2326 = vmatprep.subr.bf16.mxu0 0
        %2327 = vmatpush1.bf16.msra.mxu0 0
        %2328 = vmatprep.subr.bf16.mxu0 0
        %2329 = vmatpush1.bf16.msra.mxu0 0
        %2330 = vmatprep.subr.bf16.mxu0 0
        %2331 = vmatpush1.bf16.msra.mxu0 0
        %2332 = vmatprep.mubr.bf16.mxu0 0
        %2333 = vmatmul.mubr.bf16.gmra.mrb[0].mxu0 %v2298
        %v2334 = vpop.f32.mrb[0].mxu0
        %v2335 = vadd.f32 0.0, %v2334
        %v2336 = vpop.f32.mrb[0].mxu0
        %v2337 = vpop.f32.mrb[0].mxu0
        %v2338 = vadd.f32 0.0, %v2337
        %v2339 = vpop.f32.mrb[0].mxu0
        %2340 = vdwg.mxu0
        %v2342 = vsel %vm1848, %v2032, 0
        %2344 = vmatprep.subr.bf16.mxu0 0
        %2345 = vmatpush1.bf16.msra.mxu0 %v1470
        %2346 = vmatprep.subr.bf16.mxu0 0
        %2347 = vmatpush1.bf16.msra.mxu0 0
        %2348 = vmatprep.subr.bf16.mxu0 0
        %2349 = vmatpush1.bf16.msra.mxu0 0
        %2350 = vmatprep.subr.bf16.mxu0 0
        %2351 = vmatpush1.bf16.msra.mxu0 0
        %2352 = vmatprep.subr.bf16.mxu0 0
        %2353 = vmatpush1.bf16.msra.mxu0 0
        %2354 = vmatprep.subr.bf16.mxu0 0
        %2355 = vmatpush1.bf16.msra.mxu0 0
        %2356 = vmatprep.subr.bf16.mxu0 0
        %2357 = vmatpush1.bf16.msra.mxu0 0
        %2358 = vmatprep.subr.bf16.mxu0 0
        %2359 = vmatpush1.bf16.msra.mxu0 0
        %2360 = vmatprep.subr.bf16.mxu0 0
        %2361 = vmatpush1.bf16.msra.mxu0 0
        %2362 = vmatprep.subr.bf16.mxu0 0
        %2363 = vmatpush1.bf16.msra.mxu0 0
        %2364 = vmatprep.subr.bf16.mxu0 0
        %2365 = vmatpush1.bf16.msra.mxu0 0
        %2366 = vmatprep.subr.bf16.mxu0 0
        %2367 = vmatpush1.bf16.msra.mxu0 0
        %2368 = vmatprep.subr.bf16.mxu0 0
        %2369 = vmatpush1.bf16.msra.mxu0 0
        %2370 = vmatprep.subr.bf16.mxu0 0
        %2371 = vmatpush1.bf16.msra.mxu0 0
        %2372 = vmatprep.subr.bf16.mxu0 0
        %2373 = vmatpush1.bf16.msra.mxu0 0
        %2374 = vmatprep.subr.bf16.mxu0 0
        %2375 = vmatpush1.bf16.msra.mxu0 0
        %2376 = vmatprep.mubr.bf16.mxu0 0
        %2377 = vmatmul.mubr.bf16.gmra.mrb[0].mxu0 %v2342
        %v2378 = vpop.f32.mrb[0].mxu0
        %v2379 = vadd.f32 0.0, %v2378
        %v2380 = vpop.f32.mrb[0].mxu0
        %v2381 = vpop.f32.mrb[0].mxu0
        %v2382 = vadd.f32 0.0, %v2381
        %v2383 = vpop.f32.mrb[0].mxu0
        %2384 = vdwg.mxu0
        %v2385 = vpack.c.bf16 %v2074, %v2071
        %v2386 = vpack.c.bf16 %v2118, %v2115
        %v2387 = vpack.c.bf16 %v2162, %v2159
        %v2388 = vpack.c.bf16 %v2206, %v2203
        %v2389 = vpack.c.bf16 %v2250, %v2247
        %v2390 = vpack.c.bf16 %v2294, %v2291
        %v2391 = vpack.c.bf16 %v2338, %v2335
        %v2392 = vpack.c.bf16 %v2382, %v2379
        %2394 = vrot.lane.b32.xlu0 %v1447, 64
        %v2395 = vpop.permute.xlu0 %2394
        %2397 = vrot.lane.b32.xlu0 %v1455, 64
        %v2398 = vpop.permute.xlu0 %2397
        %v2400 = vsel %vm1471, %v2395, 0
        %v2403 = vsel %vm1471, %v2398, 0
        %2405 = vmatprep.subr.bf16.mxu0 0
        %2406 = vmatpush1.bf16.xpose.msra.mxu0 %v2403
        %2407 = vmatprep.subr.bf16.mxu0 0
        %2408 = vmatpush1.bf16.xpose.msra.mxu0 0
        %2409 = vmatprep.subr.bf16.mxu0 0
        %2410 = vmatpush1.bf16.xpose.msra.mxu0 0
        %2411 = vmatprep.subr.bf16.mxu0 0
        %2412 = vmatpush1.bf16.xpose.msra.mxu0 0
        %2413 = vmatprep.subr.bf16.mxu0 0
        %2414 = vmatpush1.bf16.xpose.msra.mxu0 0
        %2415 = vmatprep.subr.bf16.mxu0 0
        %2416 = vmatpush1.bf16.xpose.msra.mxu0 0
        %2417 = vmatprep.subr.bf16.mxu0 0
        %2418 = vmatpush1.bf16.xpose.msra.mxu0 0
        %2419 = vmatprep.subr.bf16.mxu0 0
        %2420 = vmatpush1.bf16.xpose.msra.mxu0 0
        %2421 = vmatprep.subr.bf16.mxu0 0
        %2422 = vmatpush1.bf16.xpose.msra.mxu0 0
        %2423 = vmatprep.subr.bf16.mxu0 0
        %2424 = vmatpush1.bf16.xpose.msra.mxu0 0
        %2425 = vmatprep.subr.bf16.mxu0 0
        %2426 = vmatpush1.bf16.xpose.msra.mxu0 0
        %2427 = vmatprep.subr.bf16.mxu0 0
        %2428 = vmatpush1.bf16.xpose.msra.mxu0 0
        %2429 = vmatprep.subr.bf16.mxu0 0
        %2430 = vmatpush1.bf16.xpose.msra.mxu0 0
        %2431 = vmatprep.subr.bf16.mxu0 0
        %2432 = vmatpush1.bf16.xpose.msra.mxu0 0
        %2433 = vmatprep.subr.bf16.mxu0 0
        %2434 = vmatpush1.bf16.xpose.msra.mxu0 0
        %2435 = vmatprep.subr.bf16.mxu0 0
        %2436 = vmatpush1.bf16.xpose.msra.mxu0 0
        %2437 = vmatprep.mubr.bf16.mxu0 0
        %2438 = vmatmul.mubr.bf16.gmra.mrb[0].mxu0 %v2400
        %v2439 = vpop.f32.mrb[0].mxu0
        %v2440 = vadd.f32 0.0, %v2439
        %v2441 = vpop.f32.mrb[0].mxu0
        %v2442 = vpop.f32.mrb[0].mxu0
        %v2443 = vadd.f32 0.0, %v2442
        %v2444 = vpop.f32.mrb[0].mxu0
        %2445 = vdwg.mxu0
        %2447 = vrot.lane.b32.xlu0 %v1448, 64
        %v2448 = vpop.permute.xlu0 %2447
        %2450 = vrot.lane.b32.xlu0 %v1456, 64
        %v2451 = vpop.permute.xlu0 %2450
        %v2453 = vsel %vm1471, %v2448, 0
        %v2456 = vsel %vm1471, %v2451, 0
        %2458 = vmatprep.subr.bf16.mxu0 0
        %2459 = vmatpush1.bf16.xpose.msra.mxu0 %v2456
        %2460 = vmatprep.subr.bf16.mxu0 0
        %2461 = vmatpush1.bf16.xpose.msra.mxu0 0
        %2462 = vmatprep.subr.bf16.mxu0 0
        %2463 = vmatpush1.bf16.xpose.msra.mxu0 0
        %2464 = vmatprep.subr.bf16.mxu0 0
        %2465 = vmatpush1.bf16.xpose.msra.mxu0 0
        %2466 = vmatprep.subr.bf16.mxu0 0
        %2467 = vmatpush1.bf16.xpose.msra.mxu0 0
        %2468 = vmatprep.subr.bf16.mxu0 0
        %2469 = vmatpush1.bf16.xpose.msra.mxu0 0
        %2470 = vmatprep.subr.bf16.mxu0 0
        %2471 = vmatpush1.bf16.xpose.msra.mxu0 0
        %2472 = vmatprep.subr.bf16.mxu0 0
        %2473 = vmatpush1.bf16.xpose.msra.mxu0 0
        %2474 = vmatprep.subr.bf16.mxu0 0
        %2475 = vmatpush1.bf16.xpose.msra.mxu0 0
        %2476 = vmatprep.subr.bf16.mxu0 0
        %2477 = vmatpush1.bf16.xpose.msra.mxu0 0
        %2478 = vmatprep.subr.bf16.mxu0 0
        %2479 = vmatpush1.bf16.xpose.msra.mxu0 0
        %2480 = vmatprep.subr.bf16.mxu0 0
        %2481 = vmatpush1.bf16.xpose.msra.mxu0 0
        %2482 = vmatprep.subr.bf16.mxu0 0
        %2483 = vmatpush1.bf16.xpose.msra.mxu0 0
        %2484 = vmatprep.subr.bf16.mxu0 0
        %2485 = vmatpush1.bf16.xpose.msra.mxu0 0
        %2486 = vmatprep.subr.bf16.mxu0 0
        %2487 = vmatpush1.bf16.xpose.msra.mxu0 0
        %2488 = vmatprep.subr.bf16.mxu0 0
        %2489 = vmatpush1.bf16.xpose.msra.mxu0 0
        %2490 = vmatprep.mubr.bf16.mxu0 0
        %2491 = vmatmul.mubr.bf16.gmra.mrb[0].mxu0 %v2453
        %v2492 = vpop.f32.mrb[0].mxu0
        %v2493 = vadd.f32 0.0, %v2492
        %v2494 = vpop.f32.mrb[0].mxu0
        %v2495 = vpop.f32.mrb[0].mxu0
        %v2496 = vadd.f32 0.0, %v2495
        %v2497 = vpop.f32.mrb[0].mxu0
        %2498 = vdwg.mxu0
        %2500 = vrot.lane.b32.xlu0 %v1449, 64
        %v2501 = vpop.permute.xlu0 %2500
        %2503 = vrot.lane.b32.xlu0 %v1457, 64
        %v2504 = vpop.permute.xlu0 %2503
        %v2506 = vsel %vm1471, %v2501, 0
        %v2509 = vsel %vm1471, %v2504, 0
        %2511 = vmatprep.subr.bf16.mxu0 0
        %2512 = vmatpush1.bf16.xpose.msra.mxu0 %v2509
        %2513 = vmatprep.subr.bf16.mxu0 0
        %2514 = vmatpush1.bf16.xpose.msra.mxu0 0
        %2515 = vmatprep.subr.bf16.mxu0 0
        %2516 = vmatpush1.bf16.xpose.msra.mxu0 0
        %2517 = vmatprep.subr.bf16.mxu0 0
        %2518 = vmatpush1.bf16.xpose.msra.mxu0 0
        %2519 = vmatprep.subr.bf16.mxu0 0
        %2520 = vmatpush1.bf16.xpose.msra.mxu0 0
        %2521 = vmatprep.subr.bf16.mxu0 0
        %2522 = vmatpush1.bf16.xpose.msra.mxu0 0
        %2523 = vmatprep.subr.bf16.mxu0 0
        %2524 = vmatpush1.bf16.xpose.msra.mxu0 0
        %2525 = vmatprep.subr.bf16.mxu0 0
        %2526 = vmatpush1.bf16.xpose.msra.mxu0 0
        %2527 = vmatprep.subr.bf16.mxu0 0
        %2528 = vmatpush1.bf16.xpose.msra.mxu0 0
        %2529 = vmatprep.subr.bf16.mxu0 0
        %2530 = vmatpush1.bf16.xpose.msra.mxu0 0
        %2531 = vmatprep.subr.bf16.mxu0 0
        %2532 = vmatpush1.bf16.xpose.msra.mxu0 0
        %2533 = vmatprep.subr.bf16.mxu0 0
        %2534 = vmatpush1.bf16.xpose.msra.mxu0 0
        %2535 = vmatprep.subr.bf16.mxu0 0
        %2536 = vmatpush1.bf16.xpose.msra.mxu0 0
        %2537 = vmatprep.subr.bf16.mxu0 0
        %2538 = vmatpush1.bf16.xpose.msra.mxu0 0
        %2539 = vmatprep.subr.bf16.mxu0 0
        %2540 = vmatpush1.bf16.xpose.msra.mxu0 0
        %2541 = vmatprep.subr.bf16.mxu0 0
        %2542 = vmatpush1.bf16.xpose.msra.mxu0 0
        %2543 = vmatprep.mubr.bf16.mxu0 0
        %2544 = vmatmul.mubr.bf16.gmra.mrb[0].mxu0 %v2506
        %v2545 = vpop.f32.mrb[0].mxu0
        %v2546 = vadd.f32 0.0, %v2545
        %v2547 = vpop.f32.mrb[0].mxu0
        %v2548 = vpop.f32.mrb[0].mxu0
        %v2549 = vadd.f32 0.0, %v2548
        %v2550 = vpop.f32.mrb[0].mxu0
        %2551 = vdwg.mxu0
        %2553 = vrot.lane.b32.xlu0 %v1450, 64
        %v2554 = vpop.permute.xlu0 %2553
        %2556 = vrot.lane.b32.xlu0 %v1458, 64
        %v2557 = vpop.permute.xlu0 %2556
        %v2559 = vsel %vm1471, %v2554, 0
        %v2562 = vsel %vm1471, %v2557, 0
        %2564 = vmatprep.subr.bf16.mxu0 0
        %2565 = vmatpush1.bf16.xpose.msra.mxu0 %v2562
        %2566 = vmatprep.subr.bf16.mxu0 0
        %2567 = vmatpush1.bf16.xpose.msra.mxu0 0
        %2568 = vmatprep.subr.bf16.mxu0 0
        %2569 = vmatpush1.bf16.xpose.msra.mxu0 0
        %2570 = vmatprep.subr.bf16.mxu0 0
        %2571 = vmatpush1.bf16.xpose.msra.mxu0 0
        %2572 = vmatprep.subr.bf16.mxu0 0
        %2573 = vmatpush1.bf16.xpose.msra.mxu0 0
        %2574 = vmatprep.subr.bf16.mxu0 0
        %2575 = vmatpush1.bf16.xpose.msra.mxu0 0
        %2576 = vmatprep.subr.bf16.mxu0 0
        %2577 = vmatpush1.bf16.xpose.msra.mxu0 0
        %2578 = vmatprep.subr.bf16.mxu0 0
        %2579 = vmatpush1.bf16.xpose.msra.mxu0 0
        %2580 = vmatprep.subr.bf16.mxu0 0
        %2581 = vmatpush1.bf16.xpose.msra.mxu0 0
        %2582 = vmatprep.subr.bf16.mxu0 0
        %2583 = vmatpush1.bf16.xpose.msra.mxu0 0
        %2584 = vmatprep.subr.bf16.mxu0 0
        %2585 = vmatpush1.bf16.xpose.msra.mxu0 0
        %2586 = vmatprep.subr.bf16.mxu0 0
        %2587 = vmatpush1.bf16.xpose.msra.mxu0 0
        %2588 = vmatprep.subr.bf16.mxu0 0
        %2589 = vmatpush1.bf16.xpose.msra.mxu0 0
        %2590 = vmatprep.subr.bf16.mxu0 0
        %2591 = vmatpush1.bf16.xpose.msra.mxu0 0
        %2592 = vmatprep.subr.bf16.mxu0 0
        %2593 = vmatpush1.bf16.xpose.msra.mxu0 0
        %2594 = vmatprep.subr.bf16.mxu0 0
        %2595 = vmatpush1.bf16.xpose.msra.mxu0 0
        %2596 = vmatprep.mubr.bf16.mxu0 0
        %2597 = vmatmul.mubr.bf16.gmra.mrb[0].mxu0 %v2559
        %v2598 = vpop.f32.mrb[0].mxu0
        %v2599 = vadd.f32 0.0, %v2598
        %v2600 = vpop.f32.mrb[0].mxu0
        %v2601 = vpop.f32.mrb[0].mxu0
        %v2602 = vadd.f32 0.0, %v2601
        %v2603 = vpop.f32.mrb[0].mxu0
        %2604 = vdwg.mxu0
        %2606 = vrot.lane.b32.xlu0 %v1451, 64
        %v2607 = vpop.permute.xlu0 %2606
        %2609 = vrot.lane.b32.xlu0 %v1459, 64
        %v2610 = vpop.permute.xlu0 %2609
        %v2612 = vsel %vm1471, %v2607, 0
        %v2615 = vsel %vm1471, %v2610, 0
        %2617 = vmatprep.subr.bf16.mxu0 0
        %2618 = vmatpush1.bf16.xpose.msra.mxu0 %v2615
        %2619 = vmatprep.subr.bf16.mxu0 0
        %2620 = vmatpush1.bf16.xpose.msra.mxu0 0
        %2621 = vmatprep.subr.bf16.mxu0 0
        %2622 = vmatpush1.bf16.xpose.msra.mxu0 0
        %2623 = vmatprep.subr.bf16.mxu0 0
        %2624 = vmatpush1.bf16.xpose.msra.mxu0 0
        %2625 = vmatprep.subr.bf16.mxu0 0
        %2626 = vmatpush1.bf16.xpose.msra.mxu0 0
        %2627 = vmatprep.subr.bf16.mxu0 0
        %2628 = vmatpush1.bf16.xpose.msra.mxu0 0
        %2629 = vmatprep.subr.bf16.mxu0 0
        %2630 = vmatpush1.bf16.xpose.msra.mxu0 0
        %2631 = vmatprep.subr.bf16.mxu0 0
        %2632 = vmatpush1.bf16.xpose.msra.mxu0 0
        %2633 = vmatprep.subr.bf16.mxu0 0
        %2634 = vmatpush1.bf16.xpose.msra.mxu0 0
        %2635 = vmatprep.subr.bf16.mxu0 0
        %2636 = vmatpush1.bf16.xpose.msra.mxu0 0
        %2637 = vmatprep.subr.bf16.mxu0 0
        %2638 = vmatpush1.bf16.xpose.msra.mxu0 0
        %2639 = vmatprep.subr.bf16.mxu0 0
        %2640 = vmatpush1.bf16.xpose.msra.mxu0 0
        %2641 = vmatprep.subr.bf16.mxu0 0
        %2642 = vmatpush1.bf16.xpose.msra.mxu0 0
        %2643 = vmatprep.subr.bf16.mxu0 0
        %2644 = vmatpush1.bf16.xpose.msra.mxu0 0
        %2645 = vmatprep.subr.bf16.mxu0 0
        %2646 = vmatpush1.bf16.xpose.msra.mxu0 0
        %2647 = vmatprep.subr.bf16.mxu0 0
        %2648 = vmatpush1.bf16.xpose.msra.mxu0 0
        %2649 = vmatprep.mubr.bf16.mxu0 0
        %2650 = vmatmul.mubr.bf16.gmra.mrb[0].mxu0 %v2612
        %v2651 = vpop.f32.mrb[0].mxu0
        %v2652 = vadd.f32 0.0, %v2651
        %v2653 = vpop.f32.mrb[0].mxu0
        %v2654 = vpop.f32.mrb[0].mxu0
        %v2655 = vadd.f32 0.0, %v2654
        %v2656 = vpop.f32.mrb[0].mxu0
        %2657 = vdwg.mxu0
        %2659 = vrot.lane.b32.xlu0 %v1452, 64
        %v2660 = vpop.permute.xlu0 %2659
        %2662 = vrot.lane.b32.xlu0 %v1460, 64
        %v2663 = vpop.permute.xlu0 %2662
        %v2665 = vsel %vm1471, %v2660, 0
        %v2668 = vsel %vm1471, %v2663, 0
        %2670 = vmatprep.subr.bf16.mxu0 0
        %2671 = vmatpush1.bf16.xpose.msra.mxu0 %v2668
        %2672 = vmatprep.subr.bf16.mxu0 0
        %2673 = vmatpush1.bf16.xpose.msra.mxu0 0
        %2674 = vmatprep.subr.bf16.mxu0 0
        %2675 = vmatpush1.bf16.xpose.msra.mxu0 0
        %2676 = vmatprep.subr.bf16.mxu0 0
        %2677 = vmatpush1.bf16.xpose.msra.mxu0 0
        %2678 = vmatprep.subr.bf16.mxu0 0
        %2679 = vmatpush1.bf16.xpose.msra.mxu0 0
        %2680 = vmatprep.subr.bf16.mxu0 0
        %2681 = vmatpush1.bf16.xpose.msra.mxu0 0
        %2682 = vmatprep.subr.bf16.mxu0 0
        %2683 = vmatpush1.bf16.xpose.msra.mxu0 0
        %2684 = vmatprep.subr.bf16.mxu0 0
        %2685 = vmatpush1.bf16.xpose.msra.mxu0 0
        %2686 = vmatprep.subr.bf16.mxu0 0
        %2687 = vmatpush1.bf16.xpose.msra.mxu0 0
        %2688 = vmatprep.subr.bf16.mxu0 0
        %2689 = vmatpush1.bf16.xpose.msra.mxu0 0
        %2690 = vmatprep.subr.bf16.mxu0 0
        %2691 = vmatpush1.bf16.xpose.msra.mxu0 0
        %2692 = vmatprep.subr.bf16.mxu0 0
        %2693 = vmatpush1.bf16.xpose.msra.mxu0 0
        %2694 = vmatprep.subr.bf16.mxu0 0
        %2695 = vmatpush1.bf16.xpose.msra.mxu0 0
        %2696 = vmatprep.subr.bf16.mxu0 0
        %2697 = vmatpush1.bf16.xpose.msra.mxu0 0
        %2698 = vmatprep.subr.bf16.mxu0 0
        %2699 = vmatpush1.bf16.xpose.msra.mxu0 0
        %2700 = vmatprep.subr.bf16.mxu0 0
        %2701 = vmatpush1.bf16.xpose.msra.mxu0 0
        %2702 = vmatprep.mubr.bf16.mxu0 0
        %2703 = vmatmul.mubr.bf16.gmra.mrb[0].mxu0 %v2665
        %v2704 = vpop.f32.mrb[0].mxu0
        %v2705 = vadd.f32 0.0, %v2704
        %v2706 = vpop.f32.mrb[0].mxu0
        %v2707 = vpop.f32.mrb[0].mxu0
        %v2708 = vadd.f32 0.0, %v2707
        %v2709 = vpop.f32.mrb[0].mxu0
        %2710 = vdwg.mxu0
        %2712 = vrot.lane.b32.xlu0 %v1453, 64
        %v2713 = vpop.permute.xlu0 %2712
        %2715 = vrot.lane.b32.xlu0 %v1461, 64
        %v2716 = vpop.permute.xlu0 %2715
        %v2718 = vsel %vm1471, %v2713, 0
        %v2721 = vsel %vm1471, %v2716, 0
        %2723 = vmatprep.subr.bf16.mxu0 0
        %2724 = vmatpush1.bf16.xpose.msra.mxu0 %v2721
        %2725 = vmatprep.subr.bf16.mxu0 0
        %2726 = vmatpush1.bf16.xpose.msra.mxu0 0
        %2727 = vmatprep.subr.bf16.mxu0 0
        %2728 = vmatpush1.bf16.xpose.msra.mxu0 0
        %2729 = vmatprep.subr.bf16.mxu0 0
        %2730 = vmatpush1.bf16.xpose.msra.mxu0 0
        %2731 = vmatprep.subr.bf16.mxu0 0
        %2732 = vmatpush1.bf16.xpose.msra.mxu0 0
        %2733 = vmatprep.subr.bf16.mxu0 0
        %2734 = vmatpush1.bf16.xpose.msra.mxu0 0
        %2735 = vmatprep.subr.bf16.mxu0 0
        %2736 = vmatpush1.bf16.xpose.msra.mxu0 0
        %2737 = vmatprep.subr.bf16.mxu0 0
        %2738 = vmatpush1.bf16.xpose.msra.mxu0 0
        %2739 = vmatprep.subr.bf16.mxu0 0
        %2740 = vmatpush1.bf16.xpose.msra.mxu0 0
        %2741 = vmatprep.subr.bf16.mxu0 0
        %2742 = vmatpush1.bf16.xpose.msra.mxu0 0
        %2743 = vmatprep.subr.bf16.mxu0 0
        %2744 = vmatpush1.bf16.xpose.msra.mxu0 0
        %2745 = vmatprep.subr.bf16.mxu0 0
        %2746 = vmatpush1.bf16.xpose.msra.mxu0 0
        %2747 = vmatprep.subr.bf16.mxu0 0
        %2748 = vmatpush1.bf16.xpose.msra.mxu0 0
        %2749 = vmatprep.subr.bf16.mxu0 0
        %2750 = vmatpush1.bf16.xpose.msra.mxu0 0
        %2751 = vmatprep.subr.bf16.mxu0 0
        %2752 = vmatpush1.bf16.xpose.msra.mxu0 0
        %2753 = vmatprep.subr.bf16.mxu0 0
        %2754 = vmatpush1.bf16.xpose.msra.mxu0 0
        %2755 = vmatprep.mubr.bf16.mxu0 0
        %2756 = vmatmul.mubr.bf16.gmra.mrb[0].mxu0 %v2718
        %v2757 = vpop.f32.mrb[0].mxu0
        %v2758 = vadd.f32 0.0, %v2757
        %v2759 = vpop.f32.mrb[0].mxu0
        %v2760 = vpop.f32.mrb[0].mxu0
        %v2761 = vadd.f32 0.0, %v2760
        %v2762 = vpop.f32.mrb[0].mxu0
        %2763 = vdwg.mxu0
        %2765 = vrot.lane.b32.xlu0 %v1454, 64
        %v2766 = vpop.permute.xlu0 %2765
        %2768 = vrot.lane.b32.xlu0 %v1462, 64
        %v2769 = vpop.permute.xlu0 %2768
        %v2771 = vsel %vm1471, %v2766, 0
        %v2774 = vsel %vm1471, %v2769, 0
        %2776 = vmatprep.subr.bf16.mxu0 0
        %2777 = vmatpush1.bf16.xpose.msra.mxu0 %v2774
        %2778 = vmatprep.subr.bf16.mxu0 0
        %2779 = vmatpush1.bf16.xpose.msra.mxu0 0
        %2780 = vmatprep.subr.bf16.mxu0 0
        %2781 = vmatpush1.bf16.xpose.msra.mxu0 0
        %2782 = vmatprep.subr.bf16.mxu0 0
        %2783 = vmatpush1.bf16.xpose.msra.mxu0 0
        %2784 = vmatprep.subr.bf16.mxu0 0
        %2785 = vmatpush1.bf16.xpose.msra.mxu0 0
        %2786 = vmatprep.subr.bf16.mxu0 0
        %2787 = vmatpush1.bf16.xpose.msra.mxu0 0
        %2788 = vmatprep.subr.bf16.mxu0 0
        %2789 = vmatpush1.bf16.xpose.msra.mxu0 0
        %2790 = vmatprep.subr.bf16.mxu0 0
        %2791 = vmatpush1.bf16.xpose.msra.mxu0 0
        %2792 = vmatprep.subr.bf16.mxu0 0
        %2793 = vmatpush1.bf16.xpose.msra.mxu0 0
        %2794 = vmatprep.subr.bf16.mxu0 0
        %2795 = vmatpush1.bf16.xpose.msra.mxu0 0
        %2796 = vmatprep.subr.bf16.mxu0 0
        %2797 = vmatpush1.bf16.xpose.msra.mxu0 0
        %2798 = vmatprep.subr.bf16.mxu0 0
        %2799 = vmatpush1.bf16.xpose.msra.mxu0 0
        %2800 = vmatprep.subr.bf16.mxu0 0
        %2801 = vmatpush1.bf16.xpose.msra.mxu0 0
        %2802 = vmatprep.subr.bf16.mxu0 0
        %2803 = vmatpush1.bf16.xpose.msra.mxu0 0
        %2804 = vmatprep.subr.bf16.mxu0 0
        %2805 = vmatpush1.bf16.xpose.msra.mxu0 0
        %2806 = vmatprep.subr.bf16.mxu0 0
        %2807 = vmatpush1.bf16.xpose.msra.mxu0 0
        %2808 = vmatprep.mubr.bf16.mxu0 0
        %2809 = vmatmul.mubr.bf16.gmra.mrb[0].mxu0 %v2771
        %v2810 = vpop.f32.mrb[0].mxu0
        %v2811 = vadd.f32 0.0, %v2810
        %v2812 = vpop.f32.mrb[0].mxu0
        %v2813 = vpop.f32.mrb[0].mxu0
        %v2814 = vadd.f32 0.0, %v2813
        %v2815 = vpop.f32.mrb[0].mxu0
        %2816 = vdwg.mxu0
        %v2817 = vsel %vm1848, %v2440, -inf
        %2818 = vmax.xlane.f32.xlu0 %v2817
        %v2819 = vpop.xlane.xlu0 %2818
        %v2820 = vsel %vm1848, %v2443, -inf
        %2821 = vmax.xlane.f32.xlu0 %v2820
        %v2822 = vpop.xlane.xlu0 %2821
        %v2823 = vsel %vm1848, %v2493, -inf
        %2824 = vmax.xlane.f32.xlu0 %v2823
        %v2825 = vpop.xlane.xlu0 %2824
        %v2826 = vsel %vm1848, %v2496, -inf
        %2827 = vmax.xlane.f32.xlu0 %v2826
        %v2828 = vpop.xlane.xlu0 %2827
        %v2829 = vsel %vm1848, %v2546, -inf
        %2830 = vmax.xlane.f32.xlu0 %v2829
        %v2831 = vpop.xlane.xlu0 %2830
        %v2832 = vsel %vm1848, %v2549, -inf
        %2833 = vmax.xlane.f32.xlu0 %v2832
        %v2834 = vpop.xlane.xlu0 %2833
        %v2835 = vsel %vm1848, %v2599, -inf
        %2836 = vmax.xlane.f32.xlu0 %v2835
        %v2837 = vpop.xlane.xlu0 %2836
        %v2838 = vsel %vm1848, %v2602, -inf
        %2839 = vmax.xlane.f32.xlu0 %v2838
        %v2840 = vpop.xlane.xlu0 %2839
        %v2841 = vsel %vm1848, %v2652, -inf
        %2842 = vmax.xlane.f32.xlu0 %v2841
        %v2843 = vpop.xlane.xlu0 %2842
        %v2844 = vsel %vm1848, %v2655, -inf
        %2845 = vmax.xlane.f32.xlu0 %v2844
        %v2846 = vpop.xlane.xlu0 %2845
        %v2847 = vsel %vm1848, %v2705, -inf
        %2848 = vmax.xlane.f32.xlu0 %v2847
        %v2849 = vpop.xlane.xlu0 %2848
        %v2850 = vsel %vm1848, %v2708, -inf
        %2851 = vmax.xlane.f32.xlu0 %v2850
        %v2852 = vpop.xlane.xlu0 %2851
        %v2853 = vsel %vm1848, %v2758, -inf
        %2854 = vmax.xlane.f32.xlu0 %v2853
        %v2855 = vpop.xlane.xlu0 %2854
        %v2856 = vsel %vm1848, %v2761, -inf
        %2857 = vmax.xlane.f32.xlu0 %v2856
        %v2858 = vpop.xlane.xlu0 %2857
        %v2859 = vsel %vm1848, %v2811, -inf
        %2860 = vmax.xlane.f32.xlu0 %v2859
        %v2861 = vpop.xlane.xlu0 %2860
        %v2862 = vsel %vm1848, %v2814, -inf
        %2863 = vmax.xlane.f32.xlu0 %v2862
        %v2864 = vpop.xlane.xlu0 %2863
        %v2865 = vsub.f32 %v2440, %v2819
        %v2866 = vsub.f32 %v2443, %v2822
        %v2867 = vsub.f32 %v2493, %v2825
        %v2868 = vsub.f32 %v2496, %v2828
        %v2869 = vsub.f32 %v2546, %v2831
        %v2870 = vsub.f32 %v2549, %v2834
        %v2871 = vsub.f32 %v2599, %v2837
        %v2872 = vsub.f32 %v2602, %v2840
        %v2873 = vsub.f32 %v2652, %v2843
        %v2874 = vsub.f32 %v2655, %v2846
        %v2875 = vsub.f32 %v2705, %v2849
        %v2876 = vsub.f32 %v2708, %v2852
        %v2877 = vsub.f32 %v2758, %v2855
        %v2878 = vsub.f32 %v2761, %v2858
        %v2879 = vsub.f32 %v2811, %v2861
        %v2880 = vsub.f32 %v2814, %v2864
        %v2881 = vmul.f32 %v2865, 1.442695
        %v2882 = vpow.pop %v2881
        %v2883 = vmul.f32 %v2866, 1.442695
        %v2884 = vpow.pop %v2883
        %v2885 = vmul.f32 %v2867, 1.442695
        %v2886 = vpow.pop %v2885
        %v2887 = vmul.f32 %v2868, 1.442695
        %v2888 = vpow.pop %v2887
        %v2889 = vmul.f32 %v2869, 1.442695
        %v2890 = vpow.pop %v2889
        %v2891 = vmul.f32 %v2870, 1.442695
        %v2892 = vpow.pop %v2891
        %v2893 = vmul.f32 %v2871, 1.442695
        %v2894 = vpow.pop %v2893
        %v2895 = vmul.f32 %v2872, 1.442695
        %v2896 = vpow.pop %v2895
        %v2897 = vmul.f32 %v2873, 1.442695
        %v2898 = vpow.pop %v2897
        %v2899 = vmul.f32 %v2874, 1.442695
        %v2900 = vpow.pop %v2899
        %v2901 = vmul.f32 %v2875, 1.442695
        %v2902 = vpow.pop %v2901
        %v2903 = vmul.f32 %v2876, 1.442695
        %v2904 = vpow.pop %v2903
        %v2905 = vmul.f32 %v2877, 1.442695
        %v2906 = vpow.pop %v2905
        %v2907 = vmul.f32 %v2878, 1.442695
        %v2908 = vpow.pop %v2907
        %v2909 = vmul.f32 %v2879, 1.442695
        %v2910 = vpow.pop %v2909
        %v2911 = vmul.f32 %v2880, 1.442695
        %v2912 = vpow.pop %v2911
        %v2913 = vsel %vm1848, %v2882, 0.0
        %2914 = vadd.xlane.f32.xlu0 %v2913
        %v2915 = vpop.xlane.xlu0 %2914
        %v2916 = vsel %vm1848, %v2884, 0.0
        %2917 = vadd.xlane.f32.xlu0 %v2916
        %v2918 = vpop.xlane.xlu0 %2917
        %v2919 = vsel %vm1848, %v2886, 0.0
        %2920 = vadd.xlane.f32.xlu0 %v2919
        %v2921 = vpop.xlane.xlu0 %2920
        %v2922 = vsel %vm1848, %v2888, 0.0
        %2923 = vadd.xlane.f32.xlu0 %v2922
        %v2924 = vpop.xlane.xlu0 %2923
        %v2925 = vsel %vm1848, %v2890, 0.0
        %2926 = vadd.xlane.f32.xlu0 %v2925
        %v2927 = vpop.xlane.xlu0 %2926
        %v2928 = vsel %vm1848, %v2892, 0.0
        %2929 = vadd.xlane.f32.xlu0 %v2928
        %v2930 = vpop.xlane.xlu0 %2929
        %v2931 = vsel %vm1848, %v2894, 0.0
        %2932 = vadd.xlane.f32.xlu0 %v2931
        %v2933 = vpop.xlane.xlu0 %2932
        %v2934 = vsel %vm1848, %v2896, 0.0
        %2935 = vadd.xlane.f32.xlu0 %v2934
        %v2936 = vpop.xlane.xlu0 %2935
        %v2937 = vsel %vm1848, %v2898, 0.0
        %2938 = vadd.xlane.f32.xlu0 %v2937
        %v2939 = vpop.xlane.xlu0 %2938
        %v2940 = vsel %vm1848, %v2900, 0.0
        %2941 = vadd.xlane.f32.xlu0 %v2940
        %v2942 = vpop.xlane.xlu0 %2941
        %v2943 = vsel %vm1848, %v2902, 0.0
        %2944 = vadd.xlane.f32.xlu0 %v2943
        %v2945 = vpop.xlane.xlu0 %2944
        %v2946 = vsel %vm1848, %v2904, 0.0
        %2947 = vadd.xlane.f32.xlu0 %v2946
        %v2948 = vpop.xlane.xlu0 %2947
        %v2949 = vsel %vm1848, %v2906, 0.0
        %2950 = vadd.xlane.f32.xlu0 %v2949
        %v2951 = vpop.xlane.xlu0 %2950
        %v2952 = vsel %vm1848, %v2908, 0.0
        %2953 = vadd.xlane.f32.xlu0 %v2952
        %v2954 = vpop.xlane.xlu0 %2953
        %v2955 = vsel %vm1848, %v2910, 0.0
        %2956 = vadd.xlane.f32.xlu0 %v2955
        %v2957 = vpop.xlane.xlu0 %2956
        %v2958 = vsel %vm1848, %v2912, 0.0
        %2959 = vadd.xlane.f32.xlu0 %v2958
        %v2960 = vpop.xlane.xlu0 %2959
        %v2961 = vrcp.pop %v2915
        %v2962 = vrcp.pop %v2918
        %v2963 = vrcp.pop %v2921
        %v2964 = vrcp.pop %v2924
        %v2965 = vrcp.pop %v2927
        %v2966 = vrcp.pop %v2930
        %v2967 = vrcp.pop %v2933
        %v2968 = vrcp.pop %v2936
        %v2969 = vrcp.pop %v2939
        %v2970 = vrcp.pop %v2942
        %v2971 = vrcp.pop %v2945
        %v2972 = vrcp.pop %v2948
        %v2973 = vrcp.pop %v2951
        %v2974 = vrcp.pop %v2954
        %v2975 = vrcp.pop %v2957
        %v2976 = vrcp.pop %v2960
        %v2977 = vmul.f32 %v2882, %v2961
        %v2978 = vmul.f32 %v2884, %v2962
        %v2979 = vmul.f32 %v2886, %v2963
        %v2980 = vmul.f32 %v2888, %v2964
        %v2981 = vmul.f32 %v2890, %v2965
        %v2982 = vmul.f32 %v2892, %v2966
        %v2983 = vmul.f32 %v2894, %v2967
        %v2984 = vmul.f32 %v2896, %v2968
        %v2985 = vmul.f32 %v2898, %v2969
        %v2986 = vmul.f32 %v2900, %v2970
        %v2987 = vmul.f32 %v2902, %v2971
        %v2988 = vmul.f32 %v2904, %v2972
        %v2989 = vmul.f32 %v2906, %v2973
        %v2990 = vmul.f32 %v2908, %v2974
        %v2991 = vmul.f32 %v2910, %v2975
        %v2992 = vmul.f32 %v2912, %v2976
        %v2993 = vpack.c.bf16 %v2978, %v2977
        %v2994 = vpack.c.bf16 %v2980, %v2979
        %v2995 = vpack.c.bf16 %v2982, %v2981
        %v2996 = vpack.c.bf16 %v2984, %v2983
        %v2997 = vpack.c.bf16 %v2986, %v2985
        %v2998 = vpack.c.bf16 %v2988, %v2987
        %v2999 = vpack.c.bf16 %v2990, %v2989
        %v3000 = vpack.c.bf16 %v2992, %v2991
        %3002 = vrot.lane.b32.xlu0 %v1463, 64
        %v3003 = vpop.permute.xlu0 %3002
        %v3006 = vsel %vm1848, %v2993, 0
        %3008 = vmatprep.subr.bf16.mxu0 0
        %3009 = vmatpush1.bf16.msra.mxu0 %v3003
        %3010 = vmatprep.subr.bf16.mxu0 0
        %3011 = vmatpush1.bf16.msra.mxu0 0
        %3012 = vmatprep.subr.bf16.mxu0 0
        %3013 = vmatpush1.bf16.msra.mxu0 0
        %3014 = vmatprep.subr.bf16.mxu0 0
        %3015 = vmatpush1.bf16.msra.mxu0 0
        %3016 = vmatprep.subr.bf16.mxu0 0
        %3017 = vmatpush1.bf16.msra.mxu0 0
        %3018 = vmatprep.subr.bf16.mxu0 0
        %3019 = vmatpush1.bf16.msra.mxu0 0
        %3020 = vmatprep.subr.bf16.mxu0 0
        %3021 = vmatpush1.bf16.msra.mxu0 0
        %3022 = vmatprep.subr.bf16.mxu0 0
        %3023 = vmatpush1.bf16.msra.mxu0 0
        %3024 = vmatprep.subr.bf16.mxu0 0
        %3025 = vmatpush1.bf16.msra.mxu0 0
        %3026 = vmatprep.subr.bf16.mxu0 0
        %3027 = vmatpush1.bf16.msra.mxu0 0
        %3028 = vmatprep.subr.bf16.mxu0 0
        %3029 = vmatpush1.bf16.msra.mxu0 0
        %3030 = vmatprep.subr.bf16.mxu0 0
        %3031 = vmatpush1.bf16.msra.mxu0 0
        %3032 = vmatprep.subr.bf16.mxu0 0
        %3033 = vmatpush1.bf16.msra.mxu0 0
        %3034 = vmatprep.subr.bf16.mxu0 0
        %3035 = vmatpush1.bf16.msra.mxu0 0
        %3036 = vmatprep.subr.bf16.mxu0 0
        %3037 = vmatpush1.bf16.msra.mxu0 0
        %3038 = vmatprep.subr.bf16.mxu0 0
        %3039 = vmatpush1.bf16.msra.mxu0 0
        %3040 = vmatprep.mubr.bf16.mxu0 0
        %3041 = vmatmul.mubr.bf16.gmra.mrb[0].mxu0 %v3006
        %v3042 = vpop.f32.mrb[0].mxu0
        %v3043 = vadd.f32 0.0, %v3042
        %v3044 = vpop.f32.mrb[0].mxu0
        %v3045 = vpop.f32.mrb[0].mxu0
        %v3046 = vadd.f32 0.0, %v3045
        %v3047 = vpop.f32.mrb[0].mxu0
        %3048 = vdwg.mxu0
        %3050 = vrot.lane.b32.xlu0 %v1464, 64
        %v3051 = vpop.permute.xlu0 %3050
        %v3054 = vsel %vm1848, %v2994, 0
        %3056 = vmatprep.subr.bf16.mxu0 0
        %3057 = vmatpush1.bf16.msra.mxu0 %v3051
        %3058 = vmatprep.subr.bf16.mxu0 0
        %3059 = vmatpush1.bf16.msra.mxu0 0
        %3060 = vmatprep.subr.bf16.mxu0 0
        %3061 = vmatpush1.bf16.msra.mxu0 0
        %3062 = vmatprep.subr.bf16.mxu0 0
        %3063 = vmatpush1.bf16.msra.mxu0 0
        %3064 = vmatprep.subr.bf16.mxu0 0
        %3065 = vmatpush1.bf16.msra.mxu0 0
        %3066 = vmatprep.subr.bf16.mxu0 0
        %3067 = vmatpush1.bf16.msra.mxu0 0
        %3068 = vmatprep.subr.bf16.mxu0 0
        %3069 = vmatpush1.bf16.msra.mxu0 0
        %3070 = vmatprep.subr.bf16.mxu0 0
        %3071 = vmatpush1.bf16.msra.mxu0 0
        %3072 = vmatprep.subr.bf16.mxu0 0
        %3073 = vmatpush1.bf16.msra.mxu0 0
        %3074 = vmatprep.subr.bf16.mxu0 0
        %3075 = vmatpush1.bf16.msra.mxu0 0
        %3076 = vmatprep.subr.bf16.mxu0 0
        %3077 = vmatpush1.bf16.msra.mxu0 0
        %3078 = vmatprep.subr.bf16.mxu0 0
        %3079 = vmatpush1.bf16.msra.mxu0 0
        %3080 = vmatprep.subr.bf16.mxu0 0
        %3081 = vmatpush1.bf16.msra.mxu0 0
        %3082 = vmatprep.subr.bf16.mxu0 0
        %3083 = vmatpush1.bf16.msra.mxu0 0
        %3084 = vmatprep.subr.bf16.mxu0 0
        %3085 = vmatpush1.bf16.msra.mxu0 0
        %3086 = vmatprep.subr.bf16.mxu0 0
        %3087 = vmatpush1.bf16.msra.mxu0 0
        %3088 = vmatprep.mubr.bf16.mxu0 0
        %3089 = vmatmul.mubr.bf16.gmra.mrb[0].mxu0 %v3054
        %v3090 = vpop.f32.mrb[0].mxu0
        %v3091 = vadd.f32 0.0, %v3090
        %v3092 = vpop.f32.mrb[0].mxu0
        %v3093 = vpop.f32.mrb[0].mxu0
        %v3094 = vadd.f32 0.0, %v3093
        %v3095 = vpop.f32.mrb[0].mxu0
        %3096 = vdwg.mxu0
        %3098 = vrot.lane.b32.xlu0 %v1465, 64
        %v3099 = vpop.permute.xlu0 %3098
        %v3102 = vsel %vm1848, %v2995, 0
        %3104 = vmatprep.subr.bf16.mxu0 0
        %3105 = vmatpush1.bf16.msra.mxu0 %v3099
        %3106 = vmatprep.subr.bf16.mxu0 0
        %3107 = vmatpush1.bf16.msra.mxu0 0
        %3108 = vmatprep.subr.bf16.mxu0 0
        %3109 = vmatpush1.bf16.msra.mxu0 0
        %3110 = vmatprep.subr.bf16.mxu0 0
        %3111 = vmatpush1.bf16.msra.mxu0 0
        %3112 = vmatprep.subr.bf16.mxu0 0
        %3113 = vmatpush1.bf16.msra.mxu0 0
        %3114 = vmatprep.subr.bf16.mxu0 0
        %3115 = vmatpush1.bf16.msra.mxu0 0
        %3116 = vmatprep.subr.bf16.mxu0 0
        %3117 = vmatpush1.bf16.msra.mxu0 0
        %3118 = vmatprep.subr.bf16.mxu0 0
        %3119 = vmatpush1.bf16.msra.mxu0 0
        %3120 = vmatprep.subr.bf16.mxu0 0
        %3121 = vmatpush1.bf16.msra.mxu0 0
        %3122 = vmatprep.subr.bf16.mxu0 0
        %3123 = vmatpush1.bf16.msra.mxu0 0
        %3124 = vmatprep.subr.bf16.mxu0 0
        %3125 = vmatpush1.bf16.msra.mxu0 0
        %3126 = vmatprep.subr.bf16.mxu0 0
        %3127 = vmatpush1.bf16.msra.mxu0 0
        %3128 = vmatprep.subr.bf16.mxu0 0
        %3129 = vmatpush1.bf16.msra.mxu0 0
        %3130 = vmatprep.subr.bf16.mxu0 0
        %3131 = vmatpush1.bf16.msra.mxu0 0
        %3132 = vmatprep.subr.bf16.mxu0 0
        %3133 = vmatpush1.bf16.msra.mxu0 0
        %3134 = vmatprep.subr.bf16.mxu0 0
        %3135 = vmatpush1.bf16.msra.mxu0 0
        %3136 = vmatprep.mubr.bf16.mxu0 0
        %3137 = vmatmul.mubr.bf16.gmra.mrb[0].mxu0 %v3102
        %v3138 = vpop.f32.mrb[0].mxu0
        %v3139 = vadd.f32 0.0, %v3138
        %v3140 = vpop.f32.mrb[0].mxu0
        %v3141 = vpop.f32.mrb[0].mxu0
        %v3142 = vadd.f32 0.0, %v3141
        %v3143 = vpop.f32.mrb[0].mxu0
        %3144 = vdwg.mxu0
        %3146 = vrot.lane.b32.xlu0 %v1466, 64
        %v3147 = vpop.permute.xlu0 %3146
        %v3150 = vsel %vm1848, %v2996, 0
        %3152 = vmatprep.subr.bf16.mxu0 0
        %3153 = vmatpush1.bf16.msra.mxu0 %v3147
        %3154 = vmatprep.subr.bf16.mxu0 0
        %3155 = vmatpush1.bf16.msra.mxu0 0
        %3156 = vmatprep.subr.bf16.mxu0 0
        %3157 = vmatpush1.bf16.msra.mxu0 0
        %3158 = vmatprep.subr.bf16.mxu0 0
        %3159 = vmatpush1.bf16.msra.mxu0 0
        %3160 = vmatprep.subr.bf16.mxu0 0
        %3161 = vmatpush1.bf16.msra.mxu0 0
        %3162 = vmatprep.subr.bf16.mxu0 0
        %3163 = vmatpush1.bf16.msra.mxu0 0
        %3164 = vmatprep.subr.bf16.mxu0 0
        %3165 = vmatpush1.bf16.msra.mxu0 0
        %3166 = vmatprep.subr.bf16.mxu0 0
        %3167 = vmatpush1.bf16.msra.mxu0 0
        %3168 = vmatprep.subr.bf16.mxu0 0
        %3169 = vmatpush1.bf16.msra.mxu0 0
        %3170 = vmatprep.subr.bf16.mxu0 0
        %3171 = vmatpush1.bf16.msra.mxu0 0
        %3172 = vmatprep.subr.bf16.mxu0 0
        %3173 = vmatpush1.bf16.msra.mxu0 0
        %3174 = vmatprep.subr.bf16.mxu0 0
        %3175 = vmatpush1.bf16.msra.mxu0 0
        %3176 = vmatprep.subr.bf16.mxu0 0
        %3177 = vmatpush1.bf16.msra.mxu0 0
        %3178 = vmatprep.subr.bf16.mxu0 0
        %3179 = vmatpush1.bf16.msra.mxu0 0
        %3180 = vmatprep.subr.bf16.mxu0 0
        %3181 = vmatpush1.bf16.msra.mxu0 0
        %3182 = vmatprep.subr.bf16.mxu0 0
        %3183 = vmatpush1.bf16.msra.mxu0 0
        %3184 = vmatprep.mubr.bf16.mxu0 0
        %3185 = vmatmul.mubr.bf16.gmra.mrb[0].mxu0 %v3150
        %v3186 = vpop.f32.mrb[0].mxu0
        %v3187 = vadd.f32 0.0, %v3186
        %v3188 = vpop.f32.mrb[0].mxu0
        %v3189 = vpop.f32.mrb[0].mxu0
        %v3190 = vadd.f32 0.0, %v3189
        %v3191 = vpop.f32.mrb[0].mxu0
        %3192 = vdwg.mxu0
        %3194 = vrot.lane.b32.xlu0 %v1467, 64
        %v3195 = vpop.permute.xlu0 %3194
        %v3198 = vsel %vm1848, %v2997, 0
        %3200 = vmatprep.subr.bf16.mxu0 0
        %3201 = vmatpush1.bf16.msra.mxu0 %v3195
        %3202 = vmatprep.subr.bf16.mxu0 0
        %3203 = vmatpush1.bf16.msra.mxu0 0
        %3204 = vmatprep.subr.bf16.mxu0 0
        %3205 = vmatpush1.bf16.msra.mxu0 0
        %3206 = vmatprep.subr.bf16.mxu0 0
        %3207 = vmatpush1.bf16.msra.mxu0 0
        %3208 = vmatprep.subr.bf16.mxu0 0
        %3209 = vmatpush1.bf16.msra.mxu0 0
        %3210 = vmatprep.subr.bf16.mxu0 0
        %3211 = vmatpush1.bf16.msra.mxu0 0
        %3212 = vmatprep.subr.bf16.mxu0 0
        %3213 = vmatpush1.bf16.msra.mxu0 0
        %3214 = vmatprep.subr.bf16.mxu0 0
        %3215 = vmatpush1.bf16.msra.mxu0 0
        %3216 = vmatprep.subr.bf16.mxu0 0
        %3217 = vmatpush1.bf16.msra.mxu0 0
        %3218 = vmatprep.subr.bf16.mxu0 0
        %3219 = vmatpush1.bf16.msra.mxu0 0
        %3220 = vmatprep.subr.bf16.mxu0 0
        %3221 = vmatpush1.bf16.msra.mxu0 0
        %3222 = vmatprep.subr.bf16.mxu0 0
        %3223 = vmatpush1.bf16.msra.mxu0 0
        %3224 = vmatprep.subr.bf16.mxu0 0
        %3225 = vmatpush1.bf16.msra.mxu0 0
        %3226 = vmatprep.subr.bf16.mxu0 0
        %3227 = vmatpush1.bf16.msra.mxu0 0
        %3228 = vmatprep.subr.bf16.mxu0 0
        %3229 = vmatpush1.bf16.msra.mxu0 0
        %3230 = vmatprep.subr.bf16.mxu0 0
        %3231 = vmatpush1.bf16.msra.mxu0 0
        %3232 = vmatprep.mubr.bf16.mxu0 0
        %3233 = vmatmul.mubr.bf16.gmra.mrb[0].mxu0 %v3198
        %v3234 = vpop.f32.mrb[0].mxu0
        %v3235 = vadd.f32 0.0, %v3234
        %v3236 = vpop.f32.mrb[0].mxu0
        %v3237 = vpop.f32.mrb[0].mxu0
        %v3238 = vadd.f32 0.0, %v3237
        %v3239 = vpop.f32.mrb[0].mxu0
        %3240 = vdwg.mxu0
        %3242 = vrot.lane.b32.xlu0 %v1468, 64
        %v3243 = vpop.permute.xlu0 %3242
        %v3246 = vsel %vm1848, %v2998, 0
        %3248 = vmatprep.subr.bf16.mxu0 0
        %3249 = vmatpush1.bf16.msra.mxu0 %v3243
        %3250 = vmatprep.subr.bf16.mxu0 0
        %3251 = vmatpush1.bf16.msra.mxu0 0
        %3252 = vmatprep.subr.bf16.mxu0 0
        %3253 = vmatpush1.bf16.msra.mxu0 0
        %3254 = vmatprep.subr.bf16.mxu0 0
        %3255 = vmatpush1.bf16.msra.mxu0 0
        %3256 = vmatprep.subr.bf16.mxu0 0
        %3257 = vmatpush1.bf16.msra.mxu0 0
        %3258 = vmatprep.subr.bf16.mxu0 0
        %3259 = vmatpush1.bf16.msra.mxu0 0
        %3260 = vmatprep.subr.bf16.mxu0 0
        %3261 = vmatpush1.bf16.msra.mxu0 0
        %3262 = vmatprep.subr.bf16.mxu0 0
        %3263 = vmatpush1.bf16.msra.mxu0 0
        %3264 = vmatprep.subr.bf16.mxu0 0
        %3265 = vmatpush1.bf16.msra.mxu0 0
        %3266 = vmatprep.subr.bf16.mxu0 0
        %3267 = vmatpush1.bf16.msra.mxu0 0
        %3268 = vmatprep.subr.bf16.mxu0 0
        %3269 = vmatpush1.bf16.msra.mxu0 0
        %3270 = vmatprep.subr.bf16.mxu0 0
        %3271 = vmatpush1.bf16.msra.mxu0 0
        %3272 = vmatprep.subr.bf16.mxu0 0
        %3273 = vmatpush1.bf16.msra.mxu0 0
        %3274 = vmatprep.subr.bf16.mxu0 0
        %3275 = vmatpush1.bf16.msra.mxu0 0
        %3276 = vmatprep.subr.bf16.mxu0 0
        %3277 = vmatpush1.bf16.msra.mxu0 0
        %3278 = vmatprep.subr.bf16.mxu0 0
        %3279 = vmatpush1.bf16.msra.mxu0 0
        %3280 = vmatprep.mubr.bf16.mxu0 0
        %3281 = vmatmul.mubr.bf16.gmra.mrb[0].mxu0 %v3246
        %v3282 = vpop.f32.mrb[0].mxu0
        %v3283 = vadd.f32 0.0, %v3282
        %v3284 = vpop.f32.mrb[0].mxu0
        %v3285 = vpop.f32.mrb[0].mxu0
        %v3286 = vadd.f32 0.0, %v3285
        %v3287 = vpop.f32.mrb[0].mxu0
        %3288 = vdwg.mxu0
        %3290 = vrot.lane.b32.xlu0 %v1469, 64
        %v3291 = vpop.permute.xlu0 %3290
        %v3294 = vsel %vm1848, %v2999, 0
        %3296 = vmatprep.subr.bf16.mxu0 0
        %3297 = vmatpush1.bf16.msra.mxu0 %v3291
        %3298 = vmatprep.subr.bf16.mxu0 0
        %3299 = vmatpush1.bf16.msra.mxu0 0
        %3300 = vmatprep.subr.bf16.mxu0 0
        %3301 = vmatpush1.bf16.msra.mxu0 0
        %3302 = vmatprep.subr.bf16.mxu0 0
        %3303 = vmatpush1.bf16.msra.mxu0 0
        %3304 = vmatprep.subr.bf16.mxu0 0
        %3305 = vmatpush1.bf16.msra.mxu0 0
        %3306 = vmatprep.subr.bf16.mxu0 0
        %3307 = vmatpush1.bf16.msra.mxu0 0
        %3308 = vmatprep.subr.bf16.mxu0 0
        %3309 = vmatpush1.bf16.msra.mxu0 0
        %3310 = vmatprep.subr.bf16.mxu0 0
        %3311 = vmatpush1.bf16.msra.mxu0 0
        %3312 = vmatprep.subr.bf16.mxu0 0
        %3313 = vmatpush1.bf16.msra.mxu0 0
        %3314 = vmatprep.subr.bf16.mxu0 0
        %3315 = vmatpush1.bf16.msra.mxu0 0
        %3316 = vmatprep.subr.bf16.mxu0 0
        %3317 = vmatpush1.bf16.msra.mxu0 0
        %3318 = vmatprep.subr.bf16.mxu0 0
        %3319 = vmatpush1.bf16.msra.mxu0 0
        %3320 = vmatprep.subr.bf16.mxu0 0
        %3321 = vmatpush1.bf16.msra.mxu0 0
        %3322 = vmatprep.subr.bf16.mxu0 0
        %3323 = vmatpush1.bf16.msra.mxu0 0
        %3324 = vmatprep.subr.bf16.mxu0 0
        %3325 = vmatpush1.bf16.msra.mxu0 0
        %3326 = vmatprep.subr.bf16.mxu0 0
        %3327 = vmatpush1.bf16.msra.mxu0 0
        %3328 = vmatprep.mubr.bf16.mxu0 0
        %3329 = vmatmul.mubr.bf16.gmra.mrb[0].mxu0 %v3294
        %v3330 = vpop.f32.mrb[0].mxu0
        %v3331 = vadd.f32 0.0, %v3330
        %v3332 = vpop.f32.mrb[0].mxu0
        %v3333 = vpop.f32.mrb[0].mxu0
        %v3334 = vadd.f32 0.0, %v3333
        %v3335 = vpop.f32.mrb[0].mxu0
        %3336 = vdwg.mxu0
        %3338 = vrot.lane.b32.xlu0 %v1470, 64
        %v3339 = vpop.permute.xlu0 %3338
        %v3342 = vsel %vm1848, %v3000, 0
        %3344 = vmatprep.subr.bf16.mxu0 0
        %3345 = vmatpush1.bf16.msra.mxu0 %v3339
        %3346 = vmatprep.subr.bf16.mxu0 0
        %3347 = vmatpush1.bf16.msra.mxu0 0
        %3348 = vmatprep.subr.bf16.mxu0 0
        %3349 = vmatpush1.bf16.msra.mxu0 0
        %3350 = vmatprep.subr.bf16.mxu0 0
        %3351 = vmatpush1.bf16.msra.mxu0 0
        %3352 = vmatprep.subr.bf16.mxu0 0
        %3353 = vmatpush1.bf16.msra.mxu0 0
        %3354 = vmatprep.subr.bf16.mxu0 0
        %3355 = vmatpush1.bf16.msra.mxu0 0
        %3356 = vmatprep.subr.bf16.mxu0 0
        %3357 = vmatpush1.bf16.msra.mxu0 0
        %3358 = vmatprep.subr.bf16.mxu0 0
        %3359 = vmatpush1.bf16.msra.mxu0 0
        %3360 = vmatprep.subr.bf16.mxu0 0
        %3361 = vmatpush1.bf16.msra.mxu0 0
        %3362 = vmatprep.subr.bf16.mxu0 0
        %3363 = vmatpush1.bf16.msra.mxu0 0
        %3364 = vmatprep.subr.bf16.mxu0 0
        %3365 = vmatpush1.bf16.msra.mxu0 0
        %3366 = vmatprep.subr.bf16.mxu0 0
        %3367 = vmatpush1.bf16.msra.mxu0 0
        %3368 = vmatprep.subr.bf16.mxu0 0
        %3369 = vmatpush1.bf16.msra.mxu0 0
        %3370 = vmatprep.subr.bf16.mxu0 0
        %3371 = vmatpush1.bf16.msra.mxu0 0
        %3372 = vmatprep.subr.bf16.mxu0 0
        %3373 = vmatpush1.bf16.msra.mxu0 0
        %3374 = vmatprep.subr.bf16.mxu0 0
        %3375 = vmatpush1.bf16.msra.mxu0 0
        %3376 = vmatprep.mubr.bf16.mxu0 0
        %3377 = vmatmul.mubr.bf16.gmra.mrb[0].mxu0 %v3342
        %v3378 = vpop.f32.mrb[0].mxu0
        %v3379 = vadd.f32 0.0, %v3378
        %v3380 = vpop.f32.mrb[0].mxu0
        %v3381 = vpop.f32.mrb[0].mxu0
        %v3382 = vadd.f32 0.0, %v3381
        %v3383 = vpop.f32.mrb[0].mxu0
        %3384 = vdwg.mxu0
        %v3385 = vpack.c.bf16 %v3046, %v3043
        %v3386 = vpack.c.bf16 %v3094, %v3091
        %v3387 = vpack.c.bf16 %v3142, %v3139
        %v3388 = vpack.c.bf16 %v3190, %v3187
        %v3389 = vpack.c.bf16 %v3238, %v3235
        %v3390 = vpack.c.bf16 %v3286, %v3283
        %v3391 = vpack.c.bf16 %v3334, %v3331
        %v3392 = vpack.c.bf16 %v3382, %v3379
        %v3401 = vunpack.c.l.b16 %v654
        %v3402 = vunpack.c.l.b16 %v655
        %v3403 = vunpack.c.l.b16 %v656
        %v3404 = vunpack.c.l.b16 %v657
        %v3405 = vunpack.c.l.b16 %v658
        %v3406 = vunpack.c.l.b16 %v659
        %v3407 = vunpack.c.l.b16 %v660
        %v3408 = vunpack.c.l.b16 %v661
        %v3409 = vpack.c.b16 %v3402, %v3401
        %v3410 = vpack.c.b16 %v3404, %v3403
        %v3411 = vpack.c.b16 %v3406, %v3405
        %v3412 = vpack.c.b16 %v3408, %v3407
        %v3418 = vsel %vm1471, %v3385, 0
        %v3421 = vsel %vm1471, %v3386, 0
        %v3424 = vsel %vm1471, %v3387, 0
        %v3427 = vsel %vm1471, %v3388, 0
        %v3430 = vsel %vm1471, %v3389, 0
        %v3433 = vsel %vm1471, %v3390, 0
        %v3436 = vsel %vm1471, %v3391, 0
        %v3439 = vsel %vm1471, %v3392, 0
        %3441 = vmatprep.subr.bf16.mxu0 0
        %3442 = vmatpush1.bf16.msra.mxu0 %v3409
        %3443 = vmatprep.subr.bf16.mxu0 0
        %3444 = vmatpush1.bf16.msra.mxu0 %v3410
        %3445 = vmatprep.subr.bf16.mxu0 0
        %3446 = vmatpush1.bf16.msra.mxu0 %v3411
        %3447 = vmatprep.subr.bf16.mxu0 0
        %3448 = vmatpush1.bf16.msra.mxu0 %v3412
        %3449 = vmatprep.subr.bf16.mxu0 0
        %3450 = vmatpush1.bf16.msra.mxu0 0
        %3451 = vmatprep.subr.bf16.mxu0 0
        %3452 = vmatpush1.bf16.msra.mxu0 0
        %3453 = vmatprep.subr.bf16.mxu0 0
        %3454 = vmatpush1.bf16.msra.mxu0 0
        %3455 = vmatprep.subr.bf16.mxu0 0
        %3456 = vmatpush1.bf16.msra.mxu0 0
        %3457 = vmatprep.subr.bf16.mxu0 0
        %3458 = vmatpush1.bf16.msra.mxu0 0
        %3459 = vmatprep.subr.bf16.mxu0 0
        %3460 = vmatpush1.bf16.msra.mxu0 0
        %3461 = vmatprep.subr.bf16.mxu0 0
        %3462 = vmatpush1.bf16.msra.mxu0 0
        %3463 = vmatprep.subr.bf16.mxu0 0
        %3464 = vmatpush1.bf16.msra.mxu0 0
        %3465 = vmatprep.subr.bf16.mxu0 0
        %3466 = vmatpush1.bf16.msra.mxu0 0
        %3467 = vmatprep.subr.bf16.mxu0 0
        %3468 = vmatpush1.bf16.msra.mxu0 0
        %3469 = vmatprep.subr.bf16.mxu0 0
        %3470 = vmatpush1.bf16.msra.mxu0 0
        %3471 = vmatprep.subr.bf16.mxu0 0
        %3472 = vmatpush1.bf16.msra.mxu0 0
        %3473 = vmatprep.mubr.bf16.mxu0 0
        %3474 = vmatmul.mubr.bf16.gmra.mrb[0].mxu0 %v3418
        %v3475 = vpop.f32.mrb[0].mxu0
        %v3476 = vadd.f32 0.0, %v3475
        %v3477 = vpop.f32.mrb[0].mxu0
        %v3478 = vpop.f32.mrb[0].mxu0
        %v3479 = vadd.f32 0.0, %v3478
        %v3480 = vpop.f32.mrb[0].mxu0
        %3481 = vmatprep.mubr.bf16.mxu0 0
        %3482 = vmatmul.mubr.bf16.gmra.mrb[0].mxu0 %v3421
        %v3483 = vpop.f32.mrb[0].mxu0
        %v3484 = vadd.f32 0.0, %v3483
        %v3485 = vpop.f32.mrb[0].mxu0
        %v3486 = vpop.f32.mrb[0].mxu0
        %v3487 = vadd.f32 0.0, %v3486
        %v3488 = vpop.f32.mrb[0].mxu0
        %3489 = vmatprep.mubr.bf16.mxu0 0
        %3490 = vmatmul.mubr.bf16.gmra.mrb[0].mxu0 %v3424
        %v3491 = vpop.f32.mrb[0].mxu0
        %v3492 = vadd.f32 0.0, %v3491
        %v3493 = vpop.f32.mrb[0].mxu0
        %v3494 = vpop.f32.mrb[0].mxu0
        %v3495 = vadd.f32 0.0, %v3494
        %v3496 = vpop.f32.mrb[0].mxu0
        %3497 = vmatprep.mubr.bf16.mxu0 0
        %3498 = vmatmul.mubr.bf16.gmra.mrb[0].mxu0 %v3427
        %v3499 = vpop.f32.mrb[0].mxu0
        %v3500 = vadd.f32 0.0, %v3499
        %v3501 = vpop.f32.mrb[0].mxu0
        %v3502 = vpop.f32.mrb[0].mxu0
        %v3503 = vadd.f32 0.0, %v3502
        %v3504 = vpop.f32.mrb[0].mxu0
        %3505 = vmatprep.mubr.bf16.mxu0 0
        %3506 = vmatmul.mubr.bf16.gmra.mrb[0].mxu0 %v3430
        %v3507 = vpop.f32.mrb[0].mxu0
        %v3508 = vadd.f32 0.0, %v3507
        %v3509 = vpop.f32.mrb[0].mxu0
        %v3510 = vpop.f32.mrb[0].mxu0
        %v3511 = vadd.f32 0.0, %v3510
        %v3512 = vpop.f32.mrb[0].mxu0
        %3513 = vmatprep.mubr.bf16.mxu0 0
        %3514 = vmatmul.mubr.bf16.gmra.mrb[0].mxu0 %v3433
        %v3515 = vpop.f32.mrb[0].mxu0
        %v3516 = vadd.f32 0.0, %v3515
        %v3517 = vpop.f32.mrb[0].mxu0
        %v3518 = vpop.f32.mrb[0].mxu0
        %v3519 = vadd.f32 0.0, %v3518
        %v3520 = vpop.f32.mrb[0].mxu0
        %3521 = vmatprep.mubr.bf16.mxu0 0
        %3522 = vmatmul.mubr.bf16.gmra.mrb[0].mxu0 %v3436
        %v3523 = vpop.f32.mrb[0].mxu0
        %v3524 = vadd.f32 0.0, %v3523
        %v3525 = vpop.f32.mrb[0].mxu0
        %v3526 = vpop.f32.mrb[0].mxu0
        %v3527 = vadd.f32 0.0, %v3526
        %v3528 = vpop.f32.mrb[0].mxu0
        %3529 = vmatprep.mubr.bf16.mxu0 0
        %3530 = vmatmul.mubr.bf16.gmra.mrb[0].mxu0 %v3439
        %v3531 = vpop.f32.mrb[0].mxu0
        %v3532 = vadd.f32 0.0, %v3531
        %v3533 = vpop.f32.mrb[0].mxu0
        %v3534 = vpop.f32.mrb[0].mxu0
        %v3535 = vadd.f32 0.0, %v3534
        %v3536 = vpop.f32.mrb[0].mxu0
        %3537 = vdwg.mxu0
        %v3546 = vunpack.c.l.b16 %v646
        %v3547 = vunpack.c.l.b16 %v647
        %v3548 = vunpack.c.l.b16 %v648
        %v3549 = vunpack.c.l.b16 %v649
        %v3550 = vunpack.c.l.b16 %v650
        %v3551 = vunpack.c.l.b16 %v651
        %v3552 = vunpack.c.l.b16 %v652
        %v3553 = vunpack.c.l.b16 %v653
        %v3554 = vpack.c.b16 %v3547, %v3546
        %v3555 = vpack.c.b16 %v3549, %v3548
        %v3556 = vpack.c.b16 %v3551, %v3550
        %v3557 = vpack.c.b16 %v3553, %v3552
        %v3563 = vsel %vm1471, %v2385, 0
        %v3566 = vsel %vm1471, %v2386, 0
        %v3569 = vsel %vm1471, %v2387, 0
        %v3572 = vsel %vm1471, %v2388, 0
        %v3575 = vsel %vm1471, %v2389, 0
        %v3578 = vsel %vm1471, %v2390, 0
        %v3581 = vsel %vm1471, %v2391, 0
        %v3584 = vsel %vm1471, %v2392, 0
        %3586 = vmatprep.subr.bf16.mxu0 0
        %3587 = vmatpush1.bf16.msra.mxu0 %v3554
        %3588 = vmatprep.subr.bf16.mxu0 0
        %3589 = vmatpush1.bf16.msra.mxu0 %v3555
        %3590 = vmatprep.subr.bf16.mxu0 0
        %3591 = vmatpush1.bf16.msra.mxu0 %v3556
        %3592 = vmatprep.subr.bf16.mxu0 0
        %3593 = vmatpush1.bf16.msra.mxu0 %v3557
        %3594 = vmatprep.subr.bf16.mxu0 0
        %3595 = vmatpush1.bf16.msra.mxu0 0
        %3596 = vmatprep.subr.bf16.mxu0 0
        %3597 = vmatpush1.bf16.msra.mxu0 0
        %3598 = vmatprep.subr.bf16.mxu0 0
        %3599 = vmatpush1.bf16.msra.mxu0 0
        %3600 = vmatprep.subr.bf16.mxu0 0
        %3601 = vmatpush1.bf16.msra.mxu0 0
        %3602 = vmatprep.subr.bf16.mxu0 0
        %3603 = vmatpush1.bf16.msra.mxu0 0
        %3604 = vmatprep.subr.bf16.mxu0 0
        %3605 = vmatpush1.bf16.msra.mxu0 0
        %3606 = vmatprep.subr.bf16.mxu0 0
        %3607 = vmatpush1.bf16.msra.mxu0 0
        %3608 = vmatprep.subr.bf16.mxu0 0
        %3609 = vmatpush1.bf16.msra.mxu0 0
        %3610 = vmatprep.subr.bf16.mxu0 0
        %3611 = vmatpush1.bf16.msra.mxu0 0
        %3612 = vmatprep.subr.bf16.mxu0 0
        %3613 = vmatpush1.bf16.msra.mxu0 0
        %3614 = vmatprep.subr.bf16.mxu0 0
        %3615 = vmatpush1.bf16.msra.mxu0 0
        %3616 = vmatprep.subr.bf16.mxu0 0
        %3617 = vmatpush1.bf16.msra.mxu0 0
        %3618 = vmatprep.mubr.bf16.mxu0 0
        %3619 = vmatmul.mubr.bf16.gmra.mrb[0].mxu0 %v3563
        %v3620 = vpop.f32.mrb[0].mxu0
        %v3621 = vadd.f32 %v3476, %v3620
        %v3622 = vpop.f32.mrb[0].mxu0
        %v3623 = vpop.f32.mrb[0].mxu0
        %v3624 = vadd.f32 %v3479, %v3623
        %v3625 = vpop.f32.mrb[0].mxu0
        %3626 = vmatprep.mubr.bf16.mxu0 0
        %3627 = vmatmul.mubr.bf16.gmra.mrb[0].mxu0 %v3566
        %v3628 = vpop.f32.mrb[0].mxu0
        %v3629 = vadd.f32 %v3484, %v3628
        %v3630 = vpop.f32.mrb[0].mxu0
        %v3631 = vpop.f32.mrb[0].mxu0
        %v3632 = vadd.f32 %v3487, %v3631
        %v3633 = vpop.f32.mrb[0].mxu0
        %3634 = vmatprep.mubr.bf16.mxu0 0
        %3635 = vmatmul.mubr.bf16.gmra.mrb[0].mxu0 %v3569
        %v3636 = vpop.f32.mrb[0].mxu0
        %v3637 = vadd.f32 %v3492, %v3636
        %v3638 = vpop.f32.mrb[0].mxu0
        %v3639 = vpop.f32.mrb[0].mxu0
        %v3640 = vadd.f32 %v3495, %v3639
        %v3641 = vpop.f32.mrb[0].mxu0
        %3642 = vmatprep.mubr.bf16.mxu0 0
        %3643 = vmatmul.mubr.bf16.gmra.mrb[0].mxu0 %v3572
        %v3644 = vpop.f32.mrb[0].mxu0
        %v3645 = vadd.f32 %v3500, %v3644
        %v3646 = vpop.f32.mrb[0].mxu0
        %v3647 = vpop.f32.mrb[0].mxu0
        %v3648 = vadd.f32 %v3503, %v3647
        %v3649 = vpop.f32.mrb[0].mxu0
        %3650 = vmatprep.mubr.bf16.mxu0 0
        %3651 = vmatmul.mubr.bf16.gmra.mrb[0].mxu0 %v3575
        %v3652 = vpop.f32.mrb[0].mxu0
        %v3653 = vadd.f32 %v3508, %v3652
        %v3654 = vpop.f32.mrb[0].mxu0
        %v3655 = vpop.f32.mrb[0].mxu0
        %v3656 = vadd.f32 %v3511, %v3655
        %v3657 = vpop.f32.mrb[0].mxu0
        %3658 = vmatprep.mubr.bf16.mxu0 0
        %3659 = vmatmul.mubr.bf16.gmra.mrb[0].mxu0 %v3578
        %v3660 = vpop.f32.mrb[0].mxu0
        %v3661 = vadd.f32 %v3516, %v3660
        %v3662 = vpop.f32.mrb[0].mxu0
        %v3663 = vpop.f32.mrb[0].mxu0
        %v3664 = vadd.f32 %v3519, %v3663
        %v3665 = vpop.f32.mrb[0].mxu0
        %3666 = vmatprep.mubr.bf16.mxu0 0
        %3667 = vmatmul.mubr.bf16.gmra.mrb[0].mxu0 %v3581
        %v3668 = vpop.f32.mrb[0].mxu0
        %v3669 = vadd.f32 %v3524, %v3668
        %v3670 = vpop.f32.mrb[0].mxu0
        %v3671 = vpop.f32.mrb[0].mxu0
        %v3672 = vadd.f32 %v3527, %v3671
        %v3673 = vpop.f32.mrb[0].mxu0
        %3674 = vmatprep.mubr.bf16.mxu0 0
        %3675 = vmatmul.mubr.bf16.gmra.mrb[0].mxu0 %v3584
        %v3676 = vpop.f32.mrb[0].mxu0
        %v3677 = vadd.f32 %v3532, %v3676
        %v3678 = vpop.f32.mrb[0].mxu0
        %v3679 = vpop.f32.mrb[0].mxu0
        %v3680 = vadd.f32 %v3535, %v3679
        %v3681 = vpop.f32.mrb[0].mxu0
        %3682 = vdwg.mxu0
        %v3684 = vlaneseq
        %v3685 = vshrl.u32 %v3684, 7
        %v3686 = vsub.s32 0, %v3685
        %v3687 = vrot.slane %v662, %v3686
        %v3689 = vadd.f32 %v3621, %v3687
        %v3690 = vadd.f32 %v3624, %v3687
        %v3691 = vadd.f32 %v3629, %v3687
        %v3692 = vadd.f32 %v3632, %v3687
        %v3693 = vadd.f32 %v3637, %v3687
        %v3694 = vadd.f32 %v3640, %v3687
        %v3695 = vadd.f32 %v3645, %v3687
        %v3696 = vadd.f32 %v3648, %v3687
        %v3697 = vadd.f32 %v3653, %v3687
        %v3698 = vadd.f32 %v3656, %v3687
        %v3699 = vadd.f32 %v3661, %v3687
        %v3700 = vadd.f32 %v3664, %v3687
        %v3701 = vadd.f32 %v3669, %v3687
        %v3702 = vadd.f32 %v3672, %v3687
        %v3703 = vadd.f32 %v3677, %v3687
        %v3704 = vadd.f32 %v3680, %v3687
        %v3705 = vxor.u32 %v739, 2147483648
        %v3706 = vmul.f32 %v3705, 1.442695
        %v3707 = vpow.pop %v3706
        %v3708 = vadd.f32 %v3707, 1.0
        %v3709 = vrcp.pop %v3708
        %v3710 = vmul.f32 1.0, %v3709
        %v3711 = vmul.f32 %v739, %v3710
        %v3712 = vpack.c.bf16 %v3711, %v3711
        %v3714 = vlaneseq
        %v3715 = vshrl.u32 %v3714, 7
        %v3716 = vsub.s32 0, %v3715
        %v3717 = vrot.slane %v671, %v3716
        %v3727 = vunpack.c.l.b16 %v663
        %v3728 = vunpack.c.l.b16 %v664
        %v3729 = vunpack.c.l.b16 %v665
        %v3730 = vunpack.c.l.b16 %v666
        %v3731 = vunpack.c.l.b16 %v667
        %v3732 = vunpack.c.l.b16 %v668
        %v3733 = vunpack.c.l.b16 %v669
        %v3734 = vunpack.c.l.b16 %v670
        %v3735 = vpack.c.b16 %v3728, %v3727
        %v3736 = vpack.c.b16 %v3730, %v3729
        %v3737 = vpack.c.b16 %v3732, %v3731
        %v3738 = vpack.c.b16 %v3734, %v3733
        %v3744 = vsel %vm1471, %v3712, 0
        %3746 = vmatprep.subr.bf16.mxu0 0
        %3747 = vmatpush1.bf16.msra.mxu0 %v3735
        %3748 = vmatprep.subr.bf16.mxu0 0
        %3749 = vmatpush1.bf16.msra.mxu0 %v3736
        %3750 = vmatprep.subr.bf16.mxu0 0
        %3751 = vmatpush1.bf16.msra.mxu0 %v3737
        %3752 = vmatprep.subr.bf16.mxu0 0
        %3753 = vmatpush1.bf16.msra.mxu0 %v3738
        %3754 = vmatprep.subr.bf16.mxu0 0
        %3755 = vmatpush1.bf16.msra.mxu0 0
        %3756 = vmatprep.subr.bf16.mxu0 0
        %3757 = vmatpush1.bf16.msra.mxu0 0
        %3758 = vmatprep.subr.bf16.mxu0 0
        %3759 = vmatpush1.bf16.msra.mxu0 0
        %3760 = vmatprep.subr.bf16.mxu0 0
        %3761 = vmatpush1.bf16.msra.mxu0 0
        %3762 = vmatprep.subr.bf16.mxu0 0
        %3763 = vmatpush1.bf16.msra.mxu0 0
        %3764 = vmatprep.subr.bf16.mxu0 0
        %3765 = vmatpush1.bf16.msra.mxu0 0
        %3766 = vmatprep.subr.bf16.mxu0 0
        %3767 = vmatpush1.bf16.msra.mxu0 0
        %3768 = vmatprep.subr.bf16.mxu0 0
        %3769 = vmatpush1.bf16.msra.mxu0 0
        %3770 = vmatprep.subr.bf16.mxu0 0
        %3771 = vmatpush1.bf16.msra.mxu0 0
        %3772 = vmatprep.subr.bf16.mxu0 0
        %3773 = vmatpush1.bf16.msra.mxu0 0
        %3774 = vmatprep.subr.bf16.mxu0 0
        %3775 = vmatpush1.bf16.msra.mxu0 0
        %3776 = vmatprep.subr.bf16.mxu0 0
        %3777 = vmatpush1.bf16.msra.mxu0 0
        %3778 = vmatprep.mubr.bf16.mxu0 0
        %3779 = vmatmul.mubr.bf16.gmra.mrb[0].mxu0 %v3744
        %v3780 = vpop.f32.mrb[0].mxu0
        %v3781 = vadd.f32 %v3717, %v3780
        %v3782 = vpop.f32.mrb[0].mxu0
        %v3783 = vpop.f32.mrb[0].mxu0
        %v3784 = vpop.f32.mrb[0].mxu0
        %3785 = vdwg.mxu0
        %v3787 = vcombine.high %v3781, %v3781
        %v3789 = vunpack.c.l.s4 1966171168
        %v3790 = vunpack.c.0.s8 %v3789
        %v3791 = vlaneseq
        %v3792 = vshrl.u32 %v3791, 7
        %v3793 = vsub.s32 %v3790, %v3792
        %v3794 = vrot.slane %v3781, %v3793
        %v3796 = vunpack.c.l.s4 1966171168
        %v3797 = vunpack.c.0.s8 %v3796
        %v3798 = vlaneseq
        %v3799 = vshrl.u32 %v3798, 7
        %v3800 = vsub.s32 %v3797, %v3799
        %v3801 = vrot.slane %v3787, %v3800
        %v3802 = vcombine.high %v3794, %v3794
        %v3803 = vcombine.high %v3801, %v3801
        %v3805 = vunpack.c.l.s4 1966171168
        %v3806 = vunpack.c.0.s8 %v3805
        %v3807 = vlaneseq
        %v3808 = vshrl.u32 %v3807, 7
        %v3809 = vsub.s32 %v3806, %v3808
        %v3810 = vrot.slane %v3794, %v3809
        %v3812 = vunpack.c.l.s4 1966171168
        %v3813 = vunpack.c.0.s8 %v3812
        %v3814 = vlaneseq
        %v3815 = vshrl.u32 %v3814, 7
        %v3816 = vsub.s32 %v3813, %v3815
        %v3817 = vrot.slane %v3801, %v3816
        %v3819 = vunpack.c.l.s4 1966171168
        %v3820 = vunpack.c.0.s8 %v3819
        %v3821 = vlaneseq
        %v3822 = vshrl.u32 %v3821, 7
        %v3823 = vsub.s32 %v3820, %v3822
        %v3824 = vrot.slane %v3802, %v3823
        %v3826 = vunpack.c.l.s4 1966171168
        %v3827 = vunpack.c.0.s8 %v3826
        %v3828 = vlaneseq
        %v3829 = vshrl.u32 %v3828, 7
        %v3830 = vsub.s32 %v3827, %v3829
        %v3831 = vrot.slane %v3803, %v3830
        %v3832 = vcombine.high %v3810, %v3810
        %v3833 = vcombine.high %v3817, %v3817
        %v3834 = vcombine.high %v3824, %v3824
        %v3835 = vcombine.high %v3831, %v3831
        %v3836 = vlaneseq
        %v3837 = vshrl.u32 %v3836, 7
        %v3838 = vsub.s32 0, %v3837
        %v3839 = vrot.slane %v3810, %v3838
        %v3840 = vlaneseq
        %v3841 = vshrl.u32 %v3840, 7
        %v3842 = vsub.s32 0, %v3841
        %v3843 = vrot.slane %v3824, %v3842
        %v3844 = vlaneseq
        %v3845 = vshrl.u32 %v3844, 7
        %v3846 = vsub.s32 0, %v3845
        %v3847 = vrot.slane %v3832, %v3846
        %v3848 = vlaneseq
        %v3849 = vshrl.u32 %v3848, 7
        %v3850 = vsub.s32 0, %v3849
        %v3851 = vrot.slane %v3834, %v3850
        %v3852 = vlaneseq
        %v3853 = vshrl.u32 %v3852, 7
        %v3854 = vsub.s32 0, %v3853
        %v3855 = vrot.slane %v3817, %v3854
        %v3856 = vlaneseq
        %v3857 = vshrl.u32 %v3856, 7
        %v3858 = vsub.s32 0, %v3857
        %v3859 = vrot.slane %v3831, %v3858
        %v3860 = vlaneseq
        %v3861 = vshrl.u32 %v3860, 7
        %v3862 = vsub.s32 0, %v3861
        %v3863 = vrot.slane %v3833, %v3862
        %v3864 = vlaneseq
        %v3865 = vshrl.u32 %v3864, 7
        %v3866 = vsub.s32 0, %v3865
        %v3867 = vrot.slane %v3835, %v3866
        %v3876 = vadd.f32 %v3689, %v3839
        %v3877 = vadd.f32 %v3690, %v3839
        %v3878 = vadd.f32 %v3691, %v3843
        %v3879 = vadd.f32 %v3692, %v3843
        %v3880 = vadd.f32 %v3693, %v3847
        %v3881 = vadd.f32 %v3694, %v3847
        %v3882 = vadd.f32 %v3695, %v3851
        %v3883 = vadd.f32 %v3696, %v3851
        %v3884 = vadd.f32 %v3697, %v3855
        %v3885 = vadd.f32 %v3698, %v3855
        %v3886 = vadd.f32 %v3699, %v3859
        %v3887 = vadd.f32 %v3700, %v3859
        %v3888 = vadd.f32 %v3701, %v3863
        %v3889 = vadd.f32 %v3702, %v3863
        %v3890 = vadd.f32 %v3703, %v3867
        %v3891 = vadd.f32 %v3704, %v3867
        %3892 = vadd.xlane.f32.xlu0 %v3876
        %v3893 = vpop.xlane.xlu0 %3892
        %3894 = vadd.xlane.f32.xlu0 %v3877
        %v3895 = vpop.xlane.xlu0 %3894
        %3896 = vadd.xlane.f32.xlu0 %v3878
        %v3897 = vpop.xlane.xlu0 %3896
        %3898 = vadd.xlane.f32.xlu0 %v3879
        %v3899 = vpop.xlane.xlu0 %3898
        %3900 = vadd.xlane.f32.xlu0 %v3880
        %v3901 = vpop.xlane.xlu0 %3900
        %3902 = vadd.xlane.f32.xlu0 %v3881
        %v3903 = vpop.xlane.xlu0 %3902
        %3904 = vadd.xlane.f32.xlu0 %v3882
        %v3905 = vpop.xlane.xlu0 %3904
        %3906 = vadd.xlane.f32.xlu0 %v3883
        %v3907 = vpop.xlane.xlu0 %3906
        %3908 = vadd.xlane.f32.xlu0 %v3884
        %v3909 = vpop.xlane.xlu0 %3908
        %3910 = vadd.xlane.f32.xlu0 %v3885
        %v3911 = vpop.xlane.xlu0 %3910
        %3912 = vadd.xlane.f32.xlu0 %v3886
        %v3913 = vpop.xlane.xlu0 %3912
        %3914 = vadd.xlane.f32.xlu0 %v3887
        %v3915 = vpop.xlane.xlu0 %3914
        %3916 = vadd.xlane.f32.xlu0 %v3888
        %v3917 = vpop.xlane.xlu0 %3916
        %3918 = vadd.xlane.f32.xlu0 %v3889
        %v3919 = vpop.xlane.xlu0 %3918
        %3920 = vadd.xlane.f32.xlu0 %v3890
        %v3921 = vpop.xlane.xlu0 %3920
        %3922 = vadd.xlane.f32.xlu0 %v3891
        %v3923 = vpop.xlane.xlu0 %3922
        %v3924 = vmul.f32 %v3893, %v772
        %v3925 = vmul.f32 %v3895, %v772
        %v3926 = vmul.f32 %v3897, %v772
        %v3927 = vmul.f32 %v3899, %v772
        %v3928 = vmul.f32 %v3901, %v772
        %v3929 = vmul.f32 %v3903, %v772
        %v3930 = vmul.f32 %v3905, %v772
        %v3931 = vmul.f32 %v3907, %v772
        %v3932 = vmul.f32 %v3909, %v772
        %v3933 = vmul.f32 %v3911, %v772
        %v3934 = vmul.f32 %v3913, %v772
        %v3935 = vmul.f32 %v3915, %v772
        %v3936 = vmul.f32 %v3917, %v772
        %v3937 = vmul.f32 %v3919, %v772
        %v3938 = vmul.f32 %v3921, %v772
        %v3939 = vmul.f32 %v3923, %v772
        %v3940 = vsub.f32 %v3876, %v3924
        %v3941 = vsub.f32 %v3877, %v3925
        %v3942 = vsub.f32 %v3878, %v3926
        %v3943 = vsub.f32 %v3879, %v3927
        %v3944 = vsub.f32 %v3880, %v3928
        %v3945 = vsub.f32 %v3881, %v3929
        %v3946 = vsub.f32 %v3882, %v3930
        %v3947 = vsub.f32 %v3883, %v3931
        %v3948 = vsub.f32 %v3884, %v3932
        %v3949 = vsub.f32 %v3885, %v3933
        %v3950 = vsub.f32 %v3886, %v3934
        %v3951 = vsub.f32 %v3887, %v3935
        %v3952 = vsub.f32 %v3888, %v3936
        %v3953 = vsub.f32 %v3889, %v3937
        %v3954 = vsub.f32 %v3890, %v3938
        %v3955 = vsub.f32 %v3891, %v3939
        %v3956 = vmul.f32 %v3940, %v3940
        %v3957 = vmul.f32 %v3941, %v3941
        %v3958 = vmul.f32 %v3942, %v3942
        %v3959 = vmul.f32 %v3943, %v3943
        %v3960 = vmul.f32 %v3944, %v3944
        %v3961 = vmul.f32 %v3945, %v3945
        %v3962 = vmul.f32 %v3946, %v3946
        %v3963 = vmul.f32 %v3947, %v3947
        %v3964 = vmul.f32 %v3948, %v3948
        %v3965 = vmul.f32 %v3949, %v3949
        %v3966 = vmul.f32 %v3950, %v3950
        %v3967 = vmul.f32 %v3951, %v3951
        %v3968 = vmul.f32 %v3952, %v3952
        %v3969 = vmul.f32 %v3953, %v3953
        %v3970 = vmul.f32 %v3954, %v3954
        %v3971 = vmul.f32 %v3955, %v3955
        %3972 = vadd.xlane.f32.xlu0 %v3956
        %v3973 = vpop.xlane.xlu0 %3972
        %3974 = vadd.xlane.f32.xlu0 %v3957
        %v3975 = vpop.xlane.xlu0 %3974
        %3976 = vadd.xlane.f32.xlu0 %v3958
        %v3977 = vpop.xlane.xlu0 %3976
        %3978 = vadd.xlane.f32.xlu0 %v3959
        %v3979 = vpop.xlane.xlu0 %3978
        %3980 = vadd.xlane.f32.xlu0 %v3960
        %v3981 = vpop.xlane.xlu0 %3980
        %3982 = vadd.xlane.f32.xlu0 %v3961
        %v3983 = vpop.xlane.xlu0 %3982
        %3984 = vadd.xlane.f32.xlu0 %v3962
        %v3985 = vpop.xlane.xlu0 %3984
        %3986 = vadd.xlane.f32.xlu0 %v3963
        %v3987 = vpop.xlane.xlu0 %3986
        %3988 = vadd.xlane.f32.xlu0 %v3964
        %v3989 = vpop.xlane.xlu0 %3988
        %3990 = vadd.xlane.f32.xlu0 %v3965
        %v3991 = vpop.xlane.xlu0 %3990
        %3992 = vadd.xlane.f32.xlu0 %v3966
        %v3993 = vpop.xlane.xlu0 %3992
        %3994 = vadd.xlane.f32.xlu0 %v3967
        %v3995 = vpop.xlane.xlu0 %3994
        %3996 = vadd.xlane.f32.xlu0 %v3968
        %v3997 = vpop.xlane.xlu0 %3996
        %3998 = vadd.xlane.f32.xlu0 %v3969
        %v3999 = vpop.xlane.xlu0 %3998
        %4000 = vadd.xlane.f32.xlu0 %v3970
        %v4001 = vpop.xlane.xlu0 %4000
        %4002 = vadd.xlane.f32.xlu0 %v3971
        %v4003 = vpop.xlane.xlu0 %4002
        %v4004 = vmul.f32 %v3973, %v772
        %v4005 = vmul.f32 %v3975, %v772
        %v4006 = vmul.f32 %v3977, %v772
        %v4007 = vmul.f32 %v3979, %v772
        %v4008 = vmul.f32 %v3981, %v772
        %v4009 = vmul.f32 %v3983, %v772
        %v4010 = vmul.f32 %v3985, %v772
        %v4011 = vmul.f32 %v3987, %v772
        %v4012 = vmul.f32 %v3989, %v772
        %v4013 = vmul.f32 %v3991, %v772
        %v4014 = vmul.f32 %v3993, %v772
        %v4015 = vmul.f32 %v3995, %v772
        %v4016 = vmul.f32 %v3997, %v772
        %v4017 = vmul.f32 %v3999, %v772
        %v4018 = vmul.f32 %v4001, %v772
        %v4019 = vmul.f32 %v4003, %v772
        %v4020 = vadd.f32 %v4004, 1e-05
        %v4021 = vadd.f32 %v4005, 1e-05
        %v4022 = vadd.f32 %v4006, 1e-05
        %v4023 = vadd.f32 %v4007, 1e-05
        %v4024 = vadd.f32 %v4008, 1e-05
        %v4025 = vadd.f32 %v4009, 1e-05
        %v4026 = vadd.f32 %v4010, 1e-05
        %v4027 = vadd.f32 %v4011, 1e-05
        %v4028 = vadd.f32 %v4012, 1e-05
        %v4029 = vadd.f32 %v4013, 1e-05
        %v4030 = vadd.f32 %v4014, 1e-05
        %v4031 = vadd.f32 %v4015, 1e-05
        %v4032 = vadd.f32 %v4016, 1e-05
        %v4033 = vadd.f32 %v4017, 1e-05
        %v4034 = vadd.f32 %v4018, 1e-05
        %v4035 = vadd.f32 %v4019, 1e-05
        %v4036 = vrsqrt.pop %v4020
        %v4037 = vrsqrt.pop %v4021
        %v4038 = vrsqrt.pop %v4022
        %v4039 = vrsqrt.pop %v4023
        %v4040 = vrsqrt.pop %v4024
        %v4041 = vrsqrt.pop %v4025
        %v4042 = vrsqrt.pop %v4026
        %v4043 = vrsqrt.pop %v4027
        %v4044 = vrsqrt.pop %v4028
        %v4045 = vrsqrt.pop %v4029
        %v4046 = vrsqrt.pop %v4030
        %v4047 = vrsqrt.pop %v4031
        %v4048 = vrsqrt.pop %v4032
        %v4049 = vrsqrt.pop %v4033
        %v4050 = vrsqrt.pop %v4034
        %v4051 = vrsqrt.pop %v4035
        %v4052 = vmul.f32 %v3940, %v4036
        %v4053 = vmul.f32 %v3941, %v4037
        %v4054 = vmul.f32 %v3942, %v4038
        %v4055 = vmul.f32 %v3943, %v4039
        %v4056 = vmul.f32 %v3944, %v4040
        %v4057 = vmul.f32 %v3945, %v4041
        %v4058 = vmul.f32 %v3946, %v4042
        %v4059 = vmul.f32 %v3947, %v4043
        %v4060 = vmul.f32 %v3948, %v4044
        %v4061 = vmul.f32 %v3949, %v4045
        %v4062 = vmul.f32 %v3950, %v4046
        %v4063 = vmul.f32 %v3951, %v4047
        %v4064 = vmul.f32 %v3952, %v4048
        %v4065 = vmul.f32 %v3953, %v4049
        %v4066 = vmul.f32 %v3954, %v4050
        %v4067 = vmul.f32 %v3955, %v4051
        %v4068 = vlaneseq
        %v4069 = vshrl.u32 %v4068, 7
        %v4070 = vsub.s32 0, %v4069
        %v4071 = vrot.slane %v672, %v4070
        %v4072 = vmul.f32 %v4052, %v4071
        %v4073 = vmul.f32 %v4053, %v4071
        %v4074 = vmul.f32 %v4054, %v4071
        %v4075 = vmul.f32 %v4055, %v4071
        %v4076 = vmul.f32 %v4056, %v4071
        %v4077 = vmul.f32 %v4057, %v4071
        %v4078 = vmul.f32 %v4058, %v4071
        %v4079 = vmul.f32 %v4059, %v4071
        %v4080 = vmul.f32 %v4060, %v4071
        %v4081 = vmul.f32 %v4061, %v4071
        %v4082 = vmul.f32 %v4062, %v4071
        %v4083 = vmul.f32 %v4063, %v4071
        %v4084 = vmul.f32 %v4064, %v4071
        %v4085 = vmul.f32 %v4065, %v4071
        %v4086 = vmul.f32 %v4066, %v4071
        %v4087 = vmul.f32 %v4067, %v4071
        %v4088 = vlaneseq
        %v4089 = vshrl.u32 %v4088, 7
        %v4090 = vsub.s32 1, %v4089
        %v4091 = vrot.slane %v672, %v4090
        %v4092 = vadd.f32 %v4072, %v4091
        %v4093 = vadd.f32 %v4073, %v4091
        %v4094 = vadd.f32 %v4074, %v4091
        %v4095 = vadd.f32 %v4075, %v4091
        %v4096 = vadd.f32 %v4076, %v4091
        %v4097 = vadd.f32 %v4077, %v4091
        %v4098 = vadd.f32 %v4078, %v4091
        %v4099 = vadd.f32 %v4079, %v4091
        %v4100 = vadd.f32 %v4080, %v4091
        %v4101 = vadd.f32 %v4081, %v4091
        %v4102 = vadd.f32 %v4082, %v4091
        %v4103 = vadd.f32 %v4083, %v4091
        %v4104 = vadd.f32 %v4084, %v4091
        %v4105 = vadd.f32 %v4085, %v4091
        %v4106 = vadd.f32 %v4086, %v4091
        %v4107 = vadd.f32 %v4087, %v4091
        %v4108 = vxor.u32 %v4092, 2147483648
        %v4109 = vxor.u32 %v4093, 2147483648
        %v4110 = vxor.u32 %v4094, 2147483648
        %v4111 = vxor.u32 %v4095, 2147483648
        %v4112 = vxor.u32 %v4096, 2147483648
        %v4113 = vxor.u32 %v4097, 2147483648
        %v4114 = vxor.u32 %v4098, 2147483648
        %v4115 = vxor.u32 %v4099, 2147483648
        %v4116 = vxor.u32 %v4100, 2147483648
        %v4117 = vxor.u32 %v4101, 2147483648
        %v4118 = vxor.u32 %v4102, 2147483648
        %v4119 = vxor.u32 %v4103, 2147483648
        %v4120 = vxor.u32 %v4104, 2147483648
        %v4121 = vxor.u32 %v4105, 2147483648
        %v4122 = vxor.u32 %v4106, 2147483648
        %v4123 = vxor.u32 %v4107, 2147483648
        %v4124 = vmul.f32 %v4108, 1.442695
        %v4125 = vpow.pop %v4124
        %v4126 = vmul.f32 %v4109, 1.442695
        %v4127 = vpow.pop %v4126
        %v4128 = vmul.f32 %v4110, 1.442695
        %v4129 = vpow.pop %v4128
        %v4130 = vmul.f32 %v4111, 1.442695
        %v4131 = vpow.pop %v4130
        %v4132 = vmul.f32 %v4112, 1.442695
        %v4133 = vpow.pop %v4132
        %v4134 = vmul.f32 %v4113, 1.442695
        %v4135 = vpow.pop %v4134
        %v4136 = vmul.f32 %v4114, 1.442695
        %v4137 = vpow.pop %v4136
        %v4138 = vmul.f32 %v4115, 1.442695
        %v4139 = vpow.pop %v4138
        %v4140 = vmul.f32 %v4116, 1.442695
        %v4141 = vpow.pop %v4140
        %v4142 = vmul.f32 %v4117, 1.442695
        %v4143 = vpow.pop %v4142
        %v4144 = vmul.f32 %v4118, 1.442695
        %v4145 = vpow.pop %v4144
        %v4146 = vmul.f32 %v4119, 1.442695
        %v4147 = vpow.pop %v4146
        %v4148 = vmul.f32 %v4120, 1.442695
        %v4149 = vpow.pop %v4148
        %v4150 = vmul.f32 %v4121, 1.442695
        %v4151 = vpow.pop %v4150
        %v4152 = vmul.f32 %v4122, 1.442695
        %v4153 = vpow.pop %v4152
        %v4154 = vmul.f32 %v4123, 1.442695
        %v4155 = vpow.pop %v4154
        %v4156 = vadd.f32 %v4125, 1.0
        %v4157 = vadd.f32 %v4127, 1.0
        %v4158 = vadd.f32 %v4129, 1.0
        %v4159 = vadd.f32 %v4131, 1.0
        %v4160 = vadd.f32 %v4133, 1.0
        %v4161 = vadd.f32 %v4135, 1.0
        %v4162 = vadd.f32 %v4137, 1.0
        %v4163 = vadd.f32 %v4139, 1.0
        %v4164 = vadd.f32 %v4141, 1.0
        %v4165 = vadd.f32 %v4143, 1.0
        %v4166 = vadd.f32 %v4145, 1.0
        %v4167 = vadd.f32 %v4147, 1.0
        %v4168 = vadd.f32 %v4149, 1.0
        %v4169 = vadd.f32 %v4151, 1.0
        %v4170 = vadd.f32 %v4153, 1.0
        %v4171 = vadd.f32 %v4155, 1.0
        %v4172 = vrcp.pop %v4156
        %v4173 = vmul.f32 1.0, %v4172
        %v4174 = vrcp.pop %v4157
        %v4175 = vmul.f32 1.0, %v4174
        %v4176 = vrcp.pop %v4158
        %v4177 = vmul.f32 1.0, %v4176
        %v4178 = vrcp.pop %v4159
        %v4179 = vmul.f32 1.0, %v4178
        %v4180 = vrcp.pop %v4160
        %v4181 = vmul.f32 1.0, %v4180
        %v4182 = vrcp.pop %v4161
        %v4183 = vmul.f32 1.0, %v4182
        %v4184 = vrcp.pop %v4162
        %v4185 = vmul.f32 1.0, %v4184
        %v4186 = vrcp.pop %v4163
        %v4187 = vmul.f32 1.0, %v4186
        %v4188 = vrcp.pop %v4164
        %v4189 = vmul.f32 1.0, %v4188
        %v4190 = vrcp.pop %v4165
        %v4191 = vmul.f32 1.0, %v4190
        %v4192 = vrcp.pop %v4166
        %v4193 = vmul.f32 1.0, %v4192
        %v4194 = vrcp.pop %v4167
        %v4195 = vmul.f32 1.0, %v4194
        %v4196 = vrcp.pop %v4168
        %v4197 = vmul.f32 1.0, %v4196
        %v4198 = vrcp.pop %v4169
        %v4199 = vmul.f32 1.0, %v4198
        %v4200 = vrcp.pop %v4170
        %v4201 = vmul.f32 1.0, %v4200
        %v4202 = vrcp.pop %v4171
        %v4203 = vmul.f32 1.0, %v4202
        %v4204 = vmul.f32 %v4092, %v4173
        %v4205 = vmul.f32 %v4093, %v4175
        %v4206 = vmul.f32 %v4094, %v4177
        %v4207 = vmul.f32 %v4095, %v4179
        %v4208 = vmul.f32 %v4096, %v4181
        %v4209 = vmul.f32 %v4097, %v4183
        %v4210 = vmul.f32 %v4098, %v4185
        %v4211 = vmul.f32 %v4099, %v4187
        %v4212 = vmul.f32 %v4100, %v4189
        %v4213 = vmul.f32 %v4101, %v4191
        %v4214 = vmul.f32 %v4102, %v4193
        %v4215 = vmul.f32 %v4103, %v4195
        %v4216 = vmul.f32 %v4104, %v4197
        %v4217 = vmul.f32 %v4105, %v4199
        %v4218 = vmul.f32 %v4106, %v4201
        %v4219 = vmul.f32 %v4107, %v4203
        %v4220 = vpack.c.bf16 %v4205, %v4204
        %v4221 = vpack.c.bf16 %v4207, %v4206
        %v4222 = vpack.c.bf16 %v4209, %v4208
        %v4223 = vpack.c.bf16 %v4211, %v4210
        %v4224 = vpack.c.bf16 %v4213, %v4212
        %v4225 = vpack.c.bf16 %v4215, %v4214
        %v4226 = vpack.c.bf16 %v4217, %v4216
        %v4227 = vpack.c.bf16 %v4219, %v4218
        %v4229 = vlaneseq
        %v4230 = vshrl.u32 %v4229, 7
        %v4231 = vsub.s32 0, %v4230
        %v4232 = vrot.slane %v705, %v4231
        %v4233 = vlaneseq
        %v4234 = vshrl.u32 %v4233, 7
        %v4235 = vsub.s32 1, %v4234
        %v4236 = vrot.slane %v705, %v4235
        %v4237 = vlaneseq
        %v4238 = vshrl.u32 %v4237, 7
        %v4239 = vsub.s32 2, %v4238
        %v4240 = vrot.slane %v705, %v4239
        %v4276 = vunpack.c.l.b16 %v673
        %v4277 = vunpack.c.h.b16 %v673
        %v4278 = vunpack.c.l.b16 %v674
        %v4279 = vunpack.c.l.b16 %v675
        %v4280 = vunpack.c.h.b16 %v675
        %v4281 = vunpack.c.l.b16 %v676
        %v4282 = vunpack.c.l.b16 %v677
        %v4283 = vunpack.c.h.b16 %v677
        %v4284 = vunpack.c.l.b16 %v678
        %v4285 = vunpack.c.l.b16 %v679
        %v4286 = vunpack.c.h.b16 %v679
        %v4287 = vunpack.c.l.b16 %v680
        %v4288 = vunpack.c.l.b16 %v681
        %v4289 = vunpack.c.h.b16 %v681
        %v4290 = vunpack.c.l.b16 %v682
        %v4291 = vunpack.c.l.b16 %v683
        %v4292 = vunpack.c.h.b16 %v683
        %v4293 = vunpack.c.l.b16 %v684
        %v4294 = vunpack.c.l.b16 %v685
        %v4295 = vunpack.c.h.b16 %v685
        %v4296 = vunpack.c.l.b16 %v686
        %v4297 = vunpack.c.l.b16 %v687
        %v4298 = vunpack.c.h.b16 %v687
        %v4299 = vunpack.c.l.b16 %v688
        %v4300 = vunpack.c.l.b16 %v689
        %v4301 = vunpack.c.h.b16 %v689
        %v4302 = vunpack.c.l.b16 %v690
        %v4303 = vunpack.c.l.b16 %v691
        %v4304 = vunpack.c.h.b16 %v691
        %v4305 = vunpack.c.l.b16 %v692
        %v4306 = vunpack.c.l.b16 %v693
        %v4307 = vunpack.c.h.b16 %v693
        %v4308 = vunpack.c.l.b16 %v694
        %v4309 = vunpack.c.l.b16 %v695
        %v4310 = vunpack.c.h.b16 %v695
        %v4311 = vunpack.c.l.b16 %v696
        %v4312 = vunpack.c.l.b16 %v697
        %v4313 = vunpack.c.h.b16 %v697
        %v4314 = vunpack.c.l.b16 %v698
        %v4315 = vunpack.c.l.b16 %v699
        %v4316 = vunpack.c.h.b16 %v699
        %v4317 = vunpack.c.l.b16 %v700
        %v4318 = vunpack.c.l.b16 %v701
        %v4319 = vunpack.c.h.b16 %v701
        %v4320 = vunpack.c.l.b16 %v702
        %v4321 = vunpack.c.l.b16 %v703
        %v4322 = vunpack.c.h.b16 %v703
        %v4323 = vunpack.c.l.b16 %v704
        %v4324 = vpack.c.b16 %v4279, %v4276
        %v4325 = vpack.c.b16 %v4280, %v4277
        %v4326 = vpack.c.b16 %v4281, %v4278
        %v4327 = vpack.c.b16 %v4285, %v4282
        %v4328 = vpack.c.b16 %v4286, %v4283
        %v4329 = vpack.c.b16 %v4287, %v4284
        %v4330 = vpack.c.b16 %v4291, %v4288
        %v4331 = vpack.c.b16 %v4292, %v4289
        %v4332 = vpack.c.b16 %v4293, %v4290
        %v4333 = vpack.c.b16 %v4297, %v4294
        %v4334 = vpack.c.b16 %v4298, %v4295
        %v4335 = vpack.c.b16 %v4299, %v4296
        %v4336 = vpack.c.b16 %v4303, %v4300
        %v4337 = vpack.c.b16 %v4304, %v4301
        %v4338 = vpack.c.b16 %v4305, %v4302
        %v4339 = vpack.c.b16 %v4309, %v4306
        %v4340 = vpack.c.b16 %v4310, %v4307
        %v4341 = vpack.c.b16 %v4311, %v4308
        %v4342 = vpack.c.b16 %v4315, %v4312
        %v4343 = vpack.c.b16 %v4316, %v4313
        %v4344 = vpack.c.b16 %v4317, %v4314
        %v4345 = vpack.c.b16 %v4321, %v4318
        %v4346 = vpack.c.b16 %v4322, %v4319
        %v4347 = vpack.c.b16 %v4323, %v4320
        %4372 = vmatprep.subr.bf16.mxu0 %v4325
        %4373 = vmatpush1.bf16.msra.mxu0 %v4324
        %4374 = vmatprep.subr.bf16.mxu0 %v4328
        %4375 = vmatpush1.bf16.msra.mxu0 %v4327
        %4376 = vmatprep.subr.bf16.mxu0 %v4331
        %4377 = vmatpush1.bf16.msra.mxu0 %v4330
        %4378 = vmatprep.subr.bf16.mxu0 %v4334
        %4379 = vmatpush1.bf16.msra.mxu0 %v4333
        %4380 = vmatprep.subr.bf16.mxu0 %v4337
        %4381 = vmatpush1.bf16.msra.mxu0 %v4336
        %4382 = vmatprep.subr.bf16.mxu0 %v4340
        %4383 = vmatpush1.bf16.msra.mxu0 %v4339
        %4384 = vmatprep.subr.bf16.mxu0 %v4343
        %4385 = vmatpush1.bf16.msra.mxu0 %v4342
        %4386 = vmatprep.subr.bf16.mxu0 %v4346
        %4387 = vmatpush1.bf16.msra.mxu0 %v4345
        %4388 = vmatprep.subr.bf16.mxu0 0
        %4389 = vmatpush1.bf16.msra.mxu0 0
        %4390 = vmatprep.subr.bf16.mxu0 0
        %4391 = vmatpush1.bf16.msra.mxu0 0
        %4392 = vmatprep.subr.bf16.mxu0 0
        %4393 = vmatpush1.bf16.msra.mxu0 0
        %4394 = vmatprep.subr.bf16.mxu0 0
        %4395 = vmatpush1.bf16.msra.mxu0 0
        %4396 = vmatprep.subr.bf16.mxu0 0
        %4397 = vmatpush1.bf16.msra.mxu0 0
        %4398 = vmatprep.subr.bf16.mxu0 0
        %4399 = vmatpush1.bf16.msra.mxu0 0
        %4400 = vmatprep.subr.bf16.mxu0 0
        %4401 = vmatpush1.bf16.msra.mxu0 0
        %4402 = vmatprep.subr.bf16.mxu0 0
        %4403 = vmatpush1.bf16.msra.mxu0 0
        %4404 = vmatprep.mubr.bf16.mxu0 0
        %4405 = vmatmul.mubr.bf16.gmra.mrb[0].mxu0 %v4220
        %v4406 = vpop.f32.mrb[0].mxu0
        %v4407 = vadd.f32 %v4232, %v4406
        %v4408 = vpop.f32.mrb[0].mxu0
        %v4409 = vadd.f32 %v4236, %v4408
        %v4410 = vpop.f32.mrb[0].mxu0
        %v4411 = vadd.f32 %v4232, %v4410
        %v4412 = vpop.f32.mrb[0].mxu0
        %v4413 = vadd.f32 %v4236, %v4412
        %4414 = vmatprep.mubr.bf16.mxu0 0
        %4415 = vmatmul.mubr.bf16.gmra.mrb[0].mxu0 %v4221
        %v4416 = vpop.f32.mrb[0].mxu0
        %v4417 = vadd.f32 %v4232, %v4416
        %v4418 = vpop.f32.mrb[0].mxu0
        %v4419 = vadd.f32 %v4236, %v4418
        %v4420 = vpop.f32.mrb[0].mxu0
        %v4421 = vadd.f32 %v4232, %v4420
        %v4422 = vpop.f32.mrb[0].mxu0
        %v4423 = vadd.f32 %v4236, %v4422
        %4424 = vmatprep.mubr.bf16.mxu0 0
        %4425 = vmatmul.mubr.bf16.gmra.mrb[0].mxu0 %v4222
        %v4426 = vpop.f32.mrb[0].mxu0
        %v4427 = vadd.f32 %v4232, %v4426
        %v4428 = vpop.f32.mrb[0].mxu0
        %v4429 = vadd.f32 %v4236, %v4428
        %v4430 = vpop.f32.mrb[0].mxu0
        %v4431 = vadd.f32 %v4232, %v4430
        %v4432 = vpop.f32.mrb[0].mxu0
        %v4433 = vadd.f32 %v4236, %v4432
        %4434 = vmatprep.mubr.bf16.mxu0 0
        %4435 = vmatmul.mubr.bf16.gmra.mrb[0].mxu0 %v4223
        %v4436 = vpop.f32.mrb[0].mxu0
        %v4437 = vadd.f32 %v4232, %v4436
        %v4438 = vpop.f32.mrb[0].mxu0
        %v4439 = vadd.f32 %v4236, %v4438
        %v4440 = vpop.f32.mrb[0].mxu0
        %v4441 = vadd.f32 %v4232, %v4440
        %v4442 = vpop.f32.mrb[0].mxu0
        %v4443 = vadd.f32 %v4236, %v4442
        %4444 = vmatprep.mubr.bf16.mxu0 0
        %4445 = vmatmul.mubr.bf16.gmra.mrb[0].mxu0 %v4224
        %v4446 = vpop.f32.mrb[0].mxu0
        %v4447 = vadd.f32 %v4232, %v4446
        %v4448 = vpop.f32.mrb[0].mxu0
        %v4449 = vadd.f32 %v4236, %v4448
        %v4450 = vpop.f32.mrb[0].mxu0
        %v4451 = vadd.f32 %v4232, %v4450
        %v4452 = vpop.f32.mrb[0].mxu0
        %v4453 = vadd.f32 %v4236, %v4452
        %4454 = vmatprep.mubr.bf16.mxu0 0
        %4455 = vmatmul.mubr.bf16.gmra.mrb[0].mxu0 %v4225
        %v4456 = vpop.f32.mrb[0].mxu0
        %v4457 = vadd.f32 %v4232, %v4456
        %v4458 = vpop.f32.mrb[0].mxu0
        %v4459 = vadd.f32 %v4236, %v4458
        %v4460 = vpop.f32.mrb[0].mxu0
        %v4461 = vadd.f32 %v4232, %v4460
        %v4462 = vpop.f32.mrb[0].mxu0
        %v4463 = vadd.f32 %v4236, %v4462
        %4464 = vmatprep.mubr.bf16.mxu0 0
        %4465 = vmatmul.mubr.bf16.gmra.mrb[0].mxu0 %v4226
        %v4466 = vpop.f32.mrb[0].mxu0
        %v4467 = vadd.f32 %v4232, %v4466
        %v4468 = vpop.f32.mrb[0].mxu0
        %v4469 = vadd.f32 %v4236, %v4468
        %v4470 = vpop.f32.mrb[0].mxu0
        %v4471 = vadd.f32 %v4232, %v4470
        %v4472 = vpop.f32.mrb[0].mxu0
        %v4473 = vadd.f32 %v4236, %v4472
        %4474 = vmatprep.mubr.bf16.mxu0 0
        %4475 = vmatmul.mubr.bf16.gmra.mrb[0].mxu0 %v4227
        %v4476 = vpop.f32.mrb[0].mxu0
        %v4477 = vadd.f32 %v4232, %v4476
        %v4478 = vpop.f32.mrb[0].mxu0
        %v4479 = vadd.f32 %v4236, %v4478
        %v4480 = vpop.f32.mrb[0].mxu0
        %v4481 = vadd.f32 %v4232, %v4480
        %v4482 = vpop.f32.mrb[0].mxu0
        %v4483 = vadd.f32 %v4236, %v4482
        %4484 = vdwg.mxu0
        %4485 = vmatprep.subr.bf16.mxu0 0
        %4486 = vmatpush1.bf16.msra.mxu0 %v4326
        %4487 = vmatprep.subr.bf16.mxu0 0
        %4488 = vmatpush1.bf16.msra.mxu0 %v4329
        %4489 = vmatprep.subr.bf16.mxu0 0
        %4490 = vmatpush1.bf16.msra.mxu0 %v4332
        %4491 = vmatprep.subr.bf16.mxu0 0
        %4492 = vmatpush1.bf16.msra.mxu0 %v4335
        %4493 = vmatprep.subr.bf16.mxu0 0
        %4494 = vmatpush1.bf16.msra.mxu0 %v4338
        %4495 = vmatprep.subr.bf16.mxu0 0
        %4496 = vmatpush1.bf16.msra.mxu0 %v4341
        %4497 = vmatprep.subr.bf16.mxu0 0
        %4498 = vmatpush1.bf16.msra.mxu0 %v4344
        %4499 = vmatprep.subr.bf16.mxu0 0
        %4500 = vmatpush1.bf16.msra.mxu0 %v4347
        %4501 = vmatprep.subr.bf16.mxu0 0
        %4502 = vmatpush1.bf16.msra.mxu0 0
        %4503 = vmatprep.subr.bf16.mxu0 0
        %4504 = vmatpush1.bf16.msra.mxu0 0
        %4505 = vmatprep.subr.bf16.mxu0 0
        %4506 = vmatpush1.bf16.msra.mxu0 0
        %4507 = vmatprep.subr.bf16.mxu0 0
        %4508 = vmatpush1.bf16.msra.mxu0 0
        %4509 = vmatprep.subr.bf16.mxu0 0
        %4510 = vmatpush1.bf16.msra.mxu0 0
        %4511 = vmatprep.subr.bf16.mxu0 0
        %4512 = vmatpush1.bf16.msra.mxu0 0
        %4513 = vmatprep.subr.bf16.mxu0 0
        %4514 = vmatpush1.bf16.msra.mxu0 0
        %4515 = vmatprep.subr.bf16.mxu0 0
        %4516 = vmatpush1.bf16.msra.mxu0 0
        %4517 = vmatprep.mubr.bf16.mxu0 0
        %4518 = vmatmul.mubr.bf16.gmra.mrb[0].mxu0 %v4220
        %v4519 = vpop.f32.mrb[0].mxu0
        %v4520 = vadd.f32 %v4240, %v4519
        %v4521 = vpop.f32.mrb[0].mxu0
        %v4522 = vpop.f32.mrb[0].mxu0
        %v4523 = vadd.f32 %v4240, %v4522
        %v4524 = vpop.f32.mrb[0].mxu0
        %4525 = vmatprep.mubr.bf16.mxu0 0
        %4526 = vmatmul.mubr.bf16.gmra.mrb[0].mxu0 %v4221
        %v4527 = vpop.f32.mrb[0].mxu0
        %v4528 = vadd.f32 %v4240, %v4527
        %v4529 = vpop.f32.mrb[0].mxu0
        %v4530 = vpop.f32.mrb[0].mxu0
        %v4531 = vadd.f32 %v4240, %v4530
        %v4532 = vpop.f32.mrb[0].mxu0
        %4533 = vmatprep.mubr.bf16.mxu0 0
        %4534 = vmatmul.mubr.bf16.gmra.mrb[0].mxu0 %v4222
        %v4535 = vpop.f32.mrb[0].mxu0
        %v4536 = vadd.f32 %v4240, %v4535
        %v4537 = vpop.f32.mrb[0].mxu0
        %v4538 = vpop.f32.mrb[0].mxu0
        %v4539 = vadd.f32 %v4240, %v4538
        %v4540 = vpop.f32.mrb[0].mxu0
        %4541 = vmatprep.mubr.bf16.mxu0 0
        %4542 = vmatmul.mubr.bf16.gmra.mrb[0].mxu0 %v4223
        %v4543 = vpop.f32.mrb[0].mxu0
        %v4544 = vadd.f32 %v4240, %v4543
        %v4545 = vpop.f32.mrb[0].mxu0
        %v4546 = vpop.f32.mrb[0].mxu0
        %v4547 = vadd.f32 %v4240, %v4546
        %v4548 = vpop.f32.mrb[0].mxu0
        %4549 = vmatprep.mubr.bf16.mxu0 0
        %4550 = vmatmul.mubr.bf16.gmra.mrb[0].mxu0 %v4224
        %v4551 = vpop.f32.mrb[0].mxu0
        %v4552 = vadd.f32 %v4240, %v4551
        %v4553 = vpop.f32.mrb[0].mxu0
        %v4554 = vpop.f32.mrb[0].mxu0
        %v4555 = vadd.f32 %v4240, %v4554
        %v4556 = vpop.f32.mrb[0].mxu0
        %4557 = vmatprep.mubr.bf16.mxu0 0
        %4558 = vmatmul.mubr.bf16.gmra.mrb[0].mxu0 %v4225
        %v4559 = vpop.f32.mrb[0].mxu0
        %v4560 = vadd.f32 %v4240, %v4559
        %v4561 = vpop.f32.mrb[0].mxu0
        %v4562 = vpop.f32.mrb[0].mxu0
        %v4563 = vadd.f32 %v4240, %v4562
        %v4564 = vpop.f32.mrb[0].mxu0
        %4565 = vmatprep.mubr.bf16.mxu0 0
        %4566 = vmatmul.mubr.bf16.gmra.mrb[0].mxu0 %v4226
        %v4567 = vpop.f32.mrb[0].mxu0
        %v4568 = vadd.f32 %v4240, %v4567
        %v4569 = vpop.f32.mrb[0].mxu0
        %v4570 = vpop.f32.mrb[0].mxu0
        %v4571 = vadd.f32 %v4240, %v4570
        %v4572 = vpop.f32.mrb[0].mxu0
        %4573 = vmatprep.mubr.bf16.mxu0 0
        %4574 = vmatmul.mubr.bf16.gmra.mrb[0].mxu0 %v4227
        %v4575 = vpop.f32.mrb[0].mxu0
        %v4576 = vadd.f32 %v4240, %v4575
        %v4577 = vpop.f32.mrb[0].mxu0
        %v4578 = vpop.f32.mrb[0].mxu0
        %v4579 = vadd.f32 %v4240, %v4578
        %v4580 = vpop.f32.mrb[0].mxu0
        %4581 = vdwg.mxu0
        %v4582 = vmul.f32 %v4407, 0.125
        %v4583 = vmul.f32 %v4411, 0.125
        %v4584 = vmul.f32 %v4417, 0.125
        %v4585 = vmul.f32 %v4421, 0.125
        %v4586 = vmul.f32 %v4427, 0.125
        %v4587 = vmul.f32 %v4431, 0.125
        %v4588 = vmul.f32 %v4437, 0.125
        %v4589 = vmul.f32 %v4441, 0.125
        %v4590 = vmul.f32 %v4447, 0.125
        %v4591 = vmul.f32 %v4451, 0.125
        %v4592 = vmul.f32 %v4457, 0.125
        %v4593 = vmul.f32 %v4461, 0.125
        %v4594 = vmul.f32 %v4467, 0.125
        %v4595 = vmul.f32 %v4471, 0.125
        %v4596 = vmul.f32 %v4477, 0.125
        %v4597 = vmul.f32 %v4481, 0.125
        %v4598 = vpack.c.bf16 %v4583, %v4582
        %v4599 = vpack.c.bf16 %v4585, %v4584
        %v4600 = vpack.c.bf16 %v4587, %v4586
        %v4601 = vpack.c.bf16 %v4589, %v4588
        %v4602 = vpack.c.bf16 %v4591, %v4590
        %v4603 = vpack.c.bf16 %v4593, %v4592
        %v4604 = vpack.c.bf16 %v4595, %v4594
        %v4605 = vpack.c.bf16 %v4597, %v4596
        %v4606 = vpack.c.bf16 %v4413, %v4409
        %v4607 = vpack.c.bf16 %v4423, %v4419
        %v4608 = vpack.c.bf16 %v4433, %v4429
        %v4609 = vpack.c.bf16 %v4443, %v4439
        %v4610 = vpack.c.bf16 %v4453, %v4449
        %v4611 = vpack.c.bf16 %v4463, %v4459
        %v4612 = vpack.c.bf16 %v4473, %v4469
        %v4613 = vpack.c.bf16 %v4483, %v4479
        %v4614 = vpack.c.bf16 %v4523, %v4520
        %v4615 = vpack.c.bf16 %v4531, %v4528
        %v4616 = vpack.c.bf16 %v4539, %v4536
        %v4617 = vpack.c.bf16 %v4547, %v4544
        %v4618 = vpack.c.bf16 %v4555, %v4552
        %v4619 = vpack.c.bf16 %v4563, %v4560
        %v4620 = vpack.c.bf16 %v4571, %v4568
        %v4621 = vpack.c.bf16 %v4579, %v4576
        %v4623 = vsel %vm1471, %v4598, 0
        %v4626 = vsel %vm1471, %v4606, 0
        %4628 = vmatprep.subr.bf16.mxu0 0
        %4629 = vmatpush1.bf16.xpose.msra.mxu0 %v4626
        %4630 = vmatprep.subr.bf16.mxu0 0
        %4631 = vmatpush1.bf16.xpose.msra.mxu0 0
        %4632 = vmatprep.subr.bf16.mxu0 0
        %4633 = vmatpush1.bf16.xpose.msra.mxu0 0
        %4634 = vmatprep.subr.bf16.mxu0 0
        %4635 = vmatpush1.bf16.xpose.msra.mxu0 0
        %4636 = vmatprep.subr.bf16.mxu0 0
        %4637 = vmatpush1.bf16.xpose.msra.mxu0 0
        %4638 = vmatprep.subr.bf16.mxu0 0
        %4639 = vmatpush1.bf16.xpose.msra.mxu0 0
        %4640 = vmatprep.subr.bf16.mxu0 0
        %4641 = vmatpush1.bf16.xpose.msra.mxu0 0
        %4642 = vmatprep.subr.bf16.mxu0 0
        %4643 = vmatpush1.bf16.xpose.msra.mxu0 0
        %4644 = vmatprep.subr.bf16.mxu0 0
        %4645 = vmatpush1.bf16.xpose.msra.mxu0 0
        %4646 = vmatprep.subr.bf16.mxu0 0
        %4647 = vmatpush1.bf16.xpose.msra.mxu0 0
        %4648 = vmatprep.subr.bf16.mxu0 0
        %4649 = vmatpush1.bf16.xpose.msra.mxu0 0
        %4650 = vmatprep.subr.bf16.mxu0 0
        %4651 = vmatpush1.bf16.xpose.msra.mxu0 0
        %4652 = vmatprep.subr.bf16.mxu0 0
        %4653 = vmatpush1.bf16.xpose.msra.mxu0 0
        %4654 = vmatprep.subr.bf16.mxu0 0
        %4655 = vmatpush1.bf16.xpose.msra.mxu0 0
        %4656 = vmatprep.subr.bf16.mxu0 0
        %4657 = vmatpush1.bf16.xpose.msra.mxu0 0
        %4658 = vmatprep.subr.bf16.mxu0 0
        %4659 = vmatpush1.bf16.xpose.msra.mxu0 0
        %4660 = vmatprep.mubr.bf16.mxu0 0
        %4661 = vmatmul.mubr.bf16.gmra.mrb[0].mxu0 %v4623
        %v4662 = vpop.f32.mrb[0].mxu0
        %v4663 = vadd.f32 0.0, %v4662
        %v4664 = vpop.f32.mrb[0].mxu0
        %v4665 = vpop.f32.mrb[0].mxu0
        %v4666 = vadd.f32 0.0, %v4665
        %v4667 = vpop.f32.mrb[0].mxu0
        %4668 = vdwg.mxu0
        %v4670 = vsel %vm1471, %v4599, 0
        %v4673 = vsel %vm1471, %v4607, 0
        %4675 = vmatprep.subr.bf16.mxu0 0
        %4676 = vmatpush1.bf16.xpose.msra.mxu0 %v4673
        %4677 = vmatprep.subr.bf16.mxu0 0
        %4678 = vmatpush1.bf16.xpose.msra.mxu0 0
        %4679 = vmatprep.subr.bf16.mxu0 0
        %4680 = vmatpush1.bf16.xpose.msra.mxu0 0
        %4681 = vmatprep.subr.bf16.mxu0 0
        %4682 = vmatpush1.bf16.xpose.msra.mxu0 0
        %4683 = vmatprep.subr.bf16.mxu0 0
        %4684 = vmatpush1.bf16.xpose.msra.mxu0 0
        %4685 = vmatprep.subr.bf16.mxu0 0
        %4686 = vmatpush1.bf16.xpose.msra.mxu0 0
        %4687 = vmatprep.subr.bf16.mxu0 0
        %4688 = vmatpush1.bf16.xpose.msra.mxu0 0
        %4689 = vmatprep.subr.bf16.mxu0 0
        %4690 = vmatpush1.bf16.xpose.msra.mxu0 0
        %4691 = vmatprep.subr.bf16.mxu0 0
        %4692 = vmatpush1.bf16.xpose.msra.mxu0 0
        %4693 = vmatprep.subr.bf16.mxu0 0
        %4694 = vmatpush1.bf16.xpose.msra.mxu0 0
        %4695 = vmatprep.subr.bf16.mxu0 0
        %4696 = vmatpush1.bf16.xpose.msra.mxu0 0
        %4697 = vmatprep.subr.bf16.mxu0 0
        %4698 = vmatpush1.bf16.xpose.msra.mxu0 0
        %4699 = vmatprep.subr.bf16.mxu0 0
        %4700 = vmatpush1.bf16.xpose.msra.mxu0 0
        %4701 = vmatprep.subr.bf16.mxu0 0
        %4702 = vmatpush1.bf16.xpose.msra.mxu0 0
        %4703 = vmatprep.subr.bf16.mxu0 0
        %4704 = vmatpush1.bf16.xpose.msra.mxu0 0
        %4705 = vmatprep.subr.bf16.mxu0 0
        %4706 = vmatpush1.bf16.xpose.msra.mxu0 0
        %4707 = vmatprep.mubr.bf16.mxu0 0
        %4708 = vmatmul.mubr.bf16.gmra.mrb[0].mxu0 %v4670
        %v4709 = vpop.f32.mrb[0].mxu0
        %v4710 = vadd.f32 0.0, %v4709
        %v4711 = vpop.f32.mrb[0].mxu0
        %v4712 = vpop.f32.mrb[0].mxu0
        %v4713 = vadd.f32 0.0, %v4712
        %v4714 = vpop.f32.mrb[0].mxu0
        %4715 = vdwg.mxu0
        %v4717 = vsel %vm1471, %v4600, 0
        %v4720 = vsel %vm1471, %v4608, 0
        %4722 = vmatprep.subr.bf16.mxu0 0
        %4723 = vmatpush1.bf16.xpose.msra.mxu0 %v4720
        %4724 = vmatprep.subr.bf16.mxu0 0
        %4725 = vmatpush1.bf16.xpose.msra.mxu0 0
        %4726 = vmatprep.subr.bf16.mxu0 0
        %4727 = vmatpush1.bf16.xpose.msra.mxu0 0
        %4728 = vmatprep.subr.bf16.mxu0 0
        %4729 = vmatpush1.bf16.xpose.msra.mxu0 0
        %4730 = vmatprep.subr.bf16.mxu0 0
        %4731 = vmatpush1.bf16.xpose.msra.mxu0 0
        %4732 = vmatprep.subr.bf16.mxu0 0
        %4733 = vmatpush1.bf16.xpose.msra.mxu0 0
        %4734 = vmatprep.subr.bf16.mxu0 0
        %4735 = vmatpush1.bf16.xpose.msra.mxu0 0
        %4736 = vmatprep.subr.bf16.mxu0 0
        %4737 = vmatpush1.bf16.xpose.msra.mxu0 0
        %4738 = vmatprep.subr.bf16.mxu0 0
        %4739 = vmatpush1.bf16.xpose.msra.mxu0 0
        %4740 = vmatprep.subr.bf16.mxu0 0
        %4741 = vmatpush1.bf16.xpose.msra.mxu0 0
        %4742 = vmatprep.subr.bf16.mxu0 0
        %4743 = vmatpush1.bf16.xpose.msra.mxu0 0
        %4744 = vmatprep.subr.bf16.mxu0 0
        %4745 = vmatpush1.bf16.xpose.msra.mxu0 0
        %4746 = vmatprep.subr.bf16.mxu0 0
        %4747 = vmatpush1.bf16.xpose.msra.mxu0 0
        %4748 = vmatprep.subr.bf16.mxu0 0
        %4749 = vmatpush1.bf16.xpose.msra.mxu0 0
        %4750 = vmatprep.subr.bf16.mxu0 0
        %4751 = vmatpush1.bf16.xpose.msra.mxu0 0
        %4752 = vmatprep.subr.bf16.mxu0 0
        %4753 = vmatpush1.bf16.xpose.msra.mxu0 0
        %4754 = vmatprep.mubr.bf16.mxu0 0
        %4755 = vmatmul.mubr.bf16.gmra.mrb[0].mxu0 %v4717
        %v4756 = vpop.f32.mrb[0].mxu0
        %v4757 = vadd.f32 0.0, %v4756
        %v4758 = vpop.f32.mrb[0].mxu0
        %v4759 = vpop.f32.mrb[0].mxu0
        %v4760 = vadd.f32 0.0, %v4759
        %v4761 = vpop.f32.mrb[0].mxu0
        %4762 = vdwg.mxu0
        %v4764 = vsel %vm1471, %v4601, 0
        %v4767 = vsel %vm1471, %v4609, 0
        %4769 = vmatprep.subr.bf16.mxu0 0
        %4770 = vmatpush1.bf16.xpose.msra.mxu0 %v4767
        %4771 = vmatprep.subr.bf16.mxu0 0
        %4772 = vmatpush1.bf16.xpose.msra.mxu0 0
        %4773 = vmatprep.subr.bf16.mxu0 0
        %4774 = vmatpush1.bf16.xpose.msra.mxu0 0
        %4775 = vmatprep.subr.bf16.mxu0 0
        %4776 = vmatpush1.bf16.xpose.msra.mxu0 0
        %4777 = vmatprep.subr.bf16.mxu0 0
        %4778 = vmatpush1.bf16.xpose.msra.mxu0 0
        %4779 = vmatprep.subr.bf16.mxu0 0
        %4780 = vmatpush1.bf16.xpose.msra.mxu0 0
        %4781 = vmatprep.subr.bf16.mxu0 0
        %4782 = vmatpush1.bf16.xpose.msra.mxu0 0
        %4783 = vmatprep.subr.bf16.mxu0 0
        %4784 = vmatpush1.bf16.xpose.msra.mxu0 0
        %4785 = vmatprep.subr.bf16.mxu0 0
        %4786 = vmatpush1.bf16.xpose.msra.mxu0 0
        %4787 = vmatprep.subr.bf16.mxu0 0
        %4788 = vmatpush1.bf16.xpose.msra.mxu0 0
        %4789 = vmatprep.subr.bf16.mxu0 0
        %4790 = vmatpush1.bf16.xpose.msra.mxu0 0
        %4791 = vmatprep.subr.bf16.mxu0 0
        %4792 = vmatpush1.bf16.xpose.msra.mxu0 0
        %4793 = vmatprep.subr.bf16.mxu0 0
        %4794 = vmatpush1.bf16.xpose.msra.mxu0 0
        %4795 = vmatprep.subr.bf16.mxu0 0
        %4796 = vmatpush1.bf16.xpose.msra.mxu0 0
        %4797 = vmatprep.subr.bf16.mxu0 0
        %4798 = vmatpush1.bf16.xpose.msra.mxu0 0
        %4799 = vmatprep.subr.bf16.mxu0 0
        %4800 = vmatpush1.bf16.xpose.msra.mxu0 0
        %4801 = vmatprep.mubr.bf16.mxu0 0
        %4802 = vmatmul.mubr.bf16.gmra.mrb[0].mxu0 %v4764
        %v4803 = vpop.f32.mrb[0].mxu0
        %v4804 = vadd.f32 0.0, %v4803
        %v4805 = vpop.f32.mrb[0].mxu0
        %v4806 = vpop.f32.mrb[0].mxu0
        %v4807 = vadd.f32 0.0, %v4806
        %v4808 = vpop.f32.mrb[0].mxu0
        %4809 = vdwg.mxu0
        %v4811 = vsel %vm1471, %v4602, 0
        %v4814 = vsel %vm1471, %v4610, 0
        %4816 = vmatprep.subr.bf16.mxu0 0
        %4817 = vmatpush1.bf16.xpose.msra.mxu0 %v4814
        %4818 = vmatprep.subr.bf16.mxu0 0
        %4819 = vmatpush1.bf16.xpose.msra.mxu0 0
        %4820 = vmatprep.subr.bf16.mxu0 0
        %4821 = vmatpush1.bf16.xpose.msra.mxu0 0
        %4822 = vmatprep.subr.bf16.mxu0 0
        %4823 = vmatpush1.bf16.xpose.msra.mxu0 0
        %4824 = vmatprep.subr.bf16.mxu0 0
        %4825 = vmatpush1.bf16.xpose.msra.mxu0 0
        %4826 = vmatprep.subr.bf16.mxu0 0
        %4827 = vmatpush1.bf16.xpose.msra.mxu0 0
        %4828 = vmatprep.subr.bf16.mxu0 0
        %4829 = vmatpush1.bf16.xpose.msra.mxu0 0
        %4830 = vmatprep.subr.bf16.mxu0 0
        %4831 = vmatpush1.bf16.xpose.msra.mxu0 0
        %4832 = vmatprep.subr.bf16.mxu0 0
        %4833 = vmatpush1.bf16.xpose.msra.mxu0 0
        %4834 = vmatprep.subr.bf16.mxu0 0
        %4835 = vmatpush1.bf16.xpose.msra.mxu0 0
        %4836 = vmatprep.subr.bf16.mxu0 0
        %4837 = vmatpush1.bf16.xpose.msra.mxu0 0
        %4838 = vmatprep.subr.bf16.mxu0 0
        %4839 = vmatpush1.bf16.xpose.msra.mxu0 0
        %4840 = vmatprep.subr.bf16.mxu0 0
        %4841 = vmatpush1.bf16.xpose.msra.mxu0 0
        %4842 = vmatprep.subr.bf16.mxu0 0
        %4843 = vmatpush1.bf16.xpose.msra.mxu0 0
        %4844 = vmatprep.subr.bf16.mxu0 0
        %4845 = vmatpush1.bf16.xpose.msra.mxu0 0
        %4846 = vmatprep.subr.bf16.mxu0 0
        %4847 = vmatpush1.bf16.xpose.msra.mxu0 0
        %4848 = vmatprep.mubr.bf16.mxu0 0
        %4849 = vmatmul.mubr.bf16.gmra.mrb[0].mxu0 %v4811
        %v4850 = vpop.f32.mrb[0].mxu0
        %v4851 = vadd.f32 0.0, %v4850
        %v4852 = vpop.f32.mrb[0].mxu0
        %v4853 = vpop.f32.mrb[0].mxu0
        %v4854 = vadd.f32 0.0, %v4853
        %v4855 = vpop.f32.mrb[0].mxu0
        %4856 = vdwg.mxu0
        %v4858 = vsel %vm1471, %v4603, 0
        %v4861 = vsel %vm1471, %v4611, 0
        %4863 = vmatprep.subr.bf16.mxu0 0
        %4864 = vmatpush1.bf16.xpose.msra.mxu0 %v4861
        %4865 = vmatprep.subr.bf16.mxu0 0
        %4866 = vmatpush1.bf16.xpose.msra.mxu0 0
        %4867 = vmatprep.subr.bf16.mxu0 0
        %4868 = vmatpush1.bf16.xpose.msra.mxu0 0
        %4869 = vmatprep.subr.bf16.mxu0 0
        %4870 = vmatpush1.bf16.xpose.msra.mxu0 0
        %4871 = vmatprep.subr.bf16.mxu0 0
        %4872 = vmatpush1.bf16.xpose.msra.mxu0 0
        %4873 = vmatprep.subr.bf16.mxu0 0
        %4874 = vmatpush1.bf16.xpose.msra.mxu0 0
        %4875 = vmatprep.subr.bf16.mxu0 0
        %4876 = vmatpush1.bf16.xpose.msra.mxu0 0
        %4877 = vmatprep.subr.bf16.mxu0 0
        %4878 = vmatpush1.bf16.xpose.msra.mxu0 0
        %4879 = vmatprep.subr.bf16.mxu0 0
        %4880 = vmatpush1.bf16.xpose.msra.mxu0 0
        %4881 = vmatprep.subr.bf16.mxu0 0
        %4882 = vmatpush1.bf16.xpose.msra.mxu0 0
        %4883 = vmatprep.subr.bf16.mxu0 0
        %4884 = vmatpush1.bf16.xpose.msra.mxu0 0
        %4885 = vmatprep.subr.bf16.mxu0 0
        %4886 = vmatpush1.bf16.xpose.msra.mxu0 0
        %4887 = vmatprep.subr.bf16.mxu0 0
        %4888 = vmatpush1.bf16.xpose.msra.mxu0 0
        %4889 = vmatprep.subr.bf16.mxu0 0
        %4890 = vmatpush1.bf16.xpose.msra.mxu0 0
        %4891 = vmatprep.subr.bf16.mxu0 0
        %4892 = vmatpush1.bf16.xpose.msra.mxu0 0
        %4893 = vmatprep.subr.bf16.mxu0 0
        %4894 = vmatpush1.bf16.xpose.msra.mxu0 0
        %4895 = vmatprep.mubr.bf16.mxu0 0
        %4896 = vmatmul.mubr.bf16.gmra.mrb[0].mxu0 %v4858
        %v4897 = vpop.f32.mrb[0].mxu0
        %v4898 = vadd.f32 0.0, %v4897
        %v4899 = vpop.f32.mrb[0].mxu0
        %v4900 = vpop.f32.mrb[0].mxu0
        %v4901 = vadd.f32 0.0, %v4900
        %v4902 = vpop.f32.mrb[0].mxu0
        %4903 = vdwg.mxu0
        %v4905 = vsel %vm1471, %v4604, 0
        %v4908 = vsel %vm1471, %v4612, 0
        %4910 = vmatprep.subr.bf16.mxu0 0
        %4911 = vmatpush1.bf16.xpose.msra.mxu0 %v4908
        %4912 = vmatprep.subr.bf16.mxu0 0
        %4913 = vmatpush1.bf16.xpose.msra.mxu0 0
        %4914 = vmatprep.subr.bf16.mxu0 0
        %4915 = vmatpush1.bf16.xpose.msra.mxu0 0
        %4916 = vmatprep.subr.bf16.mxu0 0
        %4917 = vmatpush1.bf16.xpose.msra.mxu0 0
        %4918 = vmatprep.subr.bf16.mxu0 0
        %4919 = vmatpush1.bf16.xpose.msra.mxu0 0
        %4920 = vmatprep.subr.bf16.mxu0 0
        %4921 = vmatpush1.bf16.xpose.msra.mxu0 0
        %4922 = vmatprep.subr.bf16.mxu0 0
        %4923 = vmatpush1.bf16.xpose.msra.mxu0 0
        %4924 = vmatprep.subr.bf16.mxu0 0
        %4925 = vmatpush1.bf16.xpose.msra.mxu0 0
        %4926 = vmatprep.subr.bf16.mxu0 0
        %4927 = vmatpush1.bf16.xpose.msra.mxu0 0
        %4928 = vmatprep.subr.bf16.mxu0 0
        %4929 = vmatpush1.bf16.xpose.msra.mxu0 0
        %4930 = vmatprep.subr.bf16.mxu0 0
        %4931 = vmatpush1.bf16.xpose.msra.mxu0 0
        %4932 = vmatprep.subr.bf16.mxu0 0
        %4933 = vmatpush1.bf16.xpose.msra.mxu0 0
        %4934 = vmatprep.subr.bf16.mxu0 0
        %4935 = vmatpush1.bf16.xpose.msra.mxu0 0
        %4936 = vmatprep.subr.bf16.mxu0 0
        %4937 = vmatpush1.bf16.xpose.msra.mxu0 0
        %4938 = vmatprep.subr.bf16.mxu0 0
        %4939 = vmatpush1.bf16.xpose.msra.mxu0 0
        %4940 = vmatprep.subr.bf16.mxu0 0
        %4941 = vmatpush1.bf16.xpose.msra.mxu0 0
        %4942 = vmatprep.mubr.bf16.mxu0 0
        %4943 = vmatmul.mubr.bf16.gmra.mrb[0].mxu0 %v4905
        %v4944 = vpop.f32.mrb[0].mxu0
        %v4945 = vadd.f32 0.0, %v4944
        %v4946 = vpop.f32.mrb[0].mxu0
        %v4947 = vpop.f32.mrb[0].mxu0
        %v4948 = vadd.f32 0.0, %v4947
        %v4949 = vpop.f32.mrb[0].mxu0
        %4950 = vdwg.mxu0
        %v4952 = vsel %vm1471, %v4605, 0
        %v4955 = vsel %vm1471, %v4613, 0
        %4957 = vmatprep.subr.bf16.mxu0 0
        %4958 = vmatpush1.bf16.xpose.msra.mxu0 %v4955
        %4959 = vmatprep.subr.bf16.mxu0 0
        %4960 = vmatpush1.bf16.xpose.msra.mxu0 0
        %4961 = vmatprep.subr.bf16.mxu0 0
        %4962 = vmatpush1.bf16.xpose.msra.mxu0 0
        %4963 = vmatprep.subr.bf16.mxu0 0
        %4964 = vmatpush1.bf16.xpose.msra.mxu0 0
        %4965 = vmatprep.subr.bf16.mxu0 0
        %4966 = vmatpush1.bf16.xpose.msra.mxu0 0
        %4967 = vmatprep.subr.bf16.mxu0 0
        %4968 = vmatpush1.bf16.xpose.msra.mxu0 0
        %4969 = vmatprep.subr.bf16.mxu0 0
        %4970 = vmatpush1.bf16.xpose.msra.mxu0 0
        %4971 = vmatprep.subr.bf16.mxu0 0
        %4972 = vmatpush1.bf16.xpose.msra.mxu0 0
        %4973 = vmatprep.subr.bf16.mxu0 0
        %4974 = vmatpush1.bf16.xpose.msra.mxu0 0
        %4975 = vmatprep.subr.bf16.mxu0 0
        %4976 = vmatpush1.bf16.xpose.msra.mxu0 0
        %4977 = vmatprep.subr.bf16.mxu0 0
        %4978 = vmatpush1.bf16.xpose.msra.mxu0 0
        %4979 = vmatprep.subr.bf16.mxu0 0
        %4980 = vmatpush1.bf16.xpose.msra.mxu0 0
        %4981 = vmatprep.subr.bf16.mxu0 0
        %4982 = vmatpush1.bf16.xpose.msra.mxu0 0
        %4983 = vmatprep.subr.bf16.mxu0 0
        %4984 = vmatpush1.bf16.xpose.msra.mxu0 0
        %4985 = vmatprep.subr.bf16.mxu0 0
        %4986 = vmatpush1.bf16.xpose.msra.mxu0 0
        %4987 = vmatprep.subr.bf16.mxu0 0
        %4988 = vmatpush1.bf16.xpose.msra.mxu0 0
        %4989 = vmatprep.mubr.bf16.mxu0 0
        %4990 = vmatmul.mubr.bf16.gmra.mrb[0].mxu0 %v4952
        %v4991 = vpop.f32.mrb[0].mxu0
        %v4992 = vadd.f32 0.0, %v4991
        %v4993 = vpop.f32.mrb[0].mxu0
        %v4994 = vpop.f32.mrb[0].mxu0
        %v4995 = vadd.f32 0.0, %v4994
        %v4996 = vpop.f32.mrb[0].mxu0
        %4997 = vdwg.mxu0
        %v4998 = vsel %vm1848, %v4663, -inf
        %4999 = vmax.xlane.f32.xlu0 %v4998
        %v5000 = vpop.xlane.xlu0 %4999
        %v5001 = vsel %vm1848, %v4666, -inf
        %5002 = vmax.xlane.f32.xlu0 %v5001
        %v5003 = vpop.xlane.xlu0 %5002
        %v5004 = vsel %vm1848, %v4710, -inf
        %5005 = vmax.xlane.f32.xlu0 %v5004
        %v5006 = vpop.xlane.xlu0 %5005
        %v5007 = vsel %vm1848, %v4713, -inf
        %5008 = vmax.xlane.f32.xlu0 %v5007
        %v5009 = vpop.xlane.xlu0 %5008
        %v5010 = vsel %vm1848, %v4757, -inf
        %5011 = vmax.xlane.f32.xlu0 %v5010
        %v5012 = vpop.xlane.xlu0 %5011
        %v5013 = vsel %vm1848, %v4760, -inf
        %5014 = vmax.xlane.f32.xlu0 %v5013
        %v5015 = vpop.xlane.xlu0 %5014
        %v5016 = vsel %vm1848, %v4804, -inf
        %5017 = vmax.xlane.f32.xlu0 %v5016
        %v5018 = vpop.xlane.xlu0 %5017
        %v5019 = vsel %vm1848, %v4807, -inf
        %5020 = vmax.xlane.f32.xlu0 %v5019
        %v5021 = vpop.xlane.xlu0 %5020
        %v5022 = vsel %vm1848, %v4851, -inf
        %5023 = vmax.xlane.f32.xlu0 %v5022
        %v5024 = vpop.xlane.xlu0 %5023
        %v5025 = vsel %vm1848, %v4854, -inf
        %5026 = vmax.xlane.f32.xlu0 %v5025
        %v5027 = vpop.xlane.xlu0 %5026
        %v5028 = vsel %vm1848, %v4898, -inf
        %5029 = vmax.xlane.f32.xlu0 %v5028
        %v5030 = vpop.xlane.xlu0 %5029
        %v5031 = vsel %vm1848, %v4901, -inf
        %5032 = vmax.xlane.f32.xlu0 %v5031
        %v5033 = vpop.xlane.xlu0 %5032
        %v5034 = vsel %vm1848, %v4945, -inf
        %5035 = vmax.xlane.f32.xlu0 %v5034
        %v5036 = vpop.xlane.xlu0 %5035
        %v5037 = vsel %vm1848, %v4948, -inf
        %5038 = vmax.xlane.f32.xlu0 %v5037
        %v5039 = vpop.xlane.xlu0 %5038
        %v5040 = vsel %vm1848, %v4992, -inf
        %5041 = vmax.xlane.f32.xlu0 %v5040
        %v5042 = vpop.xlane.xlu0 %5041
        %v5043 = vsel %vm1848, %v4995, -inf
        %5044 = vmax.xlane.f32.xlu0 %v5043
        %v5045 = vpop.xlane.xlu0 %5044
        %v5046 = vsub.f32 %v4663, %v5000
        %v5047 = vsub.f32 %v4666, %v5003
        %v5048 = vsub.f32 %v4710, %v5006
        %v5049 = vsub.f32 %v4713, %v5009
        %v5050 = vsub.f32 %v4757, %v5012
        %v5051 = vsub.f32 %v4760, %v5015
        %v5052 = vsub.f32 %v4804, %v5018
        %v5053 = vsub.f32 %v4807, %v5021
        %v5054 = vsub.f32 %v4851, %v5024
        %v5055 = vsub.f32 %v4854, %v5027
        %v5056 = vsub.f32 %v4898, %v5030
        %v5057 = vsub.f32 %v4901, %v5033
        %v5058 = vsub.f32 %v4945, %v5036
        %v5059 = vsub.f32 %v4948, %v5039
        %v5060 = vsub.f32 %v4992, %v5042
        %v5061 = vsub.f32 %v4995, %v5045
        %v5062 = vmul.f32 %v5046, 1.442695
        %v5063 = vpow.pop %v5062
        %v5064 = vmul.f32 %v5047, 1.442695
        %v5065 = vpow.pop %v5064
        %v5066 = vmul.f32 %v5048, 1.442695
        %v5067 = vpow.pop %v5066
        %v5068 = vmul.f32 %v5049, 1.442695
        %v5069 = vpow.pop %v5068
        %v5070 = vmul.f32 %v5050, 1.442695
        %v5071 = vpow.pop %v5070
        %v5072 = vmul.f32 %v5051, 1.442695
        %v5073 = vpow.pop %v5072
        %v5074 = vmul.f32 %v5052, 1.442695
        %v5075 = vpow.pop %v5074
        %v5076 = vmul.f32 %v5053, 1.442695
        %v5077 = vpow.pop %v5076
        %v5078 = vmul.f32 %v5054, 1.442695
        %v5079 = vpow.pop %v5078
        %v5080 = vmul.f32 %v5055, 1.442695
        %v5081 = vpow.pop %v5080
        %v5082 = vmul.f32 %v5056, 1.442695
        %v5083 = vpow.pop %v5082
        %v5084 = vmul.f32 %v5057, 1.442695
        %v5085 = vpow.pop %v5084
        %v5086 = vmul.f32 %v5058, 1.442695
        %v5087 = vpow.pop %v5086
        %v5088 = vmul.f32 %v5059, 1.442695
        %v5089 = vpow.pop %v5088
        %v5090 = vmul.f32 %v5060, 1.442695
        %v5091 = vpow.pop %v5090
        %v5092 = vmul.f32 %v5061, 1.442695
        %v5093 = vpow.pop %v5092
        %v5094 = vsel %vm1848, %v5063, 0.0
        %5095 = vadd.xlane.f32.xlu0 %v5094
        %v5096 = vpop.xlane.xlu0 %5095
        %v5097 = vsel %vm1848, %v5065, 0.0
        %5098 = vadd.xlane.f32.xlu0 %v5097
        %v5099 = vpop.xlane.xlu0 %5098
        %v5100 = vsel %vm1848, %v5067, 0.0
        %5101 = vadd.xlane.f32.xlu0 %v5100
        %v5102 = vpop.xlane.xlu0 %5101
        %v5103 = vsel %vm1848, %v5069, 0.0
        %5104 = vadd.xlane.f32.xlu0 %v5103
        %v5105 = vpop.xlane.xlu0 %5104
        %v5106 = vsel %vm1848, %v5071, 0.0
        %5107 = vadd.xlane.f32.xlu0 %v5106
        %v5108 = vpop.xlane.xlu0 %5107
        %v5109 = vsel %vm1848, %v5073, 0.0
        %5110 = vadd.xlane.f32.xlu0 %v5109
        %v5111 = vpop.xlane.xlu0 %5110
        %v5112 = vsel %vm1848, %v5075, 0.0
        %5113 = vadd.xlane.f32.xlu0 %v5112
        %v5114 = vpop.xlane.xlu0 %5113
        %v5115 = vsel %vm1848, %v5077, 0.0
        %5116 = vadd.xlane.f32.xlu0 %v5115
        %v5117 = vpop.xlane.xlu0 %5116
        %v5118 = vsel %vm1848, %v5079, 0.0
        %5119 = vadd.xlane.f32.xlu0 %v5118
        %v5120 = vpop.xlane.xlu0 %5119
        %v5121 = vsel %vm1848, %v5081, 0.0
        %5122 = vadd.xlane.f32.xlu0 %v5121
        %v5123 = vpop.xlane.xlu0 %5122
        %v5124 = vsel %vm1848, %v5083, 0.0
        %5125 = vadd.xlane.f32.xlu0 %v5124
        %v5126 = vpop.xlane.xlu0 %5125
        %v5127 = vsel %vm1848, %v5085, 0.0
        %5128 = vadd.xlane.f32.xlu0 %v5127
        %v5129 = vpop.xlane.xlu0 %5128
        %v5130 = vsel %vm1848, %v5087, 0.0
        %5131 = vadd.xlane.f32.xlu0 %v5130
        %v5132 = vpop.xlane.xlu0 %5131
        %v5133 = vsel %vm1848, %v5089, 0.0
        %5134 = vadd.xlane.f32.xlu0 %v5133
        %v5135 = vpop.xlane.xlu0 %5134
        %v5136 = vsel %vm1848, %v5091, 0.0
        %5137 = vadd.xlane.f32.xlu0 %v5136
        %v5138 = vpop.xlane.xlu0 %5137
        %v5139 = vsel %vm1848, %v5093, 0.0
        %5140 = vadd.xlane.f32.xlu0 %v5139
        %v5141 = vpop.xlane.xlu0 %5140
        %v5142 = vrcp.pop %v5096
        %v5143 = vrcp.pop %v5099
        %v5144 = vrcp.pop %v5102
        %v5145 = vrcp.pop %v5105
        %v5146 = vrcp.pop %v5108
        %v5147 = vrcp.pop %v5111
        %v5148 = vrcp.pop %v5114
        %v5149 = vrcp.pop %v5117
        %v5150 = vrcp.pop %v5120
        %v5151 = vrcp.pop %v5123
        %v5152 = vrcp.pop %v5126
        %v5153 = vrcp.pop %v5129
        %v5154 = vrcp.pop %v5132
        %v5155 = vrcp.pop %v5135
        %v5156 = vrcp.pop %v5138
        %v5157 = vrcp.pop %v5141
        %v5158 = vmul.f32 %v5063, %v5142
        %v5159 = vmul.f32 %v5065, %v5143
        %v5160 = vmul.f32 %v5067, %v5144
        %v5161 = vmul.f32 %v5069, %v5145
        %v5162 = vmul.f32 %v5071, %v5146
        %v5163 = vmul.f32 %v5073, %v5147
        %v5164 = vmul.f32 %v5075, %v5148
        %v5165 = vmul.f32 %v5077, %v5149
        %v5166 = vmul.f32 %v5079, %v5150
        %v5167 = vmul.f32 %v5081, %v5151
        %v5168 = vmul.f32 %v5083, %v5152
        %v5169 = vmul.f32 %v5085, %v5153
        %v5170 = vmul.f32 %v5087, %v5154
        %v5171 = vmul.f32 %v5089, %v5155
        %v5172 = vmul.f32 %v5091, %v5156
        %v5173 = vmul.f32 %v5093, %v5157
        %v5174 = vpack.c.bf16 %v5159, %v5158
        %v5175 = vpack.c.bf16 %v5161, %v5160
        %v5176 = vpack.c.bf16 %v5163, %v5162
        %v5177 = vpack.c.bf16 %v5165, %v5164
        %v5178 = vpack.c.bf16 %v5167, %v5166
        %v5179 = vpack.c.bf16 %v5169, %v5168
        %v5180 = vpack.c.bf16 %v5171, %v5170
        %v5181 = vpack.c.bf16 %v5173, %v5172
        %v5183 = vsel %vm1848, %v5174, 0
        %5185 = vmatprep.subr.bf16.mxu0 0
        %5186 = vmatpush1.bf16.msra.mxu0 %v4614
        %5187 = vmatprep.subr.bf16.mxu0 0
        %5188 = vmatpush1.bf16.msra.mxu0 0
        %5189 = vmatprep.subr.bf16.mxu0 0
        %5190 = vmatpush1.bf16.msra.mxu0 0
        %5191 = vmatprep.subr.bf16.mxu0 0
        %5192 = vmatpush1.bf16.msra.mxu0 0
        %5193 = vmatprep.subr.bf16.mxu0 0
        %5194 = vmatpush1.bf16.msra.mxu0 0
        %5195 = vmatprep.subr.bf16.mxu0 0
        %5196 = vmatpush1.bf16.msra.mxu0 0
        %5197 = vmatprep.subr.bf16.mxu0 0
        %5198 = vmatpush1.bf16.msra.mxu0 0
        %5199 = vmatprep.subr.bf16.mxu0 0
        %5200 = vmatpush1.bf16.msra.mxu0 0
        %5201 = vmatprep.subr.bf16.mxu0 0
        %5202 = vmatpush1.bf16.msra.mxu0 0
        %5203 = vmatprep.subr.bf16.mxu0 0
        %5204 = vmatpush1.bf16.msra.mxu0 0
        %5205 = vmatprep.subr.bf16.mxu0 0
        %5206 = vmatpush1.bf16.msra.mxu0 0
        %5207 = vmatprep.subr.bf16.mxu0 0
        %5208 = vmatpush1.bf16.msra.mxu0 0
        %5209 = vmatprep.subr.bf16.mxu0 0
        %5210 = vmatpush1.bf16.msra.mxu0 0
        %5211 = vmatprep.subr.bf16.mxu0 0
        %5212 = vmatpush1.bf16.msra.mxu0 0
        %5213 = vmatprep.subr.bf16.mxu0 0
        %5214 = vmatpush1.bf16.msra.mxu0 0
        %5215 = vmatprep.subr.bf16.mxu0 0
        %5216 = vmatpush1.bf16.msra.mxu0 0
        %5217 = vmatprep.mubr.bf16.mxu0 0
        %5218 = vmatmul.mubr.bf16.gmra.mrb[0].mxu0 %v5183
        %v5219 = vpop.f32.mrb[0].mxu0
        %v5220 = vadd.f32 0.0, %v5219
        %v5221 = vpop.f32.mrb[0].mxu0
        %v5222 = vpop.f32.mrb[0].mxu0
        %v5223 = vadd.f32 0.0, %v5222
        %v5224 = vpop.f32.mrb[0].mxu0
        %5225 = vdwg.mxu0
        %v5227 = vsel %vm1848, %v5175, 0
        %5229 = vmatprep.subr.bf16.mxu0 0
        %5230 = vmatpush1.bf16.msra.mxu0 %v4615
        %5231 = vmatprep.subr.bf16.mxu0 0
        %5232 = vmatpush1.bf16.msra.mxu0 0
        %5233 = vmatprep.subr.bf16.mxu0 0
        %5234 = vmatpush1.bf16.msra.mxu0 0
        %5235 = vmatprep.subr.bf16.mxu0 0
        %5236 = vmatpush1.bf16.msra.mxu0 0
        %5237 = vmatprep.subr.bf16.mxu0 0
        %5238 = vmatpush1.bf16.msra.mxu0 0
        %5239 = vmatprep.subr.bf16.mxu0 0
        %5240 = vmatpush1.bf16.msra.mxu0 0
        %5241 = vmatprep.subr.bf16.mxu0 0
        %5242 = vmatpush1.bf16.msra.mxu0 0
        %5243 = vmatprep.subr.bf16.mxu0 0
        %5244 = vmatpush1.bf16.msra.mxu0 0
        %5245 = vmatprep.subr.bf16.mxu0 0
        %5246 = vmatpush1.bf16.msra.mxu0 0
        %5247 = vmatprep.subr.bf16.mxu0 0
        %5248 = vmatpush1.bf16.msra.mxu0 0
        %5249 = vmatprep.subr.bf16.mxu0 0
        %5250 = vmatpush1.bf16.msra.mxu0 0
        %5251 = vmatprep.subr.bf16.mxu0 0
        %5252 = vmatpush1.bf16.msra.mxu0 0
        %5253 = vmatprep.subr.bf16.mxu0 0
        %5254 = vmatpush1.bf16.msra.mxu0 0
        %5255 = vmatprep.subr.bf16.mxu0 0
        %5256 = vmatpush1.bf16.msra.mxu0 0
        %5257 = vmatprep.subr.bf16.mxu0 0
        %5258 = vmatpush1.bf16.msra.mxu0 0
        %5259 = vmatprep.subr.bf16.mxu0 0
        %5260 = vmatpush1.bf16.msra.mxu0 0
        %5261 = vmatprep.mubr.bf16.mxu0 0
        %5262 = vmatmul.mubr.bf16.gmra.mrb[0].mxu0 %v5227
        %v5263 = vpop.f32.mrb[0].mxu0
        %v5264 = vadd.f32 0.0, %v5263
        %v5265 = vpop.f32.mrb[0].mxu0
        %v5266 = vpop.f32.mrb[0].mxu0
        %v5267 = vadd.f32 0.0, %v5266
        %v5268 = vpop.f32.mrb[0].mxu0
        %5269 = vdwg.mxu0
        %v5271 = vsel %vm1848, %v5176, 0
        %5273 = vmatprep.subr.bf16.mxu0 0
        %5274 = vmatpush1.bf16.msra.mxu0 %v4616
        %5275 = vmatprep.subr.bf16.mxu0 0
        %5276 = vmatpush1.bf16.msra.mxu0 0
        %5277 = vmatprep.subr.bf16.mxu0 0
        %5278 = vmatpush1.bf16.msra.mxu0 0
        %5279 = vmatprep.subr.bf16.mxu0 0
        %5280 = vmatpush1.bf16.msra.mxu0 0
        %5281 = vmatprep.subr.bf16.mxu0 0
        %5282 = vmatpush1.bf16.msra.mxu0 0
        %5283 = vmatprep.subr.bf16.mxu0 0
        %5284 = vmatpush1.bf16.msra.mxu0 0
        %5285 = vmatprep.subr.bf16.mxu0 0
        %5286 = vmatpush1.bf16.msra.mxu0 0
        %5287 = vmatprep.subr.bf16.mxu0 0
        %5288 = vmatpush1.bf16.msra.mxu0 0
        %5289 = vmatprep.subr.bf16.mxu0 0
        %5290 = vmatpush1.bf16.msra.mxu0 0
        %5291 = vmatprep.subr.bf16.mxu0 0
        %5292 = vmatpush1.bf16.msra.mxu0 0
        %5293 = vmatprep.subr.bf16.mxu0 0
        %5294 = vmatpush1.bf16.msra.mxu0 0
        %5295 = vmatprep.subr.bf16.mxu0 0
        %5296 = vmatpush1.bf16.msra.mxu0 0
        %5297 = vmatprep.subr.bf16.mxu0 0
        %5298 = vmatpush1.bf16.msra.mxu0 0
        %5299 = vmatprep.subr.bf16.mxu0 0
        %5300 = vmatpush1.bf16.msra.mxu0 0
        %5301 = vmatprep.subr.bf16.mxu0 0
        %5302 = vmatpush1.bf16.msra.mxu0 0
        %5303 = vmatprep.subr.bf16.mxu0 0
        %5304 = vmatpush1.bf16.msra.mxu0 0
        %5305 = vmatprep.mubr.bf16.mxu0 0
        %5306 = vmatmul.mubr.bf16.gmra.mrb[0].mxu0 %v5271
        %v5307 = vpop.f32.mrb[0].mxu0
        %v5308 = vadd.f32 0.0, %v5307
        %v5309 = vpop.f32.mrb[0].mxu0
        %v5310 = vpop.f32.mrb[0].mxu0
        %v5311 = vadd.f32 0.0, %v5310
        %v5312 = vpop.f32.mrb[0].mxu0
        %5313 = vdwg.mxu0
        %v5315 = vsel %vm1848, %v5177, 0
        %5317 = vmatprep.subr.bf16.mxu0 0
        %5318 = vmatpush1.bf16.msra.mxu0 %v4617
        %5319 = vmatprep.subr.bf16.mxu0 0
        %5320 = vmatpush1.bf16.msra.mxu0 0
        %5321 = vmatprep.subr.bf16.mxu0 0
        %5322 = vmatpush1.bf16.msra.mxu0 0
        %5323 = vmatprep.subr.bf16.mxu0 0
        %5324 = vmatpush1.bf16.msra.mxu0 0
        %5325 = vmatprep.subr.bf16.mxu0 0
        %5326 = vmatpush1.bf16.msra.mxu0 0
        %5327 = vmatprep.subr.bf16.mxu0 0
        %5328 = vmatpush1.bf16.msra.mxu0 0
        %5329 = vmatprep.subr.bf16.mxu0 0
        %5330 = vmatpush1.bf16.msra.mxu0 0
        %5331 = vmatprep.subr.bf16.mxu0 0
        %5332 = vmatpush1.bf16.msra.mxu0 0
        %5333 = vmatprep.subr.bf16.mxu0 0
        %5334 = vmatpush1.bf16.msra.mxu0 0
        %5335 = vmatprep.subr.bf16.mxu0 0
        %5336 = vmatpush1.bf16.msra.mxu0 0
        %5337 = vmatprep.subr.bf16.mxu0 0
        %5338 = vmatpush1.bf16.msra.mxu0 0
        %5339 = vmatprep.subr.bf16.mxu0 0
        %5340 = vmatpush1.bf16.msra.mxu0 0
        %5341 = vmatprep.subr.bf16.mxu0 0
        %5342 = vmatpush1.bf16.msra.mxu0 0
        %5343 = vmatprep.subr.bf16.mxu0 0
        %5344 = vmatpush1.bf16.msra.mxu0 0
        %5345 = vmatprep.subr.bf16.mxu0 0
        %5346 = vmatpush1.bf16.msra.mxu0 0
        %5347 = vmatprep.subr.bf16.mxu0 0
        %5348 = vmatpush1.bf16.msra.mxu0 0
        %5349 = vmatprep.mubr.bf16.mxu0 0
        %5350 = vmatmul.mubr.bf16.gmra.mrb[0].mxu0 %v5315
        %v5351 = vpop.f32.mrb[0].mxu0
        %v5352 = vadd.f32 0.0, %v5351
        %v5353 = vpop.f32.mrb[0].mxu0
        %v5354 = vpop.f32.mrb[0].mxu0
        %v5355 = vadd.f32 0.0, %v5354
        %v5356 = vpop.f32.mrb[0].mxu0
        %5357 = vdwg.mxu0
        %v5359 = vsel %vm1848, %v5178, 0
        %5361 = vmatprep.subr.bf16.mxu0 0
        %5362 = vmatpush1.bf16.msra.mxu0 %v4618
        %5363 = vmatprep.subr.bf16.mxu0 0
        %5364 = vmatpush1.bf16.msra.mxu0 0
        %5365 = vmatprep.subr.bf16.mxu0 0
        %5366 = vmatpush1.bf16.msra.mxu0 0
        %5367 = vmatprep.subr.bf16.mxu0 0
        %5368 = vmatpush1.bf16.msra.mxu0 0
        %5369 = vmatprep.subr.bf16.mxu0 0
        %5370 = vmatpush1.bf16.msra.mxu0 0
        %5371 = vmatprep.subr.bf16.mxu0 0
        %5372 = vmatpush1.bf16.msra.mxu0 0
        %5373 = vmatprep.subr.bf16.mxu0 0
        %5374 = vmatpush1.bf16.msra.mxu0 0
        %5375 = vmatprep.subr.bf16.mxu0 0
        %5376 = vmatpush1.bf16.msra.mxu0 0
        %5377 = vmatprep.subr.bf16.mxu0 0
        %5378 = vmatpush1.bf16.msra.mxu0 0
        %5379 = vmatprep.subr.bf16.mxu0 0
        %5380 = vmatpush1.bf16.msra.mxu0 0
        %5381 = vmatprep.subr.bf16.mxu0 0
        %5382 = vmatpush1.bf16.msra.mxu0 0
        %5383 = vmatprep.subr.bf16.mxu0 0
        %5384 = vmatpush1.bf16.msra.mxu0 0
        %5385 = vmatprep.subr.bf16.mxu0 0
        %5386 = vmatpush1.bf16.msra.mxu0 0
        %5387 = vmatprep.subr.bf16.mxu0 0
        %5388 = vmatpush1.bf16.msra.mxu0 0
        %5389 = vmatprep.subr.bf16.mxu0 0
        %5390 = vmatpush1.bf16.msra.mxu0 0
        %5391 = vmatprep.subr.bf16.mxu0 0
        %5392 = vmatpush1.bf16.msra.mxu0 0
        %5393 = vmatprep.mubr.bf16.mxu0 0
        %5394 = vmatmul.mubr.bf16.gmra.mrb[0].mxu0 %v5359
        %v5395 = vpop.f32.mrb[0].mxu0
        %v5396 = vadd.f32 0.0, %v5395
        %v5397 = vpop.f32.mrb[0].mxu0
        %v5398 = vpop.f32.mrb[0].mxu0
        %v5399 = vadd.f32 0.0, %v5398
        %v5400 = vpop.f32.mrb[0].mxu0
        %5401 = vdwg.mxu0
        %v5403 = vsel %vm1848, %v5179, 0
        %5405 = vmatprep.subr.bf16.mxu0 0
        %5406 = vmatpush1.bf16.msra.mxu0 %v4619
        %5407 = vmatprep.subr.bf16.mxu0 0
        %5408 = vmatpush1.bf16.msra.mxu0 0
        %5409 = vmatprep.subr.bf16.mxu0 0
        %5410 = vmatpush1.bf16.msra.mxu0 0
        %5411 = vmatprep.subr.bf16.mxu0 0
        %5412 = vmatpush1.bf16.msra.mxu0 0
        %5413 = vmatprep.subr.bf16.mxu0 0
        %5414 = vmatpush1.bf16.msra.mxu0 0
        %5415 = vmatprep.subr.bf16.mxu0 0
        %5416 = vmatpush1.bf16.msra.mxu0 0
        %5417 = vmatprep.subr.bf16.mxu0 0
        %5418 = vmatpush1.bf16.msra.mxu0 0
        %5419 = vmatprep.subr.bf16.mxu0 0
        %5420 = vmatpush1.bf16.msra.mxu0 0
        %5421 = vmatprep.subr.bf16.mxu0 0
        %5422 = vmatpush1.bf16.msra.mxu0 0
        %5423 = vmatprep.subr.bf16.mxu0 0
        %5424 = vmatpush1.bf16.msra.mxu0 0
        %5425 = vmatprep.subr.bf16.mxu0 0
        %5426 = vmatpush1.bf16.msra.mxu0 0
        %5427 = vmatprep.subr.bf16.mxu0 0
        %5428 = vmatpush1.bf16.msra.mxu0 0
        %5429 = vmatprep.subr.bf16.mxu0 0
        %5430 = vmatpush1.bf16.msra.mxu0 0
        %5431 = vmatprep.subr.bf16.mxu0 0
        %5432 = vmatpush1.bf16.msra.mxu0 0
        %5433 = vmatprep.subr.bf16.mxu0 0
        %5434 = vmatpush1.bf16.msra.mxu0 0
        %5435 = vmatprep.subr.bf16.mxu0 0
        %5436 = vmatpush1.bf16.msra.mxu0 0
        %5437 = vmatprep.mubr.bf16.mxu0 0
        %5438 = vmatmul.mubr.bf16.gmra.mrb[0].mxu0 %v5403
        %v5439 = vpop.f32.mrb[0].mxu0
        %v5440 = vadd.f32 0.0, %v5439
        %v5441 = vpop.f32.mrb[0].mxu0
        %v5442 = vpop.f32.mrb[0].mxu0
        %v5443 = vadd.f32 0.0, %v5442
        %v5444 = vpop.f32.mrb[0].mxu0
        %5445 = vdwg.mxu0
        %v5447 = vsel %vm1848, %v5180, 0
        %5449 = vmatprep.subr.bf16.mxu0 0
        %5450 = vmatpush1.bf16.msra.mxu0 %v4620
        %5451 = vmatprep.subr.bf16.mxu0 0
        %5452 = vmatpush1.bf16.msra.mxu0 0
        %5453 = vmatprep.subr.bf16.mxu0 0
        %5454 = vmatpush1.bf16.msra.mxu0 0
        %5455 = vmatprep.subr.bf16.mxu0 0
        %5456 = vmatpush1.bf16.msra.mxu0 0
        %5457 = vmatprep.subr.bf16.mxu0 0
        %5458 = vmatpush1.bf16.msra.mxu0 0
        %5459 = vmatprep.subr.bf16.mxu0 0
        %5460 = vmatpush1.bf16.msra.mxu0 0
        %5461 = vmatprep.subr.bf16.mxu0 0
        %5462 = vmatpush1.bf16.msra.mxu0 0
        %5463 = vmatprep.subr.bf16.mxu0 0
        %5464 = vmatpush1.bf16.msra.mxu0 0
        %5465 = vmatprep.subr.bf16.mxu0 0
        %5466 = vmatpush1.bf16.msra.mxu0 0
        %5467 = vmatprep.subr.bf16.mxu0 0
        %5468 = vmatpush1.bf16.msra.mxu0 0
        %5469 = vmatprep.subr.bf16.mxu0 0
        %5470 = vmatpush1.bf16.msra.mxu0 0
        %5471 = vmatprep.subr.bf16.mxu0 0
        %5472 = vmatpush1.bf16.msra.mxu0 0
        %5473 = vmatprep.subr.bf16.mxu0 0
        %5474 = vmatpush1.bf16.msra.mxu0 0
        %5475 = vmatprep.subr.bf16.mxu0 0
        %5476 = vmatpush1.bf16.msra.mxu0 0
        %5477 = vmatprep.subr.bf16.mxu0 0
        %5478 = vmatpush1.bf16.msra.mxu0 0
        %5479 = vmatprep.subr.bf16.mxu0 0
        %5480 = vmatpush1.bf16.msra.mxu0 0
        %5481 = vmatprep.mubr.bf16.mxu0 0
        %5482 = vmatmul.mubr.bf16.gmra.mrb[0].mxu0 %v5447
        %v5483 = vpop.f32.mrb[0].mxu0
        %v5484 = vadd.f32 0.0, %v5483
        %v5485 = vpop.f32.mrb[0].mxu0
        %v5486 = vpop.f32.mrb[0].mxu0
        %v5487 = vadd.f32 0.0, %v5486
        %v5488 = vpop.f32.mrb[0].mxu0
        %5489 = vdwg.mxu0
        %v5491 = vsel %vm1848, %v5181, 0
        %5493 = vmatprep.subr.bf16.mxu0 0
        %5494 = vmatpush1.bf16.msra.mxu0 %v4621
        %5495 = vmatprep.subr.bf16.mxu0 0
        %5496 = vmatpush1.bf16.msra.mxu0 0
        %5497 = vmatprep.subr.bf16.mxu0 0
        %5498 = vmatpush1.bf16.msra.mxu0 0
        %5499 = vmatprep.subr.bf16.mxu0 0
        %5500 = vmatpush1.bf16.msra.mxu0 0
        %5501 = vmatprep.subr.bf16.mxu0 0
        %5502 = vmatpush1.bf16.msra.mxu0 0
        %5503 = vmatprep.subr.bf16.mxu0 0
        %5504 = vmatpush1.bf16.msra.mxu0 0
        %5505 = vmatprep.subr.bf16.mxu0 0
        %5506 = vmatpush1.bf16.msra.mxu0 0
        %5507 = vmatprep.subr.bf16.mxu0 0
        %5508 = vmatpush1.bf16.msra.mxu0 0
        %5509 = vmatprep.subr.bf16.mxu0 0
        %5510 = vmatpush1.bf16.msra.mxu0 0
        %5511 = vmatprep.subr.bf16.mxu0 0
        %5512 = vmatpush1.bf16.msra.mxu0 0
        %5513 = vmatprep.subr.bf16.mxu0 0
        %5514 = vmatpush1.bf16.msra.mxu0 0
        %5515 = vmatprep.subr.bf16.mxu0 0
        %5516 = vmatpush1.bf16.msra.mxu0 0
        %5517 = vmatprep.subr.bf16.mxu0 0
        %5518 = vmatpush1.bf16.msra.mxu0 0
        %5519 = vmatprep.subr.bf16.mxu0 0
        %5520 = vmatpush1.bf16.msra.mxu0 0
        %5521 = vmatprep.subr.bf16.mxu0 0
        %5522 = vmatpush1.bf16.msra.mxu0 0
        %5523 = vmatprep.subr.bf16.mxu0 0
        %5524 = vmatpush1.bf16.msra.mxu0 0
        %5525 = vmatprep.mubr.bf16.mxu0 0
        %5526 = vmatmul.mubr.bf16.gmra.mrb[0].mxu0 %v5491
        %v5527 = vpop.f32.mrb[0].mxu0
        %v5528 = vadd.f32 0.0, %v5527
        %v5529 = vpop.f32.mrb[0].mxu0
        %v5530 = vpop.f32.mrb[0].mxu0
        %v5531 = vadd.f32 0.0, %v5530
        %v5532 = vpop.f32.mrb[0].mxu0
        %5533 = vdwg.mxu0
        %v5534 = vpack.c.bf16 %v5223, %v5220
        %v5535 = vpack.c.bf16 %v5267, %v5264
        %v5536 = vpack.c.bf16 %v5311, %v5308
        %v5537 = vpack.c.bf16 %v5355, %v5352
        %v5538 = vpack.c.bf16 %v5399, %v5396
        %v5539 = vpack.c.bf16 %v5443, %v5440
        %v5540 = vpack.c.bf16 %v5487, %v5484
        %v5541 = vpack.c.bf16 %v5531, %v5528
        %5543 = vrot.lane.b32.xlu0 %v4598, 64
        %v5544 = vpop.permute.xlu0 %5543
        %5546 = vrot.lane.b32.xlu0 %v4606, 64
        %v5547 = vpop.permute.xlu0 %5546
        %v5549 = vsel %vm1471, %v5544, 0
        %v5552 = vsel %vm1471, %v5547, 0
        %5554 = vmatprep.subr.bf16.mxu0 0
        %5555 = vmatpush1.bf16.xpose.msra.mxu0 %v5552
        %5556 = vmatprep.subr.bf16.mxu0 0
        %5557 = vmatpush1.bf16.xpose.msra.mxu0 0
        %5558 = vmatprep.subr.bf16.mxu0 0
        %5559 = vmatpush1.bf16.xpose.msra.mxu0 0
        %5560 = vmatprep.subr.bf16.mxu0 0
        %5561 = vmatpush1.bf16.xpose.msra.mxu0 0
        %5562 = vmatprep.subr.bf16.mxu0 0
        %5563 = vmatpush1.bf16.xpose.msra.mxu0 0
        %5564 = vmatprep.subr.bf16.mxu0 0
        %5565 = vmatpush1.bf16.xpose.msra.mxu0 0
        %5566 = vmatprep.subr.bf16.mxu0 0
        %5567 = vmatpush1.bf16.xpose.msra.mxu0 0
        %5568 = vmatprep.subr.bf16.mxu0 0
        %5569 = vmatpush1.bf16.xpose.msra.mxu0 0
        %5570 = vmatprep.subr.bf16.mxu0 0
        %5571 = vmatpush1.bf16.xpose.msra.mxu0 0
        %5572 = vmatprep.subr.bf16.mxu0 0
        %5573 = vmatpush1.bf16.xpose.msra.mxu0 0
        %5574 = vmatprep.subr.bf16.mxu0 0
        %5575 = vmatpush1.bf16.xpose.msra.mxu0 0
        %5576 = vmatprep.subr.bf16.mxu0 0
        %5577 = vmatpush1.bf16.xpose.msra.mxu0 0
        %5578 = vmatprep.subr.bf16.mxu0 0
        %5579 = vmatpush1.bf16.xpose.msra.mxu0 0
        %5580 = vmatprep.subr.bf16.mxu0 0
        %5581 = vmatpush1.bf16.xpose.msra.mxu0 0
        %5582 = vmatprep.subr.bf16.mxu0 0
        %5583 = vmatpush1.bf16.xpose.msra.mxu0 0
        %5584 = vmatprep.subr.bf16.mxu0 0
        %5585 = vmatpush1.bf16.xpose.msra.mxu0 0
        %5586 = vmatprep.mubr.bf16.mxu0 0
        %5587 = vmatmul.mubr.bf16.gmra.mrb[0].mxu0 %v5549
        %v5588 = vpop.f32.mrb[0].mxu0
        %v5589 = vadd.f32 0.0, %v5588
        %v5590 = vpop.f32.mrb[0].mxu0
        %v5591 = vpop.f32.mrb[0].mxu0
        %v5592 = vadd.f32 0.0, %v5591
        %v5593 = vpop.f32.mrb[0].mxu0
        %5594 = vdwg.mxu0
        %5596 = vrot.lane.b32.xlu0 %v4599, 64
        %v5597 = vpop.permute.xlu0 %5596
        %5599 = vrot.lane.b32.xlu0 %v4607, 64
        %v5600 = vpop.permute.xlu0 %5599
        %v5602 = vsel %vm1471, %v5597, 0
        %v5605 = vsel %vm1471, %v5600, 0
        %5607 = vmatprep.subr.bf16.mxu0 0
        %5608 = vmatpush1.bf16.xpose.msra.mxu0 %v5605
        %5609 = vmatprep.subr.bf16.mxu0 0
        %5610 = vmatpush1.bf16.xpose.msra.mxu0 0
        %5611 = vmatprep.subr.bf16.mxu0 0
        %5612 = vmatpush1.bf16.xpose.msra.mxu0 0
        %5613 = vmatprep.subr.bf16.mxu0 0
        %5614 = vmatpush1.bf16.xpose.msra.mxu0 0
        %5615 = vmatprep.subr.bf16.mxu0 0
        %5616 = vmatpush1.bf16.xpose.msra.mxu0 0
        %5617 = vmatprep.subr.bf16.mxu0 0
        %5618 = vmatpush1.bf16.xpose.msra.mxu0 0
        %5619 = vmatprep.subr.bf16.mxu0 0
        %5620 = vmatpush1.bf16.xpose.msra.mxu0 0
        %5621 = vmatprep.subr.bf16.mxu0 0
        %5622 = vmatpush1.bf16.xpose.msra.mxu0 0
        %5623 = vmatprep.subr.bf16.mxu0 0
        %5624 = vmatpush1.bf16.xpose.msra.mxu0 0
        %5625 = vmatprep.subr.bf16.mxu0 0
        %5626 = vmatpush1.bf16.xpose.msra.mxu0 0
        %5627 = vmatprep.subr.bf16.mxu0 0
        %5628 = vmatpush1.bf16.xpose.msra.mxu0 0
        %5629 = vmatprep.subr.bf16.mxu0 0
        %5630 = vmatpush1.bf16.xpose.msra.mxu0 0
        %5631 = vmatprep.subr.bf16.mxu0 0
        %5632 = vmatpush1.bf16.xpose.msra.mxu0 0
        %5633 = vmatprep.subr.bf16.mxu0 0
        %5634 = vmatpush1.bf16.xpose.msra.mxu0 0
        %5635 = vmatprep.subr.bf16.mxu0 0
        %5636 = vmatpush1.bf16.xpose.msra.mxu0 0
        %5637 = vmatprep.subr.bf16.mxu0 0
        %5638 = vmatpush1.bf16.xpose.msra.mxu0 0
        %5639 = vmatprep.mubr.bf16.mxu0 0
        %5640 = vmatmul.mubr.bf16.gmra.mrb[0].mxu0 %v5602
        %v5641 = vpop.f32.mrb[0].mxu0
        %v5642 = vadd.f32 0.0, %v5641
        %v5643 = vpop.f32.mrb[0].mxu0
        %v5644 = vpop.f32.mrb[0].mxu0
        %v5645 = vadd.f32 0.0, %v5644
        %v5646 = vpop.f32.mrb[0].mxu0
        %5647 = vdwg.mxu0
        %5649 = vrot.lane.b32.xlu0 %v4600, 64
        %v5650 = vpop.permute.xlu0 %5649
        %5652 = vrot.lane.b32.xlu0 %v4608, 64
        %v5653 = vpop.permute.xlu0 %5652
        %v5655 = vsel %vm1471, %v5650, 0
        %v5658 = vsel %vm1471, %v5653, 0
        %5660 = vmatprep.subr.bf16.mxu0 0
        %5661 = vmatpush1.bf16.xpose.msra.mxu0 %v5658
        %5662 = vmatprep.subr.bf16.mxu0 0
        %5663 = vmatpush1.bf16.xpose.msra.mxu0 0
        %5664 = vmatprep.subr.bf16.mxu0 0
        %5665 = vmatpush1.bf16.xpose.msra.mxu0 0
        %5666 = vmatprep.subr.bf16.mxu0 0
        %5667 = vmatpush1.bf16.xpose.msra.mxu0 0
        %5668 = vmatprep.subr.bf16.mxu0 0
        %5669 = vmatpush1.bf16.xpose.msra.mxu0 0
        %5670 = vmatprep.subr.bf16.mxu0 0
        %5671 = vmatpush1.bf16.xpose.msra.mxu0 0
        %5672 = vmatprep.subr.bf16.mxu0 0
        %5673 = vmatpush1.bf16.xpose.msra.mxu0 0
        %5674 = vmatprep.subr.bf16.mxu0 0
        %5675 = vmatpush1.bf16.xpose.msra.mxu0 0
        %5676 = vmatprep.subr.bf16.mxu0 0
        %5677 = vmatpush1.bf16.xpose.msra.mxu0 0
        %5678 = vmatprep.subr.bf16.mxu0 0
        %5679 = vmatpush1.bf16.xpose.msra.mxu0 0
        %5680 = vmatprep.subr.bf16.mxu0 0
        %5681 = vmatpush1.bf16.xpose.msra.mxu0 0
        %5682 = vmatprep.subr.bf16.mxu0 0
        %5683 = vmatpush1.bf16.xpose.msra.mxu0 0
        %5684 = vmatprep.subr.bf16.mxu0 0
        %5685 = vmatpush1.bf16.xpose.msra.mxu0 0
        %5686 = vmatprep.subr.bf16.mxu0 0
        %5687 = vmatpush1.bf16.xpose.msra.mxu0 0
        %5688 = vmatprep.subr.bf16.mxu0 0
        %5689 = vmatpush1.bf16.xpose.msra.mxu0 0
        %5690 = vmatprep.subr.bf16.mxu0 0
        %5691 = vmatpush1.bf16.xpose.msra.mxu0 0
        %5692 = vmatprep.mubr.bf16.mxu0 0
        %5693 = vmatmul.mubr.bf16.gmra.mrb[0].mxu0 %v5655
        %v5694 = vpop.f32.mrb[0].mxu0
        %v5695 = vadd.f32 0.0, %v5694
        %v5696 = vpop.f32.mrb[0].mxu0
        %v5697 = vpop.f32.mrb[0].mxu0
        %v5698 = vadd.f32 0.0, %v5697
        %v5699 = vpop.f32.mrb[0].mxu0
        %5700 = vdwg.mxu0
        %5702 = vrot.lane.b32.xlu0 %v4601, 64
        %v5703 = vpop.permute.xlu0 %5702
        %5705 = vrot.lane.b32.xlu0 %v4609, 64
        %v5706 = vpop.permute.xlu0 %5705
        %v5708 = vsel %vm1471, %v5703, 0
        %v5711 = vsel %vm1471, %v5706, 0
        %5713 = vmatprep.subr.bf16.mxu0 0
        %5714 = vmatpush1.bf16.xpose.msra.mxu0 %v5711
        %5715 = vmatprep.subr.bf16.mxu0 0
        %5716 = vmatpush1.bf16.xpose.msra.mxu0 0
        %5717 = vmatprep.subr.bf16.mxu0 0
        %5718 = vmatpush1.bf16.xpose.msra.mxu0 0
        %5719 = vmatprep.subr.bf16.mxu0 0
        %5720 = vmatpush1.bf16.xpose.msra.mxu0 0
        %5721 = vmatprep.subr.bf16.mxu0 0
        %5722 = vmatpush1.bf16.xpose.msra.mxu0 0
        %5723 = vmatprep.subr.bf16.mxu0 0
        %5724 = vmatpush1.bf16.xpose.msra.mxu0 0
        %5725 = vmatprep.subr.bf16.mxu0 0
        %5726 = vmatpush1.bf16.xpose.msra.mxu0 0
        %5727 = vmatprep.subr.bf16.mxu0 0
        %5728 = vmatpush1.bf16.xpose.msra.mxu0 0
        %5729 = vmatprep.subr.bf16.mxu0 0
        %5730 = vmatpush1.bf16.xpose.msra.mxu0 0
        %5731 = vmatprep.subr.bf16.mxu0 0
        %5732 = vmatpush1.bf16.xpose.msra.mxu0 0
        %5733 = vmatprep.subr.bf16.mxu0 0
        %5734 = vmatpush1.bf16.xpose.msra.mxu0 0
        %5735 = vmatprep.subr.bf16.mxu0 0
        %5736 = vmatpush1.bf16.xpose.msra.mxu0 0
        %5737 = vmatprep.subr.bf16.mxu0 0
        %5738 = vmatpush1.bf16.xpose.msra.mxu0 0
        %5739 = vmatprep.subr.bf16.mxu0 0
        %5740 = vmatpush1.bf16.xpose.msra.mxu0 0
        %5741 = vmatprep.subr.bf16.mxu0 0
        %5742 = vmatpush1.bf16.xpose.msra.mxu0 0
        %5743 = vmatprep.subr.bf16.mxu0 0
        %5744 = vmatpush1.bf16.xpose.msra.mxu0 0
        %5745 = vmatprep.mubr.bf16.mxu0 0
        %5746 = vmatmul.mubr.bf16.gmra.mrb[0].mxu0 %v5708
        %v5747 = vpop.f32.mrb[0].mxu0
        %v5748 = vadd.f32 0.0, %v5747
        %v5749 = vpop.f32.mrb[0].mxu0
        %v5750 = vpop.f32.mrb[0].mxu0
        %v5751 = vadd.f32 0.0, %v5750
        %v5752 = vpop.f32.mrb[0].mxu0
        %5753 = vdwg.mxu0
        %5755 = vrot.lane.b32.xlu0 %v4602, 64
        %v5756 = vpop.permute.xlu0 %5755
        %5758 = vrot.lane.b32.xlu0 %v4610, 64
        %v5759 = vpop.permute.xlu0 %5758
        %v5761 = vsel %vm1471, %v5756, 0
        %v5764 = vsel %vm1471, %v5759, 0
        %5766 = vmatprep.subr.bf16.mxu0 0
        %5767 = vmatpush1.bf16.xpose.msra.mxu0 %v5764
        %5768 = vmatprep.subr.bf16.mxu0 0
        %5769 = vmatpush1.bf16.xpose.msra.mxu0 0
        %5770 = vmatprep.subr.bf16.mxu0 0
        %5771 = vmatpush1.bf16.xpose.msra.mxu0 0
        %5772 = vmatprep.subr.bf16.mxu0 0
        %5773 = vmatpush1.bf16.xpose.msra.mxu0 0
        %5774 = vmatprep.subr.bf16.mxu0 0
        %5775 = vmatpush1.bf16.xpose.msra.mxu0 0
        %5776 = vmatprep.subr.bf16.mxu0 0
        %5777 = vmatpush1.bf16.xpose.msra.mxu0 0
        %5778 = vmatprep.subr.bf16.mxu0 0
        %5779 = vmatpush1.bf16.xpose.msra.mxu0 0
        %5780 = vmatprep.subr.bf16.mxu0 0
        %5781 = vmatpush1.bf16.xpose.msra.mxu0 0
        %5782 = vmatprep.subr.bf16.mxu0 0
        %5783 = vmatpush1.bf16.xpose.msra.mxu0 0
        %5784 = vmatprep.subr.bf16.mxu0 0
        %5785 = vmatpush1.bf16.xpose.msra.mxu0 0
        %5786 = vmatprep.subr.bf16.mxu0 0
        %5787 = vmatpush1.bf16.xpose.msra.mxu0 0
        %5788 = vmatprep.subr.bf16.mxu0 0
        %5789 = vmatpush1.bf16.xpose.msra.mxu0 0
        %5790 = vmatprep.subr.bf16.mxu0 0
        %5791 = vmatpush1.bf16.xpose.msra.mxu0 0
        %5792 = vmatprep.subr.bf16.mxu0 0
        %5793 = vmatpush1.bf16.xpose.msra.mxu0 0
        %5794 = vmatprep.subr.bf16.mxu0 0
        %5795 = vmatpush1.bf16.xpose.msra.mxu0 0
        %5796 = vmatprep.subr.bf16.mxu0 0
        %5797 = vmatpush1.bf16.xpose.msra.mxu0 0
        %5798 = vmatprep.mubr.bf16.mxu0 0
        %5799 = vmatmul.mubr.bf16.gmra.mrb[0].mxu0 %v5761
        %v5800 = vpop.f32.mrb[0].mxu0
        %v5801 = vadd.f32 0.0, %v5800
        %v5802 = vpop.f32.mrb[0].mxu0
        %v5803 = vpop.f32.mrb[0].mxu0
        %v5804 = vadd.f32 0.0, %v5803
        %v5805 = vpop.f32.mrb[0].mxu0
        %5806 = vdwg.mxu0
        %5808 = vrot.lane.b32.xlu0 %v4603, 64
        %v5809 = vpop.permute.xlu0 %5808
        %5811 = vrot.lane.b32.xlu0 %v4611, 64
        %v5812 = vpop.permute.xlu0 %5811
        %v5814 = vsel %vm1471, %v5809, 0
        %v5817 = vsel %vm1471, %v5812, 0
        %5819 = vmatprep.subr.bf16.mxu0 0
        %5820 = vmatpush1.bf16.xpose.msra.mxu0 %v5817
        %5821 = vmatprep.subr.bf16.mxu0 0
        %5822 = vmatpush1.bf16.xpose.msra.mxu0 0
        %5823 = vmatprep.subr.bf16.mxu0 0
        %5824 = vmatpush1.bf16.xpose.msra.mxu0 0
        %5825 = vmatprep.subr.bf16.mxu0 0
        %5826 = vmatpush1.bf16.xpose.msra.mxu0 0
        %5827 = vmatprep.subr.bf16.mxu0 0
        %5828 = vmatpush1.bf16.xpose.msra.mxu0 0
        %5829 = vmatprep.subr.bf16.mxu0 0
        %5830 = vmatpush1.bf16.xpose.msra.mxu0 0
        %5831 = vmatprep.subr.bf16.mxu0 0
        %5832 = vmatpush1.bf16.xpose.msra.mxu0 0
        %5833 = vmatprep.subr.bf16.mxu0 0
        %5834 = vmatpush1.bf16.xpose.msra.mxu0 0
        %5835 = vmatprep.subr.bf16.mxu0 0
        %5836 = vmatpush1.bf16.xpose.msra.mxu0 0
        %5837 = vmatprep.subr.bf16.mxu0 0
        %5838 = vmatpush1.bf16.xpose.msra.mxu0 0
        %5839 = vmatprep.subr.bf16.mxu0 0
        %5840 = vmatpush1.bf16.xpose.msra.mxu0 0
        %5841 = vmatprep.subr.bf16.mxu0 0
        %5842 = vmatpush1.bf16.xpose.msra.mxu0 0
        %5843 = vmatprep.subr.bf16.mxu0 0
        %5844 = vmatpush1.bf16.xpose.msra.mxu0 0
        %5845 = vmatprep.subr.bf16.mxu0 0
        %5846 = vmatpush1.bf16.xpose.msra.mxu0 0
        %5847 = vmatprep.subr.bf16.mxu0 0
        %5848 = vmatpush1.bf16.xpose.msra.mxu0 0
        %5849 = vmatprep.subr.bf16.mxu0 0
        %5850 = vmatpush1.bf16.xpose.msra.mxu0 0
        %5851 = vmatprep.mubr.bf16.mxu0 0
        %5852 = vmatmul.mubr.bf16.gmra.mrb[0].mxu0 %v5814
        %v5853 = vpop.f32.mrb[0].mxu0
        %v5854 = vadd.f32 0.0, %v5853
        %v5855 = vpop.f32.mrb[0].mxu0
        %v5856 = vpop.f32.mrb[0].mxu0
        %v5857 = vadd.f32 0.0, %v5856
        %v5858 = vpop.f32.mrb[0].mxu0
        %5859 = vdwg.mxu0
        %5861 = vrot.lane.b32.xlu0 %v4604, 64
        %v5862 = vpop.permute.xlu0 %5861
        %5864 = vrot.lane.b32.xlu0 %v4612, 64
        %v5865 = vpop.permute.xlu0 %5864
        %v5867 = vsel %vm1471, %v5862, 0
        %v5870 = vsel %vm1471, %v5865, 0
        %5872 = vmatprep.subr.bf16.mxu0 0
        %5873 = vmatpush1.bf16.xpose.msra.mxu0 %v5870
        %5874 = vmatprep.subr.bf16.mxu0 0
        %5875 = vmatpush1.bf16.xpose.msra.mxu0 0
        %5876 = vmatprep.subr.bf16.mxu0 0
        %5877 = vmatpush1.bf16.xpose.msra.mxu0 0
        %5878 = vmatprep.subr.bf16.mxu0 0
        %5879 = vmatpush1.bf16.xpose.msra.mxu0 0
        %5880 = vmatprep.subr.bf16.mxu0 0
        %5881 = vmatpush1.bf16.xpose.msra.mxu0 0
        %5882 = vmatprep.subr.bf16.mxu0 0
        %5883 = vmatpush1.bf16.xpose.msra.mxu0 0
        %5884 = vmatprep.subr.bf16.mxu0 0
        %5885 = vmatpush1.bf16.xpose.msra.mxu0 0
        %5886 = vmatprep.subr.bf16.mxu0 0
        %5887 = vmatpush1.bf16.xpose.msra.mxu0 0
        %5888 = vmatprep.subr.bf16.mxu0 0
        %5889 = vmatpush1.bf16.xpose.msra.mxu0 0
        %5890 = vmatprep.subr.bf16.mxu0 0
        %5891 = vmatpush1.bf16.xpose.msra.mxu0 0
        %5892 = vmatprep.subr.bf16.mxu0 0
        %5893 = vmatpush1.bf16.xpose.msra.mxu0 0
        %5894 = vmatprep.subr.bf16.mxu0 0
        %5895 = vmatpush1.bf16.xpose.msra.mxu0 0
        %5896 = vmatprep.subr.bf16.mxu0 0
        %5897 = vmatpush1.bf16.xpose.msra.mxu0 0
        %5898 = vmatprep.subr.bf16.mxu0 0
        %5899 = vmatpush1.bf16.xpose.msra.mxu0 0
        %5900 = vmatprep.subr.bf16.mxu0 0
        %5901 = vmatpush1.bf16.xpose.msra.mxu0 0
        %5902 = vmatprep.subr.bf16.mxu0 0
        %5903 = vmatpush1.bf16.xpose.msra.mxu0 0
        %5904 = vmatprep.mubr.bf16.mxu0 0
        %5905 = vmatmul.mubr.bf16.gmra.mrb[0].mxu0 %v5867
        %v5906 = vpop.f32.mrb[0].mxu0
        %v5907 = vadd.f32 0.0, %v5906
        %v5908 = vpop.f32.mrb[0].mxu0
        %v5909 = vpop.f32.mrb[0].mxu0
        %v5910 = vadd.f32 0.0, %v5909
        %v5911 = vpop.f32.mrb[0].mxu0
        %5912 = vdwg.mxu0
        %5914 = vrot.lane.b32.xlu0 %v4605, 64
        %v5915 = vpop.permute.xlu0 %5914
        %5917 = vrot.lane.b32.xlu0 %v4613, 64
        %v5918 = vpop.permute.xlu0 %5917
        %v5920 = vsel %vm1471, %v5915, 0
        %v5923 = vsel %vm1471, %v5918, 0
        %5925 = vmatprep.subr.bf16.mxu0 0
        %5926 = vmatpush1.bf16.xpose.msra.mxu0 %v5923
        %5927 = vmatprep.subr.bf16.mxu0 0
        %5928 = vmatpush1.bf16.xpose.msra.mxu0 0
        %5929 = vmatprep.subr.bf16.mxu0 0
        %5930 = vmatpush1.bf16.xpose.msra.mxu0 0
        %5931 = vmatprep.subr.bf16.mxu0 0
        %5932 = vmatpush1.bf16.xpose.msra.mxu0 0
        %5933 = vmatprep.subr.bf16.mxu0 0
        %5934 = vmatpush1.bf16.xpose.msra.mxu0 0
        %5935 = vmatprep.subr.bf16.mxu0 0
        %5936 = vmatpush1.bf16.xpose.msra.mxu0 0
        %5937 = vmatprep.subr.bf16.mxu0 0
        %5938 = vmatpush1.bf16.xpose.msra.mxu0 0
        %5939 = vmatprep.subr.bf16.mxu0 0
        %5940 = vmatpush1.bf16.xpose.msra.mxu0 0
        %5941 = vmatprep.subr.bf16.mxu0 0
        %5942 = vmatpush1.bf16.xpose.msra.mxu0 0
        %5943 = vmatprep.subr.bf16.mxu0 0
        %5944 = vmatpush1.bf16.xpose.msra.mxu0 0
        %5945 = vmatprep.subr.bf16.mxu0 0
        %5946 = vmatpush1.bf16.xpose.msra.mxu0 0
        %5947 = vmatprep.subr.bf16.mxu0 0
        %5948 = vmatpush1.bf16.xpose.msra.mxu0 0
        %5949 = vmatprep.subr.bf16.mxu0 0
        %5950 = vmatpush1.bf16.xpose.msra.mxu0 0
        %5951 = vmatprep.subr.bf16.mxu0 0
        %5952 = vmatpush1.bf16.xpose.msra.mxu0 0
        %5953 = vmatprep.subr.bf16.mxu0 0
        %5954 = vmatpush1.bf16.xpose.msra.mxu0 0
        %5955 = vmatprep.subr.bf16.mxu0 0
        %5956 = vmatpush1.bf16.xpose.msra.mxu0 0
        %5957 = vmatprep.mubr.bf16.mxu0 0
        %5958 = vmatmul.mubr.bf16.gmra.mrb[0].mxu0 %v5920
        %v5959 = vpop.f32.mrb[0].mxu0
        %v5960 = vadd.f32 0.0, %v5959
        %v5961 = vpop.f32.mrb[0].mxu0
        %v5962 = vpop.f32.mrb[0].mxu0
        %v5963 = vadd.f32 0.0, %v5962
        %v5964 = vpop.f32.mrb[0].mxu0
        %5965 = vdwg.mxu0
        %v5966 = vsel %vm1848, %v5589, -inf
        %5967 = vmax.xlane.f32.xlu0 %v5966
        %v5968 = vpop.xlane.xlu0 %5967
        %v5969 = vsel %vm1848, %v5592, -inf
        %5970 = vmax.xlane.f32.xlu0 %v5969
        %v5971 = vpop.xlane.xlu0 %5970
        %v5972 = vsel %vm1848, %v5642, -inf
        %5973 = vmax.xlane.f32.xlu0 %v5972
        %v5974 = vpop.xlane.xlu0 %5973
        %v5975 = vsel %vm1848, %v5645, -inf
        %5976 = vmax.xlane.f32.xlu0 %v5975
        %v5977 = vpop.xlane.xlu0 %5976
        %v5978 = vsel %vm1848, %v5695, -inf
        %5979 = vmax.xlane.f32.xlu0 %v5978
        %v5980 = vpop.xlane.xlu0 %5979
        %v5981 = vsel %vm1848, %v5698, -inf
        %5982 = vmax.xlane.f32.xlu0 %v5981
        %v5983 = vpop.xlane.xlu0 %5982
        %v5984 = vsel %vm1848, %v5748, -inf
        %5985 = vmax.xlane.f32.xlu0 %v5984
        %v5986 = vpop.xlane.xlu0 %5985
        %v5987 = vsel %vm1848, %v5751, -inf
        %5988 = vmax.xlane.f32.xlu0 %v5987
        %v5989 = vpop.xlane.xlu0 %5988
        %v5990 = vsel %vm1848, %v5801, -inf
        %5991 = vmax.xlane.f32.xlu0 %v5990
        %v5992 = vpop.xlane.xlu0 %5991
        %v5993 = vsel %vm1848, %v5804, -inf
        %5994 = vmax.xlane.f32.xlu0 %v5993
        %v5995 = vpop.xlane.xlu0 %5994
        %v5996 = vsel %vm1848, %v5854, -inf
        %5997 = vmax.xlane.f32.xlu0 %v5996
        %v5998 = vpop.xlane.xlu0 %5997
        %v5999 = vsel %vm1848, %v5857, -inf
        %6000 = vmax.xlane.f32.xlu0 %v5999
        %v6001 = vpop.xlane.xlu0 %6000
        %v6002 = vsel %vm1848, %v5907, -inf
        %6003 = vmax.xlane.f32.xlu0 %v6002
        %v6004 = vpop.xlane.xlu0 %6003
        %v6005 = vsel %vm1848, %v5910, -inf
        %6006 = vmax.xlane.f32.xlu0 %v6005
        %v6007 = vpop.xlane.xlu0 %6006
        %v6008 = vsel %vm1848, %v5960, -inf
        %6009 = vmax.xlane.f32.xlu0 %v6008
        %v6010 = vpop.xlane.xlu0 %6009
        %v6011 = vsel %vm1848, %v5963, -inf
        %6012 = vmax.xlane.f32.xlu0 %v6011
        %v6013 = vpop.xlane.xlu0 %6012
        %v6014 = vsub.f32 %v5589, %v5968
        %v6015 = vsub.f32 %v5592, %v5971
        %v6016 = vsub.f32 %v5642, %v5974
        %v6017 = vsub.f32 %v5645, %v5977
        %v6018 = vsub.f32 %v5695, %v5980
        %v6019 = vsub.f32 %v5698, %v5983
        %v6020 = vsub.f32 %v5748, %v5986
        %v6021 = vsub.f32 %v5751, %v5989
        %v6022 = vsub.f32 %v5801, %v5992
        %v6023 = vsub.f32 %v5804, %v5995
        %v6024 = vsub.f32 %v5854, %v5998
        %v6025 = vsub.f32 %v5857, %v6001
        %v6026 = vsub.f32 %v5907, %v6004
        %v6027 = vsub.f32 %v5910, %v6007
        %v6028 = vsub.f32 %v5960, %v6010
        %v6029 = vsub.f32 %v5963, %v6013
        %v6030 = vmul.f32 %v6014, 1.442695
        %v6031 = vpow.pop %v6030
        %v6032 = vmul.f32 %v6015, 1.442695
        %v6033 = vpow.pop %v6032
        %v6034 = vmul.f32 %v6016, 1.442695
        %v6035 = vpow.pop %v6034
        %v6036 = vmul.f32 %v6017, 1.442695
        %v6037 = vpow.pop %v6036
        %v6038 = vmul.f32 %v6018, 1.442695
        %v6039 = vpow.pop %v6038
        %v6040 = vmul.f32 %v6019, 1.442695
        %v6041 = vpow.pop %v6040
        %v6042 = vmul.f32 %v6020, 1.442695
        %v6043 = vpow.pop %v6042
        %v6044 = vmul.f32 %v6021, 1.442695
        %v6045 = vpow.pop %v6044
        %v6046 = vmul.f32 %v6022, 1.442695
        %v6047 = vpow.pop %v6046
        %v6048 = vmul.f32 %v6023, 1.442695
        %v6049 = vpow.pop %v6048
        %v6050 = vmul.f32 %v6024, 1.442695
        %v6051 = vpow.pop %v6050
        %v6052 = vmul.f32 %v6025, 1.442695
        %v6053 = vpow.pop %v6052
        %v6054 = vmul.f32 %v6026, 1.442695
        %v6055 = vpow.pop %v6054
        %v6056 = vmul.f32 %v6027, 1.442695
        %v6057 = vpow.pop %v6056
        %v6058 = vmul.f32 %v6028, 1.442695
        %v6059 = vpow.pop %v6058
        %v6060 = vmul.f32 %v6029, 1.442695
        %v6061 = vpow.pop %v6060
        %v6062 = vsel %vm1848, %v6031, 0.0
        %6063 = vadd.xlane.f32.xlu0 %v6062
        %v6064 = vpop.xlane.xlu0 %6063
        %v6065 = vsel %vm1848, %v6033, 0.0
        %6066 = vadd.xlane.f32.xlu0 %v6065
        %v6067 = vpop.xlane.xlu0 %6066
        %v6068 = vsel %vm1848, %v6035, 0.0
        %6069 = vadd.xlane.f32.xlu0 %v6068
        %v6070 = vpop.xlane.xlu0 %6069
        %v6071 = vsel %vm1848, %v6037, 0.0
        %6072 = vadd.xlane.f32.xlu0 %v6071
        %v6073 = vpop.xlane.xlu0 %6072
        %v6074 = vsel %vm1848, %v6039, 0.0
        %6075 = vadd.xlane.f32.xlu0 %v6074
        %v6076 = vpop.xlane.xlu0 %6075
        %v6077 = vsel %vm1848, %v6041, 0.0
        %6078 = vadd.xlane.f32.xlu0 %v6077
        %v6079 = vpop.xlane.xlu0 %6078
        %v6080 = vsel %vm1848, %v6043, 0.0
        %6081 = vadd.xlane.f32.xlu0 %v6080
        %v6082 = vpop.xlane.xlu0 %6081
        %v6083 = vsel %vm1848, %v6045, 0.0
        %6084 = vadd.xlane.f32.xlu0 %v6083
        %v6085 = vpop.xlane.xlu0 %6084
        %v6086 = vsel %vm1848, %v6047, 0.0
        %6087 = vadd.xlane.f32.xlu0 %v6086
        %v6088 = vpop.xlane.xlu0 %6087
        %v6089 = vsel %vm1848, %v6049, 0.0
        %6090 = vadd.xlane.f32.xlu0 %v6089
        %v6091 = vpop.xlane.xlu0 %6090
        %v6092 = vsel %vm1848, %v6051, 0.0
        %6093 = vadd.xlane.f32.xlu0 %v6092
        %v6094 = vpop.xlane.xlu0 %6093
        %v6095 = vsel %vm1848, %v6053, 0.0
        %6096 = vadd.xlane.f32.xlu0 %v6095
        %v6097 = vpop.xlane.xlu0 %6096
        %v6098 = vsel %vm1848, %v6055, 0.0
        %6099 = vadd.xlane.f32.xlu0 %v6098
        %v6100 = vpop.xlane.xlu0 %6099
        %v6101 = vsel %vm1848, %v6057, 0.0
        %6102 = vadd.xlane.f32.xlu0 %v6101
        %v6103 = vpop.xlane.xlu0 %6102
        %v6104 = vsel %vm1848, %v6059, 0.0
        %6105 = vadd.xlane.f32.xlu0 %v6104
        %v6106 = vpop.xlane.xlu0 %6105
        %v6107 = vsel %vm1848, %v6061, 0.0
        %6108 = vadd.xlane.f32.xlu0 %v6107
        %v6109 = vpop.xlane.xlu0 %6108
        %v6110 = vrcp.pop %v6064
        %v6111 = vrcp.pop %v6067
        %v6112 = vrcp.pop %v6070
        %v6113 = vrcp.pop %v6073
        %v6114 = vrcp.pop %v6076
        %v6115 = vrcp.pop %v6079
        %v6116 = vrcp.pop %v6082
        %v6117 = vrcp.pop %v6085
        %v6118 = vrcp.pop %v6088
        %v6119 = vrcp.pop %v6091
        %v6120 = vrcp.pop %v6094
        %v6121 = vrcp.pop %v6097
        %v6122 = vrcp.pop %v6100
        %v6123 = vrcp.pop %v6103
        %v6124 = vrcp.pop %v6106
        %v6125 = vrcp.pop %v6109
        %v6126 = vmul.f32 %v6031, %v6110
        %v6127 = vmul.f32 %v6033, %v6111
        %v6128 = vmul.f32 %v6035, %v6112
        %v6129 = vmul.f32 %v6037, %v6113
        %v6130 = vmul.f32 %v6039, %v6114
        %v6131 = vmul.f32 %v6041, %v6115
        %v6132 = vmul.f32 %v6043, %v6116
        %v6133 = vmul.f32 %v6045, %v6117
        %v6134 = vmul.f32 %v6047, %v6118
        %v6135 = vmul.f32 %v6049, %v6119
        %v6136 = vmul.f32 %v6051, %v6120
        %v6137 = vmul.f32 %v6053, %v6121
        %v6138 = vmul.f32 %v6055, %v6122
        %v6139 = vmul.f32 %v6057, %v6123
        %v6140 = vmul.f32 %v6059, %v6124
        %v6141 = vmul.f32 %v6061, %v6125
        %v6142 = vpack.c.bf16 %v6127, %v6126
        %v6143 = vpack.c.bf16 %v6129, %v6128
        %v6144 = vpack.c.bf16 %v6131, %v6130
        %v6145 = vpack.c.bf16 %v6133, %v6132
        %v6146 = vpack.c.bf16 %v6135, %v6134
        %v6147 = vpack.c.bf16 %v6137, %v6136
        %v6148 = vpack.c.bf16 %v6139, %v6138
        %v6149 = vpack.c.bf16 %v6141, %v6140
        %6151 = vrot.lane.b32.xlu0 %v4614, 64
        %v6152 = vpop.permute.xlu0 %6151
        %v6155 = vsel %vm1848, %v6142, 0
        %6157 = vmatprep.subr.bf16.mxu0 0
        %6158 = vmatpush1.bf16.msra.mxu0 %v6152
        %6159 = vmatprep.subr.bf16.mxu0 0
        %6160 = vmatpush1.bf16.msra.mxu0 0
        %6161 = vmatprep.subr.bf16.mxu0 0
        %6162 = vmatpush1.bf16.msra.mxu0 0
        %6163 = vmatprep.subr.bf16.mxu0 0
        %6164 = vmatpush1.bf16.msra.mxu0 0
        %6165 = vmatprep.subr.bf16.mxu0 0
        %6166 = vmatpush1.bf16.msra.mxu0 0
        %6167 = vmatprep.subr.bf16.mxu0 0
        %6168 = vmatpush1.bf16.msra.mxu0 0
        %6169 = vmatprep.subr.bf16.mxu0 0
        %6170 = vmatpush1.bf16.msra.mxu0 0
        %6171 = vmatprep.subr.bf16.mxu0 0
        %6172 = vmatpush1.bf16.msra.mxu0 0
        %6173 = vmatprep.subr.bf16.mxu0 0
        %6174 = vmatpush1.bf16.msra.mxu0 0
        %6175 = vmatprep.subr.bf16.mxu0 0
        %6176 = vmatpush1.bf16.msra.mxu0 0
        %6177 = vmatprep.subr.bf16.mxu0 0
        %6178 = vmatpush1.bf16.msra.mxu0 0
        %6179 = vmatprep.subr.bf16.mxu0 0
        %6180 = vmatpush1.bf16.msra.mxu0 0
        %6181 = vmatprep.subr.bf16.mxu0 0
        %6182 = vmatpush1.bf16.msra.mxu0 0
        %6183 = vmatprep.subr.bf16.mxu0 0
        %6184 = vmatpush1.bf16.msra.mxu0 0
        %6185 = vmatprep.subr.bf16.mxu0 0
        %6186 = vmatpush1.bf16.msra.mxu0 0
        %6187 = vmatprep.subr.bf16.mxu0 0
        %6188 = vmatpush1.bf16.msra.mxu0 0
        %6189 = vmatprep.mubr.bf16.mxu0 0
        %6190 = vmatmul.mubr.bf16.gmra.mrb[0].mxu0 %v6155
        %v6191 = vpop.f32.mrb[0].mxu0
        %v6192 = vadd.f32 0.0, %v6191
        %v6193 = vpop.f32.mrb[0].mxu0
        %v6194 = vpop.f32.mrb[0].mxu0
        %v6195 = vadd.f32 0.0, %v6194
        %v6196 = vpop.f32.mrb[0].mxu0
        %6197 = vdwg.mxu0
        %6199 = vrot.lane.b32.xlu0 %v4615, 64
        %v6200 = vpop.permute.xlu0 %6199
        %v6203 = vsel %vm1848, %v6143, 0
        %6205 = vmatprep.subr.bf16.mxu0 0
        %6206 = vmatpush1.bf16.msra.mxu0 %v6200
        %6207 = vmatprep.subr.bf16.mxu0 0
        %6208 = vmatpush1.bf16.msra.mxu0 0
        %6209 = vmatprep.subr.bf16.mxu0 0
        %6210 = vmatpush1.bf16.msra.mxu0 0
        %6211 = vmatprep.subr.bf16.mxu0 0
        %6212 = vmatpush1.bf16.msra.mxu0 0
        %6213 = vmatprep.subr.bf16.mxu0 0
        %6214 = vmatpush1.bf16.msra.mxu0 0
        %6215 = vmatprep.subr.bf16.mxu0 0
        %6216 = vmatpush1.bf16.msra.mxu0 0
        %6217 = vmatprep.subr.bf16.mxu0 0
        %6218 = vmatpush1.bf16.msra.mxu0 0
        %6219 = vmatprep.subr.bf16.mxu0 0
        %6220 = vmatpush1.bf16.msra.mxu0 0
        %6221 = vmatprep.subr.bf16.mxu0 0
        %6222 = vmatpush1.bf16.msra.mxu0 0
        %6223 = vmatprep.subr.bf16.mxu0 0
        %6224 = vmatpush1.bf16.msra.mxu0 0
        %6225 = vmatprep.subr.bf16.mxu0 0
        %6226 = vmatpush1.bf16.msra.mxu0 0
        %6227 = vmatprep.subr.bf16.mxu0 0
        %6228 = vmatpush1.bf16.msra.mxu0 0
        %6229 = vmatprep.subr.bf16.mxu0 0
        %6230 = vmatpush1.bf16.msra.mxu0 0
        %6231 = vmatprep.subr.bf16.mxu0 0
        %6232 = vmatpush1.bf16.msra.mxu0 0
        %6233 = vmatprep.subr.bf16.mxu0 0
        %6234 = vmatpush1.bf16.msra.mxu0 0
        %6235 = vmatprep.subr.bf16.mxu0 0
        %6236 = vmatpush1.bf16.msra.mxu0 0
        %6237 = vmatprep.mubr.bf16.mxu0 0
        %6238 = vmatmul.mubr.bf16.gmra.mrb[0].mxu0 %v6203
        %v6239 = vpop.f32.mrb[0].mxu0
        %v6240 = vadd.f32 0.0, %v6239
        %v6241 = vpop.f32.mrb[0].mxu0
        %v6242 = vpop.f32.mrb[0].mxu0
        %v6243 = vadd.f32 0.0, %v6242
        %v6244 = vpop.f32.mrb[0].mxu0
        %6245 = vdwg.mxu0
        %6247 = vrot.lane.b32.xlu0 %v4616, 64
        %v6248 = vpop.permute.xlu0 %6247
        %v6251 = vsel %vm1848, %v6144, 0
        %6253 = vmatprep.subr.bf16.mxu0 0
        %6254 = vmatpush1.bf16.msra.mxu0 %v6248
        %6255 = vmatprep.subr.bf16.mxu0 0
        %6256 = vmatpush1.bf16.msra.mxu0 0
        %6257 = vmatprep.subr.bf16.mxu0 0
        %6258 = vmatpush1.bf16.msra.mxu0 0
        %6259 = vmatprep.subr.bf16.mxu0 0
        %6260 = vmatpush1.bf16.msra.mxu0 0
        %6261 = vmatprep.subr.bf16.mxu0 0
        %6262 = vmatpush1.bf16.msra.mxu0 0
        %6263 = vmatprep.subr.bf16.mxu0 0
        %6264 = vmatpush1.bf16.msra.mxu0 0
        %6265 = vmatprep.subr.bf16.mxu0 0
        %6266 = vmatpush1.bf16.msra.mxu0 0
        %6267 = vmatprep.subr.bf16.mxu0 0
        %6268 = vmatpush1.bf16.msra.mxu0 0
        %6269 = vmatprep.subr.bf16.mxu0 0
        %6270 = vmatpush1.bf16.msra.mxu0 0
        %6271 = vmatprep.subr.bf16.mxu0 0
        %6272 = vmatpush1.bf16.msra.mxu0 0
        %6273 = vmatprep.subr.bf16.mxu0 0
        %6274 = vmatpush1.bf16.msra.mxu0 0
        %6275 = vmatprep.subr.bf16.mxu0 0
        %6276 = vmatpush1.bf16.msra.mxu0 0
        %6277 = vmatprep.subr.bf16.mxu0 0
        %6278 = vmatpush1.bf16.msra.mxu0 0
        %6279 = vmatprep.subr.bf16.mxu0 0
        %6280 = vmatpush1.bf16.msra.mxu0 0
        %6281 = vmatprep.subr.bf16.mxu0 0
        %6282 = vmatpush1.bf16.msra.mxu0 0
        %6283 = vmatprep.subr.bf16.mxu0 0
        %6284 = vmatpush1.bf16.msra.mxu0 0
        %6285 = vmatprep.mubr.bf16.mxu0 0
        %6286 = vmatmul.mubr.bf16.gmra.mrb[0].mxu0 %v6251
        %v6287 = vpop.f32.mrb[0].mxu0
        %v6288 = vadd.f32 0.0, %v6287
        %v6289 = vpop.f32.mrb[0].mxu0
        %v6290 = vpop.f32.mrb[0].mxu0
        %v6291 = vadd.f32 0.0, %v6290
        %v6292 = vpop.f32.mrb[0].mxu0
        %6293 = vdwg.mxu0
        %6295 = vrot.lane.b32.xlu0 %v4617, 64
        %v6296 = vpop.permute.xlu0 %6295
        %v6299 = vsel %vm1848, %v6145, 0
        %6301 = vmatprep.subr.bf16.mxu0 0
        %6302 = vmatpush1.bf16.msra.mxu0 %v6296
        %6303 = vmatprep.subr.bf16.mxu0 0
        %6304 = vmatpush1.bf16.msra.mxu0 0
        %6305 = vmatprep.subr.bf16.mxu0 0
        %6306 = vmatpush1.bf16.msra.mxu0 0
        %6307 = vmatprep.subr.bf16.mxu0 0
        %6308 = vmatpush1.bf16.msra.mxu0 0
        %6309 = vmatprep.subr.bf16.mxu0 0
        %6310 = vmatpush1.bf16.msra.mxu0 0
        %6311 = vmatprep.subr.bf16.mxu0 0
        %6312 = vmatpush1.bf16.msra.mxu0 0
        %6313 = vmatprep.subr.bf16.mxu0 0
        %6314 = vmatpush1.bf16.msra.mxu0 0
        %6315 = vmatprep.subr.bf16.mxu0 0
        %6316 = vmatpush1.bf16.msra.mxu0 0
        %6317 = vmatprep.subr.bf16.mxu0 0
        %6318 = vmatpush1.bf16.msra.mxu0 0
        %6319 = vmatprep.subr.bf16.mxu0 0
        %6320 = vmatpush1.bf16.msra.mxu0 0
        %6321 = vmatprep.subr.bf16.mxu0 0
        %6322 = vmatpush1.bf16.msra.mxu0 0
        %6323 = vmatprep.subr.bf16.mxu0 0
        %6324 = vmatpush1.bf16.msra.mxu0 0
        %6325 = vmatprep.subr.bf16.mxu0 0
        %6326 = vmatpush1.bf16.msra.mxu0 0
        %6327 = vmatprep.subr.bf16.mxu0 0
        %6328 = vmatpush1.bf16.msra.mxu0 0
        %6329 = vmatprep.subr.bf16.mxu0 0
        %6330 = vmatpush1.bf16.msra.mxu0 0
        %6331 = vmatprep.subr.bf16.mxu0 0
        %6332 = vmatpush1.bf16.msra.mxu0 0
        %6333 = vmatprep.mubr.bf16.mxu0 0
        %6334 = vmatmul.mubr.bf16.gmra.mrb[0].mxu0 %v6299
        %v6335 = vpop.f32.mrb[0].mxu0
        %v6336 = vadd.f32 0.0, %v6335
        %v6337 = vpop.f32.mrb[0].mxu0
        %v6338 = vpop.f32.mrb[0].mxu0
        %v6339 = vadd.f32 0.0, %v6338
        %v6340 = vpop.f32.mrb[0].mxu0
        %6341 = vdwg.mxu0
        %6343 = vrot.lane.b32.xlu0 %v4618, 64
        %v6344 = vpop.permute.xlu0 %6343
        %v6347 = vsel %vm1848, %v6146, 0
        %6349 = vmatprep.subr.bf16.mxu0 0
        %6350 = vmatpush1.bf16.msra.mxu0 %v6344
        %6351 = vmatprep.subr.bf16.mxu0 0
        %6352 = vmatpush1.bf16.msra.mxu0 0
        %6353 = vmatprep.subr.bf16.mxu0 0
        %6354 = vmatpush1.bf16.msra.mxu0 0
        %6355 = vmatprep.subr.bf16.mxu0 0
        %6356 = vmatpush1.bf16.msra.mxu0 0
        %6357 = vmatprep.subr.bf16.mxu0 0
        %6358 = vmatpush1.bf16.msra.mxu0 0
        %6359 = vmatprep.subr.bf16.mxu0 0
        %6360 = vmatpush1.bf16.msra.mxu0 0
        %6361 = vmatprep.subr.bf16.mxu0 0
        %6362 = vmatpush1.bf16.msra.mxu0 0
        %6363 = vmatprep.subr.bf16.mxu0 0
        %6364 = vmatpush1.bf16.msra.mxu0 0
        %6365 = vmatprep.subr.bf16.mxu0 0
        %6366 = vmatpush1.bf16.msra.mxu0 0
        %6367 = vmatprep.subr.bf16.mxu0 0
        %6368 = vmatpush1.bf16.msra.mxu0 0
        %6369 = vmatprep.subr.bf16.mxu0 0
        %6370 = vmatpush1.bf16.msra.mxu0 0
        %6371 = vmatprep.subr.bf16.mxu0 0
        %6372 = vmatpush1.bf16.msra.mxu0 0
        %6373 = vmatprep.subr.bf16.mxu0 0
        %6374 = vmatpush1.bf16.msra.mxu0 0
        %6375 = vmatprep.subr.bf16.mxu0 0
        %6376 = vmatpush1.bf16.msra.mxu0 0
        %6377 = vmatprep.subr.bf16.mxu0 0
        %6378 = vmatpush1.bf16.msra.mxu0 0
        %6379 = vmatprep.subr.bf16.mxu0 0
        %6380 = vmatpush1.bf16.msra.mxu0 0
        %6381 = vmatprep.mubr.bf16.mxu0 0
        %6382 = vmatmul.mubr.bf16.gmra.mrb[0].mxu0 %v6347
        %v6383 = vpop.f32.mrb[0].mxu0
        %v6384 = vadd.f32 0.0, %v6383
        %v6385 = vpop.f32.mrb[0].mxu0
        %v6386 = vpop.f32.mrb[0].mxu0
        %v6387 = vadd.f32 0.0, %v6386
        %v6388 = vpop.f32.mrb[0].mxu0
        %6389 = vdwg.mxu0
        %6391 = vrot.lane.b32.xlu0 %v4619, 64
        %v6392 = vpop.permute.xlu0 %6391
        %v6395 = vsel %vm1848, %v6147, 0
        %6397 = vmatprep.subr.bf16.mxu0 0
        %6398 = vmatpush1.bf16.msra.mxu0 %v6392
        %6399 = vmatprep.subr.bf16.mxu0 0
        %6400 = vmatpush1.bf16.msra.mxu0 0
        %6401 = vmatprep.subr.bf16.mxu0 0
        %6402 = vmatpush1.bf16.msra.mxu0 0
        %6403 = vmatprep.subr.bf16.mxu0 0
        %6404 = vmatpush1.bf16.msra.mxu0 0
        %6405 = vmatprep.subr.bf16.mxu0 0
        %6406 = vmatpush1.bf16.msra.mxu0 0
        %6407 = vmatprep.subr.bf16.mxu0 0
        %6408 = vmatpush1.bf16.msra.mxu0 0
        %6409 = vmatprep.subr.bf16.mxu0 0
        %6410 = vmatpush1.bf16.msra.mxu0 0
        %6411 = vmatprep.subr.bf16.mxu0 0
        %6412 = vmatpush1.bf16.msra.mxu0 0
        %6413 = vmatprep.subr.bf16.mxu0 0
        %6414 = vmatpush1.bf16.msra.mxu0 0
        %6415 = vmatprep.subr.bf16.mxu0 0
        %6416 = vmatpush1.bf16.msra.mxu0 0
        %6417 = vmatprep.subr.bf16.mxu0 0
        %6418 = vmatpush1.bf16.msra.mxu0 0
        %6419 = vmatprep.subr.bf16.mxu0 0
        %6420 = vmatpush1.bf16.msra.mxu0 0
        %6421 = vmatprep.subr.bf16.mxu0 0
        %6422 = vmatpush1.bf16.msra.mxu0 0
        %6423 = vmatprep.subr.bf16.mxu0 0
        %6424 = vmatpush1.bf16.msra.mxu0 0
        %6425 = vmatprep.subr.bf16.mxu0 0
        %6426 = vmatpush1.bf16.msra.mxu0 0
        %6427 = vmatprep.subr.bf16.mxu0 0
        %6428 = vmatpush1.bf16.msra.mxu0 0
        %6429 = vmatprep.mubr.bf16.mxu0 0
        %6430 = vmatmul.mubr.bf16.gmra.mrb[0].mxu0 %v6395
        %v6431 = vpop.f32.mrb[0].mxu0
        %v6432 = vadd.f32 0.0, %v6431
        %v6433 = vpop.f32.mrb[0].mxu0
        %v6434 = vpop.f32.mrb[0].mxu0
        %v6435 = vadd.f32 0.0, %v6434
        %v6436 = vpop.f32.mrb[0].mxu0
        %6437 = vdwg.mxu0
        %6439 = vrot.lane.b32.xlu0 %v4620, 64
        %v6440 = vpop.permute.xlu0 %6439
        %v6443 = vsel %vm1848, %v6148, 0
        %6445 = vmatprep.subr.bf16.mxu0 0
        %6446 = vmatpush1.bf16.msra.mxu0 %v6440
        %6447 = vmatprep.subr.bf16.mxu0 0
        %6448 = vmatpush1.bf16.msra.mxu0 0
        %6449 = vmatprep.subr.bf16.mxu0 0
        %6450 = vmatpush1.bf16.msra.mxu0 0
        %6451 = vmatprep.subr.bf16.mxu0 0
        %6452 = vmatpush1.bf16.msra.mxu0 0
        %6453 = vmatprep.subr.bf16.mxu0 0
        %6454 = vmatpush1.bf16.msra.mxu0 0
        %6455 = vmatprep.subr.bf16.mxu0 0
        %6456 = vmatpush1.bf16.msra.mxu0 0
        %6457 = vmatprep.subr.bf16.mxu0 0
        %6458 = vmatpush1.bf16.msra.mxu0 0
        %6459 = vmatprep.subr.bf16.mxu0 0
        %6460 = vmatpush1.bf16.msra.mxu0 0
        %6461 = vmatprep.subr.bf16.mxu0 0
        %6462 = vmatpush1.bf16.msra.mxu0 0
        %6463 = vmatprep.subr.bf16.mxu0 0
        %6464 = vmatpush1.bf16.msra.mxu0 0
        %6465 = vmatprep.subr.bf16.mxu0 0
        %6466 = vmatpush1.bf16.msra.mxu0 0
        %6467 = vmatprep.subr.bf16.mxu0 0
        %6468 = vmatpush1.bf16.msra.mxu0 0
        %6469 = vmatprep.subr.bf16.mxu0 0
        %6470 = vmatpush1.bf16.msra.mxu0 0
        %6471 = vmatprep.subr.bf16.mxu0 0
        %6472 = vmatpush1.bf16.msra.mxu0 0
        %6473 = vmatprep.subr.bf16.mxu0 0
        %6474 = vmatpush1.bf16.msra.mxu0 0
        %6475 = vmatprep.subr.bf16.mxu0 0
        %6476 = vmatpush1.bf16.msra.mxu0 0
        %6477 = vmatprep.mubr.bf16.mxu0 0
        %6478 = vmatmul.mubr.bf16.gmra.mrb[0].mxu0 %v6443
        %v6479 = vpop.f32.mrb[0].mxu0
        %v6480 = vadd.f32 0.0, %v6479
        %v6481 = vpop.f32.mrb[0].mxu0
        %v6482 = vpop.f32.mrb[0].mxu0
        %v6483 = vadd.f32 0.0, %v6482
        %v6484 = vpop.f32.mrb[0].mxu0
        %6485 = vdwg.mxu0
        %6487 = vrot.lane.b32.xlu0 %v4621, 64
        %v6488 = vpop.permute.xlu0 %6487
        %v6491 = vsel %vm1848, %v6149, 0
        %6493 = vmatprep.subr.bf16.mxu0 0
        %6494 = vmatpush1.bf16.msra.mxu0 %v6488
        %6495 = vmatprep.subr.bf16.mxu0 0
        %6496 = vmatpush1.bf16.msra.mxu0 0
        %6497 = vmatprep.subr.bf16.mxu0 0
        %6498 = vmatpush1.bf16.msra.mxu0 0
        %6499 = vmatprep.subr.bf16.mxu0 0
        %6500 = vmatpush1.bf16.msra.mxu0 0
        %6501 = vmatprep.subr.bf16.mxu0 0
        %6502 = vmatpush1.bf16.msra.mxu0 0
        %6503 = vmatprep.subr.bf16.mxu0 0
        %6504 = vmatpush1.bf16.msra.mxu0 0
        %6505 = vmatprep.subr.bf16.mxu0 0
        %6506 = vmatpush1.bf16.msra.mxu0 0
        %6507 = vmatprep.subr.bf16.mxu0 0
        %6508 = vmatpush1.bf16.msra.mxu0 0
        %6509 = vmatprep.subr.bf16.mxu0 0
        %6510 = vmatpush1.bf16.msra.mxu0 0
        %6511 = vmatprep.subr.bf16.mxu0 0
        %6512 = vmatpush1.bf16.msra.mxu0 0
        %6513 = vmatprep.subr.bf16.mxu0 0
        %6514 = vmatpush1.bf16.msra.mxu0 0
        %6515 = vmatprep.subr.bf16.mxu0 0
        %6516 = vmatpush1.bf16.msra.mxu0 0
        %6517 = vmatprep.subr.bf16.mxu0 0
        %6518 = vmatpush1.bf16.msra.mxu0 0
        %6519 = vmatprep.subr.bf16.mxu0 0
        %6520 = vmatpush1.bf16.msra.mxu0 0
        %6521 = vmatprep.subr.bf16.mxu0 0
        %6522 = vmatpush1.bf16.msra.mxu0 0
        %6523 = vmatprep.subr.bf16.mxu0 0
        %6524 = vmatpush1.bf16.msra.mxu0 0
        %6525 = vmatprep.mubr.bf16.mxu0 0
        %6526 = vmatmul.mubr.bf16.gmra.mrb[0].mxu0 %v6491
        %v6527 = vpop.f32.mrb[0].mxu0
        %v6528 = vadd.f32 0.0, %v6527
        %v6529 = vpop.f32.mrb[0].mxu0
        %v6530 = vpop.f32.mrb[0].mxu0
        %v6531 = vadd.f32 0.0, %v6530
        %v6532 = vpop.f32.mrb[0].mxu0
        %6533 = vdwg.mxu0
        %v6534 = vpack.c.bf16 %v6195, %v6192
        %v6535 = vpack.c.bf16 %v6243, %v6240
        %v6536 = vpack.c.bf16 %v6291, %v6288
        %v6537 = vpack.c.bf16 %v6339, %v6336
        %v6538 = vpack.c.bf16 %v6387, %v6384
        %v6539 = vpack.c.bf16 %v6435, %v6432
        %v6540 = vpack.c.bf16 %v6483, %v6480
        %v6541 = vpack.c.bf16 %v6531, %v6528
        %v6550 = vunpack.c.l.b16 %v714
        %v6551 = vunpack.c.l.b16 %v715
        %v6552 = vunpack.c.l.b16 %v716
        %v6553 = vunpack.c.l.b16 %v717
        %v6554 = vunpack.c.l.b16 %v718
        %v6555 = vunpack.c.l.b16 %v719
        %v6556 = vunpack.c.l.b16 %v720
        %v6557 = vunpack.c.l.b16 %v721
        %v6558 = vpack.c.b16 %v6551, %v6550
        %v6559 = vpack.c.b16 %v6553, %v6552
        %v6560 = vpack.c.b16 %v6555, %v6554
        %v6561 = vpack.c.b16 %v6557, %v6556
        %v6567 = vsel %vm1471, %v6534, 0
        %v6570 = vsel %vm1471, %v6535, 0
        %v6573 = vsel %vm1471, %v6536, 0
        %v6576 = vsel %vm1471, %v6537, 0
        %v6579 = vsel %vm1471, %v6538, 0
        %v6582 = vsel %vm1471, %v6539, 0
        %v6585 = vsel %vm1471, %v6540, 0
        %v6588 = vsel %vm1471, %v6541, 0
        %6590 = vmatprep.subr.bf16.mxu0 0
        %6591 = vmatpush1.bf16.msra.mxu0 %v6558
        %6592 = vmatprep.subr.bf16.mxu0 0
        %6593 = vmatpush1.bf16.msra.mxu0 %v6559
        %6594 = vmatprep.subr.bf16.mxu0 0
        %6595 = vmatpush1.bf16.msra.mxu0 %v6560
        %6596 = vmatprep.subr.bf16.mxu0 0
        %6597 = vmatpush1.bf16.msra.mxu0 %v6561
        %6598 = vmatprep.subr.bf16.mxu0 0
        %6599 = vmatpush1.bf16.msra.mxu0 0
        %6600 = vmatprep.subr.bf16.mxu0 0
        %6601 = vmatpush1.bf16.msra.mxu0 0
        %6602 = vmatprep.subr.bf16.mxu0 0
        %6603 = vmatpush1.bf16.msra.mxu0 0
        %6604 = vmatprep.subr.bf16.mxu0 0
        %6605 = vmatpush1.bf16.msra.mxu0 0
        %6606 = vmatprep.subr.bf16.mxu0 0
        %6607 = vmatpush1.bf16.msra.mxu0 0
        %6608 = vmatprep.subr.bf16.mxu0 0
        %6609 = vmatpush1.bf16.msra.mxu0 0
        %6610 = vmatprep.subr.bf16.mxu0 0
        %6611 = vmatpush1.bf16.msra.mxu0 0
        %6612 = vmatprep.subr.bf16.mxu0 0
        %6613 = vmatpush1.bf16.msra.mxu0 0
        %6614 = vmatprep.subr.bf16.mxu0 0
        %6615 = vmatpush1.bf16.msra.mxu0 0
        %6616 = vmatprep.subr.bf16.mxu0 0
        %6617 = vmatpush1.bf16.msra.mxu0 0
        %6618 = vmatprep.subr.bf16.mxu0 0
        %6619 = vmatpush1.bf16.msra.mxu0 0
        %6620 = vmatprep.subr.bf16.mxu0 0
        %6621 = vmatpush1.bf16.msra.mxu0 0
        %6622 = vmatprep.mubr.bf16.mxu0 0
        %6623 = vmatmul.mubr.bf16.gmra.mrb[0].mxu0 %v6567
        %v6624 = vpop.f32.mrb[0].mxu0
        %v6625 = vadd.f32 0.0, %v6624
        %v6626 = vpop.f32.mrb[0].mxu0
        %v6627 = vpop.f32.mrb[0].mxu0
        %v6628 = vadd.f32 0.0, %v6627
        %v6629 = vpop.f32.mrb[0].mxu0
        %6630 = vmatprep.mubr.bf16.mxu0 0
        %6631 = vmatmul.mubr.bf16.gmra.mrb[0].mxu0 %v6570
        %v6632 = vpop.f32.mrb[0].mxu0
        %v6633 = vadd.f32 0.0, %v6632
        %v6634 = vpop.f32.mrb[0].mxu0
        %v6635 = vpop.f32.mrb[0].mxu0
        %v6636 = vadd.f32 0.0, %v6635
        %v6637 = vpop.f32.mrb[0].mxu0
        %6638 = vmatprep.mubr.bf16.mxu0 0
        %6639 = vmatmul.mubr.bf16.gmra.mrb[0].mxu0 %v6573
        %v6640 = vpop.f32.mrb[0].mxu0
        %v6641 = vadd.f32 0.0, %v6640
        %v6642 = vpop.f32.mrb[0].mxu0
        %v6643 = vpop.f32.mrb[0].mxu0
        %v6644 = vadd.f32 0.0, %v6643
        %v6645 = vpop.f32.mrb[0].mxu0
        %6646 = vmatprep.mubr.bf16.mxu0 0
        %6647 = vmatmul.mubr.bf16.gmra.mrb[0].mxu0 %v6576
        %v6648 = vpop.f32.mrb[0].mxu0
        %v6649 = vadd.f32 0.0, %v6648
        %v6650 = vpop.f32.mrb[0].mxu0
        %v6651 = vpop.f32.mrb[0].mxu0
        %v6652 = vadd.f32 0.0, %v6651
        %v6653 = vpop.f32.mrb[0].mxu0
        %6654 = vmatprep.mubr.bf16.mxu0 0
        %6655 = vmatmul.mubr.bf16.gmra.mrb[0].mxu0 %v6579
        %v6656 = vpop.f32.mrb[0].mxu0
        %v6657 = vadd.f32 0.0, %v6656
        %v6658 = vpop.f32.mrb[0].mxu0
        %v6659 = vpop.f32.mrb[0].mxu0
        %v6660 = vadd.f32 0.0, %v6659
        %v6661 = vpop.f32.mrb[0].mxu0
        %6662 = vmatprep.mubr.bf16.mxu0 0
        %6663 = vmatmul.mubr.bf16.gmra.mrb[0].mxu0 %v6582
        %v6664 = vpop.f32.mrb[0].mxu0
        %v6665 = vadd.f32 0.0, %v6664
        %v6666 = vpop.f32.mrb[0].mxu0
        %v6667 = vpop.f32.mrb[0].mxu0
        %v6668 = vadd.f32 0.0, %v6667
        %v6669 = vpop.f32.mrb[0].mxu0
        %6670 = vmatprep.mubr.bf16.mxu0 0
        %6671 = vmatmul.mubr.bf16.gmra.mrb[0].mxu0 %v6585
        %v6672 = vpop.f32.mrb[0].mxu0
        %v6673 = vadd.f32 0.0, %v6672
        %v6674 = vpop.f32.mrb[0].mxu0
        %v6675 = vpop.f32.mrb[0].mxu0
        %v6676 = vadd.f32 0.0, %v6675
        %v6677 = vpop.f32.mrb[0].mxu0
        %6678 = vmatprep.mubr.bf16.mxu0 0
        %6679 = vmatmul.mubr.bf16.gmra.mrb[0].mxu0 %v6588
        %v6680 = vpop.f32.mrb[0].mxu0
        %v6681 = vadd.f32 0.0, %v6680
        %v6682 = vpop.f32.mrb[0].mxu0
        %v6683 = vpop.f32.mrb[0].mxu0
        %v6684 = vadd.f32 0.0, %v6683
        %v6685 = vpop.f32.mrb[0].mxu0
        %6686 = vdwg.mxu0
        %v6695 = vunpack.c.l.b16 %v706
        %v6696 = vunpack.c.l.b16 %v707
        %v6697 = vunpack.c.l.b16 %v708
        %v6698 = vunpack.c.l.b16 %v709
        %v6699 = vunpack.c.l.b16 %v710
        %v6700 = vunpack.c.l.b16 %v711
        %v6701 = vunpack.c.l.b16 %v712
        %v6702 = vunpack.c.l.b16 %v713
        %v6703 = vpack.c.b16 %v6696, %v6695
        %v6704 = vpack.c.b16 %v6698, %v6697
        %v6705 = vpack.c.b16 %v6700, %v6699
        %v6706 = vpack.c.b16 %v6702, %v6701
        %v6712 = vsel %vm1471, %v5534, 0
        %v6715 = vsel %vm1471, %v5535, 0
        %v6718 = vsel %vm1471, %v5536, 0
        %v6721 = vsel %vm1471, %v5537, 0
        %v6724 = vsel %vm1471, %v5538, 0
        %v6727 = vsel %vm1471, %v5539, 0
        %v6730 = vsel %vm1471, %v5540, 0
        %v6733 = vsel %vm1471, %v5541, 0
        %6735 = vmatprep.subr.bf16.mxu0 0
        %6736 = vmatpush1.bf16.msra.mxu0 %v6703
        %6737 = vmatprep.subr.bf16.mxu0 0
        %6738 = vmatpush1.bf16.msra.mxu0 %v6704
        %6739 = vmatprep.subr.bf16.mxu0 0
        %6740 = vmatpush1.bf16.msra.mxu0 %v6705
        %6741 = vmatprep.subr.bf16.mxu0 0
        %6742 = vmatpush1.bf16.msra.mxu0 %v6706
        %6743 = vmatprep.subr.bf16.mxu0 0
        %6744 = vmatpush1.bf16.msra.mxu0 0
        %6745 = vmatprep.subr.bf16.mxu0 0
        %6746 = vmatpush1.bf16.msra.mxu0 0
        %6747 = vmatprep.subr.bf16.mxu0 0
        %6748 = vmatpush1.bf16.msra.mxu0 0
        %6749 = vmatprep.subr.bf16.mxu0 0
        %6750 = vmatpush1.bf16.msra.mxu0 0
        %6751 = vmatprep.subr.bf16.mxu0 0
        %6752 = vmatpush1.bf16.msra.mxu0 0
        %6753 = vmatprep.subr.bf16.mxu0 0
        %6754 = vmatpush1.bf16.msra.mxu0 0
        %6755 = vmatprep.subr.bf16.mxu0 0
        %6756 = vmatpush1.bf16.msra.mxu0 0
        %6757 = vmatprep.subr.bf16.mxu0 0
        %6758 = vmatpush1.bf16.msra.mxu0 0
        %6759 = vmatprep.subr.bf16.mxu0 0
        %6760 = vmatpush1.bf16.msra.mxu0 0
        %6761 = vmatprep.subr.bf16.mxu0 0
        %6762 = vmatpush1.bf16.msra.mxu0 0
        %6763 = vmatprep.subr.bf16.mxu0 0
        %6764 = vmatpush1.bf16.msra.mxu0 0
        %6765 = vmatprep.subr.bf16.mxu0 0
        %6766 = vmatpush1.bf16.msra.mxu0 0
        %6767 = vmatprep.mubr.bf16.mxu0 0
        %6768 = vmatmul.mubr.bf16.gmra.mrb[0].mxu0 %v6712
        %v6769 = vpop.f32.mrb[0].mxu0
        %v6770 = vadd.f32 %v6625, %v6769
        %v6771 = vpop.f32.mrb[0].mxu0
        %v6772 = vpop.f32.mrb[0].mxu0
        %v6773 = vadd.f32 %v6628, %v6772
        %v6774 = vpop.f32.mrb[0].mxu0
        %6775 = vmatprep.mubr.bf16.mxu0 0
        %6776 = vmatmul.mubr.bf16.gmra.mrb[0].mxu0 %v6715
        %v6777 = vpop.f32.mrb[0].mxu0
        %v6778 = vadd.f32 %v6633, %v6777
        %v6779 = vpop.f32.mrb[0].mxu0
        %v6780 = vpop.f32.mrb[0].mxu0
        %v6781 = vadd.f32 %v6636, %v6780
        %v6782 = vpop.f32.mrb[0].mxu0
        %6783 = vmatprep.mubr.bf16.mxu0 0
        %6784 = vmatmul.mubr.bf16.gmra.mrb[0].mxu0 %v6718
        %v6785 = vpop.f32.mrb[0].mxu0
        %v6786 = vadd.f32 %v6641, %v6785
        %v6787 = vpop.f32.mrb[0].mxu0
        %v6788 = vpop.f32.mrb[0].mxu0
        %v6789 = vadd.f32 %v6644, %v6788
        %v6790 = vpop.f32.mrb[0].mxu0
        %6791 = vmatprep.mubr.bf16.mxu0 0
        %6792 = vmatmul.mubr.bf16.gmra.mrb[0].mxu0 %v6721
        %v6793 = vpop.f32.mrb[0].mxu0
        %v6794 = vadd.f32 %v6649, %v6793
        %v6795 = vpop.f32.mrb[0].mxu0
        %v6796 = vpop.f32.mrb[0].mxu0
        %v6797 = vadd.f32 %v6652, %v6796
        %v6798 = vpop.f32.mrb[0].mxu0
        %6799 = vmatprep.mubr.bf16.mxu0 0
        %6800 = vmatmul.mubr.bf16.gmra.mrb[0].mxu0 %v6724
        %v6801 = vpop.f32.mrb[0].mxu0
        %v6802 = vadd.f32 %v6657, %v6801
        %v6803 = vpop.f32.mrb[0].mxu0
        %v6804 = vpop.f32.mrb[0].mxu0
        %v6805 = vadd.f32 %v6660, %v6804
        %v6806 = vpop.f32.mrb[0].mxu0
        %6807 = vmatprep.mubr.bf16.mxu0 0
        %6808 = vmatmul.mubr.bf16.gmra.mrb[0].mxu0 %v6727
        %v6809 = vpop.f32.mrb[0].mxu0
        %v6810 = vadd.f32 %v6665, %v6809
        %v6811 = vpop.f32.mrb[0].mxu0
        %v6812 = vpop.f32.mrb[0].mxu0
        %v6813 = vadd.f32 %v6668, %v6812
        %v6814 = vpop.f32.mrb[0].mxu0
        %6815 = vmatprep.mubr.bf16.mxu0 0
        %6816 = vmatmul.mubr.bf16.gmra.mrb[0].mxu0 %v6730
        %v6817 = vpop.f32.mrb[0].mxu0
        %v6818 = vadd.f32 %v6673, %v6817
        %v6819 = vpop.f32.mrb[0].mxu0
        %v6820 = vpop.f32.mrb[0].mxu0
        %v6821 = vadd.f32 %v6676, %v6820
        %v6822 = vpop.f32.mrb[0].mxu0
        %6823 = vmatprep.mubr.bf16.mxu0 0
        %6824 = vmatmul.mubr.bf16.gmra.mrb[0].mxu0 %v6733
        %v6825 = vpop.f32.mrb[0].mxu0
        %v6826 = vadd.f32 %v6681, %v6825
        %v6827 = vpop.f32.mrb[0].mxu0
        %v6828 = vpop.f32.mrb[0].mxu0
        %v6829 = vadd.f32 %v6684, %v6828
        %v6830 = vpop.f32.mrb[0].mxu0
        %6831 = vdwg.mxu0
        %v6833 = vlaneseq
        %v6834 = vshrl.u32 %v6833, 7
        %v6835 = vsub.s32 0, %v6834
        %v6836 = vrot.slane %v722, %v6835
        %v6838 = vadd.f32 %v6770, %v6836
        %v6839 = vadd.f32 %v6773, %v6836
        %v6840 = vadd.f32 %v6778, %v6836
        %v6841 = vadd.f32 %v6781, %v6836
        %v6842 = vadd.f32 %v6786, %v6836
        %v6843 = vadd.f32 %v6789, %v6836
        %v6844 = vadd.f32 %v6794, %v6836
        %v6845 = vadd.f32 %v6797, %v6836
        %v6846 = vadd.f32 %v6802, %v6836
        %v6847 = vadd.f32 %v6805, %v6836
        %v6848 = vadd.f32 %v6810, %v6836
        %v6849 = vadd.f32 %v6813, %v6836
        %v6850 = vadd.f32 %v6818, %v6836
        %v6851 = vadd.f32 %v6821, %v6836
        %v6852 = vadd.f32 %v6826, %v6836
        %v6853 = vadd.f32 %v6829, %v6836
        %v6854 = vadd.f32 %v723, %v6838
        %v6855 = vadd.f32 %v724, %v6839
        %v6856 = vadd.f32 %v725, %v6840
        %v6857 = vadd.f32 %v726, %v6841
        %v6858 = vadd.f32 %v727, %v6842
        %v6859 = vadd.f32 %v728, %v6843
        %v6860 = vadd.f32 %v729, %v6844
        %v6861 = vadd.f32 %v730, %v6845
        %v6862 = vadd.f32 %v731, %v6846
        %v6863 = vadd.f32 %v732, %v6847
        %v6864 = vadd.f32 %v733, %v6848
        %v6865 = vadd.f32 %v734, %v6849
        %v6866 = vadd.f32 %v735, %v6850
        %v6867 = vadd.f32 %v736, %v6851
        %v6868 = vadd.f32 %v737, %v6852
        %v6869 = vadd.f32 %v738, %v6853
        %6870 = vst [vmem:[%s608] sm:$0xff] %v6854
        %6871 = vst [vmem:[%s608 + $0x8] sm:$0xff] %v6855
        %6872 = vst [vmem:[%s608 + $0x10] sm:$0xff] %v6856
        %6873 = vst [vmem:[%s608 + $0x18] sm:$0xff] %v6857
        %6874 = vst [vmem:[%s608 + $0x20] sm:$0xff] %v6858
        %6875 = vst [vmem:[%s608 + $0x28] sm:$0xff] %v6859
        %6876 = vst [vmem:[%s608 + $0x30] sm:$0xff] %v6860
        %6877 = vst [vmem:[%s608 + $0x38] sm:$0xff] %v6861
        %6878 = vst [vmem:[%s608 + $0x40] sm:$0xff] %v6862
        %6879 = vst [vmem:[%s608 + $0x48] sm:$0xff] %v6863
        %6880 = vst [vmem:[%s608 + $0x50] sm:$0xff] %v6864
        %6881 = vst [vmem:[%s608 + $0x58] sm:$0xff] %v6865
        %6882 = vst [vmem:[%s608 + $0x60] sm:$0xff] %v6866
        %6883 = vst [vmem:[%s608 + $0x68] sm:$0xff] %v6867
        %6884 = vst [vmem:[%s608 + $0x70] sm:$0xff] %v6868
        %6885 = vst [vmem:[%s608 + $0x78] sm:$0xff] %v6869
        %s6886 = sand.u32 %s349, 1
        %s6887 = scalar_lea.sflag [#allocation4], %s6886
        %s6888 = sand.u32 %s349, 1
        %s6889 = smul.addr %s6888, 128
        %s6890 = scalar_lea.vmem [#allocation16], %s6889
        // Predicated region
        $region109: #{tpu_custom_call.1} parent=75 // pred_check
          %p6891 = pneg %p359
        $region110: #{tpu_custom_call.1} parent=75 // pred_check_branch
          %6893 = sbr.rel (%p6891) target = $region112
        $region111: #{tpu_custom_call.1} parent=75 // pred_region
          %s6894 = smul.u32 8, %s37
          %s6896 = ssub.s32 2048, 2048
          %6897 = vsyncadd %s6887, %s6896
          %s6898 = smul.addr %s6894, 2
          %s6899 = smul.addr %s6898, 128
          %s6900 = scalar_lea.hbm %s14, %s6899
          %s6901 = sshll.u32 %s6890, 4
          %s6902 = int_to_ptr.vmem [resolvable:$true] %s6901
          %6907 = dma.vmem_to_hbm [thread:$0]  %s6902, 2048, %s6900, %s6887, 128, 128, 8
        $region112: #{tpu_custom_call.1} parent=75 // pred_fallthru
          _
      $region76: #{tpu_custom_call.1} parent=5 // pred_fallthru
        _
      %p6908 = scmp.le.s32.totalorder 2, %s32
      // Predicated region
      $region113: #{tpu_custom_call.1} parent=5 // pred_check
        %p6909 = pneg %p6908
      $region114: #{tpu_custom_call.1} parent=5 // pred_check_branch
        %6911 = sbr.rel (%p6909) target = $region116
      $region115: #{tpu_custom_call.1} parent=5 // pred_region
        %s6912 = ssub.s32 %s32, 2
        // Predicated region
        $region117: #{tpu_custom_call.1} parent=115 // pred_check
          %p6913 = pneg %p365
        $region118: #{tpu_custom_call.1} parent=115 // pred_check_branch
          %6915 = sbr.rel (%p6913) target = $region120
        $region119: #{tpu_custom_call.1} parent=115 // pred_region
          %s6916 = sand.u32 %s350, 1
          %s6917 = scalar_lea.sflag [#allocation4], %s6916
          %s6918 = sand.u32 %s350, 1
          %s6919 = smul.addr %s6918, 128
          %s6920 = scalar_lea.vmem [#allocation16], %s6919
          %6921 = dma.done %s6917, 2048
        $region120: #{tpu_custom_call.1} parent=115 // pred_fallthru
          _
      $region116: #{tpu_custom_call.1} parent=5 // pred_fallthru
        _
    $region6: #{tpu_custom_call.1} parent=1 // loop_footer
      %s36 = sadd.s32 1, %s32
    $region7: #{tpu_custom_call.1} parent=1 // loop_footer_branch
      %31 = sbr.rel target = $region3
    $region8: #{tpu_custom_call.1} parent=1 // loop_exit
      _
    %6922 = vsyncpa [#allocation3], 1
    %s6923 = scalar_lea.sflag [#allocation3], 1
    %6924 = vsyncpa %s6923, 1
    %6925 = vsyncpa [#allocation6], 1
    %s6926 = scalar_lea.sflag [#allocation6], 1
    %6927 = vsyncpa %s6926, 1
    %6928 = vsyncpa [#allocation9], 1
    %6929 = vsyncpa [#allocation12], 1
    %6930 = vsyncpa [#allocation15], 1
    %6931 = vsyncpa [#allocation4], 1
    %s6932 = scalar_lea.sflag [#allocation4], 1
    %6933 = vsyncpa %s6932, 1

</llo_original>
